<compile_context>
chip_gen: v7x
topology: tpu7x:2x2x1
jax: 0.10.0
libtpu: 0.0.40
codegen_flags: <defaults>
</compile_context>

<pallas_src>
import math
from functools import partial

import jax
import jax.numpy as jnp
from jax.experimental import pallas as pl
from jax.experimental.pallas import tpu as pltpu

CPAD = 128            # lane-dense channel padding (channels in this net are <= 32)
USE_BF16_MXU = True   # bf16 MXU inputs, f32 accumulation; set False for pure f32


# ------------------------------ Pallas kernel --------------------------------
def _fused_net_kernel(x_ref, interp_ref, w_ref, b_ref, out_ref,
                      buf_a, buf_b, *, meta, insz, btile, leak, cdt):
    """Processes BTILE batch elements end-to-end (one grid step).

    x_ref:      (btile, Lr8, CPAD) f32   raw input, channels-last, zero padded
    interp_ref: (insz, Lr8)        f32   align_corners linear-interp matrix
    w_ref:      (num_taps, CPAD, CPAD)   folded per-tap conv weights (bf16/f32)
    b_ref:      (n_layers, 1, CPAD) f32  folded biases
    out_ref:    (1, btile, CPAD)   f32   embeddings (first nemb lanes valid)
    buf_a/b:    (btile, insz+2, CPAD) f32 ping-pong activation scratch
    """
    f32 = jnp.float32
    zero_row = jnp.zeros((btile, CPAD), f32)

    # Guard rows = conv zero padding.  Data is always stored at rows [1, 1+L),
    # row 0 is the left pad, row 1+L the right pad (rewritten per layer below).
    buf_a[:, 0, :] = zero_row
    buf_a[:, insz + 1, :] = zero_row
    buf_b[:, 0, :] = zero_row

    # F.interpolate(mode='linear', align_corners=True): one small MXU matmul per
    # example, written straight into the scratch (no separate HBM round trip).
    m = interp_ref[...]
    for b in range(btile):
        buf_a[b, 1:1 + insz, :] = jnp.dot(m, x_ref[b],
                                          preferred_element_type=f32)

    bufs = (buf_a, buf_b)
    cur = 0                      # which buffer currently holds the layer input
    a_val = None                 # once spatial length collapses to 1, keep values
    tap = 0
    for li, (K, S, P, Lin, Lout, act) in enumerate(meta):
        if a_val is not None:
            # Spatial extent already 1 -> pure channel-mixing matmul.
            assert K == 1 and S == 1 and P == 0 and Lin == 1 and Lout == 1
            acc = jnp.dot(a_val.astype(cdt), w_ref[tap],
                          preferred_element_type=f32)
        else:
            src = bufs[cur]
            acc = None
            if S == 1 and Lout > 1:
                # Hoisted bf16 cast: read the padded input once, cast once,
                # take the K shifted tap slices from the bf16 value.
                xin = src[:, pl.ds(1 - P, Lin + 2 * P), :].astype(cdt)
                for k in range(K):
                    lhs = xin[:, k:k + Lout, :].reshape(btile * Lout, CPAD)
                    d = jnp.dot(lhs, w_ref[tap + k],
                                preferred_element_type=f32)
                    acc = d if acc is None else acc + d
            else:
                # Strided layers: read only the Lout rows each tap actually
                # needs (folds the stride, no selection matmul).
                for k in range(K):
                    start = k + 1 - P
                    if Lout == 1:
                        lhs = src[:, start, :]                   # (btile, CPAD)
                    else:
                        sl = (pl.ds(start, Lout, stride=S) if S > 1
                              else pl.ds(start, Lout))
                        lhs = src[:, sl, :].reshape(btile * Lout, CPAD)
                    d = jnp.dot(lhs.astype(cdt), w_ref[tap + k],
                                preferred_element_type=f32)
                    acc = d if acc is None else acc + d
        tap += K

        acc = acc + b_ref[li]                        # (rows, CPAD) + (1, CPAD)
        if act:                                      # LeakyReLU, f32 VPU path
            acc = jnp.where(acc >= 0.0, acc, jnp.float32(leak) * acc)

        if Lout == 1:
            a_val = acc.reshape(btile, CPAD)
        else:
            dst = bufs[1 - cur]
            dst[:, 1:1 + Lout, :] = acc.reshape(btile, Lout, CPAD)
            dst[:, 1 + Lout, :] = zero_row           # right-pad guard for next layer
            cur = 1 - cur

    out_ref[0] = a_val.astype(out_ref.dtype)         # (btile, CPAD) lane-dense store


def net_forward_pallas(x, interp_m, w_slab, b_slab, *, meta, insz, nemb, leak,
                       btile=8, use_bf16=True):
    """Full forward: one-time layout prep + single fused pallas_call."""
    if x.ndim == 4:
        x = jnp.squeeze(x, axis=1)
    n, c, lraw = x.shape
    insz_m, lr8 = interp_m.shape
    assert insz_m == insz and lraw <= lr8 and c <= CPAD

    pad_n = (-n) % btile
    n_pad = n + pad_n
    num_tiles = n_pad // btile

    # One-time layout prep: NCL -> channels-last, pad channels to 128 lanes.
    xt = jnp.transpose(x, (0, 2, 1))
    xt = jnp.pad(xt, ((0, pad_n), (0, lr8 - lraw), (0, CPAD - c)))

    num_taps = w_slab.shape[0]
    n_layers = b_slab.shape[0]
    cdt = jnp.bfloat16 if use_bf16 else jnp.float32

    # NOTE: interp/w/b index_maps are constant across the grid, so the blocks are
    # fetched once and reused; total VMEM (<4 MiB) is far under the default limit.
    out = pl.pallas_call(
        partial(_fused_net_kernel, meta=meta, insz=insz, btile=btile,
                leak=leak, cdt=cdt),
        out_shape=jax.ShapeDtypeStruct((num_tiles, btile, CPAD), jnp.float32),
        grid=(num_tiles,),
        in_specs=[
            pl.BlockSpec((btile, lr8, CPAD), lambda i: (i, 0, 0)),
            pl.BlockSpec((insz, lr8), lambda i: (0, 0)),
            pl.BlockSpec((num_taps, CPAD, CPAD), lambda i: (0, 0, 0)),
            pl.BlockSpec((n_layers, 1, CPAD), lambda i: (0, 0, 0)),
        ],
        out_specs=pl.BlockSpec((1, btile, CPAD), lambda i: (i, 0, 0)),
        scratch_shapes=[
            pltpu.VMEM((btile, insz + 2, CPAD), jnp.float32),
            pltpu.VMEM((btile, insz + 2, CPAD), jnp.float32),
        ],
        compiler_params=pltpu.CompilerParams(
            dimension_semantics=("parallel",)),
    )(xt, interp_m, w_slab, b_slab)
    # TODO(synk): sigmoid_from partial in-place sigmoid not exercised (config uses None).
    return out.reshape(n_pad, CPAD)[:n, :nemb]


# ------------------------- parameter construction ----------------------------
def _conv_init(key, cout, cin, k):
    kw, kb = jax.random.split(key)
    bound = 1.0 / math.sqrt(cin * k)
    w = jax.random.uniform(kw, (cout, cin, k), minval=-bound, maxval=bound)
    b = jax.random.uniform(kb, (cout,), minval=-bound, maxval=bound)
    return w.astype(jnp.float32), b.astype(jnp.float32)


def _bn_init(key, c):
    k1, k2, k3, k4 = jax.random.split(key, 4)
    gamma = jax.random.uniform(k1, (c,), minval=0.5, maxval=1.5)
    beta = 0.1 * jax.random.normal(k2, (c,))
    mean = 0.1 * jax.random.normal(k3, (c,))
    var = jax.random.uniform(k4, (c,), minval=0.5, maxval=1.5)
    return gamma, beta, mean, var


def _fold_bn(w, b, gamma, beta, mean, var, eps=1e-5):
    scale = gamma / jnp.sqrt(var + eps)
    return w * scale[:, None, None], (b - mean) * scale + beta


def init_net(key, *, nemb, nch, powf, max_powf, insz, minsz, nbsr, use_batchnorm):
    # TODO(synk): use_gap=True (AdaptiveAvgPool1d head) not implemented; config uses use_gap=False.
    nblocks = int(math.log(float(insz) / float(minsz), 2))
    n_filters = [nch] + [2 ** min(i + powf, max_powf) for i in range(nblocks)]
    keys = iter(jax.random.split(key, 4 * (len(n_filters) * (1 + nbsr) + 2)))
    layers = []

    def add_conv(cin, cout, k, stride, pad, bn, act):
        w, b = _conv_init(next(keys), cout, cin, k)
        if bn:
            w, b = _fold_bn(w, b, *_bn_init(next(keys), cout))
        layers.append(dict(w=w, b=b, stride=stride, pad=pad, act=act))

    for i in range(len(n_filters) - 1):
        add_conv(n_filters[i], n_filters[i + 1], 4, 2, 1, use_batchnorm, True)
        for _ in range(nbsr):
            add_conv(n_filters[i + 1], n_filters[i + 1], 3, 1, 1, use_batchnorm, True)
    cur_sz = int(insz / 2 ** (len(n_filters) - 1))
    inter_ch = int(abs(n_filters[-1] + nemb) / 2)
    add_conv(n_filters[-1], inter_ch, cur_sz, cur_sz, 0, use_batchnorm, True)
    add_conv(inter_ch, nemb, 1, 1, 0, False, False)
    return layers


def pack_for_kernel(layers, insz, use_bf16):
    """Static layer metadata + lane-dense padded weight/bias slabs."""
    meta, taps, biases = [], [], []
    L = insz
    for lyr in layers:
        cout, cin, k = lyr["w"].shape
        assert cin <= CPAD and cout <= CPAD
        s, p, act = lyr["stride"], lyr["pad"], lyr["act"]
        assert p in (0, 1)
        lout = (L + 2 * p - k) // s + 1
        meta.append((k, s, p, L, lout, act))
        wt = jnp.transpose(lyr["w"], (2, 1, 0))                  # (K, Cin, Cout)
        wt = jnp.pad(wt, ((0, 0), (0, CPAD - cin), (0, CPAD - cout)))
        taps.append(wt)
        biases.append(jnp.pad(lyr["b"], (0, CPAD - cout)))
        L = lout
    assert L == 1, "final spatial length must be 1 (as in the PyTorch head)"
    w_slab = jnp.concatenate(taps, axis=0)                        # (T, 128, 128)
    if use_bf16:
        w_slab = w_slab.astype(jnp.bfloat16)
    b_slab = jnp.stack(biases)[:, None, :].astype(jnp.float32)    # (nl, 1, 128)
    return tuple(meta), w_slab, b_slab


def build_interp_matrix(out_size, in_size, in_size_padded):
    """Matrix M so that M @ x == F.interpolate(linear, align_corners=True)."""
    if in_size == out_size:
        m = jnp.eye(out_size, dtype=jnp.float32)
    else:
        pos = jnp.arange(out_size, dtype=jnp.float32) * (in_size - 1) / (out_size - 1)
        lo = jnp.floor(pos).astype(jnp.int32)
        hi = jnp.minimum(lo + 1, in_size - 1)
        w = pos - lo.astype(jnp.float32)
        cols = jnp.arange(in_size)[None, :]
        m = ((1.0 - w)[:, None] * (cols == lo[:, None])
             + w[:, None] * (cols == hi[:, None])).astype(jnp.float32)
    if in_size_padded > in_size:
        m = jnp.pad(m, ((0, 0), (0, in_size_padded - in_size)))
    return m


# ------------------------------ JAX reference ---------------------------------
def _linear_interp_align_corners(x, out_size):
    n, c, l = x.shape
    if l == out_size:
        return x
    pos = jnp.arange(out_size, dtype=jnp.float32) * (l - 1) / (out_size - 1)
    lo = jnp.floor(pos).astype(jnp.int32)
    hi = jnp.minimum(lo + 1, l - 1)
    w = pos - lo.astype(jnp.float32)
    return x[:, :, lo] * (1.0 - w) + x[:, :, hi] * w


def net_forward_ref(layers, x, *, insz, leak, cast_bf16):
    """Pure-JAX reference (lax conv). cast_bf16=True mirrors the kernel numerics."""
    if x.ndim == 4:
        x = jnp.squeeze(x, axis=1)
    x = _linear_interp_align_corners(x, insz)
    for lyr in layers:
        xin = x.astype(jnp.bfloat16) if cast_bf16 else x
        w = lyr["w"].astype(jnp.bfloat16) if cast_bf16 else lyr["w"]
        y = jax.lax.conv_general_dilated(
            xin, w, window_strides=(lyr["stride"],),
            padding=[(lyr["pad"], lyr["pad"])],
            dimension_numbers=("NCH", "OIH", "NCH"),
            preferred_element_type=jnp.float32)
        y = y + lyr["b"][None, :, None]
        if lyr["act"]:
            y = jnp.where(y >= 0.0, y, leak * y)
        x = y
    return jnp.squeeze(x, axis=-1)


# ----------------------------------- main --------------------------------------
if __name__ == "__main__":
    cfg = dict(nemb=12, nch=2, powf=3, max_powf=8, insz=64, minsz=8,
               nbsr=1, use_batchnorm=True)
    leak = 0.2
    BTILE = 8                              # examples per grid step (grid stays >= 2)

    key = jax.random.PRNGKey(0)
    pkey, xkey = jax.random.split(key)
    layers = init_net(pkey, **cfg)

    # Input mirrors the PyTorch 4-D path: (N, 1, nch, L_in); L_in != insz so the
    # align_corners linear interpolation is exercised.
    N, lraw = 16, 48
    x = jax.random.normal(xkey, (N, 1, cfg["nch"], lraw), dtype=jnp.float32)

    lr8 = ((lraw + 7) // 8) * 8                      # sublane-aligned interp rhs
    interp_m = build_interp_matrix(cfg["insz"], lraw, lr8)
    meta, w_slab, b_slab = pack_for_kernel(layers, cfg["insz"], USE_BF16_MXU)

    fwd = jax.jit(partial(net_forward_pallas, meta=meta, insz=cfg["insz"],
                          nemb=cfg["nemb"], leak=leak, btile=BTILE,
                          use_bf16=USE_BF16_MXU))
    out = jax.block_until_ready(fwd(x, interp_m, w_slab, b_slab))
    assert out.shape == (N, cfg["nemb"]), out.shape

    # (1) Strict check vs a lax-conv reference with matching numerics
    #     (bf16 MXU inputs, f32 accumulation).
    ref_same = net_forward_ref(layers, x, insz=cfg["insz"], leak=leak,
                               cast_bf16=USE_BF16_MXU)
    if not jnp.allclose(out, ref_same, atol=1e-2, rtol=1e-2):
        raise AssertionError(
            "mismatch vs numerics-matched reference, max diff = "
            f"{float(jnp.max(jnp.abs(out - ref_same)))}")

    # (2) Loose check vs the pure-f32 reference (bounds the bf16 cast error).
    ref_f32 = net_forward_ref(layers, x, insz=cfg["insz"], leak=leak,
                              cast_bf16=False)
    if not jnp.allclose(out, ref_f32, atol=1e-1, rtol=1e-1):
        raise AssertionError(
            "mismatch vs f32 reference, max diff = "
            f"{float(jnp.max(jnp.abs(out - ref_f32)))}")

    print("KERNEL_OK")
</pallas_src>

<mosaic_0001>
module attributes {stable_mosaic.version = 11 : i64} {
  func.func @_fused_net_kernel(%arg0: i32, %arg1: memref<8x48x128xf32, #tpu.memory_space<vmem>>, %arg2: memref<64x48xf32, #tpu.memory_space<vmem>>, %arg3: memref<30x128x128xbf16, #tpu.memory_space<vmem>>, %arg4: memref<8x1x128xf32, #tpu.memory_space<vmem>>, %arg5: memref<1x8x128xf32, #tpu.memory_space<vmem>>, %arg6: memref<8x66x128xf32, #tpu.memory_space<vmem>>, %arg7: memref<8x66x128xf32, #tpu.memory_space<vmem>>) attributes {dimension_semantics = [#tpu.dimension_semantics<parallel>], iteration_bounds = array<i64: 2>, scalar_prefetch = 0 : i64, scratch_operands = 2 : i64, tpu.core_type = #tpu.core_type<tc>, window_params = [{transform_indices = @transform_0, window_bounds = array<i64: 8, 48, 128>}, {pipeline_mode = #tpu.pipeline_mode<synchronous>, transform_indices = @transform_1, window_bounds = array<i64: 64, 48>}, {pipeline_mode = #tpu.pipeline_mode<synchronous>, transform_indices = @transform_2, window_bounds = array<i64: 30, 128, 128>}, {pipeline_mode = #tpu.pipeline_mode<synchronous>, transform_indices = @transform_3, window_bounds = array<i64: 8, 1, 128>}, {transform_indices = @transform_4, window_bounds = array<i64: 1, 8, 128>}]} {
    %cst = arith.constant 0.000000e+00 : f32
    %0 = vector.broadcast %cst : f32 to vector<8x128xf32>
    %c0 = arith.constant 0 : index
    %c0_0 = arith.constant 0 : index
    %c0_1 = arith.constant 0 : index
    %1 = vector.load %arg6[%c0, %c0_0, %c0_1] : memref<8x66x128xf32, #tpu.memory_space<vmem>>, vector<8x1x128xf32>
    %2 = vector.shape_cast %1 : vector<8x1x128xf32> to vector<8x128xf32>
    %3 = vector.shape_cast %0 : vector<8x128xf32> to vector<8x1x128xf32>
    tpu.vector_store %arg6[%c0, %c0_0, %c0_1], %3 {strides = array<i32>} : memref<8x66x128xf32, #tpu.memory_space<vmem>>, vector<8x1x128xf32>,
    %c0_2 = arith.constant 0 : index
    %c65 = arith.constant 65 : index
    %c0_3 = arith.constant 0 : index
    %4 = vector.load %arg6[%c0_2, %c65, %c0_3] : memref<8x66x128xf32, #tpu.memory_space<vmem>>, vector<8x1x128xf32>
    %5 = vector.shape_cast %4 : vector<8x1x128xf32> to vector<8x128xf32>
    %6 = vector.shape_cast %0 : vector<8x128xf32> to vector<8x1x128xf32>
    tpu.vector_store %arg6[%c0_2, %c65, %c0_3], %6 {strides = array<i32>} : memref<8x66x128xf32, #tpu.memory_space<vmem>>, vector<8x1x128xf32>,
    %c0_4 = arith.constant 0 : index
    %c0_5 = arith.constant 0 : index
    %c0_6 = arith.constant 0 : index
    %7 = vector.load %arg7[%c0_4, %c0_5, %c0_6] : memref<8x66x128xf32, #tpu.memory_space<vmem>>, vector<8x1x128xf32>
    %8 = vector.shape_cast %7 : vector<8x1x128xf32> to vector<8x128xf32>
    %9 = vector.shape_cast %0 : vector<8x128xf32> to vector<8x1x128xf32>
    tpu.vector_store %arg7[%c0_4, %c0_5, %c0_6], %9 {strides = array<i32>} : memref<8x66x128xf32, #tpu.memory_space<vmem>>, vector<8x1x128xf32>,
    %c0_7 = arith.constant 0 : index
    %c0_8 = arith.constant 0 : index
    %10 = vector.load %arg2[%c0_7, %c0_8] : memref<64x48xf32, #tpu.memory_space<vmem>>, vector<64x48xf32>
    %c0_9 = arith.constant 0 : index
    %c0_10 = arith.constant 0 : index
    %c0_11 = arith.constant 0 : index
    %11 = vector.load %arg1[%c0_9, %c0_10, %c0_11] : memref<8x48x128xf32, #tpu.memory_space<vmem>>, vector<1x48x128xf32>
    %12 = vector.shape_cast %11 : vector<1x48x128xf32> to vector<48x128xf32>
    %cst_12 = arith.constant dense<0.000000e+00> : vector<64x128xf32>
    %13 = tpu.matmul %10, %12, %cst_12 {dimension_numbers = #tpu.dot_dimension_numbers<[1], [0], [0], [1], [0, 0, 1, 1], [], []>} : vector<64x48xf32>, vector<48x128xf32>, vector<64x128xf32> -> vector<64x128xf32>
    %c0_13 = arith.constant 0 : index
    %c1 = arith.constant 1 : index
    %c0_14 = arith.constant 0 : index
    %14 = vector.load %arg6[%c0_13, %c1, %c0_14] : memref<8x66x128xf32, #tpu.memory_space<vmem>>, vector<1x64x128xf32>
    %15 = vector.shape_cast %14 : vector<1x64x128xf32> to vector<64x128xf32>
    %16 = vector.shape_cast %13 : vector<64x128xf32> to vector<1x64x128xf32>
    tpu.vector_store %arg6[%c0_13, %c1, %c0_14], %16 {strides = array<i32>} : memref<8x66x128xf32, #tpu.memory_space<vmem>>, vector<1x64x128xf32>,
    %c1_15 = arith.constant 1 : index
    %c0_16 = arith.constant 0 : index
    %c0_17 = arith.constant 0 : index
    %17 = vector.load %arg1[%c1_15, %c0_16, %c0_17] : memref<8x48x128xf32, #tpu.memory_space<vmem>>, vector<1x48x128xf32>
    %18 = vector.shape_cast %17 : vector<1x48x128xf32> to vector<48x128xf32>
    %cst_18 = arith.constant dense<0.000000e+00> : vector<64x128xf32>
    %19 = tpu.matmul %10, %18, %cst_18 {dimension_numbers = #tpu.dot_dimension_numbers<[1], [0], [0], [1], [0, 0, 1, 1], [], []>} : vector<64x48xf32>, vector<48x128xf32>, vector<64x128xf32> -> vector<64x128xf32>
    %c1_19 = arith.constant 1 : index
    %c1_20 = arith.constant 1 : index
    %c0_21 = arith.constant 0 : index
    %20 = vector.load %arg6[%c1_19, %c1_20, %c0_21] : memref<8x66x128xf32, #tpu.memory_space<vmem>>, vector<1x64x128xf32>
    %21 = vector.shape_cast %20 : vector<1x64x128xf32> to vector<64x128xf32>
    %22 = vector.shape_cast %19 : vector<64x128xf32> to vector<1x64x128xf32>
    tpu.vector_store %arg6[%c1_19, %c1_20, %c0_21], %22 {strides = array<i32>} : memref<8x66x128xf32, #tpu.memory_space<vmem>>, vector<1x64x128xf32>,
    %c2 = arith.constant 2 : index
    %c0_22 = arith.constant 0 : index
    %c0_23 = arith.constant 0 : index
    %23 = vector.load %arg1[%c2, %c0_22, %c0_23] : memref<8x48x128xf32, #tpu.memory_space<vmem>>, vector<1x48x128xf32>
    %24 = vector.shape_cast %23 : vector<1x48x128xf32> to vector<48x128xf32>
    %cst_24 = arith.constant dense<0.000000e+00> : vector<64x128xf32>
    %25 = tpu.matmul %10, %24, %cst_24 {dimension_numbers = #tpu.dot_dimension_numbers<[1], [0], [0], [1], [0, 0, 1, 1], [], []>} : vector<64x48xf32>, vector<48x128xf32>, vector<64x128xf32> -> vector<64x128xf32>
    %c2_25 = arith.constant 2 : index
    %c1_26 = arith.constant 1 : index
    %c0_27 = arith.constant 0 : index
    %26 = vector.load %arg6[%c2_25, %c1_26, %c0_27] : memref<8x66x128xf32, #tpu.memory_space<vmem>>, vector<1x64x128xf32>
    %27 = vector.shape_cast %26 : vector<1x64x128xf32> to vector<64x128xf32>
    %28 = vector.shape_cast %25 : vector<64x128xf32> to vector<1x64x128xf32>
    tpu.vector_store %arg6[%c2_25, %c1_26, %c0_27], %28 {strides = array<i32>} : memref<8x66x128xf32, #tpu.memory_space<vmem>>, vector<1x64x128xf32>,
    %c3 = arith.constant 3 : index
    %c0_28 = arith.constant 0 : index
    %c0_29 = arith.constant 0 : index
    %29 = vector.load %arg1[%c3, %c0_28, %c0_29] : memref<8x48x128xf32, #tpu.memory_space<vmem>>, vector<1x48x128xf32>
    %30 = vector.shape_cast %29 : vector<1x48x128xf32> to vector<48x128xf32>
    %cst_30 = arith.constant dense<0.000000e+00> : vector<64x128xf32>
    %31 = tpu.matmul %10, %30, %cst_30 {dimension_numbers = #tpu.dot_dimension_numbers<[1], [0], [0], [1], [0, 0, 1, 1], [], []>} : vector<64x48xf32>, vector<48x128xf32>, vector<64x128xf32> -> vector<64x128xf32>
    %c3_31 = arith.constant 3 : index
    %c1_32 = arith.constant 1 : index
    %c0_33 = arith.constant 0 : index
    %32 = vector.load %arg6[%c3_31, %c1_32, %c0_33] : memref<8x66x128xf32, #tpu.memory_space<vmem>>, vector<1x64x128xf32>
    %33 = vector.shape_cast %32 : vector<1x64x128xf32> to vector<64x128xf32>
    %34 = vector.shape_cast %31 : vector<64x128xf32> to vector<1x64x128xf32>
    tpu.vector_store %arg6[%c3_31, %c1_32, %c0_33], %34 {strides = array<i32>} : memref<8x66x128xf32, #tpu.memory_space<vmem>>, vector<1x64x128xf32>,
    %c4 = arith.constant 4 : index
    %c0_34 = arith.constant 0 : index
    %c0_35 = arith.constant 0 : index
    %35 = vector.load %arg1[%c4, %c0_34, %c0_35] : memref<8x48x128xf32, #tpu.memory_space<vmem>>, vector<1x48x128xf32>
    %36 = vector.shape_cast %35 : vector<1x48x128xf32> to vector<48x128xf32>
    %cst_36 = arith.constant dense<0.000000e+00> : vector<64x128xf32>
    %37 = tpu.matmul %10, %36, %cst_36 {dimension_numbers = #tpu.dot_dimension_numbers<[1], [0], [0], [1], [0, 0, 1, 1], [], []>} : vector<64x48xf32>, vector<48x128xf32>, vector<64x128xf32> -> vector<64x128xf32>
    %c4_37 = arith.constant 4 : index
    %c1_38 = arith.constant 1 : index
    %c0_39 = arith.constant 0 : index
    %38 = vector.load %arg6[%c4_37, %c1_38, %c0_39] : memref<8x66x128xf32, #tpu.memory_space<vmem>>, vector<1x64x128xf32>
    %39 = vector.shape_cast %38 : vector<1x64x128xf32> to vector<64x128xf32>
    %40 = vector.shape_cast %37 : vector<64x128xf32> to vector<1x64x128xf32>
    tpu.vector_store %arg6[%c4_37, %c1_38, %c0_39], %40 {strides = array<i32>} : memref<8x66x128xf32, #tpu.memory_space<vmem>>, vector<1x64x128xf32>,
    %c5 = arith.constant 5 : index
    %c0_40 = arith.constant 0 : index
    %c0_41 = arith.constant 0 : index
    %41 = vector.load %arg1[%c5, %c0_40, %c0_41] : memref<8x48x128xf32, #tpu.memory_space<vmem>>, vector<1x48x128xf32>
    %42 = vector.shape_cast %41 : vector<1x48x128xf32> to vector<48x128xf32>
    %cst_42 = arith.constant dense<0.000000e+00> : vector<64x128xf32>
    %43 = tpu.matmul %10, %42, %cst_42 {dimension_numbers = #tpu.dot_dimension_numbers<[1], [0], [0], [1], [0, 0, 1, 1], [], []>} : vector<64x48xf32>, vector<48x128xf32>, vector<64x128xf32> -> vector<64x128xf32>
    %c5_43 = arith.constant 5 : index
    %c1_44 = arith.constant 1 : index
    %c0_45 = arith.constant 0 : index
    %44 = vector.load %arg6[%c5_43, %c1_44, %c0_45] : memref<8x66x128xf32, #tpu.memory_space<vmem>>, vector<1x64x128xf32>
    %45 = vector.shape_cast %44 : vector<1x64x128xf32> to vector<64x128xf32>
    %46 = vector.shape_cast %43 : vector<64x128xf32> to vector<1x64x128xf32>
    tpu.vector_store %arg6[%c5_43, %c1_44, %c0_45], %46 {strides = array<i32>} : memref<8x66x128xf32, #tpu.memory_space<vmem>>, vector<1x64x128xf32>,
    %c6 = arith.constant 6 : index
    %c0_46 = arith.constant 0 : index
    %c0_47 = arith.constant 0 : index
    %47 = vector.load %arg1[%c6, %c0_46, %c0_47] : memref<8x48x128xf32, #tpu.memory_space<vmem>>, vector<1x48x128xf32>
    %48 = vector.shape_cast %47 : vector<1x48x128xf32> to vector<48x128xf32>
    %cst_48 = arith.constant dense<0.000000e+00> : vector<64x128xf32>
    %49 = tpu.matmul %10, %48, %cst_48 {dimension_numbers = #tpu.dot_dimension_numbers<[1], [0], [0], [1], [0, 0, 1, 1], [], []>} : vector<64x48xf32>, vector<48x128xf32>, vector<64x128xf32> -> vector<64x128xf32>
    %c6_49 = arith.constant 6 : index
    %c1_50 = arith.constant 1 : index
    %c0_51 = arith.constant 0 : index
    %50 = vector.load %arg6[%c6_49, %c1_50, %c0_51] : memref<8x66x128xf32, #tpu.memory_space<vmem>>, vector<1x64x128xf32>
    %51 = vector.shape_cast %50 : vector<1x64x128xf32> to vector<64x128xf32>
    %52 = vector.shape_cast %49 : vector<64x128xf32> to vector<1x64x128xf32>
    tpu.vector_store %arg6[%c6_49, %c1_50, %c0_51], %52 {strides = array<i32>} : memref<8x66x128xf32, #tpu.memory_space<vmem>>, vector<1x64x128xf32>,
    %c7 = arith.constant 7 : index
    %c0_52 = arith.constant 0 : index
    %c0_53 = arith.constant 0 : index
    %53 = vector.load %arg1[%c7, %c0_52, %c0_53] : memref<8x48x128xf32, #tpu.memory_space<vmem>>, vector<1x48x128xf32>
    %54 = vector.shape_cast %53 : vector<1x48x128xf32> to vector<48x128xf32>
    %cst_54 = arith.constant dense<0.000000e+00> : vector<64x128xf32>
    %55 = tpu.matmul %10, %54, %cst_54 {dimension_numbers = #tpu.dot_dimension_numbers<[1], [0], [0], [1], [0, 0, 1, 1], [], []>} : vector<64x48xf32>, vector<48x128xf32>, vector<64x128xf32> -> vector<64x128xf32>
    %c7_55 = arith.constant 7 : index
    %c1_56 = arith.constant 1 : index
    %c0_57 = arith.constant 0 : index
    %56 = vector.load %arg6[%c7_55, %c1_56, %c0_57] : memref<8x66x128xf32, #tpu.memory_space<vmem>>, vector<1x64x128xf32>
    %57 = vector.shape_cast %56 : vector<1x64x128xf32> to vector<64x128xf32>
    %58 = vector.shape_cast %55 : vector<64x128xf32> to vector<1x64x128xf32>
    tpu.vector_store %arg6[%c7_55, %c1_56, %c0_57], %58 {strides = array<i32>} : memref<8x66x128xf32, #tpu.memory_space<vmem>>, vector<1x64x128xf32>,
    %c0_58 = arith.constant 0 : index
    %c0_59 = arith.constant 0 : index
    %c0_60 = arith.constant 0 : index
    %59 = tpu.strided_load %arg6[%c0_58, %c0_59, %c0_60] {strides = array<i32: 1, 2, 1>} : memref<8x66x128xf32, #tpu.memory_space<vmem>>, vector<8x32x128xf32>
    %60 = vector.shape_cast %59 : vector<8x32x128xf32> to vector<256x128xf32>
    %61 = arith.truncf %60 : vector<256x128xf32> to vector<256x128xbf16>
    %c0_61 = arith.constant 0 : index
    %c0_62 = arith.constant 0 : index
    %c0_63 = arith.constant 0 : index
    %62 = vector.load %arg3[%c0_61, %c0_62, %c0_63] : memref<30x128x128xbf16, #tpu.memory_space<vmem>>, vector<1x128x128xbf16>
    %63 = vector.shape_cast %62 : vector<1x128x128xbf16> to vector<128x128xbf16>
    %cst_64 = arith.constant dense<0.000000e+00> : vector<256x128xf32>
    %64 = tpu.matmul %61, %63, %cst_64 {dimension_numbers = #tpu.dot_dimension_numbers<[1], [0], [0], [1], [0, 0, 1, 1], [], []>} : vector<256x128xbf16>, vector<128x128xbf16>, vector<256x128xf32> -> vector<256x128xf32>
    %c0_65 = arith.constant 0 : index
    %c1_66 = arith.constant 1 : index
    %c0_67 = arith.constant 0 : index
    %65 = tpu.strided_load %arg6[%c0_65, %c1_66, %c0_67] {strides = array<i32: 1, 2, 1>} : memref<8x66x128xf32, #tpu.memory_space<vmem>>, vector<8x32x128xf32>
    %66 = vector.shape_cast %65 : vector<8x32x128xf32> to vector<256x128xf32>
    %67 = arith.truncf %66 : vector<256x128xf32> to vector<256x128xbf16>
    %c1_68 = arith.constant 1 : index
    %c0_69 = arith.constant 0 : index
    %c0_70 = arith.constant 0 : index
    %68 = vector.load %arg3[%c1_68, %c0_69, %c0_70] : memref<30x128x128xbf16, #tpu.memory_space<vmem>>, vector<1x128x128xbf16>
    %69 = vector.shape_cast %68 : vector<1x128x128xbf16> to vector<128x128xbf16>
    %cst_71 = arith.constant dense<0.000000e+00> : vector<256x128xf32>
    %70 = tpu.matmul %67, %69, %cst_71 {dimension_numbers = #tpu.dot_dimension_numbers<[1], [0], [0], [1], [0, 0, 1, 1], [], []>} : vector<256x128xbf16>, vector<128x128xbf16>, vector<256x128xf32> -> vector<256x128xf32>
    %71 = arith.addf %64, %70 : vector<256x128xf32>
    %c0_72 = arith.constant 0 : index
    %c2_73 = arith.constant 2 : index
    %c0_74 = arith.constant 0 : index
    %72 = tpu.strided_load %arg6[%c0_72, %c2_73, %c0_74] {strides = array<i32: 1, 2, 1>} : memref<8x66x128xf32, #tpu.memory_space<vmem>>, vector<8x32x128xf32>
    %73 = vector.shape_cast %72 : vector<8x32x128xf32> to vector<256x128xf32>
    %74 = arith.truncf %73 : vector<256x128xf32> to vector<256x128xbf16>
    %c2_75 = arith.constant 2 : index
    %c0_76 = arith.constant 0 : index
    %c0_77 = arith.constant 0 : index
    %75 = vector.load %arg3[%c2_75, %c0_76, %c0_77] : memref<30x128x128xbf16, #tpu.memory_space<vmem>>, vector<1x128x128xbf16>
    %76 = vector.shape_cast %75 : vector<1x128x128xbf16> to vector<128x128xbf16>
    %cst_78 = arith.constant dense<0.000000e+00> : vector<256x128xf32>
    %77 = tpu.matmul %74, %76, %cst_78 {dimension_numbers = #tpu.dot_dimension_numbers<[1], [0], [0], [1], [0, 0, 1, 1], [], []>} : vector<256x128xbf16>, vector<128x128xbf16>, vector<256x128xf32> -> vector<256x128xf32>
    %78 = arith.addf %71, %77 : vector<256x128xf32>
    %c0_79 = arith.constant 0 : index
    %c3_80 = arith.constant 3 : index
    %c0_81 = arith.constant 0 : index
    %79 = tpu.strided_load %arg6[%c0_79, %c3_80, %c0_81] {strides = array<i32: 1, 2, 1>} : memref<8x66x128xf32, #tpu.memory_space<vmem>>, vector<8x32x128xf32>
    %80 = vector.shape_cast %79 : vector<8x32x128xf32> to vector<256x128xf32>
    %81 = arith.truncf %80 : vector<256x128xf32> to vector<256x128xbf16>
    %c3_82 = arith.constant 3 : index
    %c0_83 = arith.constant 0 : index
    %c0_84 = arith.constant 0 : index
    %82 = vector.load %arg3[%c3_82, %c0_83, %c0_84] : memref<30x128x128xbf16, #tpu.memory_space<vmem>>, vector<1x128x128xbf16>
    %83 = vector.shape_cast %82 : vector<1x128x128xbf16> to vector<128x128xbf16>
    %cst_85 = arith.constant dense<0.000000e+00> : vector<256x128xf32>
    %84 = tpu.matmul %81, %83, %cst_85 {dimension_numbers = #tpu.dot_dimension_numbers<[1], [0], [0], [1], [0, 0, 1, 1], [], []>} : vector<256x128xbf16>, vector<128x128xbf16>, vector<256x128xf32> -> vector<256x128xf32>
    %85 = arith.addf %78, %84 : vector<256x128xf32>
    %c0_86 = arith.constant 0 : index
    %c0_87 = arith.constant 0 : index
    %c0_88 = arith.constant 0 : index
    %86 = vector.load %arg4[%c0_86, %c0_87, %c0_88] : memref<8x1x128xf32, #tpu.memory_space<vmem>>, vector<1x1x128xf32>
    %87 = vector.shape_cast %86 : vector<1x1x128xf32> to vector<1x128xf32>
    %88 = vector.broadcast %87 : vector<1x128xf32> to vector<256x128xf32>
    %89 = arith.addf %85, %88 : vector<256x128xf32>
    %cst_89 = arith.constant 0.000000e+00 : f32
    %90 = vector.broadcast %cst_89 : f32 to vector<256x128xf32>
    %91 = arith.cmpf oge, %89, %90 : vector<256x128xf32>
    %cst_90 = arith.constant 2.000000e-01 : f32
    %92 = vector.broadcast %cst_90 : f32 to vector<256x128xf32>
    %93 = arith.mulf %92, %89 : vector<256x128xf32>
    %94 = arith.select %91, %89, %93 : vector<256x128xi1>, vector<256x128xf32>
    %95 = vector.shape_cast %94 : vector<256x128xf32> to vector<8x32x128xf32>
    %c0_91 = arith.constant 0 : index
    %c1_92 = arith.constant 1 : index
    %c0_93 = arith.constant 0 : index
    %96 = vector.load %arg7[%c0_91, %c1_92, %c0_93] : memref<8x66x128xf32, #tpu.memory_space<vmem>>, vector<8x32x128xf32>
    tpu.vector_store %arg7[%c0_91, %c1_92, %c0_93], %95 {strides = array<i32>} : memref<8x66x128xf32, #tpu.memory_space<vmem>>, vector<8x32x128xf32>,
    %c0_94 = arith.constant 0 : index
    %c33 = arith.constant 33 : index
    %c0_95 = arith.constant 0 : index
    %97 = vector.load %arg7[%c0_94, %c33, %c0_95] : memref<8x66x128xf32, #tpu.memory_space<vmem>>, vector<8x1x128xf32>
    %98 = vector.shape_cast %97 : vector<8x1x128xf32> to vector<8x128xf32>
    %99 = vector.shape_cast %0 : vector<8x128xf32> to vector<8x1x128xf32>
    tpu.vector_store %arg7[%c0_94, %c33, %c0_95], %99 {strides = array<i32>} : memref<8x66x128xf32, #tpu.memory_space<vmem>>, vector<8x1x128xf32>,
    %c0_96 = arith.constant 0 : index
    %c0_97 = arith.constant 0 : index
    %c0_98 = arith.constant 0 : index
    %100 = vector.load %arg7[%c0_96, %c0_97, %c0_98] : memref<8x66x128xf32, #tpu.memory_space<vmem>>, vector<8x34x128xf32>
    %101 = arith.truncf %100 : vector<8x34x128xf32> to vector<8x34x128xbf16>
    %102 = vector.extract_strided_slice %101 {offsets = [0, 0, 0], sizes = [8, 32, 128], strides = [1, 1, 1]} : vector<8x34x128xbf16> to vector<8x32x128xbf16>
    %103 = vector.shape_cast %102 : vector<8x32x128xbf16> to vector<256x128xbf16>
    %c4_99 = arith.constant 4 : index
    %c0_100 = arith.constant 0 : index
    %c0_101 = arith.constant 0 : index
    %104 = vector.load %arg3[%c4_99, %c0_100, %c0_101] : memref<30x128x128xbf16, #tpu.memory_space<vmem>>, vector<1x128x128xbf16>
    %105 = vector.shape_cast %104 : vector<1x128x128xbf16> to vector<128x128xbf16>
    %cst_102 = arith.constant dense<0.000000e+00> : vector<256x128xf32>
    %106 = tpu.matmul %103, %105, %cst_102 {dimension_numbers = #tpu.dot_dimension_numbers<[1], [0], [0], [1], [0, 0, 1, 1], [], []>} : vector<256x128xbf16>, vector<128x128xbf16>, vector<256x128xf32> -> vector<256x128xf32>
    %107 = vector.extract_strided_slice %101 {offsets = [0, 1, 0], sizes = [8, 32, 128], strides = [1, 1, 1]} : vector<8x34x128xbf16> to vector<8x32x128xbf16>
    %108 = vector.shape_cast %107 : vector<8x32x128xbf16> to vector<256x128xbf16>
    %c5_103 = arith.constant 5 : index
    %c0_104 = arith.constant 0 : index
    %c0_105 = arith.constant 0 : index
    %109 = vector.load %arg3[%c5_103, %c0_104, %c0_105] : memref<30x128x128xbf16, #tpu.memory_space<vmem>>, vector<1x128x128xbf16>
    %110 = vector.shape_cast %109 : vector<1x128x128xbf16> to vector<128x128xbf16>
    %cst_106 = arith.constant dense<0.000000e+00> : vector<256x128xf32>
    %111 = tpu.matmul %108, %110, %cst_106 {dimension_numbers = #tpu.dot_dimension_numbers<[1], [0], [0], [1], [0, 0, 1, 1], [], []>} : vector<256x128xbf16>, vector<128x128xbf16>, vector<256x128xf32> -> vector<256x128xf32>
    %112 = arith.addf %106, %111 : vector<256x128xf32>
    %113 = vector.extract_strided_slice %101 {offsets = [0, 2, 0], sizes = [8, 32, 128], strides = [1, 1, 1]} : vector<8x34x128xbf16> to vector<8x32x128xbf16>
    %114 = vector.shape_cast %113 : vector<8x32x128xbf16> to vector<256x128xbf16>
    %c6_107 = arith.constant 6 : index
    %c0_108 = arith.constant 0 : index
    %c0_109 = arith.constant 0 : index
    %115 = vector.load %arg3[%c6_107, %c0_108, %c0_109] : memref<30x128x128xbf16, #tpu.memory_space<vmem>>, vector<1x128x128xbf16>
    %116 = vector.shape_cast %115 : vector<1x128x128xbf16> to vector<128x128xbf16>
    %cst_110 = arith.constant dense<0.000000e+00> : vector<256x128xf32>
    %117 = tpu.matmul %114, %116, %cst_110 {dimension_numbers = #tpu.dot_dimension_numbers<[1], [0], [0], [1], [0, 0, 1, 1], [], []>} : vector<256x128xbf16>, vector<128x128xbf16>, vector<256x128xf32> -> vector<256x128xf32>
    %118 = arith.addf %112, %117 : vector<256x128xf32>
    %c1_111 = arith.constant 1 : index
    %c0_112 = arith.constant 0 : index
    %c0_113 = arith.constant 0 : index
    %119 = vector.load %arg4[%c1_111, %c0_112, %c0_113] : memref<8x1x128xf32, #tpu.memory_space<vmem>>, vector<1x1x128xf32>
    %120 = vector.shape_cast %119 : vector<1x1x128xf32> to vector<1x128xf32>
    %121 = vector.broadcast %120 : vector<1x128xf32> to vector<256x128xf32>
    %122 = arith.addf %118, %121 : vector<256x128xf32>
    %cst_114 = arith.constant 0.000000e+00 : f32
    %123 = vector.broadcast %cst_114 : f32 to vector<256x128xf32>
    %124 = arith.cmpf oge, %122, %123 : vector<256x128xf32>
    %cst_115 = arith.constant 2.000000e-01 : f32
    %125 = vector.broadcast %cst_115 : f32 to vector<256x128xf32>
    %126 = arith.mulf %125, %122 : vector<256x128xf32>
    %127 = arith.select %124, %122, %126 : vector<256x128xi1>, vector<256x128xf32>
    %128 = vector.shape_cast %127 : vector<256x128xf32> to vector<8x32x128xf32>
    %c0_116 = arith.constant 0 : index
    %c1_117 = arith.constant 1 : index
    %c0_118 = arith.constant 0 : index
    %129 = vector.load %arg6[%c0_116, %c1_117, %c0_118] : memref<8x66x128xf32, #tpu.memory_space<vmem>>, vector<8x32x128xf32>
    tpu.vector_store %arg6[%c0_116, %c1_117, %c0_118], %128 {strides = array<i32>} : memref<8x66x128xf32, #tpu.memory_space<vmem>>, vector<8x32x128xf32>,
    %c0_119 = arith.constant 0 : index
    %c33_120 = arith.constant 33 : index
    %c0_121 = arith.constant 0 : index
    %130 = vector.load %arg6[%c0_119, %c33_120, %c0_121] : memref<8x66x128xf32, #tpu.memory_space<vmem>>, vector<8x1x128xf32>
    %131 = vector.shape_cast %130 : vector<8x1x128xf32> to vector<8x128xf32>
    %132 = vector.shape_cast %0 : vector<8x128xf32> to vector<8x1x128xf32>
    tpu.vector_store %arg6[%c0_119, %c33_120, %c0_121], %132 {strides = array<i32>} : memref<8x66x128xf32, #tpu.memory_space<vmem>>, vector<8x1x128xf32>,
    %c0_122 = arith.constant 0 : index
    %c0_123 = arith.constant 0 : index
    %c0_124 = arith.constant 0 : index
    %133 = tpu.strided_load %arg6[%c0_122, %c0_123, %c0_124] {strides = array<i32: 1, 2, 1>} : memref<8x66x128xf32, #tpu.memory_space<vmem>>, vector<8x16x128xf32>
    %134 = vector.shape_cast %133 : vector<8x16x128xf32> to vector<128x128xf32>
    %135 = arith.truncf %134 : vector<128x128xf32> to vector<128x128xbf16>
    %c7_125 = arith.constant 7 : index
    %c0_126 = arith.constant 0 : index
    %c0_127 = arith.constant 0 : index
    %136 = vector.load %arg3[%c7_125, %c0_126, %c0_127] : memref<30x128x128xbf16, #tpu.memory_space<vmem>>, vector<1x128x128xbf16>
    %137 = vector.shape_cast %136 : vector<1x128x128xbf16> to vector<128x128xbf16>
    %cst_128 = arith.constant dense<0.000000e+00> : vector<128x128xf32>
    %138 = tpu.matmul %135, %137, %cst_128 {dimension_numbers = #tpu.dot_dimension_numbers<[1], [0], [0], [1], [0, 0, 1, 1], [], []>} : vector<128x128xbf16>, vector<128x128xbf16>, vector<128x128xf32> -> vector<128x128xf32>
    %c0_129 = arith.constant 0 : index
    %c1_130 = arith.constant 1 : index
    %c0_131 = arith.constant 0 : index
    %139 = tpu.strided_load %arg6[%c0_129, %c1_130, %c0_131] {strides = array<i32: 1, 2, 1>} : memref<8x66x128xf32, #tpu.memory_space<vmem>>, vector<8x16x128xf32>
    %140 = vector.shape_cast %139 : vector<8x16x128xf32> to vector<128x128xf32>
    %141 = arith.truncf %140 : vector<128x128xf32> to vector<128x128xbf16>
    %c8 = arith.constant 8 : index
    %c0_132 = arith.constant 0 : index
    %c0_133 = arith.constant 0 : index
    %142 = vector.load %arg3[%c8, %c0_132, %c0_133] : memref<30x128x128xbf16, #tpu.memory_space<vmem>>, vector<1x128x128xbf16>
    %143 = vector.shape_cast %142 : vector<1x128x128xbf16> to vector<128x128xbf16>
    %cst_134 = arith.constant dense<0.000000e+00> : vector<128x128xf32>
    %144 = tpu.matmul %141, %143, %cst_134 {dimension_numbers = #tpu.dot_dimension_numbers<[1], [0], [0], [1], [0, 0, 1, 1], [], []>} : vector<128x128xbf16>, vector<128x128xbf16>, vector<128x128xf32> -> vector<128x128xf32>
    %145 = arith.addf %138, %144 : vector<128x128xf32>
    %c0_135 = arith.constant 0 : index
    %c2_136 = arith.constant 2 : index
    %c0_137 = arith.constant 0 : index
    %146 = tpu.strided_load %arg6[%c0_135, %c2_136, %c0_137] {strides = array<i32: 1, 2, 1>} : memref<8x66x128xf32, #tpu.memory_space<vmem>>, vector<8x16x128xf32>
    %147 = vector.shape_cast %146 : vector<8x16x128xf32> to vector<128x128xf32>
    %148 = arith.truncf %147 : vector<128x128xf32> to vector<128x128xbf16>
    %c9 = arith.constant 9 : index
    %c0_138 = arith.constant 0 : index
    %c0_139 = arith.constant 0 : index
    %149 = vector.load %arg3[%c9, %c0_138, %c0_139] : memref<30x128x128xbf16, #tpu.memory_space<vmem>>, vector<1x128x128xbf16>
    %150 = vector.shape_cast %149 : vector<1x128x128xbf16> to vector<128x128xbf16>
    %cst_140 = arith.constant dense<0.000000e+00> : vector<128x128xf32>
    %151 = tpu.matmul %148, %150, %cst_140 {dimension_numbers = #tpu.dot_dimension_numbers<[1], [0], [0], [1], [0, 0, 1, 1], [], []>} : vector<128x128xbf16>, vector<128x128xbf16>, vector<128x128xf32> -> vector<128x128xf32>
    %152 = arith.addf %145, %151 : vector<128x128xf32>
    %c0_141 = arith.constant 0 : index
    %c3_142 = arith.constant 3 : index
    %c0_143 = arith.constant 0 : index
    %153 = tpu.strided_load %arg6[%c0_141, %c3_142, %c0_143] {strides = array<i32: 1, 2, 1>} : memref<8x66x128xf32, #tpu.memory_space<vmem>>, vector<8x16x128xf32>
    %154 = vector.shape_cast %153 : vector<8x16x128xf32> to vector<128x128xf32>
    %155 = arith.truncf %154 : vector<128x128xf32> to vector<128x128xbf16>
    %c10 = arith.constant 10 : index
    %c0_144 = arith.constant 0 : index
    %c0_145 = arith.constant 0 : index
    %156 = vector.load %arg3[%c10, %c0_144, %c0_145] : memref<30x128x128xbf16, #tpu.memory_space<vmem>>, vector<1x128x128xbf16>
    %157 = vector.shape_cast %156 : vector<1x128x128xbf16> to vector<128x128xbf16>
    %cst_146 = arith.constant dense<0.000000e+00> : vector<128x128xf32>
    %158 = tpu.matmul %155, %157, %cst_146 {dimension_numbers = #tpu.dot_dimension_numbers<[1], [0], [0], [1], [0, 0, 1, 1], [], []>} : vector<128x128xbf16>, vector<128x128xbf16>, vector<128x128xf32> -> vector<128x128xf32>
    %159 = arith.addf %152, %158 : vector<128x128xf32>
    %c2_147 = arith.constant 2 : index
    %c0_148 = arith.constant 0 : index
    %c0_149 = arith.constant 0 : index
    %160 = vector.load %arg4[%c2_147, %c0_148, %c0_149] : memref<8x1x128xf32, #tpu.memory_space<vmem>>, vector<1x1x128xf32>
    %161 = vector.shape_cast %160 : vector<1x1x128xf32> to vector<1x128xf32>
    %162 = vector.broadcast %161 : vector<1x128xf32> to vector<128x128xf32>
    %163 = arith.addf %159, %162 : vector<128x128xf32>
    %cst_150 = arith.constant 0.000000e+00 : f32
    %164 = vector.broadcast %cst_150 : f32 to vector<128x128xf32>
    %165 = arith.cmpf oge, %163, %164 : vector<128x128xf32>
    %cst_151 = arith.constant 2.000000e-01 : f32
    %166 = vector.broadcast %cst_151 : f32 to vector<128x128xf32>
    %167 = arith.mulf %166, %163 : vector<128x128xf32>
    %168 = arith.select %165, %163, %167 : vector<128x128xi1>, vector<128x128xf32>
    %169 = vector.shape_cast %168 : vector<128x128xf32> to vector<8x16x128xf32>
    %c0_152 = arith.constant 0 : index
    %c1_153 = arith.constant 1 : index
    %c0_154 = arith.constant 0 : index
    %170 = vector.load %arg7[%c0_152, %c1_153, %c0_154] : memref<8x66x128xf32, #tpu.memory_space<vmem>>, vector<8x16x128xf32>
    tpu.vector_store %arg7[%c0_152, %c1_153, %c0_154], %169 {strides = array<i32>} : memref<8x66x128xf32, #tpu.memory_space<vmem>>, vector<8x16x128xf32>,
    %c0_155 = arith.constant 0 : index
    %c17 = arith.constant 17 : index
    %c0_156 = arith.constant 0 : index
    %171 = vector.load %arg7[%c0_155, %c17, %c0_156] : memref<8x66x128xf32, #tpu.memory_space<vmem>>, vector<8x1x128xf32>
    %172 = vector.shape_cast %171 : vector<8x1x128xf32> to vector<8x128xf32>
    %173 = vector.shape_cast %0 : vector<8x128xf32> to vector<8x1x128xf32>
    tpu.vector_store %arg7[%c0_155, %c17, %c0_156], %173 {strides = array<i32>} : memref<8x66x128xf32, #tpu.memory_space<vmem>>, vector<8x1x128xf32>,
    %c0_157 = arith.constant 0 : index
    %c0_158 = arith.constant 0 : index
    %c0_159 = arith.constant 0 : index
    %174 = vector.load %arg7[%c0_157, %c0_158, %c0_159] : memref<8x66x128xf32, #tpu.memory_space<vmem>>, vector<8x18x128xf32>
    %175 = arith.truncf %174 : vector<8x18x128xf32> to vector<8x18x128xbf16>
    %176 = vector.extract_strided_slice %175 {offsets = [0, 0, 0], sizes = [8, 16, 128], strides = [1, 1, 1]} : vector<8x18x128xbf16> to vector<8x16x128xbf16>
    %177 = vector.shape_cast %176 : vector<8x16x128xbf16> to vector<128x128xbf16>
    %c11 = arith.constant 11 : index
    %c0_160 = arith.constant 0 : index
    %c0_161 = arith.constant 0 : index
    %178 = vector.load %arg3[%c11, %c0_160, %c0_161] : memref<30x128x128xbf16, #tpu.memory_space<vmem>>, vector<1x128x128xbf16>
    %179 = vector.shape_cast %178 : vector<1x128x128xbf16> to vector<128x128xbf16>
    %cst_162 = arith.constant dense<0.000000e+00> : vector<128x128xf32>
    %180 = tpu.matmul %177, %179, %cst_162 {dimension_numbers = #tpu.dot_dimension_numbers<[1], [0], [0], [1], [0, 0, 1, 1], [], []>} : vector<128x128xbf16>, vector<128x128xbf16>, vector<128x128xf32> -> vector<128x128xf32>
    %181 = vector.extract_strided_slice %175 {offsets = [0, 1, 0], sizes = [8, 16, 128], strides = [1, 1, 1]} : vector<8x18x128xbf16> to vector<8x16x128xbf16>
    %182 = vector.shape_cast %181 : vector<8x16x128xbf16> to vector<128x128xbf16>
    %c12 = arith.constant 12 : index
    %c0_163 = arith.constant 0 : index
    %c0_164 = arith.constant 0 : index
    %183 = vector.load %arg3[%c12, %c0_163, %c0_164] : memref<30x128x128xbf16, #tpu.memory_space<vmem>>, vector<1x128x128xbf16>
    %184 = vector.shape_cast %183 : vector<1x128x128xbf16> to vector<128x128xbf16>
    %cst_165 = arith.constant dense<0.000000e+00> : vector<128x128xf32>
    %185 = tpu.matmul %182, %184, %cst_165 {dimension_numbers = #tpu.dot_dimension_numbers<[1], [0], [0], [1], [0, 0, 1, 1], [], []>} : vector<128x128xbf16>, vector<128x128xbf16>, vector<128x128xf32> -> vector<128x128xf32>
    %186 = arith.addf %180, %185 : vector<128x128xf32>
    %187 = vector.extract_strided_slice %175 {offsets = [0, 2, 0], sizes = [8, 16, 128], strides = [1, 1, 1]} : vector<8x18x128xbf16> to vector<8x16x128xbf16>
    %188 = vector.shape_cast %187 : vector<8x16x128xbf16> to vector<128x128xbf16>
    %c13 = arith.constant 13 : index
    %c0_166 = arith.constant 0 : index
    %c0_167 = arith.constant 0 : index
    %189 = vector.load %arg3[%c13, %c0_166, %c0_167] : memref<30x128x128xbf16, #tpu.memory_space<vmem>>, vector<1x128x128xbf16>
    %190 = vector.shape_cast %189 : vector<1x128x128xbf16> to vector<128x128xbf16>
    %cst_168 = arith.constant dense<0.000000e+00> : vector<128x128xf32>
    %191 = tpu.matmul %188, %190, %cst_168 {dimension_numbers = #tpu.dot_dimension_numbers<[1], [0], [0], [1], [0, 0, 1, 1], [], []>} : vector<128x128xbf16>, vector<128x128xbf16>, vector<128x128xf32> -> vector<128x128xf32>
    %192 = arith.addf %186, %191 : vector<128x128xf32>
    %c3_169 = arith.constant 3 : index
    %c0_170 = arith.constant 0 : index
    %c0_171 = arith.constant 0 : index
    %193 = vector.load %arg4[%c3_169, %c0_170, %c0_171] : memref<8x1x128xf32, #tpu.memory_space<vmem>>, vector<1x1x128xf32>
    %194 = vector.shape_cast %193 : vector<1x1x128xf32> to vector<1x128xf32>
    %195 = vector.broadcast %194 : vector<1x128xf32> to vector<128x128xf32>
    %196 = arith.addf %192, %195 : vector<128x128xf32>
    %cst_172 = arith.constant 0.000000e+00 : f32
    %197 = vector.broadcast %cst_172 : f32 to vector<128x128xf32>
    %198 = arith.cmpf oge, %196, %197 : vector<128x128xf32>
    %cst_173 = arith.constant 2.000000e-01 : f32
    %199 = vector.broadcast %cst_173 : f32 to vector<128x128xf32>
    %200 = arith.mulf %199, %196 : vector<128x128xf32>
    %201 = arith.select %198, %196, %200 : vector<128x128xi1>, vector<128x128xf32>
    %202 = vector.shape_cast %201 : vector<128x128xf32> to vector<8x16x128xf32>
    %c0_174 = arith.constant 0 : index
    %c1_175 = arith.constant 1 : index
    %c0_176 = arith.constant 0 : index
    %203 = vector.load %arg6[%c0_174, %c1_175, %c0_176] : memref<8x66x128xf32, #tpu.memory_space<vmem>>, vector<8x16x128xf32>
    tpu.vector_store %arg6[%c0_174, %c1_175, %c0_176], %202 {strides = array<i32>} : memref<8x66x128xf32, #tpu.memory_space<vmem>>, vector<8x16x128xf32>,
    %c0_177 = arith.constant 0 : index
    %c17_178 = arith.constant 17 : index
    %c0_179 = arith.constant 0 : index
    %204 = vector.load %arg6[%c0_177, %c17_178, %c0_179] : memref<8x66x128xf32, #tpu.memory_space<vmem>>, vector<8x1x128xf32>
    %205 = vector.shape_cast %204 : vector<8x1x128xf32> to vector<8x128xf32>
    %206 = vector.shape_cast %0 : vector<8x128xf32> to vector<8x1x128xf32>
    tpu.vector_store %arg6[%c0_177, %c17_178, %c0_179], %206 {strides = array<i32>} : memref<8x66x128xf32, #tpu.memory_space<vmem>>, vector<8x1x128xf32>,
    %c0_180 = arith.constant 0 : index
    %c0_181 = arith.constant 0 : index
    %c0_182 = arith.constant 0 : index
    %207 = tpu.strided_load %arg6[%c0_180, %c0_181, %c0_182] {strides = array<i32: 1, 2, 1>} : memref<8x66x128xf32, #tpu.memory_space<vmem>>, vector<8x8x128xf32>
    %208 = vector.shape_cast %207 : vector<8x8x128xf32> to vector<64x128xf32>
    %209 = arith.truncf %208 : vector<64x128xf32> to vector<64x128xbf16>
    %c14 = arith.constant 14 : index
    %c0_183 = arith.constant 0 : index
    %c0_184 = arith.constant 0 : index
    %210 = vector.load %arg3[%c14, %c0_183, %c0_184] : memref<30x128x128xbf16, #tpu.memory_space<vmem>>, vector<1x128x128xbf16>
    %211 = vector.shape_cast %210 : vector<1x128x128xbf16> to vector<128x128xbf16>
    %cst_185 = arith.constant dense<0.000000e+00> : vector<64x128xf32>
    %212 = tpu.matmul %209, %211, %cst_185 {dimension_numbers = #tpu.dot_dimension_numbers<[1], [0], [0], [1], [0, 0, 1, 1], [], []>} : vector<64x128xbf16>, vector<128x128xbf16>, vector<64x128xf32> -> vector<64x128xf32>
    %c0_186 = arith.constant 0 : index
    %c1_187 = arith.constant 1 : index
    %c0_188 = arith.constant 0 : index
    %213 = tpu.strided_load %arg6[%c0_186, %c1_187, %c0_188] {strides = array<i32: 1, 2, 1>} : memref<8x66x128xf32, #tpu.memory_space<vmem>>, vector<8x8x128xf32>
    %214 = vector.shape_cast %213 : vector<8x8x128xf32> to vector<64x128xf32>
    %215 = arith.truncf %214 : vector<64x128xf32> to vector<64x128xbf16>
    %c15 = arith.constant 15 : index
    %c0_189 = arith.constant 0 : index
    %c0_190 = arith.constant 0 : index
    %216 = vector.load %arg3[%c15, %c0_189, %c0_190] : memref<30x128x128xbf16, #tpu.memory_space<vmem>>, vector<1x128x128xbf16>
    %217 = vector.shape_cast %216 : vector<1x128x128xbf16> to vector<128x128xbf16>
    %cst_191 = arith.constant dense<0.000000e+00> : vector<64x128xf32>
    %218 = tpu.matmul %215, %217, %cst_191 {dimension_numbers = #tpu.dot_dimension_numbers<[1], [0], [0], [1], [0, 0, 1, 1], [], []>} : vector<64x128xbf16>, vector<128x128xbf16>, vector<64x128xf32> -> vector<64x128xf32>
    %219 = arith.addf %212, %218 : vector<64x128xf32>
    %c0_192 = arith.constant 0 : index
    %c2_193 = arith.constant 2 : index
    %c0_194 = arith.constant 0 : index
    %220 = tpu.strided_load %arg6[%c0_192, %c2_193, %c0_194] {strides = array<i32: 1, 2, 1>} : memref<8x66x128xf32, #tpu.memory_space<vmem>>, vector<8x8x128xf32>
    %221 = vector.shape_cast %220 : vector<8x8x128xf32> to vector<64x128xf32>
    %222 = arith.truncf %221 : vector<64x128xf32> to vector<64x128xbf16>
    %c16 = arith.constant 16 : index
    %c0_195 = arith.constant 0 : index
    %c0_196 = arith.constant 0 : index
    %223 = vector.load %arg3[%c16, %c0_195, %c0_196] : memref<30x128x128xbf16, #tpu.memory_space<vmem>>, vector<1x128x128xbf16>
    %224 = vector.shape_cast %223 : vector<1x128x128xbf16> to vector<128x128xbf16>
    %cst_197 = arith.constant dense<0.000000e+00> : vector<64x128xf32>
    %225 = tpu.matmul %222, %224, %cst_197 {dimension_numbers = #tpu.dot_dimension_numbers<[1], [0], [0], [1], [0, 0, 1, 1], [], []>} : vector<64x128xbf16>, vector<128x128xbf16>, vector<64x128xf32> -> vector<64x128xf32>
    %226 = arith.addf %219, %225 : vector<64x128xf32>
    %c0_198 = arith.constant 0 : index
    %c3_199 = arith.constant 3 : index
    %c0_200 = arith.constant 0 : index
    %227 = tpu.strided_load %arg6[%c0_198, %c3_199, %c0_200] {strides = array<i32: 1, 2, 1>} : memref<8x66x128xf32, #tpu.memory_space<vmem>>, vector<8x8x128xf32>
    %228 = vector.shape_cast %227 : vector<8x8x128xf32> to vector<64x128xf32>
    %229 = arith.truncf %228 : vector<64x128xf32> to vector<64x128xbf16>
    %c17_201 = arith.constant 17 : index
    %c0_202 = arith.constant 0 : index
    %c0_203 = arith.constant 0 : index
    %230 = vector.load %arg3[%c17_201, %c0_202, %c0_203] : memref<30x128x128xbf16, #tpu.memory_space<vmem>>, vector<1x128x128xbf16>
    %231 = vector.shape_cast %230 : vector<1x128x128xbf16> to vector<128x128xbf16>
    %cst_204 = arith.constant dense<0.000000e+00> : vector<64x128xf32>
    %232 = tpu.matmul %229, %231, %cst_204 {dimension_numbers = #tpu.dot_dimension_numbers<[1], [0], [0], [1], [0, 0, 1, 1], [], []>} : vector<64x128xbf16>, vector<128x128xbf16>, vector<64x128xf32> -> vector<64x128xf32>
    %233 = arith.addf %226, %232 : vector<64x128xf32>
    %c4_205 = arith.constant 4 : index
    %c0_206 = arith.constant 0 : index
    %c0_207 = arith.constant 0 : index
    %234 = vector.load %arg4[%c4_205, %c0_206, %c0_207] : memref<8x1x128xf32, #tpu.memory_space<vmem>>, vector<1x1x128xf32>
    %235 = vector.shape_cast %234 : vector<1x1x128xf32> to vector<1x128xf32>
    %236 = vector.broadcast %235 : vector<1x128xf32> to vector<64x128xf32>
    %237 = arith.addf %233, %236 : vector<64x128xf32>
    %cst_208 = arith.constant 0.000000e+00 : f32
    %238 = vector.broadcast %cst_208 : f32 to vector<64x128xf32>
    %239 = arith.cmpf oge, %237, %238 : vector<64x128xf32>
    %cst_209 = arith.constant 2.000000e-01 : f32
    %240 = vector.broadcast %cst_209 : f32 to vector<64x128xf32>
    %241 = arith.mulf %240, %237 : vector<64x128xf32>
    %242 = arith.select %239, %237, %241 : vector<64x128xi1>, vector<64x128xf32>
    %243 = vector.shape_cast %242 : vector<64x128xf32> to vector<8x8x128xf32>
    %c0_210 = arith.constant 0 : index
    %c1_211 = arith.constant 1 : index
    %c0_212 = arith.constant 0 : index
    %244 = vector.load %arg7[%c0_210, %c1_211, %c0_212] : memref<8x66x128xf32, #tpu.memory_space<vmem>>, vector<8x8x128xf32>
    tpu.vector_store %arg7[%c0_210, %c1_211, %c0_212], %243 {strides = array<i32>} : memref<8x66x128xf32, #tpu.memory_space<vmem>>, vector<8x8x128xf32>,
    %c0_213 = arith.constant 0 : index
    %c9_214 = arith.constant 9 : index
    %c0_215 = arith.constant 0 : index
    %245 = vector.load %arg7[%c0_213, %c9_214, %c0_215] : memref<8x66x128xf32, #tpu.memory_space<vmem>>, vector<8x1x128xf32>
    %246 = vector.shape_cast %245 : vector<8x1x128xf32> to vector<8x128xf32>
    %247 = vector.shape_cast %0 : vector<8x128xf32> to vector<8x1x128xf32>
    tpu.vector_store %arg7[%c0_213, %c9_214, %c0_215], %247 {strides = array<i32>} : memref<8x66x128xf32, #tpu.memory_space<vmem>>, vector<8x1x128xf32>,
    %c0_216 = arith.constant 0 : index
    %c0_217 = arith.constant 0 : index
    %c0_218 = arith.constant 0 : index
    %248 = vector.load %arg7[%c0_216, %c0_217, %c0_218] : memref<8x66x128xf32, #tpu.memory_space<vmem>>, vector<8x10x128xf32>
    %249 = arith.truncf %248 : vector<8x10x128xf32> to vector<8x10x128xbf16>
    %250 = vector.extract_strided_slice %249 {offsets = [0, 0, 0], sizes = [8, 8, 128], strides = [1, 1, 1]} : vector<8x10x128xbf16> to vector<8x8x128xbf16>
    %251 = vector.shape_cast %250 : vector<8x8x128xbf16> to vector<64x128xbf16>
    %c18 = arith.constant 18 : index
    %c0_219 = arith.constant 0 : index
    %c0_220 = arith.constant 0 : index
    %252 = vector.load %arg3[%c18, %c0_219, %c0_220] : memref<30x128x128xbf16, #tpu.memory_space<vmem>>, vector<1x128x128xbf16>
    %253 = vector.shape_cast %252 : vector<1x128x128xbf16> to vector<128x128xbf16>
    %cst_221 = arith.constant dense<0.000000e+00> : vector<64x128xf32>
    %254 = tpu.matmul %251, %253, %cst_221 {dimension_numbers = #tpu.dot_dimension_numbers<[1], [0], [0], [1], [0, 0, 1, 1], [], []>} : vector<64x128xbf16>, vector<128x128xbf16>, vector<64x128xf32> -> vector<64x128xf32>
    %255 = vector.extract_strided_slice %249 {offsets = [0, 1, 0], sizes = [8, 8, 128], strides = [1, 1, 1]} : vector<8x10x128xbf16> to vector<8x8x128xbf16>
    %256 = vector.shape_cast %255 : vector<8x8x128xbf16> to vector<64x128xbf16>
    %c19 = arith.constant 19 : index
    %c0_222 = arith.constant 0 : index
    %c0_223 = arith.constant 0 : index
    %257 = vector.load %arg3[%c19, %c0_222, %c0_223] : memref<30x128x128xbf16, #tpu.memory_space<vmem>>, vector<1x128x128xbf16>
    %258 = vector.shape_cast %257 : vector<1x128x128xbf16> to vector<128x128xbf16>
    %cst_224 = arith.constant dense<0.000000e+00> : vector<64x128xf32>
    %259 = tpu.matmul %256, %258, %cst_224 {dimension_numbers = #tpu.dot_dimension_numbers<[1], [0], [0], [1], [0, 0, 1, 1], [], []>} : vector<64x128xbf16>, vector<128x128xbf16>, vector<64x128xf32> -> vector<64x128xf32>
    %260 = arith.addf %254, %259 : vector<64x128xf32>
    %261 = vector.extract_strided_slice %249 {offsets = [0, 2, 0], sizes = [8, 8, 128], strides = [1, 1, 1]} : vector<8x10x128xbf16> to vector<8x8x128xbf16>
    %262 = vector.shape_cast %261 : vector<8x8x128xbf16> to vector<64x128xbf16>
    %c20 = arith.constant 20 : index
    %c0_225 = arith.constant 0 : index
    %c0_226 = arith.constant 0 : index
    %263 = vector.load %arg3[%c20, %c0_225, %c0_226] : memref<30x128x128xbf16, #tpu.memory_space<vmem>>, vector<1x128x128xbf16>
    %264 = vector.shape_cast %263 : vector<1x128x128xbf16> to vector<128x128xbf16>
    %cst_227 = arith.constant dense<0.000000e+00> : vector<64x128xf32>
    %265 = tpu.matmul %262, %264, %cst_227 {dimension_numbers = #tpu.dot_dimension_numbers<[1], [0], [0], [1], [0, 0, 1, 1], [], []>} : vector<64x128xbf16>, vector<128x128xbf16>, vector<64x128xf32> -> vector<64x128xf32>
    %266 = arith.addf %260, %265 : vector<64x128xf32>
    %c5_228 = arith.constant 5 : index
    %c0_229 = arith.constant 0 : index
    %c0_230 = arith.constant 0 : index
    %267 = vector.load %arg4[%c5_228, %c0_229, %c0_230] : memref<8x1x128xf32, #tpu.memory_space<vmem>>, vector<1x1x128xf32>
    %268 = vector.shape_cast %267 : vector<1x1x128xf32> to vector<1x128xf32>
    %269 = vector.broadcast %268 : vector<1x128xf32> to vector<64x128xf32>
    %270 = arith.addf %266, %269 : vector<64x128xf32>
    %cst_231 = arith.constant 0.000000e+00 : f32
    %271 = vector.broadcast %cst_231 : f32 to vector<64x128xf32>
    %272 = arith.cmpf oge, %270, %271 : vector<64x128xf32>
    %cst_232 = arith.constant 2.000000e-01 : f32
    %273 = vector.broadcast %cst_232 : f32 to vector<64x128xf32>
    %274 = arith.mulf %273, %270 : vector<64x128xf32>
    %275 = arith.select %272, %270, %274 : vector<64x128xi1>, vector<64x128xf32>
    %276 = vector.shape_cast %275 : vector<64x128xf32> to vector<8x8x128xf32>
    %c0_233 = arith.constant 0 : index
    %c1_234 = arith.constant 1 : index
    %c0_235 = arith.constant 0 : index
    %277 = vector.load %arg6[%c0_233, %c1_234, %c0_235] : memref<8x66x128xf32, #tpu.memory_space<vmem>>, vector<8x8x128xf32>
    tpu.vector_store %arg6[%c0_233, %c1_234, %c0_235], %276 {strides = array<i32>} : memref<8x66x128xf32, #tpu.memory_space<vmem>>, vector<8x8x128xf32>,
    %c0_236 = arith.constant 0 : index
    %c9_237 = arith.constant 9 : index
    %c0_238 = arith.constant 0 : index
    %278 = vector.load %arg6[%c0_236, %c9_237, %c0_238] : memref<8x66x128xf32, #tpu.memory_space<vmem>>, vector<8x1x128xf32>
    %279 = vector.shape_cast %278 : vector<8x1x128xf32> to vector<8x128xf32>
    %280 = vector.shape_cast %0 : vector<8x128xf32> to vector<8x1x128xf32>
    tpu.vector_store %arg6[%c0_236, %c9_237, %c0_238], %280 {strides = array<i32>} : memref<8x66x128xf32, #tpu.memory_space<vmem>>, vector<8x1x128xf32>,
    %c0_239 = arith.constant 0 : index
    %c1_240 = arith.constant 1 : index
    %c0_241 = arith.constant 0 : index
    %281 = vector.load %arg6[%c0_239, %c1_240, %c0_241] : memref<8x66x128xf32, #tpu.memory_space<vmem>>, vector<8x1x128xf32>
    %282 = vector.shape_cast %281 : vector<8x1x128xf32> to vector<8x128xf32>
    %283 = arith.truncf %282 : vector<8x128xf32> to vector<8x128xbf16>
    %c21 = arith.constant 21 : index
    %c0_242 = arith.constant 0 : index
    %c0_243 = arith.constant 0 : index
    %284 = vector.load %arg3[%c21, %c0_242, %c0_243] : memref<30x128x128xbf16, #tpu.memory_space<vmem>>, vector<1x128x128xbf16>
    %285 = vector.shape_cast %284 : vector<1x128x128xbf16> to vector<128x128xbf16>
    %cst_244 = arith.constant dense<0.000000e+00> : vector<8x128xf32>
    %286 = tpu.matmul %283, %285, %cst_244 {dimension_numbers = #tpu.dot_dimension_numbers<[1], [0], [0], [1], [0, 0, 1, 1], [], []>} : vector<8x128xbf16>, vector<128x128xbf16>, vector<8x128xf32> -> vector<8x128xf32>
    %c0_245 = arith.constant 0 : index
    %c2_246 = arith.constant 2 : index
    %c0_247 = arith.constant 0 : index
    %287 = vector.load %arg6[%c0_245, %c2_246, %c0_247] : memref<8x66x128xf32, #tpu.memory_space<vmem>>, vector<8x1x128xf32>
    %288 = vector.shape_cast %287 : vector<8x1x128xf32> to vector<8x128xf32>
    %289 = arith.truncf %288 : vector<8x128xf32> to vector<8x128xbf16>
    %c22 = arith.constant 22 : index
    %c0_248 = arith.constant 0 : index
    %c0_249 = arith.constant 0 : index
    %290 = vector.load %arg3[%c22, %c0_248, %c0_249] : memref<30x128x128xbf16, #tpu.memory_space<vmem>>, vector<1x128x128xbf16>
    %291 = vector.shape_cast %290 : vector<1x128x128xbf16> to vector<128x128xbf16>
    %cst_250 = arith.constant dense<0.000000e+00> : vector<8x128xf32>
    %292 = tpu.matmul %289, %291, %cst_250 {dimension_numbers = #tpu.dot_dimension_numbers<[1], [0], [0], [1], [0, 0, 1, 1], [], []>} : vector<8x128xbf16>, vector<128x128xbf16>, vector<8x128xf32> -> vector<8x128xf32>
    %293 = arith.addf %286, %292 : vector<8x128xf32>
    %c0_251 = arith.constant 0 : index
    %c3_252 = arith.constant 3 : index
    %c0_253 = arith.constant 0 : index
    %294 = vector.load %arg6[%c0_251, %c3_252, %c0_253] : memref<8x66x128xf32, #tpu.memory_space<vmem>>, vector<8x1x128xf32>
    %295 = vector.shape_cast %294 : vector<8x1x128xf32> to vector<8x128xf32>
    %296 = arith.truncf %295 : vector<8x128xf32> to vector<8x128xbf16>
    %c23 = arith.constant 23 : index
    %c0_254 = arith.constant 0 : index
    %c0_255 = arith.constant 0 : index
    %297 = vector.load %arg3[%c23, %c0_254, %c0_255] : memref<30x128x128xbf16, #tpu.memory_space<vmem>>, vector<1x128x128xbf16>
    %298 = vector.shape_cast %297 : vector<1x128x128xbf16> to vector<128x128xbf16>
    %cst_256 = arith.constant dense<0.000000e+00> : vector<8x128xf32>
    %299 = tpu.matmul %296, %298, %cst_256 {dimension_numbers = #tpu.dot_dimension_numbers<[1], [0], [0], [1], [0, 0, 1, 1], [], []>} : vector<8x128xbf16>, vector<128x128xbf16>, vector<8x128xf32> -> vector<8x128xf32>
    %300 = arith.addf %293, %299 : vector<8x128xf32>
    %c0_257 = arith.constant 0 : index
    %c4_258 = arith.constant 4 : index
    %c0_259 = arith.constant 0 : index
    %301 = vector.load %arg6[%c0_257, %c4_258, %c0_259] : memref<8x66x128xf32, #tpu.memory_space<vmem>>, vector<8x1x128xf32>
    %302 = vector.shape_cast %301 : vector<8x1x128xf32> to vector<8x128xf32>
    %303 = arith.truncf %302 : vector<8x128xf32> to vector<8x128xbf16>
    %c24 = arith.constant 24 : index
    %c0_260 = arith.constant 0 : index
    %c0_261 = arith.constant 0 : index
    %304 = vector.load %arg3[%c24, %c0_260, %c0_261] : memref<30x128x128xbf16, #tpu.memory_space<vmem>>, vector<1x128x128xbf16>
    %305 = vector.shape_cast %304 : vector<1x128x128xbf16> to vector<128x128xbf16>
    %cst_262 = arith.constant dense<0.000000e+00> : vector<8x128xf32>
    %306 = tpu.matmul %303, %305, %cst_262 {dimension_numbers = #tpu.dot_dimension_numbers<[1], [0], [0], [1], [0, 0, 1, 1], [], []>} : vector<8x128xbf16>, vector<128x128xbf16>, vector<8x128xf32> -> vector<8x128xf32>
    %307 = arith.addf %300, %306 : vector<8x128xf32>
    %c0_263 = arith.constant 0 : index
    %c5_264 = arith.constant 5 : index
    %c0_265 = arith.constant 0 : index
    %308 = vector.load %arg6[%c0_263, %c5_264, %c0_265] : memref<8x66x128xf32, #tpu.memory_space<vmem>>, vector<8x1x128xf32>
    %309 = vector.shape_cast %308 : vector<8x1x128xf32> to vector<8x128xf32>
    %310 = arith.truncf %309 : vector<8x128xf32> to vector<8x128xbf16>
    %c25 = arith.constant 25 : index
    %c0_266 = arith.constant 0 : index
    %c0_267 = arith.constant 0 : index
    %311 = vector.load %arg3[%c25, %c0_266, %c0_267] : memref<30x128x128xbf16, #tpu.memory_space<vmem>>, vector<1x128x128xbf16>
    %312 = vector.shape_cast %311 : vector<1x128x128xbf16> to vector<128x128xbf16>
    %cst_268 = arith.constant dense<0.000000e+00> : vector<8x128xf32>
    %313 = tpu.matmul %310, %312, %cst_268 {dimension_numbers = #tpu.dot_dimension_numbers<[1], [0], [0], [1], [0, 0, 1, 1], [], []>} : vector<8x128xbf16>, vector<128x128xbf16>, vector<8x128xf32> -> vector<8x128xf32>
    %314 = arith.addf %307, %313 : vector<8x128xf32>
    %c0_269 = arith.constant 0 : index
    %c6_270 = arith.constant 6 : index
    %c0_271 = arith.constant 0 : index
    %315 = vector.load %arg6[%c0_269, %c6_270, %c0_271] : memref<8x66x128xf32, #tpu.memory_space<vmem>>, vector<8x1x128xf32>
    %316 = vector.shape_cast %315 : vector<8x1x128xf32> to vector<8x128xf32>
    %317 = arith.truncf %316 : vector<8x128xf32> to vector<8x128xbf16>
    %c26 = arith.constant 26 : index
    %c0_272 = arith.constant 0 : index
    %c0_273 = arith.constant 0 : index
    %318 = vector.load %arg3[%c26, %c0_272, %c0_273] : memref<30x128x128xbf16, #tpu.memory_space<vmem>>, vector<1x128x128xbf16>
    %319 = vector.shape_cast %318 : vector<1x128x128xbf16> to vector<128x128xbf16>
    %cst_274 = arith.constant dense<0.000000e+00> : vector<8x128xf32>
    %320 = tpu.matmul %317, %319, %cst_274 {dimension_numbers = #tpu.dot_dimension_numbers<[1], [0], [0], [1], [0, 0, 1, 1], [], []>} : vector<8x128xbf16>, vector<128x128xbf16>, vector<8x128xf32> -> vector<8x128xf32>
    %321 = arith.addf %314, %320 : vector<8x128xf32>
    %c0_275 = arith.constant 0 : index
    %c7_276 = arith.constant 7 : index
    %c0_277 = arith.constant 0 : index
    %322 = vector.load %arg6[%c0_275, %c7_276, %c0_277] : memref<8x66x128xf32, #tpu.memory_space<vmem>>, vector<8x1x128xf32>
    %323 = vector.shape_cast %322 : vector<8x1x128xf32> to vector<8x128xf32>
    %324 = arith.truncf %323 : vector<8x128xf32> to vector<8x128xbf16>
    %c27 = arith.constant 27 : index
    %c0_278 = arith.constant 0 : index
    %c0_279 = arith.constant 0 : index
    %325 = vector.load %arg3[%c27, %c0_278, %c0_279] : memref<30x128x128xbf16, #tpu.memory_space<vmem>>, vector<1x128x128xbf16>
    %326 = vector.shape_cast %325 : vector<1x128x128xbf16> to vector<128x128xbf16>
    %cst_280 = arith.constant dense<0.000000e+00> : vector<8x128xf32>
    %327 = tpu.matmul %324, %326, %cst_280 {dimension_numbers = #tpu.dot_dimension_numbers<[1], [0], [0], [1], [0, 0, 1, 1], [], []>} : vector<8x128xbf16>, vector<128x128xbf16>, vector<8x128xf32> -> vector<8x128xf32>
    %328 = arith.addf %321, %327 : vector<8x128xf32>
    %c0_281 = arith.constant 0 : index
    %c8_282 = arith.constant 8 : index
    %c0_283 = arith.constant 0 : index
    %329 = vector.load %arg6[%c0_281, %c8_282, %c0_283] : memref<8x66x128xf32, #tpu.memory_space<vmem>>, vector<8x1x128xf32>
    %330 = vector.shape_cast %329 : vector<8x1x128xf32> to vector<8x128xf32>
    %331 = arith.truncf %330 : vector<8x128xf32> to vector<8x128xbf16>
    %c28 = arith.constant 28 : index
    %c0_284 = arith.constant 0 : index
    %c0_285 = arith.constant 0 : index
    %332 = vector.load %arg3[%c28, %c0_284, %c0_285] : memref<30x128x128xbf16, #tpu.memory_space<vmem>>, vector<1x128x128xbf16>
    %333 = vector.shape_cast %332 : vector<1x128x128xbf16> to vector<128x128xbf16>
    %cst_286 = arith.constant dense<0.000000e+00> : vector<8x128xf32>
    %334 = tpu.matmul %331, %333, %cst_286 {dimension_numbers = #tpu.dot_dimension_numbers<[1], [0], [0], [1], [0, 0, 1, 1], [], []>} : vector<8x128xbf16>, vector<128x128xbf16>, vector<8x128xf32> -> vector<8x128xf32>
    %335 = arith.addf %328, %334 : vector<8x128xf32>
    %c6_287 = arith.constant 6 : index
    %c0_288 = arith.constant 0 : index
    %c0_289 = arith.constant 0 : index
    %336 = vector.load %arg4[%c6_287, %c0_288, %c0_289] : memref<8x1x128xf32, #tpu.memory_space<vmem>>, vector<1x1x128xf32>
    %337 = vector.shape_cast %336 : vector<1x1x128xf32> to vector<1x128xf32>
    %338 = vector.broadcast %337 : vector<1x128xf32> to vector<8x128xf32>
    %339 = arith.addf %335, %338 : vector<8x128xf32>
    %cst_290 = arith.constant 0.000000e+00 : f32
    %340 = vector.broadcast %cst_290 : f32 to vector<8x128xf32>
    %341 = arith.cmpf oge, %339, %340 : vector<8x128xf32>
    %cst_291 = arith.constant 2.000000e-01 : f32
    %342 = vector.broadcast %cst_291 : f32 to vector<8x128xf32>
    %343 = arith.mulf %342, %339 : vector<8x128xf32>
    %344 = arith.select %341, %339, %343 : vector<8x128xi1>, vector<8x128xf32>
    %345 = arith.truncf %344 : vector<8x128xf32> to vector<8x128xbf16>
    %c29 = arith.constant 29 : index
    %c0_292 = arith.constant 0 : index
    %c0_293 = arith.constant 0 : index
    %346 = vector.load %arg3[%c29, %c0_292, %c0_293] : memref<30x128x128xbf16, #tpu.memory_space<vmem>>, vector<1x128x128xbf16>
    %347 = vector.shape_cast %346 : vector<1x128x128xbf16> to vector<128x128xbf16>
    %cst_294 = arith.constant dense<0.000000e+00> : vector<8x128xf32>
    %348 = tpu.matmul %345, %347, %cst_294 {dimension_numbers = #tpu.dot_dimension_numbers<[1], [0], [0], [1], [0, 0, 1, 1], [], []>} : vector<8x128xbf16>, vector<128x128xbf16>, vector<8x128xf32> -> vector<8x128xf32>
    %c7_295 = arith.constant 7 : index
    %c0_296 = arith.constant 0 : index
    %c0_297 = arith.constant 0 : index
    %349 = vector.load %arg4[%c7_295, %c0_296, %c0_297] : memref<8x1x128xf32, #tpu.memory_space<vmem>>, vector<1x1x128xf32>
    %350 = vector.shape_cast %349 : vector<1x1x128xf32> to vector<1x128xf32>
    %351 = vector.broadcast %350 : vector<1x128xf32> to vector<8x128xf32>
    %352 = arith.addf %348, %351 : vector<8x128xf32>
    %c0_298 = arith.constant 0 : index
    %c0_299 = arith.constant 0 : index
    %c0_300 = arith.constant 0 : index
    %353 = vector.load %arg5[%c0_298, %c0_299, %c0_300] : memref<1x8x128xf32, #tpu.memory_space<vmem>>, vector<1x8x128xf32>
    %354 = vector.shape_cast %353 : vector<1x8x128xf32> to vector<8x128xf32>
    %355 = vector.shape_cast %352 : vector<8x128xf32> to vector<1x8x128xf32>
    tpu.vector_store %arg5[%c0_298, %c0_299, %c0_300], %355 {strides = array<i32>} : memref<1x8x128xf32, #tpu.memory_space<vmem>>, vector<1x8x128xf32>,
    return
  }
  func.func @transform_0(%arg0: i32) -> (i32, i32, i32) {
    %c0_i32 = arith.constant 0 : i32
    %c0_i32_0 = arith.constant 0 : i32
    %c0_i32_1 = arith.constant 0 : i32
    return %arg0, %c0_i32, %c0_i32_0 : i32, i32, i32
  }
  func.func @transform_1(%arg0: i32) -> (i32, i32) {
    %c0_i32 = arith.constant 0 : i32
    %c0_i32_0 = arith.constant 0 : i32
    %c0_i32_1 = arith.constant 0 : i32
    return %c0_i32, %c0_i32_0 : i32, i32
  }
  func.func @transform_2(%arg0: i32) -> (i32, i32, i32) {
    %c0_i32 = arith.constant 0 : i32
    %c0_i32_0 = arith.constant 0 : i32
    %c0_i32_1 = arith.constant 0 : i32
    %c0_i32_2 = arith.constant 0 : i32
    return %c0_i32, %c0_i32_0, %c0_i32_1 : i32, i32, i32
  }
  func.func @transform_3(%arg0: i32) -> (i32, i32, i32) {
    %c0_i32 = arith.constant 0 : i32
    %c0_i32_0 = arith.constant 0 : i32
    %c0_i32_1 = arith.constant 0 : i32
    %c0_i32_2 = arith.constant 0 : i32
    return %c0_i32, %c0_i32_0, %c0_i32_1 : i32, i32, i32
  }
  func.func @transform_4(%arg0: i32) -> (i32, i32, i32) {
    %c0_i32 = arith.constant 0 : i32
    %c0_i32_0 = arith.constant 0 : i32
    %c0_i32_1 = arith.constant 0 : i32
    return %arg0, %c0_i32, %c0_i32_0 : i32, i32, i32
  }
}

</mosaic_0001>

<llo_original>
// kernel: net_forward_pallas.1
$region0: #{net_forward_pallas.1}
  #allocation0 [shape = 'u32[]', space=smem, size = 0x4, offset = 0x4, fixed_abs, tag = 'smem constant byte address 0x4 - core index']
  #allocation1 [shape = 'u32[144,128]{1,0:T(1,128)}', space=vmem, size = 0x12000, scoped, tag = 'internal scratch']
  #allocation2 [shape = 'f32[8,66,128]{2,1,0:T(8,128)}', space=vmem, size = 0x48000, scoped, tag = 'scratch operand']
  #allocation3 [shape = 'f32[8,66,128]{2,1,0:T(8,128)}', space=vmem, size = 0x48000, scoped, tag = 'scratch operand']
  %s0 = inlined_call_operand.vmem [shape: f32[16,48,128], index: 0, kind: input, shape index: {}]
  %s1 = inlined_call_operand.vmem [shape: f32[64,48], index: 1, kind: input, shape index: {}]
  %s2 = inlined_call_operand.vmem [shape: bf16[30,128,128], index: 2, kind: input, shape index: {}]
  %s3 = inlined_call_operand.vmem [shape: f32[8,1,128], index: 3, kind: input, shape index: {}]
  %s4 = inlined_call_operand.hbm [shape: f32[2,8,128], index: 4, kind: output, shape index: {}]
  %s5 = sld [smem:[#allocation0]]
  $region49: #{net_forward_pallas.1} parent=0
    _
  %s7 = ssub.s32 1, %s5
  %s8 = scalar_select 0, %s7, %s5
  $region1: #{net_forward_pallas.1} parent=0
    #allocation4 [shape = 'u8[8192]{0}', space=vmem, size = 0x2000, scoped, tag = 'output window, operand 0']
    #allocation5 [shape = 's32[2]{0}', space=sflag, size = 0x8, scoped, tag = 'scoped memory for net_forward_pallas.1']
    %9 = vsyncpa [#allocation5], 0
    %s10 = scalar_lea.sflag [#allocation5], 1
    %11 = vsyncpa %s10, 0
    loop: start=0, step=1, limit=4
    $region2: #{net_forward_pallas.1} parent=1 // loop_pre_header
      _
    $region3: #{net_forward_pallas.1} parent=1 // loop_header
      %s13 = sphi 0, %s17
      %p14 = scmp.ge.s32.totalorder %s13, 4
      %s23 = sphi 0, %s25
      %s26 = sphi 0, %s23
      %s27 = sphi 0, %s26
      %s43 = sphi 0, %s27
      %s47 = sphi 0, %s47
      %s49 = sphi 0, %s47
      %s50 = sphi 0, %s49
      %s64 = sphi 0, %s50
      %s68 = sphi 0, %s68
      %s70 = sphi 0, %s68
      %s71 = sphi 0, %s70
      %s85 = sphi 0, %s71
      %s89 = sphi 0, %s89
      %s91 = sphi 0, %s89
      %s92 = sphi 0, %s91
      %s106 = sphi 0, %s92
      %s112 = sphi 0, %s114
      %s115 = sphi 0, %s112
      %s116 = sphi 0, %s115
      %s132 = sphi 0, %s116
    $region4: #{net_forward_pallas.1} parent=1 // loop_header_branch
      %16 = sbr.rel (%p14) target = $region8
    $region5: #{net_forward_pallas.1} parent=1 // loop_body
      %s18 = ssub.s32 %s13, 1
      %s19 = ssub.s32 %s13, 2
      %s20 = sadd.s32 %s13, 1
      %s21 = ssub.s32 %s13, %s20
      %p22 = scmp.eq.s32.totalorder %s21, 0
      %s24 = sadd.s32 %s23, 1
      %s25 = scalar_select %p22, %s23, %s24
      %p28 = pneg %p22
      %p29 = scmp.eq.s32.totalorder %s13, 1
      %p30 = por %p28, %p29
      %p31 = scmp.ne.s32.totalorder %s23, %s26
      %p32 = scmp.eq.s32.totalorder %s13, 0
      %p33 = por %p31, %p32
      %p34 = scmp.ne.s32.totalorder %s23, %s26
      %p35 = scmp.eq.s32.totalorder %s18, 1
      %p36 = por %p34, %p35
      %p37 = scmp.ne.s32.totalorder %s26, %s27
      %p38 = scmp.eq.s32.totalorder %s18, 0
      %p39 = por %p37, %p38
      %p40 = scmp.ne.s32.totalorder %s26, %s27
      %p41 = scmp.eq.s32.totalorder %s19, 1
      %p42 = por %p40, %p41
      %p44 = scmp.ne.s32.totalorder %s27, %s43
      %p45 = scmp.eq.s32.totalorder %s19, 0
      %p46 = por %p44, %p45
      %s48 = sadd.s32 %s47, 1
      %p51 = scmp.eq.s32.totalorder %s13, 1
      %p52 = scmp.ne.s32.totalorder %s47, %s49
      %p53 = scmp.eq.s32.totalorder %s13, 0
      %p54 = por %p52, %p53
      %p55 = scmp.ne.s32.totalorder %s47, %s49
      %p56 = scmp.eq.s32.totalorder %s18, 1
      %p57 = por %p55, %p56
      %p58 = scmp.ne.s32.totalorder %s49, %s50
      %p59 = scmp.eq.s32.totalorder %s18, 0
      %p60 = por %p58, %p59
      %p61 = scmp.ne.s32.totalorder %s49, %s50
      %p62 = scmp.eq.s32.totalorder %s19, 1
      %p63 = por %p61, %p62
      %p65 = scmp.ne.s32.totalorder %s50, %s64
      %p66 = scmp.eq.s32.totalorder %s19, 0
      %p67 = por %p65, %p66
      %s69 = sadd.s32 %s68, 1
      %p72 = scmp.eq.s32.totalorder %s13, 1
      %p73 = scmp.ne.s32.totalorder %s68, %s70
      %p74 = scmp.eq.s32.totalorder %s13, 0
      %p75 = por %p73, %p74
      %p76 = scmp.ne.s32.totalorder %s68, %s70
      %p77 = scmp.eq.s32.totalorder %s18, 1
      %p78 = por %p76, %p77
      %p79 = scmp.ne.s32.totalorder %s70, %s71
      %p80 = scmp.eq.s32.totalorder %s18, 0
      %p81 = por %p79, %p80
      %p82 = scmp.ne.s32.totalorder %s70, %s71
      %p83 = scmp.eq.s32.totalorder %s19, 1
      %p84 = por %p82, %p83
      %p86 = scmp.ne.s32.totalorder %s71, %s85
      %p87 = scmp.eq.s32.totalorder %s19, 0
      %p88 = por %p86, %p87
      %s90 = sadd.s32 %s89, 1
      %p93 = scmp.eq.s32.totalorder %s13, 1
      %p94 = scmp.ne.s32.totalorder %s89, %s91
      %p95 = scmp.eq.s32.totalorder %s13, 0
      %p96 = por %p94, %p95
      %p97 = scmp.ne.s32.totalorder %s89, %s91
      %p98 = scmp.eq.s32.totalorder %s18, 1
      %p99 = por %p97, %p98
      %p100 = scmp.ne.s32.totalorder %s91, %s92
      %p101 = scmp.eq.s32.totalorder %s18, 0
      %p102 = por %p100, %p101
      %p103 = scmp.ne.s32.totalorder %s91, %s92
      %p104 = scmp.eq.s32.totalorder %s19, 1
      %p105 = por %p103, %p104
      %p107 = scmp.ne.s32.totalorder %s92, %s106
      %p108 = scmp.eq.s32.totalorder %s19, 0
      %p109 = por %p107, %p108
      %s110 = ssub.s32 %s13, %s20
      %p111 = scmp.eq.s32.totalorder %s110, 0
      %s113 = sadd.s32 %s112, 1
      %s114 = scalar_select %p111, %s112, %s113
      %p117 = pneg %p111
      %p118 = scmp.eq.s32.totalorder %s13, 1
      %p119 = por %p117, %p118
      %p120 = scmp.ne.s32.totalorder %s112, %s115
      %p121 = scmp.eq.s32.totalorder %s13, 0
      %p122 = por %p120, %p121
      %p123 = scmp.ne.s32.totalorder %s112, %s115
      %p124 = scmp.eq.s32.totalorder %s18, 1
      %p125 = por %p123, %p124
      %p126 = scmp.ne.s32.totalorder %s115, %s116
      %p127 = scmp.eq.s32.totalorder %s18, 0
      %p128 = por %p126, %p127
      %p129 = scmp.ne.s32.totalorder %s115, %s116
      %p130 = scmp.eq.s32.totalorder %s19, 1
      %p131 = por %p129, %p130
      %p133 = scmp.ne.s32.totalorder %s116, %s132
      %p134 = scmp.eq.s32.totalorder %s19, 0
      %p135 = por %p133, %p134
      %p136 = scmp.le.s32.totalorder 1, %s13
      %p137 = scmp.lt.s32.totalorder %s13, 3
      %p138 = pnand %p136, %p137
      %p139 = pneg %p138
      // Predicated region
      $region9: #{net_forward_pallas.1} parent=5 // pred_check
        _
      $region10: #{net_forward_pallas.1} parent=5 // pred_check_branch
        %141 = sbr.rel (%p138) target = $region12
      $region11: #{net_forward_pallas.1} parent=5 // pred_region
        %s142 = ssub.s32 %s13, 1
        // Predicated region
        $region13: #{net_forward_pallas.1} parent=11 // pred_check
          %p143 = pneg %p60
        $region14: #{net_forward_pallas.1} parent=11 // pred_check_branch
          %145 = sbr.rel (%p143) target = $region16
        $region15: #{net_forward_pallas.1} parent=11 // pred_region
          _
        $region16: #{net_forward_pallas.1} parent=11 // pred_fallthru
          _
        // Predicated region
        $region17: #{net_forward_pallas.1} parent=11 // pred_check
          %p146 = pneg %p81
        $region18: #{net_forward_pallas.1} parent=11 // pred_check_branch
          %148 = sbr.rel (%p146) target = $region20
        $region19: #{net_forward_pallas.1} parent=11 // pred_region
          _
        $region20: #{net_forward_pallas.1} parent=11 // pred_fallthru
          _
        // Predicated region
        $region21: #{net_forward_pallas.1} parent=11 // pred_check
          %p149 = pneg %p102
        $region22: #{net_forward_pallas.1} parent=11 // pred_check_branch
          %151 = sbr.rel (%p149) target = $region24
        $region23: #{net_forward_pallas.1} parent=11 // pred_region
          _
        $region24: #{net_forward_pallas.1} parent=11 // pred_fallthru
          _
      $region12: #{net_forward_pallas.1} parent=5 // pred_fallthru
        _
      %p152 = scmp.lt.s32.totalorder %s13, 2
      // Predicated region
      $region25: #{net_forward_pallas.1} parent=5 // pred_check
        %p153 = pneg %p152
      $region26: #{net_forward_pallas.1} parent=5 // pred_check_branch
        %155 = sbr.rel (%p153) target = $region28
      $region27: #{net_forward_pallas.1} parent=5 // pred_region
        // Predicated region
        $region29: #{net_forward_pallas.1} parent=27 // pred_check
          %p156 = pneg %p33
        $region30: #{net_forward_pallas.1} parent=27 // pred_check_branch
          %158 = sbr.rel (%p156) target = $region32
        $region31: #{net_forward_pallas.1} parent=27 // pred_region
          %s159 = smul.u32 8, %s13
          %p160 = scmp.lt.s32.totalorder %s159, 15
          %s161 = scalar_select %p160, %s159, 15
          %s162 = smul.addr %s161, 6
          %s163 = smul.addr %s162, 8
          %s164 = scalar_lea.vmem %s0, %s163
          %s165 = smul.u32 8, %s13
        $region32: #{net_forward_pallas.1} parent=27 // pred_fallthru
          _
      $region28: #{net_forward_pallas.1} parent=5 // pred_fallthru
        _
      %p166 = scmp.le.s32.totalorder 1, %s13
      %p167 = scmp.lt.s32.totalorder %s13, 3
      %p168 = pnand %p166, %p167
      %p169 = pneg %p168
      // Predicated region
      $region33: #{net_forward_pallas.1} parent=5 // pred_check
        _
      $region34: #{net_forward_pallas.1} parent=5 // pred_check_branch
        %171 = sbr.rel (%p168) target = $region36
      $region35: #{net_forward_pallas.1} parent=5 // pred_region
        %s172 = ssub.s32 %s13, 1
        %s173 = smul.u32 8, %s18
        %p174 = scmp.lt.s32.totalorder %s173, 15
        %s175 = scalar_select %p174, %s173, 15
        %s176 = smul.addr %s175, 6
        %s177 = smul.addr %s176, 8
        %s178 = scalar_lea.vmem %s0, %s177
        %p179 = pneg %p39
        %p180 = pneg %p36
        %p181 = pneg %p60
        %p182 = pneg %p57
        %p183 = pneg %p81
        %p184 = pneg %p78
        %p185 = pneg %p102
        %p186 = pneg %p99
        %p187 = pneg %p128
        %p188 = pneg %p125
        %s189 = sand.u32 %s115, 1
        %s190 = scalar_lea.sflag [#allocation5], %s189
        %s191 = sand.u32 %s115, 1
        %s192 = smul.addr %s191, 8
        %s193 = scalar_lea.vmem [#allocation4], %s192
        %s194 = smul.u32 8, %s18
        %p195 = scmp.lt.s32.totalorder %s194, 15
        %s196 = scalar_select %p195, %s194, 15
        %s197 = smul.addr %s196, 6
        %s198 = smul.addr %s197, 8
        %s199 = scalar_lea.vmem %s0, %s198
        %s200 = smul.u32 8, %s18
        %202 = vst [vmem:[#allocation2] sm:$0x1] 0.0
        %203 = vst [vmem:[#allocation2 + $0x48] sm:$0x1] 0.0
        %204 = vst [vmem:[#allocation2 + $0x90] sm:$0x1] 0.0
        %205 = vst [vmem:[#allocation2 + $0xd8] sm:$0x1] 0.0
        %206 = vst [vmem:[#allocation2 + $0x120] sm:$0x1] 0.0
        %207 = vst [vmem:[#allocation2 + $0x168] sm:$0x1] 0.0
        %208 = vst [vmem:[#allocation2 + $0x1b0] sm:$0x1] 0.0
        %209 = vst [vmem:[#allocation2 + $0x1f8] sm:$0x1] 0.0
        %210 = vst [vmem:[#allocation2 + $0x41] sm:$0x1] 0.0
        %211 = vst [vmem:[#allocation2 + $0x89] sm:$0x1] 0.0
        %212 = vst [vmem:[#allocation2 + $0xd1] sm:$0x1] 0.0
        %213 = vst [vmem:[#allocation2 + $0x119] sm:$0x1] 0.0
        %214 = vst [vmem:[#allocation2 + $0x161] sm:$0x1] 0.0
        %215 = vst [vmem:[#allocation2 + $0x1a9] sm:$0x1] 0.0
        %216 = vst [vmem:[#allocation2 + $0x1f1] sm:$0x1] 0.0
        %217 = vst [vmem:[#allocation2 + $0x239] sm:$0x1] 0.0
        %218 = vst [vmem:[#allocation3] sm:$0x1] 0.0
        %219 = vst [vmem:[#allocation3 + $0x48] sm:$0x1] 0.0
        %220 = vst [vmem:[#allocation3 + $0x90] sm:$0x1] 0.0
        %221 = vst [vmem:[#allocation3 + $0xd8] sm:$0x1] 0.0
        %222 = vst [vmem:[#allocation3 + $0x120] sm:$0x1] 0.0
        %223 = vst [vmem:[#allocation3 + $0x168] sm:$0x1] 0.0
        %224 = vst [vmem:[#allocation3 + $0x1b0] sm:$0x1] 0.0
        %225 = vst [vmem:[#allocation3 + $0x1f8] sm:$0x1] 0.0
        %v226 = vld [vmem:[%s1] sm:$0xff]
        %v227 = vld [vmem:[%s1 + $0x8] sm:$0xff]
        %v228 = vld [vmem:[%s1 + $0x10] sm:$0xff]
        %v229 = vld [vmem:[%s1 + $0x18] sm:$0xff]
        %v230 = vld [vmem:[%s1 + $0x20] sm:$0xff]
        %v231 = vld [vmem:[%s1 + $0x28] sm:$0xff]
        %v232 = vld [vmem:[%s1 + $0x30] sm:$0xff]
        %v233 = vld [vmem:[%s1 + $0x38] sm:$0xff]
        %v234 = vld [vmem:[%s199] sm:$0xff]
        %v235 = vld [vmem:[%s199 + $0x8] sm:$0xff]
        %v236 = vld [vmem:[%s199 + $0x10] sm:$0xff]
        %v237 = vld [vmem:[%s199 + $0x18] sm:$0xff]
        %v238 = vld [vmem:[%s199 + $0x20] sm:$0xff]
        %v239 = vld [vmem:[%s199 + $0x28] sm:$0xff]
        %vm240 = vcmask 392192
        %v242 = vsel %vm240, %v226, 0
        %v245 = vsel %vm240, %v227, 0
        %v248 = vsel %vm240, %v228, 0
        %v251 = vsel %vm240, %v229, 0
        %v254 = vsel %vm240, %v230, 0
        %v257 = vsel %vm240, %v231, 0
        %v260 = vsel %vm240, %v232, 0
        %v263 = vsel %vm240, %v233, 0
        %265 = vmatprep.subr.mxu0 0.0
        %266 = vmatpush1.msra.mxu0 %v234
        %267 = vmatprep.subr.mxu0 0.0
        %268 = vmatpush1.msra.mxu0 %v235
        %269 = vmatprep.subr.mxu0 0.0
        %270 = vmatpush1.msra.mxu0 %v236
        %271 = vmatprep.subr.mxu0 0.0
        %272 = vmatpush1.msra.mxu0 %v237
        %273 = vmatprep.subr.mxu0 0.0
        %274 = vmatpush1.msra.mxu0 %v238
        %275 = vmatprep.subr.mxu0 0.0
        %276 = vmatpush1.msra.mxu0 %v239
        %277 = vmatprep.subr.mxu0 0.0
        %278 = vmatpush1.msra.mxu0 0.0
        %279 = vmatprep.subr.mxu0 0.0
        %280 = vmatpush1.msra.mxu0 0.0
        %281 = vmatprep.subr.mxu0 0.0
        %282 = vmatpush1.msra.mxu0 0.0
        %283 = vmatprep.subr.mxu0 0.0
        %284 = vmatpush1.msra.mxu0 0.0
        %285 = vmatprep.subr.mxu0 0.0
        %286 = vmatpush1.msra.mxu0 0.0
        %287 = vmatprep.subr.mxu0 0.0
        %288 = vmatpush1.msra.mxu0 0.0
        %289 = vmatprep.subr.mxu0 0.0
        %290 = vmatpush1.msra.mxu0 0.0
        %291 = vmatprep.subr.mxu0 0.0
        %292 = vmatpush1.msra.mxu0 0.0
        %293 = vmatprep.subr.mxu0 0.0
        %294 = vmatpush1.msra.mxu0 0.0
        %295 = vmatprep.subr.mxu0 0.0
        %296 = vmatpush1.msra.mxu0 0.0
        %297 = vmatprep.subr.mxu0 0.0
        %298 = vmatpush1.msra.mxu0 0.0
        %299 = vmatprep.subr.mxu0 0.0
        %300 = vmatpush1.msra.mxu0 0.0
        %301 = vmatprep.subr.mxu0 0.0
        %302 = vmatpush1.msra.mxu0 0.0
        %303 = vmatprep.subr.mxu0 0.0
        %304 = vmatpush1.msra.mxu0 0.0
        %305 = vmatprep.subr.mxu0 0.0
        %306 = vmatpush1.msra.mxu0 0.0
        %307 = vmatprep.subr.mxu0 0.0
        %308 = vmatpush1.msra.mxu0 0.0
        %309 = vmatprep.subr.mxu0 0.0
        %310 = vmatpush1.msra.mxu0 0.0
        %311 = vmatprep.subr.mxu0 0.0
        %312 = vmatpush1.msra.mxu0 0.0
        %313 = vmatprep.subr.mxu0 0.0
        %314 = vmatpush1.msra.mxu0 0.0
        %315 = vmatprep.subr.mxu0 0.0
        %316 = vmatpush1.msra.mxu0 0.0
        %317 = vmatprep.subr.mxu0 0.0
        %318 = vmatpush1.msra.mxu0 0.0
        %319 = vmatprep.subr.mxu0 0.0
        %320 = vmatpush1.msra.mxu0 0.0
        %321 = vmatprep.subr.mxu0 0.0
        %322 = vmatpush1.msra.mxu0 0.0
        %323 = vmatprep.subr.mxu0 0.0
        %324 = vmatpush1.msra.mxu0 0.0
        %325 = vmatprep.subr.mxu0 0.0
        %326 = vmatpush1.msra.mxu0 0.0
        %327 = vmatprep.subr.mxu0 0.0
        %328 = vmatpush1.msra.mxu0 0.0
        %329 = vmatprep.mubr.f32.mxu0 0.0
        %330 = vmatmul.mubr.f32.gmra.mrb[0].mxu0 %v242
        %v331 = vpop.f32.mrb[0].mxu0
        %v332 = vadd.f32 0.0, %v331
        %v333 = vpop.f32.mrb[0].mxu0
        %334 = vmatprep.mubr.f32.mxu0 0.0
        %335 = vmatmul.mubr.f32.gmra.mrb[0].mxu0 %v245
        %v336 = vpop.f32.mrb[0].mxu0
        %v337 = vadd.f32 0.0, %v336
        %v338 = vpop.f32.mrb[0].mxu0
        %339 = vmatprep.mubr.f32.mxu0 0.0
        %340 = vmatmul.mubr.f32.gmra.mrb[0].mxu0 %v248
        %v341 = vpop.f32.mrb[0].mxu0
        %v342 = vadd.f32 0.0, %v341
        %v343 = vpop.f32.mrb[0].mxu0
        %344 = vmatprep.mubr.f32.mxu0 0.0
        %345 = vmatmul.mubr.f32.gmra.mrb[0].mxu0 %v251
        %v346 = vpop.f32.mrb[0].mxu0
        %v347 = vadd.f32 0.0, %v346
        %v348 = vpop.f32.mrb[0].mxu0
        %349 = vmatprep.mubr.f32.mxu0 0.0
        %350 = vmatmul.mubr.f32.gmra.mrb[0].mxu0 %v254
        %v351 = vpop.f32.mrb[0].mxu0
        %v352 = vadd.f32 0.0, %v351
        %v353 = vpop.f32.mrb[0].mxu0
        %354 = vmatprep.mubr.f32.mxu0 0.0
        %355 = vmatmul.mubr.f32.gmra.mrb[0].mxu0 %v257
        %v356 = vpop.f32.mrb[0].mxu0
        %v357 = vadd.f32 0.0, %v356
        %v358 = vpop.f32.mrb[0].mxu0
        %359 = vmatprep.mubr.f32.mxu0 0.0
        %360 = vmatmul.mubr.f32.gmra.mrb[0].mxu0 %v260
        %v361 = vpop.f32.mrb[0].mxu0
        %v362 = vadd.f32 0.0, %v361
        %v363 = vpop.f32.mrb[0].mxu0
        %364 = vmatprep.mubr.f32.mxu0 0.0
        %365 = vmatmul.mubr.f32.gmra.mrb[0].mxu0 %v263
        %v366 = vpop.f32.mrb[0].mxu0
        %v367 = vadd.f32 0.0, %v366
        %v368 = vpop.f32.mrb[0].mxu0
        %369 = vdwg.mxu0
        %370 = vst [vmem:[#allocation2 + $0x1] sm:$0xff] %v332
        %371 = vst [vmem:[#allocation2 + $0x9] sm:$0xff] %v337
        %372 = vst [vmem:[#allocation2 + $0x11] sm:$0xff] %v342
        %373 = vst [vmem:[#allocation2 + $0x19] sm:$0xff] %v347
        %374 = vst [vmem:[#allocation2 + $0x21] sm:$0xff] %v352
        %375 = vst [vmem:[#allocation2 + $0x29] sm:$0xff] %v357
        %376 = vst [vmem:[#allocation2 + $0x31] sm:$0xff] %v362
        %377 = vst [vmem:[#allocation2 + $0x39] sm:$0xff] %v367
        %s378 = scalar_lea.vmem %s199, 48
        %v379 = vld [vmem:[%s378] sm:$0xff]
        %v380 = vld [vmem:[%s378 + $0x8] sm:$0xff]
        %v381 = vld [vmem:[%s378 + $0x10] sm:$0xff]
        %v382 = vld [vmem:[%s378 + $0x18] sm:$0xff]
        %v383 = vld [vmem:[%s378 + $0x20] sm:$0xff]
        %v384 = vld [vmem:[%s378 + $0x28] sm:$0xff]
        %385 = vmatprep.subr.mxu0 0.0
        %386 = vmatpush1.msra.mxu0 %v379
        %387 = vmatprep.subr.mxu0 0.0
        %388 = vmatpush1.msra.mxu0 %v380
        %389 = vmatprep.subr.mxu0 0.0
        %390 = vmatpush1.msra.mxu0 %v381
        %391 = vmatprep.subr.mxu0 0.0
        %392 = vmatpush1.msra.mxu0 %v382
        %393 = vmatprep.subr.mxu0 0.0
        %394 = vmatpush1.msra.mxu0 %v383
        %395 = vmatprep.subr.mxu0 0.0
        %396 = vmatpush1.msra.mxu0 %v384
        %397 = vmatprep.subr.mxu0 0.0
        %398 = vmatpush1.msra.mxu0 0.0
        %399 = vmatprep.subr.mxu0 0.0
        %400 = vmatpush1.msra.mxu0 0.0
        %401 = vmatprep.subr.mxu0 0.0
        %402 = vmatpush1.msra.mxu0 0.0
        %403 = vmatprep.subr.mxu0 0.0
        %404 = vmatpush1.msra.mxu0 0.0
        %405 = vmatprep.subr.mxu0 0.0
        %406 = vmatpush1.msra.mxu0 0.0
        %407 = vmatprep.subr.mxu0 0.0
        %408 = vmatpush1.msra.mxu0 0.0
        %409 = vmatprep.subr.mxu0 0.0
        %410 = vmatpush1.msra.mxu0 0.0
        %411 = vmatprep.subr.mxu0 0.0
        %412 = vmatpush1.msra.mxu0 0.0
        %413 = vmatprep.subr.mxu0 0.0
        %414 = vmatpush1.msra.mxu0 0.0
        %415 = vmatprep.subr.mxu0 0.0
        %416 = vmatpush1.msra.mxu0 0.0
        %417 = vmatprep.subr.mxu0 0.0
        %418 = vmatpush1.msra.mxu0 0.0
        %419 = vmatprep.subr.mxu0 0.0
        %420 = vmatpush1.msra.mxu0 0.0
        %421 = vmatprep.subr.mxu0 0.0
        %422 = vmatpush1.msra.mxu0 0.0
        %423 = vmatprep.subr.mxu0 0.0
        %424 = vmatpush1.msra.mxu0 0.0
        %425 = vmatprep.subr.mxu0 0.0
        %426 = vmatpush1.msra.mxu0 0.0
        %427 = vmatprep.subr.mxu0 0.0
        %428 = vmatpush1.msra.mxu0 0.0
        %429 = vmatprep.subr.mxu0 0.0
        %430 = vmatpush1.msra.mxu0 0.0
        %431 = vmatprep.subr.mxu0 0.0
        %432 = vmatpush1.msra.mxu0 0.0
        %433 = vmatprep.subr.mxu0 0.0
        %434 = vmatpush1.msra.mxu0 0.0
        %435 = vmatprep.subr.mxu0 0.0
        %436 = vmatpush1.msra.mxu0 0.0
        %437 = vmatprep.subr.mxu0 0.0
        %438 = vmatpush1.msra.mxu0 0.0
        %439 = vmatprep.subr.mxu0 0.0
        %440 = vmatpush1.msra.mxu0 0.0
        %441 = vmatprep.subr.mxu0 0.0
        %442 = vmatpush1.msra.mxu0 0.0
        %443 = vmatprep.subr.mxu0 0.0
        %444 = vmatpush1.msra.mxu0 0.0
        %445 = vmatprep.subr.mxu0 0.0
        %446 = vmatpush1.msra.mxu0 0.0
        %447 = vmatprep.subr.mxu0 0.0
        %448 = vmatpush1.msra.mxu0 0.0
        %449 = vmatprep.mubr.f32.mxu0 0.0
        %450 = vmatmul.mubr.f32.gmra.mrb[0].mxu0 %v242
        %v451 = vpop.f32.mrb[0].mxu0
        %v452 = vadd.f32 0.0, %v451
        %v453 = vpop.f32.mrb[0].mxu0
        %454 = vmatprep.mubr.f32.mxu0 0.0
        %455 = vmatmul.mubr.f32.gmra.mrb[0].mxu0 %v245
        %v456 = vpop.f32.mrb[0].mxu0
        %v457 = vadd.f32 0.0, %v456
        %v458 = vpop.f32.mrb[0].mxu0
        %459 = vmatprep.mubr.f32.mxu0 0.0
        %460 = vmatmul.mubr.f32.gmra.mrb[0].mxu0 %v248
        %v461 = vpop.f32.mrb[0].mxu0
        %v462 = vadd.f32 0.0, %v461
        %v463 = vpop.f32.mrb[0].mxu0
        %464 = vmatprep.mubr.f32.mxu0 0.0
        %465 = vmatmul.mubr.f32.gmra.mrb[0].mxu0 %v251
        %v466 = vpop.f32.mrb[0].mxu0
        %v467 = vadd.f32 0.0, %v466
        %v468 = vpop.f32.mrb[0].mxu0
        %469 = vmatprep.mubr.f32.mxu0 0.0
        %470 = vmatmul.mubr.f32.gmra.mrb[0].mxu0 %v254
        %v471 = vpop.f32.mrb[0].mxu0
        %v472 = vadd.f32 0.0, %v471
        %v473 = vpop.f32.mrb[0].mxu0
        %474 = vmatprep.mubr.f32.mxu0 0.0
        %475 = vmatmul.mubr.f32.gmra.mrb[0].mxu0 %v257
        %v476 = vpop.f32.mrb[0].mxu0
        %v477 = vadd.f32 0.0, %v476
        %v478 = vpop.f32.mrb[0].mxu0
        %479 = vmatprep.mubr.f32.mxu0 0.0
        %480 = vmatmul.mubr.f32.gmra.mrb[0].mxu0 %v260
        %v481 = vpop.f32.mrb[0].mxu0
        %v482 = vadd.f32 0.0, %v481
        %v483 = vpop.f32.mrb[0].mxu0
        %484 = vmatprep.mubr.f32.mxu0 0.0
        %485 = vmatmul.mubr.f32.gmra.mrb[0].mxu0 %v263
        %v486 = vpop.f32.mrb[0].mxu0
        %v487 = vadd.f32 0.0, %v486
        %v488 = vpop.f32.mrb[0].mxu0
        %489 = vdwg.mxu0
        %s490 = scalar_lea.vmem [#allocation2], 72
        %491 = vst [vmem:[%s490 + $0x1] sm:$0xff] %v452
        %492 = vst [vmem:[%s490 + $0x9] sm:$0xff] %v457
        %493 = vst [vmem:[%s490 + $0x11] sm:$0xff] %v462
        %494 = vst [vmem:[%s490 + $0x19] sm:$0xff] %v467
        %495 = vst [vmem:[%s490 + $0x21] sm:$0xff] %v472
        %496 = vst [vmem:[%s490 + $0x29] sm:$0xff] %v477
        %497 = vst [vmem:[%s490 + $0x31] sm:$0xff] %v482
        %498 = vst [vmem:[%s490 + $0x39] sm:$0xff] %v487
        %s499 = scalar_lea.vmem %s199, 96
        %v500 = vld [vmem:[%s499] sm:$0xff]
        %v501 = vld [vmem:[%s499 + $0x8] sm:$0xff]
        %v502 = vld [vmem:[%s499 + $0x10] sm:$0xff]
        %v503 = vld [vmem:[%s499 + $0x18] sm:$0xff]
        %v504 = vld [vmem:[%s499 + $0x20] sm:$0xff]
        %v505 = vld [vmem:[%s499 + $0x28] sm:$0xff]
        %506 = vmatprep.subr.mxu0 0.0
        %507 = vmatpush1.msra.mxu0 %v500
        %508 = vmatprep.subr.mxu0 0.0
        %509 = vmatpush1.msra.mxu0 %v501
        %510 = vmatprep.subr.mxu0 0.0
        %511 = vmatpush1.msra.mxu0 %v502
        %512 = vmatprep.subr.mxu0 0.0
        %513 = vmatpush1.msra.mxu0 %v503
        %514 = vmatprep.subr.mxu0 0.0
        %515 = vmatpush1.msra.mxu0 %v504
        %516 = vmatprep.subr.mxu0 0.0
        %517 = vmatpush1.msra.mxu0 %v505
        %518 = vmatprep.subr.mxu0 0.0
        %519 = vmatpush1.msra.mxu0 0.0
        %520 = vmatprep.subr.mxu0 0.0
        %521 = vmatpush1.msra.mxu0 0.0
        %522 = vmatprep.subr.mxu0 0.0
        %523 = vmatpush1.msra.mxu0 0.0
        %524 = vmatprep.subr.mxu0 0.0
        %525 = vmatpush1.msra.mxu0 0.0
        %526 = vmatprep.subr.mxu0 0.0
        %527 = vmatpush1.msra.mxu0 0.0
        %528 = vmatprep.subr.mxu0 0.0
        %529 = vmatpush1.msra.mxu0 0.0
        %530 = vmatprep.subr.mxu0 0.0
        %531 = vmatpush1.msra.mxu0 0.0
        %532 = vmatprep.subr.mxu0 0.0
        %533 = vmatpush1.msra.mxu0 0.0
        %534 = vmatprep.subr.mxu0 0.0
        %535 = vmatpush1.msra.mxu0 0.0
        %536 = vmatprep.subr.mxu0 0.0
        %537 = vmatpush1.msra.mxu0 0.0
        %538 = vmatprep.subr.mxu0 0.0
        %539 = vmatpush1.msra.mxu0 0.0
        %540 = vmatprep.subr.mxu0 0.0
        %541 = vmatpush1.msra.mxu0 0.0
        %542 = vmatprep.subr.mxu0 0.0
        %543 = vmatpush1.msra.mxu0 0.0
        %544 = vmatprep.subr.mxu0 0.0
        %545 = vmatpush1.msra.mxu0 0.0
        %546 = vmatprep.subr.mxu0 0.0
        %547 = vmatpush1.msra.mxu0 0.0
        %548 = vmatprep.subr.mxu0 0.0
        %549 = vmatpush1.msra.mxu0 0.0
        %550 = vmatprep.subr.mxu0 0.0
        %551 = vmatpush1.msra.mxu0 0.0
        %552 = vmatprep.subr.mxu0 0.0
        %553 = vmatpush1.msra.mxu0 0.0
        %554 = vmatprep.subr.mxu0 0.0
        %555 = vmatpush1.msra.mxu0 0.0
        %556 = vmatprep.subr.mxu0 0.0
        %557 = vmatpush1.msra.mxu0 0.0
        %558 = vmatprep.subr.mxu0 0.0
        %559 = vmatpush1.msra.mxu0 0.0
        %560 = vmatprep.subr.mxu0 0.0
        %561 = vmatpush1.msra.mxu0 0.0
        %562 = vmatprep.subr.mxu0 0.0
        %563 = vmatpush1.msra.mxu0 0.0
        %564 = vmatprep.subr.mxu0 0.0
        %565 = vmatpush1.msra.mxu0 0.0
        %566 = vmatprep.subr.mxu0 0.0
        %567 = vmatpush1.msra.mxu0 0.0
        %568 = vmatprep.subr.mxu0 0.0
        %569 = vmatpush1.msra.mxu0 0.0
        %570 = vmatprep.mubr.f32.mxu0 0.0
        %571 = vmatmul.mubr.f32.gmra.mrb[0].mxu0 %v242
        %v572 = vpop.f32.mrb[0].mxu0
        %v573 = vadd.f32 0.0, %v572
        %v574 = vpop.f32.mrb[0].mxu0
        %575 = vmatprep.mubr.f32.mxu0 0.0
        %576 = vmatmul.mubr.f32.gmra.mrb[0].mxu0 %v245
        %v577 = vpop.f32.mrb[0].mxu0
        %v578 = vadd.f32 0.0, %v577
        %v579 = vpop.f32.mrb[0].mxu0
        %580 = vmatprep.mubr.f32.mxu0 0.0
        %581 = vmatmul.mubr.f32.gmra.mrb[0].mxu0 %v248
        %v582 = vpop.f32.mrb[0].mxu0
        %v583 = vadd.f32 0.0, %v582
        %v584 = vpop.f32.mrb[0].mxu0
        %585 = vmatprep.mubr.f32.mxu0 0.0
        %586 = vmatmul.mubr.f32.gmra.mrb[0].mxu0 %v251
        %v587 = vpop.f32.mrb[0].mxu0
        %v588 = vadd.f32 0.0, %v587
        %v589 = vpop.f32.mrb[0].mxu0
        %590 = vmatprep.mubr.f32.mxu0 0.0
        %591 = vmatmul.mubr.f32.gmra.mrb[0].mxu0 %v254
        %v592 = vpop.f32.mrb[0].mxu0
        %v593 = vadd.f32 0.0, %v592
        %v594 = vpop.f32.mrb[0].mxu0
        %595 = vmatprep.mubr.f32.mxu0 0.0
        %596 = vmatmul.mubr.f32.gmra.mrb[0].mxu0 %v257
        %v597 = vpop.f32.mrb[0].mxu0
        %v598 = vadd.f32 0.0, %v597
        %v599 = vpop.f32.mrb[0].mxu0
        %600 = vmatprep.mubr.f32.mxu0 0.0
        %601 = vmatmul.mubr.f32.gmra.mrb[0].mxu0 %v260
        %v602 = vpop.f32.mrb[0].mxu0
        %v603 = vadd.f32 0.0, %v602
        %v604 = vpop.f32.mrb[0].mxu0
        %605 = vmatprep.mubr.f32.mxu0 0.0
        %606 = vmatmul.mubr.f32.gmra.mrb[0].mxu0 %v263
        %v607 = vpop.f32.mrb[0].mxu0
        %v608 = vadd.f32 0.0, %v607
        %v609 = vpop.f32.mrb[0].mxu0
        %610 = vdwg.mxu0
        %s611 = scalar_lea.vmem [#allocation2], 144
        %612 = vst [vmem:[%s611 + $0x1] sm:$0xff] %v573
        %613 = vst [vmem:[%s611 + $0x9] sm:$0xff] %v578
        %614 = vst [vmem:[%s611 + $0x11] sm:$0xff] %v583
        %615 = vst [vmem:[%s611 + $0x19] sm:$0xff] %v588
        %616 = vst [vmem:[%s611 + $0x21] sm:$0xff] %v593
        %617 = vst [vmem:[%s611 + $0x29] sm:$0xff] %v598
        %618 = vst [vmem:[%s611 + $0x31] sm:$0xff] %v603
        %619 = vst [vmem:[%s611 + $0x39] sm:$0xff] %v608
        %s620 = scalar_lea.vmem %s199, 144
        %v621 = vld [vmem:[%s620] sm:$0xff]
        %v622 = vld [vmem:[%s620 + $0x8] sm:$0xff]
        %v623 = vld [vmem:[%s620 + $0x10] sm:$0xff]
        %v624 = vld [vmem:[%s620 + $0x18] sm:$0xff]
        %v625 = vld [vmem:[%s620 + $0x20] sm:$0xff]
        %v626 = vld [vmem:[%s620 + $0x28] sm:$0xff]
        %627 = vmatprep.subr.mxu0 0.0
        %628 = vmatpush1.msra.mxu0 %v621
        %629 = vmatprep.subr.mxu0 0.0
        %630 = vmatpush1.msra.mxu0 %v622
        %631 = vmatprep.subr.mxu0 0.0
        %632 = vmatpush1.msra.mxu0 %v623
        %633 = vmatprep.subr.mxu0 0.0
        %634 = vmatpush1.msra.mxu0 %v624
        %635 = vmatprep.subr.mxu0 0.0
        %636 = vmatpush1.msra.mxu0 %v625
        %637 = vmatprep.subr.mxu0 0.0
        %638 = vmatpush1.msra.mxu0 %v626
        %639 = vmatprep.subr.mxu0 0.0
        %640 = vmatpush1.msra.mxu0 0.0
        %641 = vmatprep.subr.mxu0 0.0
        %642 = vmatpush1.msra.mxu0 0.0
        %643 = vmatprep.subr.mxu0 0.0
        %644 = vmatpush1.msra.mxu0 0.0
        %645 = vmatprep.subr.mxu0 0.0
        %646 = vmatpush1.msra.mxu0 0.0
        %647 = vmatprep.subr.mxu0 0.0
        %648 = vmatpush1.msra.mxu0 0.0
        %649 = vmatprep.subr.mxu0 0.0
        %650 = vmatpush1.msra.mxu0 0.0
        %651 = vmatprep.subr.mxu0 0.0
        %652 = vmatpush1.msra.mxu0 0.0
        %653 = vmatprep.subr.mxu0 0.0
        %654 = vmatpush1.msra.mxu0 0.0
        %655 = vmatprep.subr.mxu0 0.0
        %656 = vmatpush1.msra.mxu0 0.0
        %657 = vmatprep.subr.mxu0 0.0
        %658 = vmatpush1.msra.mxu0 0.0
        %659 = vmatprep.subr.mxu0 0.0
        %660 = vmatpush1.msra.mxu0 0.0
        %661 = vmatprep.subr.mxu0 0.0
        %662 = vmatpush1.msra.mxu0 0.0
        %663 = vmatprep.subr.mxu0 0.0
        %664 = vmatpush1.msra.mxu0 0.0
        %665 = vmatprep.subr.mxu0 0.0
        %666 = vmatpush1.msra.mxu0 0.0
        %667 = vmatprep.subr.mxu0 0.0
        %668 = vmatpush1.msra.mxu0 0.0
        %669 = vmatprep.subr.mxu0 0.0
        %670 = vmatpush1.msra.mxu0 0.0
        %671 = vmatprep.subr.mxu0 0.0
        %672 = vmatpush1.msra.mxu0 0.0
        %673 = vmatprep.subr.mxu0 0.0
        %674 = vmatpush1.msra.mxu0 0.0
        %675 = vmatprep.subr.mxu0 0.0
        %676 = vmatpush1.msra.mxu0 0.0
        %677 = vmatprep.subr.mxu0 0.0
        %678 = vmatpush1.msra.mxu0 0.0
        %679 = vmatprep.subr.mxu0 0.0
        %680 = vmatpush1.msra.mxu0 0.0
        %681 = vmatprep.subr.mxu0 0.0
        %682 = vmatpush1.msra.mxu0 0.0
        %683 = vmatprep.subr.mxu0 0.0
        %684 = vmatpush1.msra.mxu0 0.0
        %685 = vmatprep.subr.mxu0 0.0
        %686 = vmatpush1.msra.mxu0 0.0
        %687 = vmatprep.subr.mxu0 0.0
        %688 = vmatpush1.msra.mxu0 0.0
        %689 = vmatprep.subr.mxu0 0.0
        %690 = vmatpush1.msra.mxu0 0.0
        %691 = vmatprep.mubr.f32.mxu0 0.0
        %692 = vmatmul.mubr.f32.gmra.mrb[0].mxu0 %v242
        %v693 = vpop.f32.mrb[0].mxu0
        %v694 = vadd.f32 0.0, %v693
        %v695 = vpop.f32.mrb[0].mxu0
        %696 = vmatprep.mubr.f32.mxu0 0.0
        %697 = vmatmul.mubr.f32.gmra.mrb[0].mxu0 %v245
        %v698 = vpop.f32.mrb[0].mxu0
        %v699 = vadd.f32 0.0, %v698
        %v700 = vpop.f32.mrb[0].mxu0
        %701 = vmatprep.mubr.f32.mxu0 0.0
        %702 = vmatmul.mubr.f32.gmra.mrb[0].mxu0 %v248
        %v703 = vpop.f32.mrb[0].mxu0
        %v704 = vadd.f32 0.0, %v703
        %v705 = vpop.f32.mrb[0].mxu0
        %706 = vmatprep.mubr.f32.mxu0 0.0
        %707 = vmatmul.mubr.f32.gmra.mrb[0].mxu0 %v251
        %v708 = vpop.f32.mrb[0].mxu0
        %v709 = vadd.f32 0.0, %v708
        %v710 = vpop.f32.mrb[0].mxu0
        %711 = vmatprep.mubr.f32.mxu0 0.0
        %712 = vmatmul.mubr.f32.gmra.mrb[0].mxu0 %v254
        %v713 = vpop.f32.mrb[0].mxu0
        %v714 = vadd.f32 0.0, %v713
        %v715 = vpop.f32.mrb[0].mxu0
        %716 = vmatprep.mubr.f32.mxu0 0.0
        %717 = vmatmul.mubr.f32.gmra.mrb[0].mxu0 %v257
        %v718 = vpop.f32.mrb[0].mxu0
        %v719 = vadd.f32 0.0, %v718
        %v720 = vpop.f32.mrb[0].mxu0
        %721 = vmatprep.mubr.f32.mxu0 0.0
        %722 = vmatmul.mubr.f32.gmra.mrb[0].mxu0 %v260
        %v723 = vpop.f32.mrb[0].mxu0
        %v724 = vadd.f32 0.0, %v723
        %v725 = vpop.f32.mrb[0].mxu0
        %726 = vmatprep.mubr.f32.mxu0 0.0
        %727 = vmatmul.mubr.f32.gmra.mrb[0].mxu0 %v263
        %v728 = vpop.f32.mrb[0].mxu0
        %v729 = vadd.f32 0.0, %v728
        %v730 = vpop.f32.mrb[0].mxu0
        %731 = vdwg.mxu0
        %s732 = scalar_lea.vmem [#allocation2], 216
        %733 = vst [vmem:[%s732 + $0x1] sm:$0xff] %v694
        %734 = vst [vmem:[%s732 + $0x9] sm:$0xff] %v699
        %735 = vst [vmem:[%s732 + $0x11] sm:$0xff] %v704
        %736 = vst [vmem:[%s732 + $0x19] sm:$0xff] %v709
        %737 = vst [vmem:[%s732 + $0x21] sm:$0xff] %v714
        %738 = vst [vmem:[%s732 + $0x29] sm:$0xff] %v719
        %739 = vst [vmem:[%s732 + $0x31] sm:$0xff] %v724
        %740 = vst [vmem:[%s732 + $0x39] sm:$0xff] %v729
        %s741 = scalar_lea.vmem %s199, 192
        %v742 = vld [vmem:[%s741] sm:$0xff]
        %v743 = vld [vmem:[%s741 + $0x8] sm:$0xff]
        %v744 = vld [vmem:[%s741 + $0x10] sm:$0xff]
        %v745 = vld [vmem:[%s741 + $0x18] sm:$0xff]
        %v746 = vld [vmem:[%s741 + $0x20] sm:$0xff]
        %v747 = vld [vmem:[%s741 + $0x28] sm:$0xff]
        %748 = vmatprep.subr.mxu0 0.0
        %749 = vmatpush1.msra.mxu0 %v742
        %750 = vmatprep.subr.mxu0 0.0
        %751 = vmatpush1.msra.mxu0 %v743
        %752 = vmatprep.subr.mxu0 0.0
        %753 = vmatpush1.msra.mxu0 %v744
        %754 = vmatprep.subr.mxu0 0.0
        %755 = vmatpush1.msra.mxu0 %v745
        %756 = vmatprep.subr.mxu0 0.0
        %757 = vmatpush1.msra.mxu0 %v746
        %758 = vmatprep.subr.mxu0 0.0
        %759 = vmatpush1.msra.mxu0 %v747
        %760 = vmatprep.subr.mxu0 0.0
        %761 = vmatpush1.msra.mxu0 0.0
        %762 = vmatprep.subr.mxu0 0.0
        %763 = vmatpush1.msra.mxu0 0.0
        %764 = vmatprep.subr.mxu0 0.0
        %765 = vmatpush1.msra.mxu0 0.0
        %766 = vmatprep.subr.mxu0 0.0
        %767 = vmatpush1.msra.mxu0 0.0
        %768 = vmatprep.subr.mxu0 0.0
        %769 = vmatpush1.msra.mxu0 0.0
        %770 = vmatprep.subr.mxu0 0.0
        %771 = vmatpush1.msra.mxu0 0.0
        %772 = vmatprep.subr.mxu0 0.0
        %773 = vmatpush1.msra.mxu0 0.0
        %774 = vmatprep.subr.mxu0 0.0
        %775 = vmatpush1.msra.mxu0 0.0
        %776 = vmatprep.subr.mxu0 0.0
        %777 = vmatpush1.msra.mxu0 0.0
        %778 = vmatprep.subr.mxu0 0.0
        %779 = vmatpush1.msra.mxu0 0.0
        %780 = vmatprep.subr.mxu0 0.0
        %781 = vmatpush1.msra.mxu0 0.0
        %782 = vmatprep.subr.mxu0 0.0
        %783 = vmatpush1.msra.mxu0 0.0
        %784 = vmatprep.subr.mxu0 0.0
        %785 = vmatpush1.msra.mxu0 0.0
        %786 = vmatprep.subr.mxu0 0.0
        %787 = vmatpush1.msra.mxu0 0.0
        %788 = vmatprep.subr.mxu0 0.0
        %789 = vmatpush1.msra.mxu0 0.0
        %790 = vmatprep.subr.mxu0 0.0
        %791 = vmatpush1.msra.mxu0 0.0
        %792 = vmatprep.subr.mxu0 0.0
        %793 = vmatpush1.msra.mxu0 0.0
        %794 = vmatprep.subr.mxu0 0.0
        %795 = vmatpush1.msra.mxu0 0.0
        %796 = vmatprep.subr.mxu0 0.0
        %797 = vmatpush1.msra.mxu0 0.0
        %798 = vmatprep.subr.mxu0 0.0
        %799 = vmatpush1.msra.mxu0 0.0
        %800 = vmatprep.subr.mxu0 0.0
        %801 = vmatpush1.msra.mxu0 0.0
        %802 = vmatprep.subr.mxu0 0.0
        %803 = vmatpush1.msra.mxu0 0.0
        %804 = vmatprep.subr.mxu0 0.0
        %805 = vmatpush1.msra.mxu0 0.0
        %806 = vmatprep.subr.mxu0 0.0
        %807 = vmatpush1.msra.mxu0 0.0
        %808 = vmatprep.subr.mxu0 0.0
        %809 = vmatpush1.msra.mxu0 0.0
        %810 = vmatprep.subr.mxu0 0.0
        %811 = vmatpush1.msra.mxu0 0.0
        %812 = vmatprep.mubr.f32.mxu0 0.0
        %813 = vmatmul.mubr.f32.gmra.mrb[0].mxu0 %v242
        %v814 = vpop.f32.mrb[0].mxu0
        %v815 = vadd.f32 0.0, %v814
        %v816 = vpop.f32.mrb[0].mxu0
        %817 = vmatprep.mubr.f32.mxu0 0.0
        %818 = vmatmul.mubr.f32.gmra.mrb[0].mxu0 %v245
        %v819 = vpop.f32.mrb[0].mxu0
        %v820 = vadd.f32 0.0, %v819
        %v821 = vpop.f32.mrb[0].mxu0
        %822 = vmatprep.mubr.f32.mxu0 0.0
        %823 = vmatmul.mubr.f32.gmra.mrb[0].mxu0 %v248
        %v824 = vpop.f32.mrb[0].mxu0
        %v825 = vadd.f32 0.0, %v824
        %v826 = vpop.f32.mrb[0].mxu0
        %827 = vmatprep.mubr.f32.mxu0 0.0
        %828 = vmatmul.mubr.f32.gmra.mrb[0].mxu0 %v251
        %v829 = vpop.f32.mrb[0].mxu0
        %v830 = vadd.f32 0.0, %v829
        %v831 = vpop.f32.mrb[0].mxu0
        %832 = vmatprep.mubr.f32.mxu0 0.0
        %833 = vmatmul.mubr.f32.gmra.mrb[0].mxu0 %v254
        %v834 = vpop.f32.mrb[0].mxu0
        %v835 = vadd.f32 0.0, %v834
        %v836 = vpop.f32.mrb[0].mxu0
        %837 = vmatprep.mubr.f32.mxu0 0.0
        %838 = vmatmul.mubr.f32.gmra.mrb[0].mxu0 %v257
        %v839 = vpop.f32.mrb[0].mxu0
        %v840 = vadd.f32 0.0, %v839
        %v841 = vpop.f32.mrb[0].mxu0
        %842 = vmatprep.mubr.f32.mxu0 0.0
        %843 = vmatmul.mubr.f32.gmra.mrb[0].mxu0 %v260
        %v844 = vpop.f32.mrb[0].mxu0
        %v845 = vadd.f32 0.0, %v844
        %v846 = vpop.f32.mrb[0].mxu0
        %847 = vmatprep.mubr.f32.mxu0 0.0
        %848 = vmatmul.mubr.f32.gmra.mrb[0].mxu0 %v263
        %v849 = vpop.f32.mrb[0].mxu0
        %v850 = vadd.f32 0.0, %v849
        %v851 = vpop.f32.mrb[0].mxu0
        %852 = vdwg.mxu0
        %s853 = scalar_lea.vmem [#allocation2], 288
        %854 = vst [vmem:[%s853 + $0x1] sm:$0xff] %v815
        %855 = vst [vmem:[%s853 + $0x9] sm:$0xff] %v820
        %856 = vst [vmem:[%s853 + $0x11] sm:$0xff] %v825
        %857 = vst [vmem:[%s853 + $0x19] sm:$0xff] %v830
        %858 = vst [vmem:[%s853 + $0x21] sm:$0xff] %v835
        %859 = vst [vmem:[%s853 + $0x29] sm:$0xff] %v840
        %860 = vst [vmem:[%s853 + $0x31] sm:$0xff] %v845
        %861 = vst [vmem:[%s853 + $0x39] sm:$0xff] %v850
        %s862 = scalar_lea.vmem %s199, 240
        %v863 = vld [vmem:[%s862] sm:$0xff]
        %v864 = vld [vmem:[%s862 + $0x8] sm:$0xff]
        %v865 = vld [vmem:[%s862 + $0x10] sm:$0xff]
        %v866 = vld [vmem:[%s862 + $0x18] sm:$0xff]
        %v867 = vld [vmem:[%s862 + $0x20] sm:$0xff]
        %v868 = vld [vmem:[%s862 + $0x28] sm:$0xff]
        %869 = vmatprep.subr.mxu0 0.0
        %870 = vmatpush1.msra.mxu0 %v863
        %871 = vmatprep.subr.mxu0 0.0
        %872 = vmatpush1.msra.mxu0 %v864
        %873 = vmatprep.subr.mxu0 0.0
        %874 = vmatpush1.msra.mxu0 %v865
        %875 = vmatprep.subr.mxu0 0.0
        %876 = vmatpush1.msra.mxu0 %v866
        %877 = vmatprep.subr.mxu0 0.0
        %878 = vmatpush1.msra.mxu0 %v867
        %879 = vmatprep.subr.mxu0 0.0
        %880 = vmatpush1.msra.mxu0 %v868
        %881 = vmatprep.subr.mxu0 0.0
        %882 = vmatpush1.msra.mxu0 0.0
        %883 = vmatprep.subr.mxu0 0.0
        %884 = vmatpush1.msra.mxu0 0.0
        %885 = vmatprep.subr.mxu0 0.0
        %886 = vmatpush1.msra.mxu0 0.0
        %887 = vmatprep.subr.mxu0 0.0
        %888 = vmatpush1.msra.mxu0 0.0
        %889 = vmatprep.subr.mxu0 0.0
        %890 = vmatpush1.msra.mxu0 0.0
        %891 = vmatprep.subr.mxu0 0.0
        %892 = vmatpush1.msra.mxu0 0.0
        %893 = vmatprep.subr.mxu0 0.0
        %894 = vmatpush1.msra.mxu0 0.0
        %895 = vmatprep.subr.mxu0 0.0
        %896 = vmatpush1.msra.mxu0 0.0
        %897 = vmatprep.subr.mxu0 0.0
        %898 = vmatpush1.msra.mxu0 0.0
        %899 = vmatprep.subr.mxu0 0.0
        %900 = vmatpush1.msra.mxu0 0.0
        %901 = vmatprep.subr.mxu0 0.0
        %902 = vmatpush1.msra.mxu0 0.0
        %903 = vmatprep.subr.mxu0 0.0
        %904 = vmatpush1.msra.mxu0 0.0
        %905 = vmatprep.subr.mxu0 0.0
        %906 = vmatpush1.msra.mxu0 0.0
        %907 = vmatprep.subr.mxu0 0.0
        %908 = vmatpush1.msra.mxu0 0.0
        %909 = vmatprep.subr.mxu0 0.0
        %910 = vmatpush1.msra.mxu0 0.0
        %911 = vmatprep.subr.mxu0 0.0
        %912 = vmatpush1.msra.mxu0 0.0
        %913 = vmatprep.subr.mxu0 0.0
        %914 = vmatpush1.msra.mxu0 0.0
        %915 = vmatprep.subr.mxu0 0.0
        %916 = vmatpush1.msra.mxu0 0.0
        %917 = vmatprep.subr.mxu0 0.0
        %918 = vmatpush1.msra.mxu0 0.0
        %919 = vmatprep.subr.mxu0 0.0
        %920 = vmatpush1.msra.mxu0 0.0
        %921 = vmatprep.subr.mxu0 0.0
        %922 = vmatpush1.msra.mxu0 0.0
        %923 = vmatprep.subr.mxu0 0.0
        %924 = vmatpush1.msra.mxu0 0.0
        %925 = vmatprep.subr.mxu0 0.0
        %926 = vmatpush1.msra.mxu0 0.0
        %927 = vmatprep.subr.mxu0 0.0
        %928 = vmatpush1.msra.mxu0 0.0
        %929 = vmatprep.subr.mxu0 0.0
        %930 = vmatpush1.msra.mxu0 0.0
        %931 = vmatprep.subr.mxu0 0.0
        %932 = vmatpush1.msra.mxu0 0.0
        %933 = vmatprep.mubr.f32.mxu0 0.0
        %934 = vmatmul.mubr.f32.gmra.mrb[0].mxu0 %v242
        %v935 = vpop.f32.mrb[0].mxu0
        %v936 = vadd.f32 0.0, %v935
        %v937 = vpop.f32.mrb[0].mxu0
        %938 = vmatprep.mubr.f32.mxu0 0.0
        %939 = vmatmul.mubr.f32.gmra.mrb[0].mxu0 %v245
        %v940 = vpop.f32.mrb[0].mxu0
        %v941 = vadd.f32 0.0, %v940
        %v942 = vpop.f32.mrb[0].mxu0
        %943 = vmatprep.mubr.f32.mxu0 0.0
        %944 = vmatmul.mubr.f32.gmra.mrb[0].mxu0 %v248
        %v945 = vpop.f32.mrb[0].mxu0
        %v946 = vadd.f32 0.0, %v945
        %v947 = vpop.f32.mrb[0].mxu0
        %948 = vmatprep.mubr.f32.mxu0 0.0
        %949 = vmatmul.mubr.f32.gmra.mrb[0].mxu0 %v251
        %v950 = vpop.f32.mrb[0].mxu0
        %v951 = vadd.f32 0.0, %v950
        %v952 = vpop.f32.mrb[0].mxu0
        %953 = vmatprep.mubr.f32.mxu0 0.0
        %954 = vmatmul.mubr.f32.gmra.mrb[0].mxu0 %v254
        %v955 = vpop.f32.mrb[0].mxu0
        %v956 = vadd.f32 0.0, %v955
        %v957 = vpop.f32.mrb[0].mxu0
        %958 = vmatprep.mubr.f32.mxu0 0.0
        %959 = vmatmul.mubr.f32.gmra.mrb[0].mxu0 %v257
        %v960 = vpop.f32.mrb[0].mxu0
        %v961 = vadd.f32 0.0, %v960
        %v962 = vpop.f32.mrb[0].mxu0
        %963 = vmatprep.mubr.f32.mxu0 0.0
        %964 = vmatmul.mubr.f32.gmra.mrb[0].mxu0 %v260
        %v965 = vpop.f32.mrb[0].mxu0
        %v966 = vadd.f32 0.0, %v965
        %v967 = vpop.f32.mrb[0].mxu0
        %968 = vmatprep.mubr.f32.mxu0 0.0
        %969 = vmatmul.mubr.f32.gmra.mrb[0].mxu0 %v263
        %v970 = vpop.f32.mrb[0].mxu0
        %v971 = vadd.f32 0.0, %v970
        %v972 = vpop.f32.mrb[0].mxu0
        %973 = vdwg.mxu0
        %s974 = scalar_lea.vmem [#allocation2], 360
        %975 = vst [vmem:[%s974 + $0x1] sm:$0xff] %v936
        %976 = vst [vmem:[%s974 + $0x9] sm:$0xff] %v941
        %977 = vst [vmem:[%s974 + $0x11] sm:$0xff] %v946
        %978 = vst [vmem:[%s974 + $0x19] sm:$0xff] %v951
        %979 = vst [vmem:[%s974 + $0x21] sm:$0xff] %v956
        %980 = vst [vmem:[%s974 + $0x29] sm:$0xff] %v961
        %981 = vst [vmem:[%s974 + $0x31] sm:$0xff] %v966
        %982 = vst [vmem:[%s974 + $0x39] sm:$0xff] %v971
        %s983 = scalar_lea.vmem %s199, 288
        %v984 = vld [vmem:[%s983] sm:$0xff]
        %v985 = vld [vmem:[%s983 + $0x8] sm:$0xff]
        %v986 = vld [vmem:[%s983 + $0x10] sm:$0xff]
        %v987 = vld [vmem:[%s983 + $0x18] sm:$0xff]
        %v988 = vld [vmem:[%s983 + $0x20] sm:$0xff]
        %v989 = vld [vmem:[%s983 + $0x28] sm:$0xff]
        %990 = vmatprep.subr.mxu0 0.0
        %991 = vmatpush1.msra.mxu0 %v984
        %992 = vmatprep.subr.mxu0 0.0
        %993 = vmatpush1.msra.mxu0 %v985
        %994 = vmatprep.subr.mxu0 0.0
        %995 = vmatpush1.msra.mxu0 %v986
        %996 = vmatprep.subr.mxu0 0.0
        %997 = vmatpush1.msra.mxu0 %v987
        %998 = vmatprep.subr.mxu0 0.0
        %999 = vmatpush1.msra.mxu0 %v988
        %1000 = vmatprep.subr.mxu0 0.0
        %1001 = vmatpush1.msra.mxu0 %v989
        %1002 = vmatprep.subr.mxu0 0.0
        %1003 = vmatpush1.msra.mxu0 0.0
        %1004 = vmatprep.subr.mxu0 0.0
        %1005 = vmatpush1.msra.mxu0 0.0
        %1006 = vmatprep.subr.mxu0 0.0
        %1007 = vmatpush1.msra.mxu0 0.0
        %1008 = vmatprep.subr.mxu0 0.0
        %1009 = vmatpush1.msra.mxu0 0.0
        %1010 = vmatprep.subr.mxu0 0.0
        %1011 = vmatpush1.msra.mxu0 0.0
        %1012 = vmatprep.subr.mxu0 0.0
        %1013 = vmatpush1.msra.mxu0 0.0
        %1014 = vmatprep.subr.mxu0 0.0
        %1015 = vmatpush1.msra.mxu0 0.0
        %1016 = vmatprep.subr.mxu0 0.0
        %1017 = vmatpush1.msra.mxu0 0.0
        %1018 = vmatprep.subr.mxu0 0.0
        %1019 = vmatpush1.msra.mxu0 0.0
        %1020 = vmatprep.subr.mxu0 0.0
        %1021 = vmatpush1.msra.mxu0 0.0
        %1022 = vmatprep.subr.mxu0 0.0
        %1023 = vmatpush1.msra.mxu0 0.0
        %1024 = vmatprep.subr.mxu0 0.0
        %1025 = vmatpush1.msra.mxu0 0.0
        %1026 = vmatprep.subr.mxu0 0.0
        %1027 = vmatpush1.msra.mxu0 0.0
        %1028 = vmatprep.subr.mxu0 0.0
        %1029 = vmatpush1.msra.mxu0 0.0
        %1030 = vmatprep.subr.mxu0 0.0
        %1031 = vmatpush1.msra.mxu0 0.0
        %1032 = vmatprep.subr.mxu0 0.0
        %1033 = vmatpush1.msra.mxu0 0.0
        %1034 = vmatprep.subr.mxu0 0.0
        %1035 = vmatpush1.msra.mxu0 0.0
        %1036 = vmatprep.subr.mxu0 0.0
        %1037 = vmatpush1.msra.mxu0 0.0
        %1038 = vmatprep.subr.mxu0 0.0
        %1039 = vmatpush1.msra.mxu0 0.0
        %1040 = vmatprep.subr.mxu0 0.0
        %1041 = vmatpush1.msra.mxu0 0.0
        %1042 = vmatprep.subr.mxu0 0.0
        %1043 = vmatpush1.msra.mxu0 0.0
        %1044 = vmatprep.subr.mxu0 0.0
        %1045 = vmatpush1.msra.mxu0 0.0
        %1046 = vmatprep.subr.mxu0 0.0
        %1047 = vmatpush1.msra.mxu0 0.0
        %1048 = vmatprep.subr.mxu0 0.0
        %1049 = vmatpush1.msra.mxu0 0.0
        %1050 = vmatprep.subr.mxu0 0.0
        %1051 = vmatpush1.msra.mxu0 0.0
        %1052 = vmatprep.subr.mxu0 0.0
        %1053 = vmatpush1.msra.mxu0 0.0
        %1054 = vmatprep.mubr.f32.mxu0 0.0
        %1055 = vmatmul.mubr.f32.gmra.mrb[0].mxu0 %v242
        %v1056 = vpop.f32.mrb[0].mxu0
        %v1057 = vadd.f32 0.0, %v1056
        %v1058 = vpop.f32.mrb[0].mxu0
        %1059 = vmatprep.mubr.f32.mxu0 0.0
        %1060 = vmatmul.mubr.f32.gmra.mrb[0].mxu0 %v245
        %v1061 = vpop.f32.mrb[0].mxu0
        %v1062 = vadd.f32 0.0, %v1061
        %v1063 = vpop.f32.mrb[0].mxu0
        %1064 = vmatprep.mubr.f32.mxu0 0.0
        %1065 = vmatmul.mubr.f32.gmra.mrb[0].mxu0 %v248
        %v1066 = vpop.f32.mrb[0].mxu0
        %v1067 = vadd.f32 0.0, %v1066
        %v1068 = vpop.f32.mrb[0].mxu0
        %1069 = vmatprep.mubr.f32.mxu0 0.0
        %1070 = vmatmul.mubr.f32.gmra.mrb[0].mxu0 %v251
        %v1071 = vpop.f32.mrb[0].mxu0
        %v1072 = vadd.f32 0.0, %v1071
        %v1073 = vpop.f32.mrb[0].mxu0
        %1074 = vmatprep.mubr.f32.mxu0 0.0
        %1075 = vmatmul.mubr.f32.gmra.mrb[0].mxu0 %v254
        %v1076 = vpop.f32.mrb[0].mxu0
        %v1077 = vadd.f32 0.0, %v1076
        %v1078 = vpop.f32.mrb[0].mxu0
        %1079 = vmatprep.mubr.f32.mxu0 0.0
        %1080 = vmatmul.mubr.f32.gmra.mrb[0].mxu0 %v257
        %v1081 = vpop.f32.mrb[0].mxu0
        %v1082 = vadd.f32 0.0, %v1081
        %v1083 = vpop.f32.mrb[0].mxu0
        %1084 = vmatprep.mubr.f32.mxu0 0.0
        %1085 = vmatmul.mubr.f32.gmra.mrb[0].mxu0 %v260
        %v1086 = vpop.f32.mrb[0].mxu0
        %v1087 = vadd.f32 0.0, %v1086
        %v1088 = vpop.f32.mrb[0].mxu0
        %1089 = vmatprep.mubr.f32.mxu0 0.0
        %1090 = vmatmul.mubr.f32.gmra.mrb[0].mxu0 %v263
        %v1091 = vpop.f32.mrb[0].mxu0
        %v1092 = vadd.f32 0.0, %v1091
        %v1093 = vpop.f32.mrb[0].mxu0
        %1094 = vdwg.mxu0
        %s1095 = scalar_lea.vmem [#allocation2], 432
        %1096 = vst [vmem:[%s1095 + $0x1] sm:$0xff] %v1057
        %1097 = vst [vmem:[%s1095 + $0x9] sm:$0xff] %v1062
        %1098 = vst [vmem:[%s1095 + $0x11] sm:$0xff] %v1067
        %1099 = vst [vmem:[%s1095 + $0x19] sm:$0xff] %v1072
        %1100 = vst [vmem:[%s1095 + $0x21] sm:$0xff] %v1077
        %1101 = vst [vmem:[%s1095 + $0x29] sm:$0xff] %v1082
        %1102 = vst [vmem:[%s1095 + $0x31] sm:$0xff] %v1087
        %1103 = vst [vmem:[%s1095 + $0x39] sm:$0xff] %v1092
        %s1104 = scalar_lea.vmem %s199, 336
        %v1105 = vld [vmem:[%s1104] sm:$0xff]
        %v1106 = vld [vmem:[%s1104 + $0x8] sm:$0xff]
        %v1107 = vld [vmem:[%s1104 + $0x10] sm:$0xff]
        %v1108 = vld [vmem:[%s1104 + $0x18] sm:$0xff]
        %v1109 = vld [vmem:[%s1104 + $0x20] sm:$0xff]
        %v1110 = vld [vmem:[%s1104 + $0x28] sm:$0xff]
        %1111 = vmatprep.subr.mxu0 0.0
        %1112 = vmatpush1.msra.mxu0 %v1105
        %1113 = vmatprep.subr.mxu0 0.0
        %1114 = vmatpush1.msra.mxu0 %v1106
        %1115 = vmatprep.subr.mxu0 0.0
        %1116 = vmatpush1.msra.mxu0 %v1107
        %1117 = vmatprep.subr.mxu0 0.0
        %1118 = vmatpush1.msra.mxu0 %v1108
        %1119 = vmatprep.subr.mxu0 0.0
        %1120 = vmatpush1.msra.mxu0 %v1109
        %1121 = vmatprep.subr.mxu0 0.0
        %1122 = vmatpush1.msra.mxu0 %v1110
        %1123 = vmatprep.subr.mxu0 0.0
        %1124 = vmatpush1.msra.mxu0 0.0
        %1125 = vmatprep.subr.mxu0 0.0
        %1126 = vmatpush1.msra.mxu0 0.0
        %1127 = vmatprep.subr.mxu0 0.0
        %1128 = vmatpush1.msra.mxu0 0.0
        %1129 = vmatprep.subr.mxu0 0.0
        %1130 = vmatpush1.msra.mxu0 0.0
        %1131 = vmatprep.subr.mxu0 0.0
        %1132 = vmatpush1.msra.mxu0 0.0
        %1133 = vmatprep.subr.mxu0 0.0
        %1134 = vmatpush1.msra.mxu0 0.0
        %1135 = vmatprep.subr.mxu0 0.0
        %1136 = vmatpush1.msra.mxu0 0.0
        %1137 = vmatprep.subr.mxu0 0.0
        %1138 = vmatpush1.msra.mxu0 0.0
        %1139 = vmatprep.subr.mxu0 0.0
        %1140 = vmatpush1.msra.mxu0 0.0
        %1141 = vmatprep.subr.mxu0 0.0
        %1142 = vmatpush1.msra.mxu0 0.0
        %1143 = vmatprep.subr.mxu0 0.0
        %1144 = vmatpush1.msra.mxu0 0.0
        %1145 = vmatprep.subr.mxu0 0.0
        %1146 = vmatpush1.msra.mxu0 0.0
        %1147 = vmatprep.subr.mxu0 0.0
        %1148 = vmatpush1.msra.mxu0 0.0
        %1149 = vmatprep.subr.mxu0 0.0
        %1150 = vmatpush1.msra.mxu0 0.0
        %1151 = vmatprep.subr.mxu0 0.0
        %1152 = vmatpush1.msra.mxu0 0.0
        %1153 = vmatprep.subr.mxu0 0.0
        %1154 = vmatpush1.msra.mxu0 0.0
        %1155 = vmatprep.subr.mxu0 0.0
        %1156 = vmatpush1.msra.mxu0 0.0
        %1157 = vmatprep.subr.mxu0 0.0
        %1158 = vmatpush1.msra.mxu0 0.0
        %1159 = vmatprep.subr.mxu0 0.0
        %1160 = vmatpush1.msra.mxu0 0.0
        %1161 = vmatprep.subr.mxu0 0.0
        %1162 = vmatpush1.msra.mxu0 0.0
        %1163 = vmatprep.subr.mxu0 0.0
        %1164 = vmatpush1.msra.mxu0 0.0
        %1165 = vmatprep.subr.mxu0 0.0
        %1166 = vmatpush1.msra.mxu0 0.0
        %1167 = vmatprep.subr.mxu0 0.0
        %1168 = vmatpush1.msra.mxu0 0.0
        %1169 = vmatprep.subr.mxu0 0.0
        %1170 = vmatpush1.msra.mxu0 0.0
        %1171 = vmatprep.subr.mxu0 0.0
        %1172 = vmatpush1.msra.mxu0 0.0
        %1173 = vmatprep.subr.mxu0 0.0
        %1174 = vmatpush1.msra.mxu0 0.0
        %1175 = vmatprep.mubr.f32.mxu0 0.0
        %1176 = vmatmul.mubr.f32.gmra.mrb[0].mxu0 %v242
        %v1177 = vpop.f32.mrb[0].mxu0
        %v1178 = vadd.f32 0.0, %v1177
        %v1179 = vpop.f32.mrb[0].mxu0
        %1180 = vmatprep.mubr.f32.mxu0 0.0
        %1181 = vmatmul.mubr.f32.gmra.mrb[0].mxu0 %v245
        %v1182 = vpop.f32.mrb[0].mxu0
        %v1183 = vadd.f32 0.0, %v1182
        %v1184 = vpop.f32.mrb[0].mxu0
        %1185 = vmatprep.mubr.f32.mxu0 0.0
        %1186 = vmatmul.mubr.f32.gmra.mrb[0].mxu0 %v248
        %v1187 = vpop.f32.mrb[0].mxu0
        %v1188 = vadd.f32 0.0, %v1187
        %v1189 = vpop.f32.mrb[0].mxu0
        %1190 = vmatprep.mubr.f32.mxu0 0.0
        %1191 = vmatmul.mubr.f32.gmra.mrb[0].mxu0 %v251
        %v1192 = vpop.f32.mrb[0].mxu0
        %v1193 = vadd.f32 0.0, %v1192
        %v1194 = vpop.f32.mrb[0].mxu0
        %1195 = vmatprep.mubr.f32.mxu0 0.0
        %1196 = vmatmul.mubr.f32.gmra.mrb[0].mxu0 %v254
        %v1197 = vpop.f32.mrb[0].mxu0
        %v1198 = vadd.f32 0.0, %v1197
        %v1199 = vpop.f32.mrb[0].mxu0
        %1200 = vmatprep.mubr.f32.mxu0 0.0
        %1201 = vmatmul.mubr.f32.gmra.mrb[0].mxu0 %v257
        %v1202 = vpop.f32.mrb[0].mxu0
        %v1203 = vadd.f32 0.0, %v1202
        %v1204 = vpop.f32.mrb[0].mxu0
        %1205 = vmatprep.mubr.f32.mxu0 0.0
        %1206 = vmatmul.mubr.f32.gmra.mrb[0].mxu0 %v260
        %v1207 = vpop.f32.mrb[0].mxu0
        %v1208 = vadd.f32 0.0, %v1207
        %v1209 = vpop.f32.mrb[0].mxu0
        %1210 = vmatprep.mubr.f32.mxu0 0.0
        %1211 = vmatmul.mubr.f32.gmra.mrb[0].mxu0 %v263
        %v1212 = vpop.f32.mrb[0].mxu0
        %v1213 = vadd.f32 0.0, %v1212
        %v1214 = vpop.f32.mrb[0].mxu0
        %1215 = vdwg.mxu0
        %s1216 = scalar_lea.vmem [#allocation2], 504
        %1217 = vst [vmem:[%s1216 + $0x1] sm:$0xff] %v1178
        %1218 = vst [vmem:[%s1216 + $0x9] sm:$0xff] %v1183
        %1219 = vst [vmem:[%s1216 + $0x11] sm:$0xff] %v1188
        %1220 = vst [vmem:[%s1216 + $0x19] sm:$0xff] %v1193
        %1221 = vst [vmem:[%s1216 + $0x21] sm:$0xff] %v1198
        %1222 = vst [vmem:[%s1216 + $0x29] sm:$0xff] %v1203
        %1223 = vst [vmem:[%s1216 + $0x31] sm:$0xff] %v1208
        %1224 = vst [vmem:[%s1216 + $0x39] sm:$0xff] %v1213
        %v1225 = vld [vmem:[#allocation2] ss:$2 sm:$0xff]
        %s1226 = scalar_lea.vmem [#allocation2], 16
        %v1227 = vld [vmem:[%s1226] ss:$2 sm:$0xff]
        %s1228 = scalar_lea.vmem [#allocation2], 32
        %v1229 = vld [vmem:[%s1228] ss:$2 sm:$0xff]
        %s1230 = scalar_lea.vmem [#allocation2], 48
        %v1231 = vld [vmem:[%s1230] ss:$2 sm:$0xff]
        %s1232 = scalar_lea.vmem [#allocation2], 72
        %v1233 = vld [vmem:[%s1232] ss:$2 sm:$0xff]
        %s1234 = scalar_lea.vmem [#allocation2], 88
        %v1235 = vld [vmem:[%s1234] ss:$2 sm:$0xff]
        %s1236 = scalar_lea.vmem [#allocation2], 104
        %v1237 = vld [vmem:[%s1236] ss:$2 sm:$0xff]
        %s1238 = scalar_lea.vmem [#allocation2], 120
        %v1239 = vld [vmem:[%s1238] ss:$2 sm:$0xff]
        %s1240 = scalar_lea.vmem [#allocation2], 144
        %v1241 = vld [vmem:[%s1240] ss:$2 sm:$0xff]
        %s1242 = scalar_lea.vmem [#allocation2], 160
        %v1243 = vld [vmem:[%s1242] ss:$2 sm:$0xff]
        %s1244 = scalar_lea.vmem [#allocation2], 176
        %v1245 = vld [vmem:[%s1244] ss:$2 sm:$0xff]
        %s1246 = scalar_lea.vmem [#allocation2], 192
        %v1247 = vld [vmem:[%s1246] ss:$2 sm:$0xff]
        %s1248 = scalar_lea.vmem [#allocation2], 216
        %v1249 = vld [vmem:[%s1248] ss:$2 sm:$0xff]
        %s1250 = scalar_lea.vmem [#allocation2], 232
        %v1251 = vld [vmem:[%s1250] ss:$2 sm:$0xff]
        %s1252 = scalar_lea.vmem [#allocation2], 248
        %v1253 = vld [vmem:[%s1252] ss:$2 sm:$0xff]
        %s1254 = scalar_lea.vmem [#allocation2], 264
        %v1255 = vld [vmem:[%s1254] ss:$2 sm:$0xff]
        %s1256 = scalar_lea.vmem [#allocation2], 288
        %v1257 = vld [vmem:[%s1256] ss:$2 sm:$0xff]
        %s1258 = scalar_lea.vmem [#allocation2], 304
        %v1259 = vld [vmem:[%s1258] ss:$2 sm:$0xff]
        %s1260 = scalar_lea.vmem [#allocation2], 320
        %v1261 = vld [vmem:[%s1260] ss:$2 sm:$0xff]
        %s1262 = scalar_lea.vmem [#allocation2], 336
        %v1263 = vld [vmem:[%s1262] ss:$2 sm:$0xff]
        %s1264 = scalar_lea.vmem [#allocation2], 360
        %v1265 = vld [vmem:[%s1264] ss:$2 sm:$0xff]
        %s1266 = scalar_lea.vmem [#allocation2], 376
        %v1267 = vld [vmem:[%s1266] ss:$2 sm:$0xff]
        %s1268 = scalar_lea.vmem [#allocation2], 392
        %v1269 = vld [vmem:[%s1268] ss:$2 sm:$0xff]
        %s1270 = scalar_lea.vmem [#allocation2], 408
        %v1271 = vld [vmem:[%s1270] ss:$2 sm:$0xff]
        %s1272 = scalar_lea.vmem [#allocation2], 432
        %v1273 = vld [vmem:[%s1272] ss:$2 sm:$0xff]
        %s1274 = scalar_lea.vmem [#allocation2], 448
        %v1275 = vld [vmem:[%s1274] ss:$2 sm:$0xff]
        %s1276 = scalar_lea.vmem [#allocation2], 464
        %v1277 = vld [vmem:[%s1276] ss:$2 sm:$0xff]
        %s1278 = scalar_lea.vmem [#allocation2], 480
        %v1279 = vld [vmem:[%s1278] ss:$2 sm:$0xff]
        %s1280 = scalar_lea.vmem [#allocation2], 504
        %v1281 = vld [vmem:[%s1280] ss:$2 sm:$0xff]
        %s1282 = scalar_lea.vmem [#allocation2], 520
        %v1283 = vld [vmem:[%s1282] ss:$2 sm:$0xff]
        %s1284 = scalar_lea.vmem [#allocation2], 536
        %v1285 = vld [vmem:[%s1284] ss:$2 sm:$0xff]
        %s1286 = scalar_lea.vmem [#allocation2], 552
        %v1287 = vld [vmem:[%s1286] ss:$2 sm:$0xff]
        %v1288 = vpack.c.bf16 %v1227, %v1225
        %v1289 = vpack.c.bf16 %v1231, %v1229
        %v1290 = vpack.c.bf16 %v1235, %v1233
        %v1291 = vpack.c.bf16 %v1239, %v1237
        %v1292 = vpack.c.bf16 %v1243, %v1241
        %v1293 = vpack.c.bf16 %v1247, %v1245
        %v1294 = vpack.c.bf16 %v1251, %v1249
        %v1295 = vpack.c.bf16 %v1255, %v1253
        %v1296 = vpack.c.bf16 %v1259, %v1257
        %v1297 = vpack.c.bf16 %v1263, %v1261
        %v1298 = vpack.c.bf16 %v1267, %v1265
        %v1299 = vpack.c.bf16 %v1271, %v1269
        %v1300 = vpack.c.bf16 %v1275, %v1273
        %v1301 = vpack.c.bf16 %v1279, %v1277
        %v1302 = vpack.c.bf16 %v1283, %v1281
        %v1303 = vpack.c.bf16 %v1287, %v1285
        %v1304 = vld [vmem:[%s2] sm:$0xf]
        %v1305 = vld [vmem:[%s2 + $0x4] sm:$0xf]
        %v1306 = vld [vmem:[%s2 + $0x8] sm:$0xf]
        %v1307 = vld [vmem:[%s2 + $0xc] sm:$0xf]
        %v1308 = vld [vmem:[%s2 + $0x10] sm:$0xf]
        %v1309 = vld [vmem:[%s2 + $0x14] sm:$0xf]
        %v1310 = vld [vmem:[%s2 + $0x18] sm:$0xf]
        %v1311 = vld [vmem:[%s2 + $0x1c] sm:$0xf]
        %v1312 = vld [vmem:[%s2 + $0x20] sm:$0xf]
        %v1313 = vld [vmem:[%s2 + $0x24] sm:$0xf]
        %v1314 = vld [vmem:[%s2 + $0x28] sm:$0xf]
        %v1315 = vld [vmem:[%s2 + $0x2c] sm:$0xf]
        %v1316 = vld [vmem:[%s2 + $0x30] sm:$0xf]
        %v1317 = vld [vmem:[%s2 + $0x34] sm:$0xf]
        %v1318 = vld [vmem:[%s2 + $0x38] sm:$0xf]
        %v1319 = vld [vmem:[%s2 + $0x3c] sm:$0xf]
        %s1320 = scalar_lea.vmem [#allocation2], 1
        %v1321 = vld [vmem:[%s1320] ss:$2 sm:$0xff]
        %s1322 = scalar_lea.vmem [#allocation2], 17
        %v1323 = vld [vmem:[%s1322] ss:$2 sm:$0xff]
        %s1324 = scalar_lea.vmem [#allocation2], 33
        %v1325 = vld [vmem:[%s1324] ss:$2 sm:$0xff]
        %s1326 = scalar_lea.vmem [#allocation2], 49
        %v1327 = vld [vmem:[%s1326] ss:$2 sm:$0xff]
        %s1328 = scalar_lea.vmem [#allocation2], 73
        %v1329 = vld [vmem:[%s1328] ss:$2 sm:$0xff]
        %s1330 = scalar_lea.vmem [#allocation2], 89
        %v1331 = vld [vmem:[%s1330] ss:$2 sm:$0xff]
        %s1332 = scalar_lea.vmem [#allocation2], 105
        %v1333 = vld [vmem:[%s1332] ss:$2 sm:$0xff]
        %s1334 = scalar_lea.vmem [#allocation2], 121
        %v1335 = vld [vmem:[%s1334] ss:$2 sm:$0xff]
        %s1336 = scalar_lea.vmem [#allocation2], 145
        %v1337 = vld [vmem:[%s1336] ss:$2 sm:$0xff]
        %s1338 = scalar_lea.vmem [#allocation2], 161
        %v1339 = vld [vmem:[%s1338] ss:$2 sm:$0xff]
        %s1340 = scalar_lea.vmem [#allocation2], 177
        %v1341 = vld [vmem:[%s1340] ss:$2 sm:$0xff]
        %s1342 = scalar_lea.vmem [#allocation2], 193
        %v1343 = vld [vmem:[%s1342] ss:$2 sm:$0xff]
        %s1344 = scalar_lea.vmem [#allocation2], 217
        %v1345 = vld [vmem:[%s1344] ss:$2 sm:$0xff]
        %s1346 = scalar_lea.vmem [#allocation2], 233
        %v1347 = vld [vmem:[%s1346] ss:$2 sm:$0xff]
        %s1348 = scalar_lea.vmem [#allocation2], 249
        %v1349 = vld [vmem:[%s1348] ss:$2 sm:$0xff]
        %s1350 = scalar_lea.vmem [#allocation2], 265
        %v1351 = vld [vmem:[%s1350] ss:$2 sm:$0xff]
        %s1352 = scalar_lea.vmem [#allocation2], 289
        %v1353 = vld [vmem:[%s1352] ss:$2 sm:$0xff]
        %s1354 = scalar_lea.vmem [#allocation2], 305
        %v1355 = vld [vmem:[%s1354] ss:$2 sm:$0xff]
        %s1356 = scalar_lea.vmem [#allocation2], 321
        %v1357 = vld [vmem:[%s1356] ss:$2 sm:$0xff]
        %s1358 = scalar_lea.vmem [#allocation2], 337
        %v1359 = vld [vmem:[%s1358] ss:$2 sm:$0xff]
        %s1360 = scalar_lea.vmem [#allocation2], 361
        %v1361 = vld [vmem:[%s1360] ss:$2 sm:$0xff]
        %s1362 = scalar_lea.vmem [#allocation2], 377
        %v1363 = vld [vmem:[%s1362] ss:$2 sm:$0xff]
        %s1364 = scalar_lea.vmem [#allocation2], 393
        %v1365 = vld [vmem:[%s1364] ss:$2 sm:$0xff]
        %s1366 = scalar_lea.vmem [#allocation2], 409
        %v1367 = vld [vmem:[%s1366] ss:$2 sm:$0xff]
        %s1368 = scalar_lea.vmem [#allocation2], 433
        %v1369 = vld [vmem:[%s1368] ss:$2 sm:$0xff]
        %s1370 = scalar_lea.vmem [#allocation2], 449
        %v1371 = vld [vmem:[%s1370] ss:$2 sm:$0xff]
        %s1372 = scalar_lea.vmem [#allocation2], 465
        %v1373 = vld [vmem:[%s1372] ss:$2 sm:$0xff]
        %s1374 = scalar_lea.vmem [#allocation2], 481
        %v1375 = vld [vmem:[%s1374] ss:$2 sm:$0xff]
        %s1376 = scalar_lea.vmem [#allocation2], 505
        %v1377 = vld [vmem:[%s1376] ss:$2 sm:$0xff]
        %s1378 = scalar_lea.vmem [#allocation2], 521
        %v1379 = vld [vmem:[%s1378] ss:$2 sm:$0xff]
        %s1380 = scalar_lea.vmem [#allocation2], 537
        %v1381 = vld [vmem:[%s1380] ss:$2 sm:$0xff]
        %s1382 = scalar_lea.vmem [#allocation2], 553
        %v1383 = vld [vmem:[%s1382] ss:$2 sm:$0xff]
        %v1384 = vpack.c.bf16 %v1323, %v1321
        %v1385 = vpack.c.bf16 %v1327, %v1325
        %v1386 = vpack.c.bf16 %v1331, %v1329
        %v1387 = vpack.c.bf16 %v1335, %v1333
        %v1388 = vpack.c.bf16 %v1339, %v1337
        %v1389 = vpack.c.bf16 %v1343, %v1341
        %v1390 = vpack.c.bf16 %v1347, %v1345
        %v1391 = vpack.c.bf16 %v1351, %v1349
        %v1392 = vpack.c.bf16 %v1355, %v1353
        %v1393 = vpack.c.bf16 %v1359, %v1357
        %v1394 = vpack.c.bf16 %v1363, %v1361
        %v1395 = vpack.c.bf16 %v1367, %v1365
        %v1396 = vpack.c.bf16 %v1371, %v1369
        %v1397 = vpack.c.bf16 %v1375, %v1373
        %v1398 = vpack.c.bf16 %v1379, %v1377
        %v1399 = vpack.c.bf16 %v1383, %v1381
        %s1400 = scalar_lea.vmem %s2, 64
        %v1401 = vld [vmem:[%s1400] sm:$0xf]
        %v1402 = vld [vmem:[%s1400 + $0x4] sm:$0xf]
        %v1403 = vld [vmem:[%s1400 + $0x8] sm:$0xf]
        %v1404 = vld [vmem:[%s1400 + $0xc] sm:$0xf]
        %v1405 = vld [vmem:[%s1400 + $0x10] sm:$0xf]
        %v1406 = vld [vmem:[%s1400 + $0x14] sm:$0xf]
        %v1407 = vld [vmem:[%s1400 + $0x18] sm:$0xf]
        %v1408 = vld [vmem:[%s1400 + $0x1c] sm:$0xf]
        %v1409 = vld [vmem:[%s1400 + $0x20] sm:$0xf]
        %v1410 = vld [vmem:[%s1400 + $0x24] sm:$0xf]
        %v1411 = vld [vmem:[%s1400 + $0x28] sm:$0xf]
        %v1412 = vld [vmem:[%s1400 + $0x2c] sm:$0xf]
        %v1413 = vld [vmem:[%s1400 + $0x30] sm:$0xf]
        %v1414 = vld [vmem:[%s1400 + $0x34] sm:$0xf]
        %v1415 = vld [vmem:[%s1400 + $0x38] sm:$0xf]
        %v1416 = vld [vmem:[%s1400 + $0x3c] sm:$0xf]
        %v1433 = vunpack.c.l.b16 %v1401
        %v1434 = vunpack.c.l.b16 %v1402
        %v1435 = vunpack.c.l.b16 %v1403
        %v1436 = vunpack.c.l.b16 %v1404
        %v1437 = vunpack.c.l.b16 %v1405
        %v1438 = vunpack.c.l.b16 %v1406
        %v1439 = vunpack.c.l.b16 %v1407
        %v1440 = vunpack.c.l.b16 %v1408
        %v1441 = vunpack.c.l.b16 %v1409
        %v1442 = vunpack.c.l.b16 %v1410
        %v1443 = vunpack.c.l.b16 %v1411
        %v1444 = vunpack.c.l.b16 %v1412
        %v1445 = vunpack.c.l.b16 %v1413
        %v1446 = vunpack.c.l.b16 %v1414
        %v1447 = vunpack.c.l.b16 %v1415
        %v1448 = vunpack.c.l.b16 %v1416
        %v1449 = vpack.c.b16 %v1434, %v1433
        %v1450 = vpack.c.b16 %v1436, %v1435
        %v1451 = vpack.c.b16 %v1438, %v1437
        %v1452 = vpack.c.b16 %v1440, %v1439
        %v1453 = vpack.c.b16 %v1442, %v1441
        %v1454 = vpack.c.b16 %v1444, %v1443
        %v1455 = vpack.c.b16 %v1446, %v1445
        %v1456 = vpack.c.b16 %v1448, %v1447
        %1465 = vmatprep.subr.bf16.mxu0 0
        %1466 = vmatpush1.bf16.msra.mxu0 %v1449
        %1467 = vmatprep.subr.bf16.mxu0 0
        %1468 = vmatpush1.bf16.msra.mxu0 %v1450
        %1469 = vmatprep.subr.bf16.mxu0 0
        %1470 = vmatpush1.bf16.msra.mxu0 %v1451
        %1471 = vmatprep.subr.bf16.mxu0 0
        %1472 = vmatpush1.bf16.msra.mxu0 %v1452
        %1473 = vmatprep.subr.bf16.mxu0 0
        %1474 = vmatpush1.bf16.msra.mxu0 %v1453
        %1475 = vmatprep.subr.bf16.mxu0 0
        %1476 = vmatpush1.bf16.msra.mxu0 %v1454
        %1477 = vmatprep.subr.bf16.mxu0 0
        %1478 = vmatpush1.bf16.msra.mxu0 %v1455
        %1479 = vmatprep.subr.bf16.mxu0 0
        %1480 = vmatpush1.bf16.msra.mxu0 %v1456
        %1481 = vmatprep.subr.bf16.mxu0 0
        %1482 = vmatpush1.bf16.msra.mxu0 0
        %1483 = vmatprep.subr.bf16.mxu0 0
        %1484 = vmatpush1.bf16.msra.mxu0 0
        %1485 = vmatprep.subr.bf16.mxu0 0
        %1486 = vmatpush1.bf16.msra.mxu0 0
        %1487 = vmatprep.subr.bf16.mxu0 0
        %1488 = vmatpush1.bf16.msra.mxu0 0
        %1489 = vmatprep.subr.bf16.mxu0 0
        %1490 = vmatpush1.bf16.msra.mxu0 0
        %1491 = vmatprep.subr.bf16.mxu0 0
        %1492 = vmatpush1.bf16.msra.mxu0 0
        %1493 = vmatprep.subr.bf16.mxu0 0
        %1494 = vmatpush1.bf16.msra.mxu0 0
        %1495 = vmatprep.subr.bf16.mxu0 0
        %1496 = vmatpush1.bf16.msra.mxu0 0
        %1497 = vmatprep.mubr.bf16.mxu0 0
        %1498 = vmatmul.mubr.bf16.gmra.mrb[0].mxu0 %v1384
        %v1499 = vpop.f32.mrb[0].mxu0
        %v1500 = vadd.f32 0.0, %v1499
        %v1501 = vpop.f32.mrb[0].mxu0
        %v1502 = vpop.f32.mrb[0].mxu0
        %v1503 = vadd.f32 0.0, %v1502
        %v1504 = vpop.f32.mrb[0].mxu0
        %1505 = vmatprep.mubr.bf16.mxu0 0
        %1506 = vmatmul.mubr.bf16.gmra.mrb[0].mxu0 %v1385
        %v1507 = vpop.f32.mrb[0].mxu0
        %v1508 = vadd.f32 0.0, %v1507
        %v1509 = vpop.f32.mrb[0].mxu0
        %v1510 = vpop.f32.mrb[0].mxu0
        %v1511 = vadd.f32 0.0, %v1510
        %v1512 = vpop.f32.mrb[0].mxu0
        %1513 = vmatprep.mubr.bf16.mxu0 0
        %1514 = vmatmul.mubr.bf16.gmra.mrb[0].mxu0 %v1386
        %v1515 = vpop.f32.mrb[0].mxu0
        %v1516 = vadd.f32 0.0, %v1515
        %v1517 = vpop.f32.mrb[0].mxu0
        %v1518 = vpop.f32.mrb[0].mxu0
        %v1519 = vadd.f32 0.0, %v1518
        %v1520 = vpop.f32.mrb[0].mxu0
        %1521 = vmatprep.mubr.bf16.mxu0 0
        %1522 = vmatmul.mubr.bf16.gmra.mrb[0].mxu0 %v1387
        %v1523 = vpop.f32.mrb[0].mxu0
        %v1524 = vadd.f32 0.0, %v1523
        %v1525 = vpop.f32.mrb[0].mxu0
        %v1526 = vpop.f32.mrb[0].mxu0
        %v1527 = vadd.f32 0.0, %v1526
        %v1528 = vpop.f32.mrb[0].mxu0
        %1529 = vmatprep.mubr.bf16.mxu0 0
        %1530 = vmatmul.mubr.bf16.gmra.mrb[0].mxu0 %v1388
        %v1531 = vpop.f32.mrb[0].mxu0
        %v1532 = vadd.f32 0.0, %v1531
        %v1533 = vpop.f32.mrb[0].mxu0
        %v1534 = vpop.f32.mrb[0].mxu0
        %v1535 = vadd.f32 0.0, %v1534
        %v1536 = vpop.f32.mrb[0].mxu0
        %1537 = vmatprep.mubr.bf16.mxu0 0
        %1538 = vmatmul.mubr.bf16.gmra.mrb[0].mxu0 %v1389
        %v1539 = vpop.f32.mrb[0].mxu0
        %v1540 = vadd.f32 0.0, %v1539
        %v1541 = vpop.f32.mrb[0].mxu0
        %v1542 = vpop.f32.mrb[0].mxu0
        %v1543 = vadd.f32 0.0, %v1542
        %v1544 = vpop.f32.mrb[0].mxu0
        %1545 = vmatprep.mubr.bf16.mxu0 0
        %1546 = vmatmul.mubr.bf16.gmra.mrb[0].mxu0 %v1390
        %v1547 = vpop.f32.mrb[0].mxu0
        %v1548 = vadd.f32 0.0, %v1547
        %v1549 = vpop.f32.mrb[0].mxu0
        %v1550 = vpop.f32.mrb[0].mxu0
        %v1551 = vadd.f32 0.0, %v1550
        %v1552 = vpop.f32.mrb[0].mxu0
        %1553 = vmatprep.mubr.bf16.mxu0 0
        %1554 = vmatmul.mubr.bf16.gmra.mrb[0].mxu0 %v1391
        %v1555 = vpop.f32.mrb[0].mxu0
        %v1556 = vadd.f32 0.0, %v1555
        %v1557 = vpop.f32.mrb[0].mxu0
        %v1558 = vpop.f32.mrb[0].mxu0
        %v1559 = vadd.f32 0.0, %v1558
        %v1560 = vpop.f32.mrb[0].mxu0
        %1561 = vmatprep.mubr.bf16.mxu0 0
        %1562 = vmatmul.mubr.bf16.gmra.mrb[0].mxu0 %v1392
        %v1563 = vpop.f32.mrb[0].mxu0
        %v1564 = vadd.f32 0.0, %v1563
        %v1565 = vpop.f32.mrb[0].mxu0
        %v1566 = vpop.f32.mrb[0].mxu0
        %v1567 = vadd.f32 0.0, %v1566
        %v1568 = vpop.f32.mrb[0].mxu0
        %1569 = vmatprep.mubr.bf16.mxu0 0
        %1570 = vmatmul.mubr.bf16.gmra.mrb[0].mxu0 %v1393
        %v1571 = vpop.f32.mrb[0].mxu0
        %v1572 = vadd.f32 0.0, %v1571
        %v1573 = vpop.f32.mrb[0].mxu0
        %v1574 = vpop.f32.mrb[0].mxu0
        %v1575 = vadd.f32 0.0, %v1574
        %v1576 = vpop.f32.mrb[0].mxu0
        %1577 = vmatprep.mubr.bf16.mxu0 0
        %1578 = vmatmul.mubr.bf16.gmra.mrb[0].mxu0 %v1394
        %v1579 = vpop.f32.mrb[0].mxu0
        %v1580 = vadd.f32 0.0, %v1579
        %v1581 = vpop.f32.mrb[0].mxu0
        %v1582 = vpop.f32.mrb[0].mxu0
        %v1583 = vadd.f32 0.0, %v1582
        %v1584 = vpop.f32.mrb[0].mxu0
        %1585 = vmatprep.mubr.bf16.mxu0 0
        %1586 = vmatmul.mubr.bf16.gmra.mrb[0].mxu0 %v1395
        %v1587 = vpop.f32.mrb[0].mxu0
        %v1588 = vadd.f32 0.0, %v1587
        %v1589 = vpop.f32.mrb[0].mxu0
        %v1590 = vpop.f32.mrb[0].mxu0
        %v1591 = vadd.f32 0.0, %v1590
        %v1592 = vpop.f32.mrb[0].mxu0
        %1593 = vmatprep.mubr.bf16.mxu0 0
        %1594 = vmatmul.mubr.bf16.gmra.mrb[0].mxu0 %v1396
        %v1595 = vpop.f32.mrb[0].mxu0
        %v1596 = vadd.f32 0.0, %v1595
        %v1597 = vpop.f32.mrb[0].mxu0
        %v1598 = vpop.f32.mrb[0].mxu0
        %v1599 = vadd.f32 0.0, %v1598
        %v1600 = vpop.f32.mrb[0].mxu0
        %1601 = vmatprep.mubr.bf16.mxu0 0
        %1602 = vmatmul.mubr.bf16.gmra.mrb[0].mxu0 %v1397
        %v1603 = vpop.f32.mrb[0].mxu0
        %v1604 = vadd.f32 0.0, %v1603
        %v1605 = vpop.f32.mrb[0].mxu0
        %v1606 = vpop.f32.mrb[0].mxu0
        %v1607 = vadd.f32 0.0, %v1606
        %v1608 = vpop.f32.mrb[0].mxu0
        %1609 = vmatprep.mubr.bf16.mxu0 0
        %1610 = vmatmul.mubr.bf16.gmra.mrb[0].mxu0 %v1398
        %v1611 = vpop.f32.mrb[0].mxu0
        %v1612 = vadd.f32 0.0, %v1611
        %v1613 = vpop.f32.mrb[0].mxu0
        %v1614 = vpop.f32.mrb[0].mxu0
        %v1615 = vadd.f32 0.0, %v1614
        %v1616 = vpop.f32.mrb[0].mxu0
        %1617 = vmatprep.mubr.bf16.mxu0 0
        %1618 = vmatmul.mubr.bf16.gmra.mrb[0].mxu0 %v1399
        %v1619 = vpop.f32.mrb[0].mxu0
        %v1620 = vadd.f32 0.0, %v1619
        %v1621 = vpop.f32.mrb[0].mxu0
        %v1622 = vpop.f32.mrb[0].mxu0
        %v1623 = vadd.f32 0.0, %v1622
        %v1624 = vpop.f32.mrb[0].mxu0
        %1625 = vdwg.mxu0
        %v1642 = vunpack.c.l.b16 %v1304
        %v1643 = vunpack.c.l.b16 %v1305
        %v1644 = vunpack.c.l.b16 %v1306
        %v1645 = vunpack.c.l.b16 %v1307
        %v1646 = vunpack.c.l.b16 %v1308
        %v1647 = vunpack.c.l.b16 %v1309
        %v1648 = vunpack.c.l.b16 %v1310
        %v1649 = vunpack.c.l.b16 %v1311
        %v1650 = vunpack.c.l.b16 %v1312
        %v1651 = vunpack.c.l.b16 %v1313
        %v1652 = vunpack.c.l.b16 %v1314
        %v1653 = vunpack.c.l.b16 %v1315
        %v1654 = vunpack.c.l.b16 %v1316
        %v1655 = vunpack.c.l.b16 %v1317
        %v1656 = vunpack.c.l.b16 %v1318
        %v1657 = vunpack.c.l.b16 %v1319
        %v1658 = vpack.c.b16 %v1643, %v1642
        %v1659 = vpack.c.b16 %v1645, %v1644
        %v1660 = vpack.c.b16 %v1647, %v1646
        %v1661 = vpack.c.b16 %v1649, %v1648
        %v1662 = vpack.c.b16 %v1651, %v1650
        %v1663 = vpack.c.b16 %v1653, %v1652
        %v1664 = vpack.c.b16 %v1655, %v1654
        %v1665 = vpack.c.b16 %v1657, %v1656
        %1674 = vmatprep.subr.bf16.mxu0 0
        %1675 = vmatpush1.bf16.msra.mxu0 %v1658
        %1676 = vmatprep.subr.bf16.mxu0 0
        %1677 = vmatpush1.bf16.msra.mxu0 %v1659
        %1678 = vmatprep.subr.bf16.mxu0 0
        %1679 = vmatpush1.bf16.msra.mxu0 %v1660
        %1680 = vmatprep.subr.bf16.mxu0 0
        %1681 = vmatpush1.bf16.msra.mxu0 %v1661
        %1682 = vmatprep.subr.bf16.mxu0 0
        %1683 = vmatpush1.bf16.msra.mxu0 %v1662
        %1684 = vmatprep.subr.bf16.mxu0 0
        %1685 = vmatpush1.bf16.msra.mxu0 %v1663
        %1686 = vmatprep.subr.bf16.mxu0 0
        %1687 = vmatpush1.bf16.msra.mxu0 %v1664
        %1688 = vmatprep.subr.bf16.mxu0 0
        %1689 = vmatpush1.bf16.msra.mxu0 %v1665
        %1690 = vmatprep.subr.bf16.mxu0 0
        %1691 = vmatpush1.bf16.msra.mxu0 0
        %1692 = vmatprep.subr.bf16.mxu0 0
        %1693 = vmatpush1.bf16.msra.mxu0 0
        %1694 = vmatprep.subr.bf16.mxu0 0
        %1695 = vmatpush1.bf16.msra.mxu0 0
        %1696 = vmatprep.subr.bf16.mxu0 0
        %1697 = vmatpush1.bf16.msra.mxu0 0
        %1698 = vmatprep.subr.bf16.mxu0 0
        %1699 = vmatpush1.bf16.msra.mxu0 0
        %1700 = vmatprep.subr.bf16.mxu0 0
        %1701 = vmatpush1.bf16.msra.mxu0 0
        %1702 = vmatprep.subr.bf16.mxu0 0
        %1703 = vmatpush1.bf16.msra.mxu0 0
        %1704 = vmatprep.subr.bf16.mxu0 0
        %1705 = vmatpush1.bf16.msra.mxu0 0
        %1706 = vmatprep.mubr.bf16.mxu0 0
        %1707 = vmatmul.mubr.bf16.gmra.mrb[0].mxu0 %v1288
        %v1708 = vpop.f32.mrb[0].mxu0
        %v1709 = vadd.f32 %v1500, %v1708
        %v1710 = vpop.f32.mrb[0].mxu0
        %v1711 = vpop.f32.mrb[0].mxu0
        %v1712 = vadd.f32 %v1503, %v1711
        %v1713 = vpop.f32.mrb[0].mxu0
        %1714 = vmatprep.mubr.bf16.mxu0 0
        %1715 = vmatmul.mubr.bf16.gmra.mrb[0].mxu0 %v1289
        %v1716 = vpop.f32.mrb[0].mxu0
        %v1717 = vadd.f32 %v1508, %v1716
        %v1718 = vpop.f32.mrb[0].mxu0
        %v1719 = vpop.f32.mrb[0].mxu0
        %v1720 = vadd.f32 %v1511, %v1719
        %v1721 = vpop.f32.mrb[0].mxu0
        %1722 = vmatprep.mubr.bf16.mxu0 0
        %1723 = vmatmul.mubr.bf16.gmra.mrb[0].mxu0 %v1290
        %v1724 = vpop.f32.mrb[0].mxu0
        %v1725 = vadd.f32 %v1516, %v1724
        %v1726 = vpop.f32.mrb[0].mxu0
        %v1727 = vpop.f32.mrb[0].mxu0
        %v1728 = vadd.f32 %v1519, %v1727
        %v1729 = vpop.f32.mrb[0].mxu0
        %1730 = vmatprep.mubr.bf16.mxu0 0
        %1731 = vmatmul.mubr.bf16.gmra.mrb[0].mxu0 %v1291
        %v1732 = vpop.f32.mrb[0].mxu0
        %v1733 = vadd.f32 %v1524, %v1732
        %v1734 = vpop.f32.mrb[0].mxu0
        %v1735 = vpop.f32.mrb[0].mxu0
        %v1736 = vadd.f32 %v1527, %v1735
        %v1737 = vpop.f32.mrb[0].mxu0
        %1738 = vmatprep.mubr.bf16.mxu0 0
        %1739 = vmatmul.mubr.bf16.gmra.mrb[0].mxu0 %v1292
        %v1740 = vpop.f32.mrb[0].mxu0
        %v1741 = vadd.f32 %v1532, %v1740
        %v1742 = vpop.f32.mrb[0].mxu0
        %v1743 = vpop.f32.mrb[0].mxu0
        %v1744 = vadd.f32 %v1535, %v1743
        %v1745 = vpop.f32.mrb[0].mxu0
        %1746 = vmatprep.mubr.bf16.mxu0 0
        %1747 = vmatmul.mubr.bf16.gmra.mrb[0].mxu0 %v1293
        %v1748 = vpop.f32.mrb[0].mxu0
        %v1749 = vadd.f32 %v1540, %v1748
        %v1750 = vpop.f32.mrb[0].mxu0
        %v1751 = vpop.f32.mrb[0].mxu0
        %v1752 = vadd.f32 %v1543, %v1751
        %v1753 = vpop.f32.mrb[0].mxu0
        %1754 = vmatprep.mubr.bf16.mxu0 0
        %1755 = vmatmul.mubr.bf16.gmra.mrb[0].mxu0 %v1294
        %v1756 = vpop.f32.mrb[0].mxu0
        %v1757 = vadd.f32 %v1548, %v1756
        %v1758 = vpop.f32.mrb[0].mxu0
        %v1759 = vpop.f32.mrb[0].mxu0
        %v1760 = vadd.f32 %v1551, %v1759
        %v1761 = vpop.f32.mrb[0].mxu0
        %1762 = vmatprep.mubr.bf16.mxu0 0
        %1763 = vmatmul.mubr.bf16.gmra.mrb[0].mxu0 %v1295
        %v1764 = vpop.f32.mrb[0].mxu0
        %v1765 = vadd.f32 %v1556, %v1764
        %v1766 = vpop.f32.mrb[0].mxu0
        %v1767 = vpop.f32.mrb[0].mxu0
        %v1768 = vadd.f32 %v1559, %v1767
        %v1769 = vpop.f32.mrb[0].mxu0
        %1770 = vmatprep.mubr.bf16.mxu0 0
        %1771 = vmatmul.mubr.bf16.gmra.mrb[0].mxu0 %v1296
        %v1772 = vpop.f32.mrb[0].mxu0
        %v1773 = vadd.f32 %v1564, %v1772
        %v1774 = vpop.f32.mrb[0].mxu0
        %v1775 = vpop.f32.mrb[0].mxu0
        %v1776 = vadd.f32 %v1567, %v1775
        %v1777 = vpop.f32.mrb[0].mxu0
        %1778 = vmatprep.mubr.bf16.mxu0 0
        %1779 = vmatmul.mubr.bf16.gmra.mrb[0].mxu0 %v1297
        %v1780 = vpop.f32.mrb[0].mxu0
        %v1781 = vadd.f32 %v1572, %v1780
        %v1782 = vpop.f32.mrb[0].mxu0
        %v1783 = vpop.f32.mrb[0].mxu0
        %v1784 = vadd.f32 %v1575, %v1783
        %v1785 = vpop.f32.mrb[0].mxu0
        %1786 = vmatprep.mubr.bf16.mxu0 0
        %1787 = vmatmul.mubr.bf16.gmra.mrb[0].mxu0 %v1298
        %v1788 = vpop.f32.mrb[0].mxu0
        %v1789 = vadd.f32 %v1580, %v1788
        %v1790 = vpop.f32.mrb[0].mxu0
        %v1791 = vpop.f32.mrb[0].mxu0
        %v1792 = vadd.f32 %v1583, %v1791
        %v1793 = vpop.f32.mrb[0].mxu0
        %1794 = vmatprep.mubr.bf16.mxu0 0
        %1795 = vmatmul.mubr.bf16.gmra.mrb[0].mxu0 %v1299
        %v1796 = vpop.f32.mrb[0].mxu0
        %v1797 = vadd.f32 %v1588, %v1796
        %v1798 = vpop.f32.mrb[0].mxu0
        %v1799 = vpop.f32.mrb[0].mxu0
        %v1800 = vadd.f32 %v1591, %v1799
        %v1801 = vpop.f32.mrb[0].mxu0
        %1802 = vmatprep.mubr.bf16.mxu0 0
        %1803 = vmatmul.mubr.bf16.gmra.mrb[0].mxu0 %v1300
        %v1804 = vpop.f32.mrb[0].mxu0
        %v1805 = vadd.f32 %v1596, %v1804
        %v1806 = vpop.f32.mrb[0].mxu0
        %v1807 = vpop.f32.mrb[0].mxu0
        %v1808 = vadd.f32 %v1599, %v1807
        %v1809 = vpop.f32.mrb[0].mxu0
        %1810 = vmatprep.mubr.bf16.mxu0 0
        %1811 = vmatmul.mubr.bf16.gmra.mrb[0].mxu0 %v1301
        %v1812 = vpop.f32.mrb[0].mxu0
        %v1813 = vadd.f32 %v1604, %v1812
        %v1814 = vpop.f32.mrb[0].mxu0
        %v1815 = vpop.f32.mrb[0].mxu0
        %v1816 = vadd.f32 %v1607, %v1815
        %v1817 = vpop.f32.mrb[0].mxu0
        %1818 = vmatprep.mubr.bf16.mxu0 0
        %1819 = vmatmul.mubr.bf16.gmra.mrb[0].mxu0 %v1302
        %v1820 = vpop.f32.mrb[0].mxu0
        %v1821 = vadd.f32 %v1612, %v1820
        %v1822 = vpop.f32.mrb[0].mxu0
        %v1823 = vpop.f32.mrb[0].mxu0
        %v1824 = vadd.f32 %v1615, %v1823
        %v1825 = vpop.f32.mrb[0].mxu0
        %1826 = vmatprep.mubr.bf16.mxu0 0
        %1827 = vmatmul.mubr.bf16.gmra.mrb[0].mxu0 %v1303
        %v1828 = vpop.f32.mrb[0].mxu0
        %v1829 = vadd.f32 %v1620, %v1828
        %v1830 = vpop.f32.mrb[0].mxu0
        %v1831 = vpop.f32.mrb[0].mxu0
        %v1832 = vadd.f32 %v1623, %v1831
        %v1833 = vpop.f32.mrb[0].mxu0
        %1834 = vdwg.mxu0
        %s1835 = scalar_lea.vmem [#allocation2], 2
        %v1836 = vld [vmem:[%s1835] ss:$2 sm:$0xff]
        %s1837 = scalar_lea.vmem [#allocation2], 18
        %v1838 = vld [vmem:[%s1837] ss:$2 sm:$0xff]
        %s1839 = scalar_lea.vmem [#allocation2], 34
        %v1840 = vld [vmem:[%s1839] ss:$2 sm:$0xff]
        %s1841 = scalar_lea.vmem [#allocation2], 50
        %v1842 = vld [vmem:[%s1841] ss:$2 sm:$0xff]
        %s1843 = scalar_lea.vmem [#allocation2], 74
        %v1844 = vld [vmem:[%s1843] ss:$2 sm:$0xff]
        %s1845 = scalar_lea.vmem [#allocation2], 90
        %v1846 = vld [vmem:[%s1845] ss:$2 sm:$0xff]
        %s1847 = scalar_lea.vmem [#allocation2], 106
        %v1848 = vld [vmem:[%s1847] ss:$2 sm:$0xff]
        %s1849 = scalar_lea.vmem [#allocation2], 122
        %v1850 = vld [vmem:[%s1849] ss:$2 sm:$0xff]
        %s1851 = scalar_lea.vmem [#allocation2], 146
        %v1852 = vld [vmem:[%s1851] ss:$2 sm:$0xff]
        %s1853 = scalar_lea.vmem [#allocation2], 162
        %v1854 = vld [vmem:[%s1853] ss:$2 sm:$0xff]
        %s1855 = scalar_lea.vmem [#allocation2], 178
        %v1856 = vld [vmem:[%s1855] ss:$2 sm:$0xff]
        %s1857 = scalar_lea.vmem [#allocation2], 194
        %v1858 = vld [vmem:[%s1857] ss:$2 sm:$0xff]
        %s1859 = scalar_lea.vmem [#allocation2], 218
        %v1860 = vld [vmem:[%s1859] ss:$2 sm:$0xff]
        %s1861 = scalar_lea.vmem [#allocation2], 234
        %v1862 = vld [vmem:[%s1861] ss:$2 sm:$0xff]
        %s1863 = scalar_lea.vmem [#allocation2], 250
        %v1864 = vld [vmem:[%s1863] ss:$2 sm:$0xff]
        %s1865 = scalar_lea.vmem [#allocation2], 266
        %v1866 = vld [vmem:[%s1865] ss:$2 sm:$0xff]
        %s1867 = scalar_lea.vmem [#allocation2], 290
        %v1868 = vld [vmem:[%s1867] ss:$2 sm:$0xff]
        %s1869 = scalar_lea.vmem [#allocation2], 306
        %v1870 = vld [vmem:[%s1869] ss:$2 sm:$0xff]
        %s1871 = scalar_lea.vmem [#allocation2], 322
        %v1872 = vld [vmem:[%s1871] ss:$2 sm:$0xff]
        %s1873 = scalar_lea.vmem [#allocation2], 338
        %v1874 = vld [vmem:[%s1873] ss:$2 sm:$0xff]
        %s1875 = scalar_lea.vmem [#allocation2], 362
        %v1876 = vld [vmem:[%s1875] ss:$2 sm:$0xff]
        %s1877 = scalar_lea.vmem [#allocation2], 378
        %v1878 = vld [vmem:[%s1877] ss:$2 sm:$0xff]
        %s1879 = scalar_lea.vmem [#allocation2], 394
        %v1880 = vld [vmem:[%s1879] ss:$2 sm:$0xff]
        %s1881 = scalar_lea.vmem [#allocation2], 410
        %v1882 = vld [vmem:[%s1881] ss:$2 sm:$0xff]
        %s1883 = scalar_lea.vmem [#allocation2], 434
        %v1884 = vld [vmem:[%s1883] ss:$2 sm:$0xff]
        %s1885 = scalar_lea.vmem [#allocation2], 450
        %v1886 = vld [vmem:[%s1885] ss:$2 sm:$0xff]
        %s1887 = scalar_lea.vmem [#allocation2], 466
        %v1888 = vld [vmem:[%s1887] ss:$2 sm:$0xff]
        %s1889 = scalar_lea.vmem [#allocation2], 482
        %v1890 = vld [vmem:[%s1889] ss:$2 sm:$0xff]
        %s1891 = scalar_lea.vmem [#allocation2], 506
        %v1892 = vld [vmem:[%s1891] ss:$2 sm:$0xff]
        %s1893 = scalar_lea.vmem [#allocation2], 522
        %v1894 = vld [vmem:[%s1893] ss:$2 sm:$0xff]
        %s1895 = scalar_lea.vmem [#allocation2], 538
        %v1896 = vld [vmem:[%s1895] ss:$2 sm:$0xff]
        %s1897 = scalar_lea.vmem [#allocation2], 554
        %v1898 = vld [vmem:[%s1897] ss:$2 sm:$0xff]
        %v1899 = vpack.c.bf16 %v1838, %v1836
        %v1900 = vpack.c.bf16 %v1842, %v1840
        %v1901 = vpack.c.bf16 %v1846, %v1844
        %v1902 = vpack.c.bf16 %v1850, %v1848
        %v1903 = vpack.c.bf16 %v1854, %v1852
        %v1904 = vpack.c.bf16 %v1858, %v1856
        %v1905 = vpack.c.bf16 %v1862, %v1860
        %v1906 = vpack.c.bf16 %v1866, %v1864
        %v1907 = vpack.c.bf16 %v1870, %v1868
        %v1908 = vpack.c.bf16 %v1874, %v1872
        %v1909 = vpack.c.bf16 %v1878, %v1876
        %v1910 = vpack.c.bf16 %v1882, %v1880
        %v1911 = vpack.c.bf16 %v1886, %v1884
        %v1912 = vpack.c.bf16 %v1890, %v1888
        %v1913 = vpack.c.bf16 %v1894, %v1892
        %v1914 = vpack.c.bf16 %v1898, %v1896
        %s1915 = scalar_lea.vmem %s2, 128
        %v1916 = vld [vmem:[%s1915] sm:$0xf]
        %v1917 = vld [vmem:[%s1915 + $0x4] sm:$0xf]
        %v1918 = vld [vmem:[%s1915 + $0x8] sm:$0xf]
        %v1919 = vld [vmem:[%s1915 + $0xc] sm:$0xf]
        %v1920 = vld [vmem:[%s1915 + $0x10] sm:$0xf]
        %v1921 = vld [vmem:[%s1915 + $0x14] sm:$0xf]
        %v1922 = vld [vmem:[%s1915 + $0x18] sm:$0xf]
        %v1923 = vld [vmem:[%s1915 + $0x1c] sm:$0xf]
        %v1924 = vld [vmem:[%s1915 + $0x20] sm:$0xf]
        %v1925 = vld [vmem:[%s1915 + $0x24] sm:$0xf]
        %v1926 = vld [vmem:[%s1915 + $0x28] sm:$0xf]
        %v1927 = vld [vmem:[%s1915 + $0x2c] sm:$0xf]
        %v1928 = vld [vmem:[%s1915 + $0x30] sm:$0xf]
        %v1929 = vld [vmem:[%s1915 + $0x34] sm:$0xf]
        %v1930 = vld [vmem:[%s1915 + $0x38] sm:$0xf]
        %v1931 = vld [vmem:[%s1915 + $0x3c] sm:$0xf]
        %v1948 = vunpack.c.l.b16 %v1916
        %v1949 = vunpack.c.l.b16 %v1917
        %v1950 = vunpack.c.l.b16 %v1918
        %v1951 = vunpack.c.l.b16 %v1919
        %v1952 = vunpack.c.l.b16 %v1920
        %v1953 = vunpack.c.l.b16 %v1921
        %v1954 = vunpack.c.l.b16 %v1922
        %v1955 = vunpack.c.l.b16 %v1923
        %v1956 = vunpack.c.l.b16 %v1924
        %v1957 = vunpack.c.l.b16 %v1925
        %v1958 = vunpack.c.l.b16 %v1926
        %v1959 = vunpack.c.l.b16 %v1927
        %v1960 = vunpack.c.l.b16 %v1928
        %v1961 = vunpack.c.l.b16 %v1929
        %v1962 = vunpack.c.l.b16 %v1930
        %v1963 = vunpack.c.l.b16 %v1931
        %v1964 = vpack.c.b16 %v1949, %v1948
        %v1965 = vpack.c.b16 %v1951, %v1950
        %v1966 = vpack.c.b16 %v1953, %v1952
        %v1967 = vpack.c.b16 %v1955, %v1954
        %v1968 = vpack.c.b16 %v1957, %v1956
        %v1969 = vpack.c.b16 %v1959, %v1958
        %v1970 = vpack.c.b16 %v1961, %v1960
        %v1971 = vpack.c.b16 %v1963, %v1962
        %1980 = vmatprep.subr.bf16.mxu0 0
        %1981 = vmatpush1.bf16.msra.mxu0 %v1964
        %1982 = vmatprep.subr.bf16.mxu0 0
        %1983 = vmatpush1.bf16.msra.mxu0 %v1965
        %1984 = vmatprep.subr.bf16.mxu0 0
        %1985 = vmatpush1.bf16.msra.mxu0 %v1966
        %1986 = vmatprep.subr.bf16.mxu0 0
        %1987 = vmatpush1.bf16.msra.mxu0 %v1967
        %1988 = vmatprep.subr.bf16.mxu0 0
        %1989 = vmatpush1.bf16.msra.mxu0 %v1968
        %1990 = vmatprep.subr.bf16.mxu0 0
        %1991 = vmatpush1.bf16.msra.mxu0 %v1969
        %1992 = vmatprep.subr.bf16.mxu0 0
        %1993 = vmatpush1.bf16.msra.mxu0 %v1970
        %1994 = vmatprep.subr.bf16.mxu0 0
        %1995 = vmatpush1.bf16.msra.mxu0 %v1971
        %1996 = vmatprep.subr.bf16.mxu0 0
        %1997 = vmatpush1.bf16.msra.mxu0 0
        %1998 = vmatprep.subr.bf16.mxu0 0
        %1999 = vmatpush1.bf16.msra.mxu0 0
        %2000 = vmatprep.subr.bf16.mxu0 0
        %2001 = vmatpush1.bf16.msra.mxu0 0
        %2002 = vmatprep.subr.bf16.mxu0 0
        %2003 = vmatpush1.bf16.msra.mxu0 0
        %2004 = vmatprep.subr.bf16.mxu0 0
        %2005 = vmatpush1.bf16.msra.mxu0 0
        %2006 = vmatprep.subr.bf16.mxu0 0
        %2007 = vmatpush1.bf16.msra.mxu0 0
        %2008 = vmatprep.subr.bf16.mxu0 0
        %2009 = vmatpush1.bf16.msra.mxu0 0
        %2010 = vmatprep.subr.bf16.mxu0 0
        %2011 = vmatpush1.bf16.msra.mxu0 0
        %2012 = vmatprep.mubr.bf16.mxu0 0
        %2013 = vmatmul.mubr.bf16.gmra.mrb[0].mxu0 %v1899
        %v2014 = vpop.f32.mrb[0].mxu0
        %v2015 = vadd.f32 0.0, %v2014
        %v2016 = vpop.f32.mrb[0].mxu0
        %v2017 = vpop.f32.mrb[0].mxu0
        %v2018 = vadd.f32 0.0, %v2017
        %v2019 = vpop.f32.mrb[0].mxu0
        %2020 = vmatprep.mubr.bf16.mxu0 0
        %2021 = vmatmul.mubr.bf16.gmra.mrb[0].mxu0 %v1900
        %v2022 = vpop.f32.mrb[0].mxu0
        %v2023 = vadd.f32 0.0, %v2022
        %v2024 = vpop.f32.mrb[0].mxu0
        %v2025 = vpop.f32.mrb[0].mxu0
        %v2026 = vadd.f32 0.0, %v2025
        %v2027 = vpop.f32.mrb[0].mxu0
        %2028 = vmatprep.mubr.bf16.mxu0 0
        %2029 = vmatmul.mubr.bf16.gmra.mrb[0].mxu0 %v1901
        %v2030 = vpop.f32.mrb[0].mxu0
        %v2031 = vadd.f32 0.0, %v2030
        %v2032 = vpop.f32.mrb[0].mxu0
        %v2033 = vpop.f32.mrb[0].mxu0
        %v2034 = vadd.f32 0.0, %v2033
        %v2035 = vpop.f32.mrb[0].mxu0
        %2036 = vmatprep.mubr.bf16.mxu0 0
        %2037 = vmatmul.mubr.bf16.gmra.mrb[0].mxu0 %v1902
        %v2038 = vpop.f32.mrb[0].mxu0
        %v2039 = vadd.f32 0.0, %v2038
        %v2040 = vpop.f32.mrb[0].mxu0
        %v2041 = vpop.f32.mrb[0].mxu0
        %v2042 = vadd.f32 0.0, %v2041
        %v2043 = vpop.f32.mrb[0].mxu0
        %2044 = vmatprep.mubr.bf16.mxu0 0
        %2045 = vmatmul.mubr.bf16.gmra.mrb[0].mxu0 %v1903
        %v2046 = vpop.f32.mrb[0].mxu0
        %v2047 = vadd.f32 0.0, %v2046
        %v2048 = vpop.f32.mrb[0].mxu0
        %v2049 = vpop.f32.mrb[0].mxu0
        %v2050 = vadd.f32 0.0, %v2049
        %v2051 = vpop.f32.mrb[0].mxu0
        %2052 = vmatprep.mubr.bf16.mxu0 0
        %2053 = vmatmul.mubr.bf16.gmra.mrb[0].mxu0 %v1904
        %v2054 = vpop.f32.mrb[0].mxu0
        %v2055 = vadd.f32 0.0, %v2054
        %v2056 = vpop.f32.mrb[0].mxu0
        %v2057 = vpop.f32.mrb[0].mxu0
        %v2058 = vadd.f32 0.0, %v2057
        %v2059 = vpop.f32.mrb[0].mxu0
        %2060 = vmatprep.mubr.bf16.mxu0 0
        %2061 = vmatmul.mubr.bf16.gmra.mrb[0].mxu0 %v1905
        %v2062 = vpop.f32.mrb[0].mxu0
        %v2063 = vadd.f32 0.0, %v2062
        %v2064 = vpop.f32.mrb[0].mxu0
        %v2065 = vpop.f32.mrb[0].mxu0
        %v2066 = vadd.f32 0.0, %v2065
        %v2067 = vpop.f32.mrb[0].mxu0
        %2068 = vmatprep.mubr.bf16.mxu0 0
        %2069 = vmatmul.mubr.bf16.gmra.mrb[0].mxu0 %v1906
        %v2070 = vpop.f32.mrb[0].mxu0
        %v2071 = vadd.f32 0.0, %v2070
        %v2072 = vpop.f32.mrb[0].mxu0
        %v2073 = vpop.f32.mrb[0].mxu0
        %v2074 = vadd.f32 0.0, %v2073
        %v2075 = vpop.f32.mrb[0].mxu0
        %2076 = vmatprep.mubr.bf16.mxu0 0
        %2077 = vmatmul.mubr.bf16.gmra.mrb[0].mxu0 %v1907
        %v2078 = vpop.f32.mrb[0].mxu0
        %v2079 = vadd.f32 0.0, %v2078
        %v2080 = vpop.f32.mrb[0].mxu0
        %v2081 = vpop.f32.mrb[0].mxu0
        %v2082 = vadd.f32 0.0, %v2081
        %v2083 = vpop.f32.mrb[0].mxu0
        %2084 = vmatprep.mubr.bf16.mxu0 0
        %2085 = vmatmul.mubr.bf16.gmra.mrb[0].mxu0 %v1908
        %v2086 = vpop.f32.mrb[0].mxu0
        %v2087 = vadd.f32 0.0, %v2086
        %v2088 = vpop.f32.mrb[0].mxu0
        %v2089 = vpop.f32.mrb[0].mxu0
        %v2090 = vadd.f32 0.0, %v2089
        %v2091 = vpop.f32.mrb[0].mxu0
        %2092 = vmatprep.mubr.bf16.mxu0 0
        %2093 = vmatmul.mubr.bf16.gmra.mrb[0].mxu0 %v1909
        %v2094 = vpop.f32.mrb[0].mxu0
        %v2095 = vadd.f32 0.0, %v2094
        %v2096 = vpop.f32.mrb[0].mxu0
        %v2097 = vpop.f32.mrb[0].mxu0
        %v2098 = vadd.f32 0.0, %v2097
        %v2099 = vpop.f32.mrb[0].mxu0
        %2100 = vmatprep.mubr.bf16.mxu0 0
        %2101 = vmatmul.mubr.bf16.gmra.mrb[0].mxu0 %v1910
        %v2102 = vpop.f32.mrb[0].mxu0
        %v2103 = vadd.f32 0.0, %v2102
        %v2104 = vpop.f32.mrb[0].mxu0
        %v2105 = vpop.f32.mrb[0].mxu0
        %v2106 = vadd.f32 0.0, %v2105
        %v2107 = vpop.f32.mrb[0].mxu0
        %2108 = vmatprep.mubr.bf16.mxu0 0
        %2109 = vmatmul.mubr.bf16.gmra.mrb[0].mxu0 %v1911
        %v2110 = vpop.f32.mrb[0].mxu0
        %v2111 = vadd.f32 0.0, %v2110
        %v2112 = vpop.f32.mrb[0].mxu0
        %v2113 = vpop.f32.mrb[0].mxu0
        %v2114 = vadd.f32 0.0, %v2113
        %v2115 = vpop.f32.mrb[0].mxu0
        %2116 = vmatprep.mubr.bf16.mxu0 0
        %2117 = vmatmul.mubr.bf16.gmra.mrb[0].mxu0 %v1912
        %v2118 = vpop.f32.mrb[0].mxu0
        %v2119 = vadd.f32 0.0, %v2118
        %v2120 = vpop.f32.mrb[0].mxu0
        %v2121 = vpop.f32.mrb[0].mxu0
        %v2122 = vadd.f32 0.0, %v2121
        %v2123 = vpop.f32.mrb[0].mxu0
        %2124 = vmatprep.mubr.bf16.mxu0 0
        %2125 = vmatmul.mubr.bf16.gmra.mrb[0].mxu0 %v1913
        %v2126 = vpop.f32.mrb[0].mxu0
        %v2127 = vadd.f32 0.0, %v2126
        %v2128 = vpop.f32.mrb[0].mxu0
        %v2129 = vpop.f32.mrb[0].mxu0
        %v2130 = vadd.f32 0.0, %v2129
        %v2131 = vpop.f32.mrb[0].mxu0
        %2132 = vmatprep.mubr.bf16.mxu0 0
        %2133 = vmatmul.mubr.bf16.gmra.mrb[0].mxu0 %v1914
        %v2134 = vpop.f32.mrb[0].mxu0
        %v2135 = vadd.f32 0.0, %v2134
        %v2136 = vpop.f32.mrb[0].mxu0
        %v2137 = vpop.f32.mrb[0].mxu0
        %v2138 = vadd.f32 0.0, %v2137
        %v2139 = vpop.f32.mrb[0].mxu0
        %2140 = vdwg.mxu0
        %v2141 = vadd.f32 %v1709, %v2015
        %v2142 = vadd.f32 %v1712, %v2018
        %v2143 = vadd.f32 %v1717, %v2023
        %v2144 = vadd.f32 %v1720, %v2026
        %v2145 = vadd.f32 %v1725, %v2031
        %v2146 = vadd.f32 %v1728, %v2034
        %v2147 = vadd.f32 %v1733, %v2039
        %v2148 = vadd.f32 %v1736, %v2042
        %v2149 = vadd.f32 %v1741, %v2047
        %v2150 = vadd.f32 %v1744, %v2050
        %v2151 = vadd.f32 %v1749, %v2055
        %v2152 = vadd.f32 %v1752, %v2058
        %v2153 = vadd.f32 %v1757, %v2063
        %v2154 = vadd.f32 %v1760, %v2066
        %v2155 = vadd.f32 %v1765, %v2071
        %v2156 = vadd.f32 %v1768, %v2074
        %v2157 = vadd.f32 %v1773, %v2079
        %v2158 = vadd.f32 %v1776, %v2082
        %v2159 = vadd.f32 %v1781, %v2087
        %v2160 = vadd.f32 %v1784, %v2090
        %v2161 = vadd.f32 %v1789, %v2095
        %v2162 = vadd.f32 %v1792, %v2098
        %v2163 = vadd.f32 %v1797, %v2103
        %v2164 = vadd.f32 %v1800, %v2106
        %v2165 = vadd.f32 %v1805, %v2111
        %v2166 = vadd.f32 %v1808, %v2114
        %v2167 = vadd.f32 %v1813, %v2119
        %v2168 = vadd.f32 %v1816, %v2122
        %v2169 = vadd.f32 %v1821, %v2127
        %v2170 = vadd.f32 %v1824, %v2130
        %v2171 = vadd.f32 %v1829, %v2135
        %v2172 = vadd.f32 %v1832, %v2138
        %s2173 = scalar_lea.vmem [#allocation2], 3
        %v2174 = vld [vmem:[%s2173] ss:$2 sm:$0xff]
        %s2175 = scalar_lea.vmem [#allocation2], 19
        %v2176 = vld [vmem:[%s2175] ss:$2 sm:$0xff]
        %s2177 = scalar_lea.vmem [#allocation2], 35
        %v2178 = vld [vmem:[%s2177] ss:$2 sm:$0xff]
        %s2179 = scalar_lea.vmem [#allocation2], 51
        %v2180 = vld [vmem:[%s2179] ss:$2 sm:$0xff]
        %s2181 = scalar_lea.vmem [#allocation2], 75
        %v2182 = vld [vmem:[%s2181] ss:$2 sm:$0xff]
        %s2183 = scalar_lea.vmem [#allocation2], 91
        %v2184 = vld [vmem:[%s2183] ss:$2 sm:$0xff]
        %s2185 = scalar_lea.vmem [#allocation2], 107
        %v2186 = vld [vmem:[%s2185] ss:$2 sm:$0xff]
        %s2187 = scalar_lea.vmem [#allocation2], 123
        %v2188 = vld [vmem:[%s2187] ss:$2 sm:$0xff]
        %s2189 = scalar_lea.vmem [#allocation2], 147
        %v2190 = vld [vmem:[%s2189] ss:$2 sm:$0xff]
        %s2191 = scalar_lea.vmem [#allocation2], 163
        %v2192 = vld [vmem:[%s2191] ss:$2 sm:$0xff]
        %s2193 = scalar_lea.vmem [#allocation2], 179
        %v2194 = vld [vmem:[%s2193] ss:$2 sm:$0xff]
        %s2195 = scalar_lea.vmem [#allocation2], 195
        %v2196 = vld [vmem:[%s2195] ss:$2 sm:$0xff]
        %s2197 = scalar_lea.vmem [#allocation2], 219
        %v2198 = vld [vmem:[%s2197] ss:$2 sm:$0xff]
        %s2199 = scalar_lea.vmem [#allocation2], 235
        %v2200 = vld [vmem:[%s2199] ss:$2 sm:$0xff]
        %s2201 = scalar_lea.vmem [#allocation2], 251
        %v2202 = vld [vmem:[%s2201] ss:$2 sm:$0xff]
        %s2203 = scalar_lea.vmem [#allocation2], 267
        %v2204 = vld [vmem:[%s2203] ss:$2 sm:$0xff]
        %s2205 = scalar_lea.vmem [#allocation2], 291
        %v2206 = vld [vmem:[%s2205] ss:$2 sm:$0xff]
        %s2207 = scalar_lea.vmem [#allocation2], 307
        %v2208 = vld [vmem:[%s2207] ss:$2 sm:$0xff]
        %s2209 = scalar_lea.vmem [#allocation2], 323
        %v2210 = vld [vmem:[%s2209] ss:$2 sm:$0xff]
        %s2211 = scalar_lea.vmem [#allocation2], 339
        %v2212 = vld [vmem:[%s2211] ss:$2 sm:$0xff]
        %s2213 = scalar_lea.vmem [#allocation2], 363
        %v2214 = vld [vmem:[%s2213] ss:$2 sm:$0xff]
        %s2215 = scalar_lea.vmem [#allocation2], 379
        %v2216 = vld [vmem:[%s2215] ss:$2 sm:$0xff]
        %s2217 = scalar_lea.vmem [#allocation2], 395
        %v2218 = vld [vmem:[%s2217] ss:$2 sm:$0xff]
        %s2219 = scalar_lea.vmem [#allocation2], 411
        %v2220 = vld [vmem:[%s2219] ss:$2 sm:$0xff]
        %s2221 = scalar_lea.vmem [#allocation2], 435
        %v2222 = vld [vmem:[%s2221] ss:$2 sm:$0xff]
        %s2223 = scalar_lea.vmem [#allocation2], 451
        %v2224 = vld [vmem:[%s2223] ss:$2 sm:$0xff]
        %s2225 = scalar_lea.vmem [#allocation2], 467
        %v2226 = vld [vmem:[%s2225] ss:$2 sm:$0xff]
        %s2227 = scalar_lea.vmem [#allocation2], 483
        %v2228 = vld [vmem:[%s2227] ss:$2 sm:$0xff]
        %s2229 = scalar_lea.vmem [#allocation2], 507
        %v2230 = vld [vmem:[%s2229] ss:$2 sm:$0xff]
        %s2231 = scalar_lea.vmem [#allocation2], 523
        %v2232 = vld [vmem:[%s2231] ss:$2 sm:$0xff]
        %s2233 = scalar_lea.vmem [#allocation2], 539
        %v2234 = vld [vmem:[%s2233] ss:$2 sm:$0xff]
        %s2235 = scalar_lea.vmem [#allocation2], 555
        %v2236 = vld [vmem:[%s2235] ss:$2 sm:$0xff]
        %v2237 = vpack.c.bf16 %v2176, %v2174
        %v2238 = vpack.c.bf16 %v2180, %v2178
        %v2239 = vpack.c.bf16 %v2184, %v2182
        %v2240 = vpack.c.bf16 %v2188, %v2186
        %v2241 = vpack.c.bf16 %v2192, %v2190
        %v2242 = vpack.c.bf16 %v2196, %v2194
        %v2243 = vpack.c.bf16 %v2200, %v2198
        %v2244 = vpack.c.bf16 %v2204, %v2202
        %v2245 = vpack.c.bf16 %v2208, %v2206
        %v2246 = vpack.c.bf16 %v2212, %v2210
        %v2247 = vpack.c.bf16 %v2216, %v2214
        %v2248 = vpack.c.bf16 %v2220, %v2218
        %v2249 = vpack.c.bf16 %v2224, %v2222
        %v2250 = vpack.c.bf16 %v2228, %v2226
        %v2251 = vpack.c.bf16 %v2232, %v2230
        %v2252 = vpack.c.bf16 %v2236, %v2234
        %s2253 = scalar_lea.vmem %s2, 192
        %v2254 = vld [vmem:[%s2253] sm:$0xf]
        %v2255 = vld [vmem:[%s2253 + $0x4] sm:$0xf]
        %v2256 = vld [vmem:[%s2253 + $0x8] sm:$0xf]
        %v2257 = vld [vmem:[%s2253 + $0xc] sm:$0xf]
        %v2258 = vld [vmem:[%s2253 + $0x10] sm:$0xf]
        %v2259 = vld [vmem:[%s2253 + $0x14] sm:$0xf]
        %v2260 = vld [vmem:[%s2253 + $0x18] sm:$0xf]
        %v2261 = vld [vmem:[%s2253 + $0x1c] sm:$0xf]
        %v2262 = vld [vmem:[%s2253 + $0x20] sm:$0xf]
        %v2263 = vld [vmem:[%s2253 + $0x24] sm:$0xf]
        %v2264 = vld [vmem:[%s2253 + $0x28] sm:$0xf]
        %v2265 = vld [vmem:[%s2253 + $0x2c] sm:$0xf]
        %v2266 = vld [vmem:[%s2253 + $0x30] sm:$0xf]
        %v2267 = vld [vmem:[%s2253 + $0x34] sm:$0xf]
        %v2268 = vld [vmem:[%s2253 + $0x38] sm:$0xf]
        %v2269 = vld [vmem:[%s2253 + $0x3c] sm:$0xf]
        %v2286 = vunpack.c.l.b16 %v2254
        %v2287 = vunpack.c.l.b16 %v2255
        %v2288 = vunpack.c.l.b16 %v2256
        %v2289 = vunpack.c.l.b16 %v2257
        %v2290 = vunpack.c.l.b16 %v2258
        %v2291 = vunpack.c.l.b16 %v2259
        %v2292 = vunpack.c.l.b16 %v2260
        %v2293 = vunpack.c.l.b16 %v2261
        %v2294 = vunpack.c.l.b16 %v2262
        %v2295 = vunpack.c.l.b16 %v2263
        %v2296 = vunpack.c.l.b16 %v2264
        %v2297 = vunpack.c.l.b16 %v2265
        %v2298 = vunpack.c.l.b16 %v2266
        %v2299 = vunpack.c.l.b16 %v2267
        %v2300 = vunpack.c.l.b16 %v2268
        %v2301 = vunpack.c.l.b16 %v2269
        %v2302 = vpack.c.b16 %v2287, %v2286
        %v2303 = vpack.c.b16 %v2289, %v2288
        %v2304 = vpack.c.b16 %v2291, %v2290
        %v2305 = vpack.c.b16 %v2293, %v2292
        %v2306 = vpack.c.b16 %v2295, %v2294
        %v2307 = vpack.c.b16 %v2297, %v2296
        %v2308 = vpack.c.b16 %v2299, %v2298
        %v2309 = vpack.c.b16 %v2301, %v2300
        %2318 = vmatprep.subr.bf16.mxu0 0
        %2319 = vmatpush1.bf16.msra.mxu0 %v2302
        %2320 = vmatprep.subr.bf16.mxu0 0
        %2321 = vmatpush1.bf16.msra.mxu0 %v2303
        %2322 = vmatprep.subr.bf16.mxu0 0
        %2323 = vmatpush1.bf16.msra.mxu0 %v2304
        %2324 = vmatprep.subr.bf16.mxu0 0
        %2325 = vmatpush1.bf16.msra.mxu0 %v2305
        %2326 = vmatprep.subr.bf16.mxu0 0
        %2327 = vmatpush1.bf16.msra.mxu0 %v2306
        %2328 = vmatprep.subr.bf16.mxu0 0
        %2329 = vmatpush1.bf16.msra.mxu0 %v2307
        %2330 = vmatprep.subr.bf16.mxu0 0
        %2331 = vmatpush1.bf16.msra.mxu0 %v2308
        %2332 = vmatprep.subr.bf16.mxu0 0
        %2333 = vmatpush1.bf16.msra.mxu0 %v2309
        %2334 = vmatprep.subr.bf16.mxu0 0
        %2335 = vmatpush1.bf16.msra.mxu0 0
        %2336 = vmatprep.subr.bf16.mxu0 0
        %2337 = vmatpush1.bf16.msra.mxu0 0
        %2338 = vmatprep.subr.bf16.mxu0 0
        %2339 = vmatpush1.bf16.msra.mxu0 0
        %2340 = vmatprep.subr.bf16.mxu0 0
        %2341 = vmatpush1.bf16.msra.mxu0 0
        %2342 = vmatprep.subr.bf16.mxu0 0
        %2343 = vmatpush1.bf16.msra.mxu0 0
        %2344 = vmatprep.subr.bf16.mxu0 0
        %2345 = vmatpush1.bf16.msra.mxu0 0
        %2346 = vmatprep.subr.bf16.mxu0 0
        %2347 = vmatpush1.bf16.msra.mxu0 0
        %2348 = vmatprep.subr.bf16.mxu0 0
        %2349 = vmatpush1.bf16.msra.mxu0 0
        %2350 = vmatprep.mubr.bf16.mxu0 0
        %2351 = vmatmul.mubr.bf16.gmra.mrb[0].mxu0 %v2237
        %v2352 = vpop.f32.mrb[0].mxu0
        %v2353 = vadd.f32 0.0, %v2352
        %v2354 = vpop.f32.mrb[0].mxu0
        %v2355 = vpop.f32.mrb[0].mxu0
        %v2356 = vadd.f32 0.0, %v2355
        %v2357 = vpop.f32.mrb[0].mxu0
        %2358 = vmatprep.mubr.bf16.mxu0 0
        %2359 = vmatmul.mubr.bf16.gmra.mrb[0].mxu0 %v2238
        %v2360 = vpop.f32.mrb[0].mxu0
        %v2361 = vadd.f32 0.0, %v2360
        %v2362 = vpop.f32.mrb[0].mxu0
        %v2363 = vpop.f32.mrb[0].mxu0
        %v2364 = vadd.f32 0.0, %v2363
        %v2365 = vpop.f32.mrb[0].mxu0
        %2366 = vmatprep.mubr.bf16.mxu0 0
        %2367 = vmatmul.mubr.bf16.gmra.mrb[0].mxu0 %v2239
        %v2368 = vpop.f32.mrb[0].mxu0
        %v2369 = vadd.f32 0.0, %v2368
        %v2370 = vpop.f32.mrb[0].mxu0
        %v2371 = vpop.f32.mrb[0].mxu0
        %v2372 = vadd.f32 0.0, %v2371
        %v2373 = vpop.f32.mrb[0].mxu0
        %2374 = vmatprep.mubr.bf16.mxu0 0
        %2375 = vmatmul.mubr.bf16.gmra.mrb[0].mxu0 %v2240
        %v2376 = vpop.f32.mrb[0].mxu0
        %v2377 = vadd.f32 0.0, %v2376
        %v2378 = vpop.f32.mrb[0].mxu0
        %v2379 = vpop.f32.mrb[0].mxu0
        %v2380 = vadd.f32 0.0, %v2379
        %v2381 = vpop.f32.mrb[0].mxu0
        %2382 = vmatprep.mubr.bf16.mxu0 0
        %2383 = vmatmul.mubr.bf16.gmra.mrb[0].mxu0 %v2241
        %v2384 = vpop.f32.mrb[0].mxu0
        %v2385 = vadd.f32 0.0, %v2384
        %v2386 = vpop.f32.mrb[0].mxu0
        %v2387 = vpop.f32.mrb[0].mxu0
        %v2388 = vadd.f32 0.0, %v2387
        %v2389 = vpop.f32.mrb[0].mxu0
        %2390 = vmatprep.mubr.bf16.mxu0 0
        %2391 = vmatmul.mubr.bf16.gmra.mrb[0].mxu0 %v2242
        %v2392 = vpop.f32.mrb[0].mxu0
        %v2393 = vadd.f32 0.0, %v2392
        %v2394 = vpop.f32.mrb[0].mxu0
        %v2395 = vpop.f32.mrb[0].mxu0
        %v2396 = vadd.f32 0.0, %v2395
        %v2397 = vpop.f32.mrb[0].mxu0
        %2398 = vmatprep.mubr.bf16.mxu0 0
        %2399 = vmatmul.mubr.bf16.gmra.mrb[0].mxu0 %v2243
        %v2400 = vpop.f32.mrb[0].mxu0
        %v2401 = vadd.f32 0.0, %v2400
        %v2402 = vpop.f32.mrb[0].mxu0
        %v2403 = vpop.f32.mrb[0].mxu0
        %v2404 = vadd.f32 0.0, %v2403
        %v2405 = vpop.f32.mrb[0].mxu0
        %2406 = vmatprep.mubr.bf16.mxu0 0
        %2407 = vmatmul.mubr.bf16.gmra.mrb[0].mxu0 %v2244
        %v2408 = vpop.f32.mrb[0].mxu0
        %v2409 = vadd.f32 0.0, %v2408
        %v2410 = vpop.f32.mrb[0].mxu0
        %v2411 = vpop.f32.mrb[0].mxu0
        %v2412 = vadd.f32 0.0, %v2411
        %v2413 = vpop.f32.mrb[0].mxu0
        %2414 = vmatprep.mubr.bf16.mxu0 0
        %2415 = vmatmul.mubr.bf16.gmra.mrb[0].mxu0 %v2245
        %v2416 = vpop.f32.mrb[0].mxu0
        %v2417 = vadd.f32 0.0, %v2416
        %v2418 = vpop.f32.mrb[0].mxu0
        %v2419 = vpop.f32.mrb[0].mxu0
        %v2420 = vadd.f32 0.0, %v2419
        %v2421 = vpop.f32.mrb[0].mxu0
        %2422 = vmatprep.mubr.bf16.mxu0 0
        %2423 = vmatmul.mubr.bf16.gmra.mrb[0].mxu0 %v2246
        %v2424 = vpop.f32.mrb[0].mxu0
        %v2425 = vadd.f32 0.0, %v2424
        %v2426 = vpop.f32.mrb[0].mxu0
        %v2427 = vpop.f32.mrb[0].mxu0
        %v2428 = vadd.f32 0.0, %v2427
        %v2429 = vpop.f32.mrb[0].mxu0
        %2430 = vmatprep.mubr.bf16.mxu0 0
        %2431 = vmatmul.mubr.bf16.gmra.mrb[0].mxu0 %v2247
        %v2432 = vpop.f32.mrb[0].mxu0
        %v2433 = vadd.f32 0.0, %v2432
        %v2434 = vpop.f32.mrb[0].mxu0
        %v2435 = vpop.f32.mrb[0].mxu0
        %v2436 = vadd.f32 0.0, %v2435
        %v2437 = vpop.f32.mrb[0].mxu0
        %2438 = vmatprep.mubr.bf16.mxu0 0
        %2439 = vmatmul.mubr.bf16.gmra.mrb[0].mxu0 %v2248
        %v2440 = vpop.f32.mrb[0].mxu0
        %v2441 = vadd.f32 0.0, %v2440
        %v2442 = vpop.f32.mrb[0].mxu0
        %v2443 = vpop.f32.mrb[0].mxu0
        %v2444 = vadd.f32 0.0, %v2443
        %v2445 = vpop.f32.mrb[0].mxu0
        %2446 = vmatprep.mubr.bf16.mxu0 0
        %2447 = vmatmul.mubr.bf16.gmra.mrb[0].mxu0 %v2249
        %v2448 = vpop.f32.mrb[0].mxu0
        %v2449 = vadd.f32 0.0, %v2448
        %v2450 = vpop.f32.mrb[0].mxu0
        %v2451 = vpop.f32.mrb[0].mxu0
        %v2452 = vadd.f32 0.0, %v2451
        %v2453 = vpop.f32.mrb[0].mxu0
        %2454 = vmatprep.mubr.bf16.mxu0 0
        %2455 = vmatmul.mubr.bf16.gmra.mrb[0].mxu0 %v2250
        %v2456 = vpop.f32.mrb[0].mxu0
        %v2457 = vadd.f32 0.0, %v2456
        %v2458 = vpop.f32.mrb[0].mxu0
        %v2459 = vpop.f32.mrb[0].mxu0
        %v2460 = vadd.f32 0.0, %v2459
        %v2461 = vpop.f32.mrb[0].mxu0
        %2462 = vmatprep.mubr.bf16.mxu0 0
        %2463 = vmatmul.mubr.bf16.gmra.mrb[0].mxu0 %v2251
        %v2464 = vpop.f32.mrb[0].mxu0
        %v2465 = vadd.f32 0.0, %v2464
        %v2466 = vpop.f32.mrb[0].mxu0
        %v2467 = vpop.f32.mrb[0].mxu0
        %v2468 = vadd.f32 0.0, %v2467
        %v2469 = vpop.f32.mrb[0].mxu0
        %2470 = vmatprep.mubr.bf16.mxu0 0
        %2471 = vmatmul.mubr.bf16.gmra.mrb[0].mxu0 %v2252
        %v2472 = vpop.f32.mrb[0].mxu0
        %v2473 = vadd.f32 0.0, %v2472
        %v2474 = vpop.f32.mrb[0].mxu0
        %v2475 = vpop.f32.mrb[0].mxu0
        %v2476 = vadd.f32 0.0, %v2475
        %v2477 = vpop.f32.mrb[0].mxu0
        %2478 = vdwg.mxu0
        %v2479 = vadd.f32 %v2141, %v2353
        %v2480 = vadd.f32 %v2142, %v2356
        %v2481 = vadd.f32 %v2143, %v2361
        %v2482 = vadd.f32 %v2144, %v2364
        %v2483 = vadd.f32 %v2145, %v2369
        %v2484 = vadd.f32 %v2146, %v2372
        %v2485 = vadd.f32 %v2147, %v2377
        %v2486 = vadd.f32 %v2148, %v2380
        %v2487 = vadd.f32 %v2149, %v2385
        %v2488 = vadd.f32 %v2150, %v2388
        %v2489 = vadd.f32 %v2151, %v2393
        %v2490 = vadd.f32 %v2152, %v2396
        %v2491 = vadd.f32 %v2153, %v2401
        %v2492 = vadd.f32 %v2154, %v2404
        %v2493 = vadd.f32 %v2155, %v2409
        %v2494 = vadd.f32 %v2156, %v2412
        %v2495 = vadd.f32 %v2157, %v2417
        %v2496 = vadd.f32 %v2158, %v2420
        %v2497 = vadd.f32 %v2159, %v2425
        %v2498 = vadd.f32 %v2160, %v2428
        %v2499 = vadd.f32 %v2161, %v2433
        %v2500 = vadd.f32 %v2162, %v2436
        %v2501 = vadd.f32 %v2163, %v2441
        %v2502 = vadd.f32 %v2164, %v2444
        %v2503 = vadd.f32 %v2165, %v2449
        %v2504 = vadd.f32 %v2166, %v2452
        %v2505 = vadd.f32 %v2167, %v2457
        %v2506 = vadd.f32 %v2168, %v2460
        %v2507 = vadd.f32 %v2169, %v2465
        %v2508 = vadd.f32 %v2170, %v2468
        %v2509 = vadd.f32 %v2171, %v2473
        %v2510 = vadd.f32 %v2172, %v2476
        %v2511 = vld [vmem:[%s3] sm:$0x1]
        %v2513 = vlaneseq
        %v2514 = vshrl.u32 %v2513, 7
        %v2515 = vsub.s32 0, %v2514
        %v2516 = vrot.slane %v2511, %v2515
        %v2518 = vadd.f32 %v2479, %v2516
        %v2519 = vadd.f32 %v2480, %v2516
        %v2520 = vadd.f32 %v2481, %v2516
        %v2521 = vadd.f32 %v2482, %v2516
        %v2522 = vadd.f32 %v2483, %v2516
        %v2523 = vadd.f32 %v2484, %v2516
        %v2524 = vadd.f32 %v2485, %v2516
        %v2525 = vadd.f32 %v2486, %v2516
        %v2526 = vadd.f32 %v2487, %v2516
        %v2527 = vadd.f32 %v2488, %v2516
        %v2528 = vadd.f32 %v2489, %v2516
        %v2529 = vadd.f32 %v2490, %v2516
        %v2530 = vadd.f32 %v2491, %v2516
        %v2531 = vadd.f32 %v2492, %v2516
        %v2532 = vadd.f32 %v2493, %v2516
        %v2533 = vadd.f32 %v2494, %v2516
        %v2534 = vadd.f32 %v2495, %v2516
        %v2535 = vadd.f32 %v2496, %v2516
        %v2536 = vadd.f32 %v2497, %v2516
        %v2537 = vadd.f32 %v2498, %v2516
        %v2538 = vadd.f32 %v2499, %v2516
        %v2539 = vadd.f32 %v2500, %v2516
        %v2540 = vadd.f32 %v2501, %v2516
        %v2541 = vadd.f32 %v2502, %v2516
        %v2542 = vadd.f32 %v2503, %v2516
        %v2543 = vadd.f32 %v2504, %v2516
        %v2544 = vadd.f32 %v2505, %v2516
        %v2545 = vadd.f32 %v2506, %v2516
        %v2546 = vadd.f32 %v2507, %v2516
        %v2547 = vadd.f32 %v2508, %v2516
        %v2548 = vadd.f32 %v2509, %v2516
        %v2549 = vadd.f32 %v2510, %v2516
        %vm2550 = vcmp.ge.f32.partialorder %v2518, 0.0
        %vm2551 = vcmp.ge.f32.partialorder %v2519, 0.0
        %vm2552 = vcmp.ge.f32.partialorder %v2520, 0.0
        %vm2553 = vcmp.ge.f32.partialorder %v2521, 0.0
        %vm2554 = vcmp.ge.f32.partialorder %v2522, 0.0
        %vm2555 = vcmp.ge.f32.partialorder %v2523, 0.0
        %vm2556 = vcmp.ge.f32.partialorder %v2524, 0.0
        %vm2557 = vcmp.ge.f32.partialorder %v2525, 0.0
        %vm2558 = vcmp.ge.f32.partialorder %v2526, 0.0
        %vm2559 = vcmp.ge.f32.partialorder %v2527, 0.0
        %vm2560 = vcmp.ge.f32.partialorder %v2528, 0.0
        %vm2561 = vcmp.ge.f32.partialorder %v2529, 0.0
        %vm2562 = vcmp.ge.f32.partialorder %v2530, 0.0
        %vm2563 = vcmp.ge.f32.partialorder %v2531, 0.0
        %vm2564 = vcmp.ge.f32.partialorder %v2532, 0.0
        %vm2565 = vcmp.ge.f32.partialorder %v2533, 0.0
        %vm2566 = vcmp.ge.f32.partialorder %v2534, 0.0
        %vm2567 = vcmp.ge.f32.partialorder %v2535, 0.0
        %vm2568 = vcmp.ge.f32.partialorder %v2536, 0.0
        %vm2569 = vcmp.ge.f32.partialorder %v2537, 0.0
        %vm2570 = vcmp.ge.f32.partialorder %v2538, 0.0
        %vm2571 = vcmp.ge.f32.partialorder %v2539, 0.0
        %vm2572 = vcmp.ge.f32.partialorder %v2540, 0.0
        %vm2573 = vcmp.ge.f32.partialorder %v2541, 0.0
        %vm2574 = vcmp.ge.f32.partialorder %v2542, 0.0
        %vm2575 = vcmp.ge.f32.partialorder %v2543, 0.0
        %vm2576 = vcmp.ge.f32.partialorder %v2544, 0.0
        %vm2577 = vcmp.ge.f32.partialorder %v2545, 0.0
        %vm2578 = vcmp.ge.f32.partialorder %v2546, 0.0
        %vm2579 = vcmp.ge.f32.partialorder %v2547, 0.0
        %vm2580 = vcmp.ge.f32.partialorder %v2548, 0.0
        %vm2581 = vcmp.ge.f32.partialorder %v2549, 0.0
        %v2582 = vmul.f32 %v2518, 0.2
        %v2583 = vmul.f32 %v2519, 0.2
        %v2584 = vmul.f32 %v2520, 0.2
        %v2585 = vmul.f32 %v2521, 0.2
        %v2586 = vmul.f32 %v2522, 0.2
        %v2587 = vmul.f32 %v2523, 0.2
        %v2588 = vmul.f32 %v2524, 0.2
        %v2589 = vmul.f32 %v2525, 0.2
        %v2590 = vmul.f32 %v2526, 0.2
        %v2591 = vmul.f32 %v2527, 0.2
        %v2592 = vmul.f32 %v2528, 0.2
        %v2593 = vmul.f32 %v2529, 0.2
        %v2594 = vmul.f32 %v2530, 0.2
        %v2595 = vmul.f32 %v2531, 0.2
        %v2596 = vmul.f32 %v2532, 0.2
        %v2597 = vmul.f32 %v2533, 0.2
        %v2598 = vmul.f32 %v2534, 0.2
        %v2599 = vmul.f32 %v2535, 0.2
        %v2600 = vmul.f32 %v2536, 0.2
        %v2601 = vmul.f32 %v2537, 0.2
        %v2602 = vmul.f32 %v2538, 0.2
        %v2603 = vmul.f32 %v2539, 0.2
        %v2604 = vmul.f32 %v2540, 0.2
        %v2605 = vmul.f32 %v2541, 0.2
        %v2606 = vmul.f32 %v2542, 0.2
        %v2607 = vmul.f32 %v2543, 0.2
        %v2608 = vmul.f32 %v2544, 0.2
        %v2609 = vmul.f32 %v2545, 0.2
        %v2610 = vmul.f32 %v2546, 0.2
        %v2611 = vmul.f32 %v2547, 0.2
        %v2612 = vmul.f32 %v2548, 0.2
        %v2613 = vmul.f32 %v2549, 0.2
        %v2614 = vsel %vm2550, %v2518, %v2582
        %v2615 = vsel %vm2551, %v2519, %v2583
        %v2616 = vsel %vm2552, %v2520, %v2584
        %v2617 = vsel %vm2553, %v2521, %v2585
        %v2618 = vsel %vm2554, %v2522, %v2586
        %v2619 = vsel %vm2555, %v2523, %v2587
        %v2620 = vsel %vm2556, %v2524, %v2588
        %v2621 = vsel %vm2557, %v2525, %v2589
        %v2622 = vsel %vm2558, %v2526, %v2590
        %v2623 = vsel %vm2559, %v2527, %v2591
        %v2624 = vsel %vm2560, %v2528, %v2592
        %v2625 = vsel %vm2561, %v2529, %v2593
        %v2626 = vsel %vm2562, %v2530, %v2594
        %v2627 = vsel %vm2563, %v2531, %v2595
        %v2628 = vsel %vm2564, %v2532, %v2596
        %v2629 = vsel %vm2565, %v2533, %v2597
        %v2630 = vsel %vm2566, %v2534, %v2598
        %v2631 = vsel %vm2567, %v2535, %v2599
        %v2632 = vsel %vm2568, %v2536, %v2600
        %v2633 = vsel %vm2569, %v2537, %v2601
        %v2634 = vsel %vm2570, %v2538, %v2602
        %v2635 = vsel %vm2571, %v2539, %v2603
        %v2636 = vsel %vm2572, %v2540, %v2604
        %v2637 = vsel %vm2573, %v2541, %v2605
        %v2638 = vsel %vm2574, %v2542, %v2606
        %v2639 = vsel %vm2575, %v2543, %v2607
        %v2640 = vsel %vm2576, %v2544, %v2608
        %v2641 = vsel %vm2577, %v2545, %v2609
        %v2642 = vsel %vm2578, %v2546, %v2610
        %v2643 = vsel %vm2579, %v2547, %v2611
        %v2644 = vsel %vm2580, %v2548, %v2612
        %v2645 = vsel %vm2581, %v2549, %v2613
        %2646 = vst [vmem:[#allocation3 + $0x1] sm:$0xff] %v2614
        %2647 = vst [vmem:[#allocation3 + $0x9] sm:$0xff] %v2615
        %2648 = vst [vmem:[#allocation3 + $0x11] sm:$0xff] %v2616
        %2649 = vst [vmem:[#allocation3 + $0x19] sm:$0xff] %v2617
        %2650 = vst [vmem:[#allocation3 + $0x49] sm:$0xff] %v2618
        %2651 = vst [vmem:[#allocation3 + $0x51] sm:$0xff] %v2619
        %2652 = vst [vmem:[#allocation3 + $0x59] sm:$0xff] %v2620
        %2653 = vst [vmem:[#allocation3 + $0x61] sm:$0xff] %v2621
        %2654 = vst [vmem:[#allocation3 + $0x91] sm:$0xff] %v2622
        %2655 = vst [vmem:[#allocation3 + $0x99] sm:$0xff] %v2623
        %2656 = vst [vmem:[#allocation3 + $0xa1] sm:$0xff] %v2624
        %2657 = vst [vmem:[#allocation3 + $0xa9] sm:$0xff] %v2625
        %2658 = vst [vmem:[#allocation3 + $0xd9] sm:$0xff] %v2626
        %2659 = vst [vmem:[#allocation3 + $0xe1] sm:$0xff] %v2627
        %2660 = vst [vmem:[#allocation3 + $0xe9] sm:$0xff] %v2628
        %2661 = vst [vmem:[#allocation3 + $0xf1] sm:$0xff] %v2629
        %2662 = vst [vmem:[#allocation3 + $0x121] sm:$0xff] %v2630
        %2663 = vst [vmem:[#allocation3 + $0x129] sm:$0xff] %v2631
        %2664 = vst [vmem:[#allocation3 + $0x131] sm:$0xff] %v2632
        %2665 = vst [vmem:[#allocation3 + $0x139] sm:$0xff] %v2633
        %2666 = vst [vmem:[#allocation3 + $0x169] sm:$0xff] %v2634
        %2667 = vst [vmem:[#allocation3 + $0x171] sm:$0xff] %v2635
        %2668 = vst [vmem:[#allocation3 + $0x179] sm:$0xff] %v2636
        %2669 = vst [vmem:[#allocation3 + $0x181] sm:$0xff] %v2637
        %2670 = vst [vmem:[#allocation3 + $0x1b1] sm:$0xff] %v2638
        %2671 = vst [vmem:[#allocation3 + $0x1b9] sm:$0xff] %v2639
        %2672 = vst [vmem:[#allocation3 + $0x1c1] sm:$0xff] %v2640
        %2673 = vst [vmem:[#allocation3 + $0x1c9] sm:$0xff] %v2641
        %2674 = vst [vmem:[#allocation3 + $0x1f9] sm:$0xff] %v2642
        %2675 = vst [vmem:[#allocation3 + $0x201] sm:$0xff] %v2643
        %2676 = vst [vmem:[#allocation3 + $0x209] sm:$0xff] %v2644
        %2677 = vst [vmem:[#allocation3 + $0x211] sm:$0xff] %v2645
        %2678 = vst [vmem:[#allocation3 + $0x21] sm:$0x1] 0.0
        %2679 = vst [vmem:[#allocation3 + $0x69] sm:$0x1] 0.0
        %2680 = vst [vmem:[#allocation3 + $0xb1] sm:$0x1] 0.0
        %2681 = vst [vmem:[#allocation3 + $0xf9] sm:$0x1] 0.0
        %2682 = vst [vmem:[#allocation3 + $0x141] sm:$0x1] 0.0
        %2683 = vst [vmem:[#allocation3 + $0x189] sm:$0x1] 0.0
        %2684 = vst [vmem:[#allocation3 + $0x1d1] sm:$0x1] 0.0
        %2685 = vst [vmem:[#allocation3 + $0x219] sm:$0x1] 0.0
        %v2686 = vld [vmem:[#allocation3] sm:$0xff]
        %v2687 = vld [vmem:[#allocation3 + $0x8] sm:$0xff]
        %v2688 = vld [vmem:[#allocation3 + $0x10] sm:$0xff]
        %v2689 = vld [vmem:[#allocation3 + $0x18] sm:$0xff]
        %v2690 = vld [vmem:[#allocation3 + $0x20] sm:$0x3]
        %v2691 = vld [vmem:[#allocation3 + $0x48] sm:$0xff]
        %v2692 = vld [vmem:[#allocation3 + $0x50] sm:$0xff]
        %v2693 = vld [vmem:[#allocation3 + $0x58] sm:$0xff]
        %v2694 = vld [vmem:[#allocation3 + $0x60] sm:$0xff]
        %v2695 = vld [vmem:[#allocation3 + $0x68] sm:$0x3]
        %v2696 = vld [vmem:[#allocation3 + $0x90] sm:$0xff]
        %v2697 = vld [vmem:[#allocation3 + $0x98] sm:$0xff]
        %v2698 = vld [vmem:[#allocation3 + $0xa0] sm:$0xff]
        %v2699 = vld [vmem:[#allocation3 + $0xa8] sm:$0xff]
        %v2700 = vld [vmem:[#allocation3 + $0xb0] sm:$0x3]
        %v2701 = vld [vmem:[#allocation3 + $0xd8] sm:$0xff]
        %v2702 = vld [vmem:[#allocation3 + $0xe0] sm:$0xff]
        %v2703 = vld [vmem:[#allocation3 + $0xe8] sm:$0xff]
        %v2704 = vld [vmem:[#allocation3 + $0xf0] sm:$0xff]
        %v2705 = vld [vmem:[#allocation3 + $0xf8] sm:$0x3]
        %v2706 = vld [vmem:[#allocation3 + $0x120] sm:$0xff]
        %v2707 = vld [vmem:[#allocation3 + $0x128] sm:$0xff]
        %v2708 = vld [vmem:[#allocation3 + $0x130] sm:$0xff]
        %v2709 = vld [vmem:[#allocation3 + $0x138] sm:$0xff]
        %v2710 = vld [vmem:[#allocation3 + $0x140] sm:$0x3]
        %v2711 = vld [vmem:[#allocation3 + $0x168] sm:$0xff]
        %v2712 = vld [vmem:[#allocation3 + $0x170] sm:$0xff]
        %v2713 = vld [vmem:[#allocation3 + $0x178] sm:$0xff]
        %v2714 = vld [vmem:[#allocation3 + $0x180] sm:$0xff]
        %v2715 = vld [vmem:[#allocation3 + $0x188] sm:$0x3]
        %v2716 = vld [vmem:[#allocation3 + $0x1b0] sm:$0xff]
        %v2717 = vld [vmem:[#allocation3 + $0x1b8] sm:$0xff]
        %v2718 = vld [vmem:[#allocation3 + $0x1c0] sm:$0xff]
        %v2719 = vld [vmem:[#allocation3 + $0x1c8] sm:$0xff]
        %v2720 = vld [vmem:[#allocation3 + $0x1d0] sm:$0x3]
        %v2721 = vld [vmem:[#allocation3 + $0x1f8] sm:$0xff]
        %v2722 = vld [vmem:[#allocation3 + $0x200] sm:$0xff]
        %v2723 = vld [vmem:[#allocation3 + $0x208] sm:$0xff]
        %v2724 = vld [vmem:[#allocation3 + $0x210] sm:$0xff]
        %v2725 = vld [vmem:[#allocation3 + $0x218] sm:$0x3]
        %v2726 = vpack.c.bf16 %v2687, %v2686
        %v2727 = vpack.c.bf16 %v2689, %v2688
        %v2728 = vpack.c.bf16 %v2690, %v2690
        %v2729 = vpack.c.bf16 %v2692, %v2691
        %v2730 = vpack.c.bf16 %v2694, %v2693
        %v2731 = vpack.c.bf16 %v2695, %v2695
        %v2732 = vpack.c.bf16 %v2697, %v2696
        %v2733 = vpack.c.bf16 %v2699, %v2698
        %v2734 = vpack.c.bf16 %v2700, %v2700
        %v2735 = vpack.c.bf16 %v2702, %v2701
        %v2736 = vpack.c.bf16 %v2704, %v2703
        %v2737 = vpack.c.bf16 %v2705, %v2705
        %v2738 = vpack.c.bf16 %v2707, %v2706
        %v2739 = vpack.c.bf16 %v2709, %v2708
        %v2740 = vpack.c.bf16 %v2710, %v2710
        %v2741 = vpack.c.bf16 %v2712, %v2711
        %v2742 = vpack.c.bf16 %v2714, %v2713
        %v2743 = vpack.c.bf16 %v2715, %v2715
        %v2744 = vpack.c.bf16 %v2717, %v2716
        %v2745 = vpack.c.bf16 %v2719, %v2718
        %v2746 = vpack.c.bf16 %v2720, %v2720
        %v2747 = vpack.c.bf16 %v2722, %v2721
        %v2748 = vpack.c.bf16 %v2724, %v2723
        %v2749 = vpack.c.bf16 %v2725, %v2725
        %s2750 = scalar_lea.vmem %s2, 256
        %v2751 = vld [vmem:[%s2750] sm:$0xf]
        %v2752 = vld [vmem:[%s2750 + $0x4] sm:$0xf]
        %v2753 = vld [vmem:[%s2750 + $0x8] sm:$0xf]
        %v2754 = vld [vmem:[%s2750 + $0xc] sm:$0xf]
        %v2755 = vld [vmem:[%s2750 + $0x10] sm:$0xf]
        %v2756 = vld [vmem:[%s2750 + $0x14] sm:$0xf]
        %v2757 = vld [vmem:[%s2750 + $0x18] sm:$0xf]
        %v2758 = vld [vmem:[%s2750 + $0x1c] sm:$0xf]
        %v2759 = vld [vmem:[%s2750 + $0x20] sm:$0xf]
        %v2760 = vld [vmem:[%s2750 + $0x24] sm:$0xf]
        %v2761 = vld [vmem:[%s2750 + $0x28] sm:$0xf]
        %v2762 = vld [vmem:[%s2750 + $0x2c] sm:$0xf]
        %v2763 = vld [vmem:[%s2750 + $0x30] sm:$0xf]
        %v2764 = vld [vmem:[%s2750 + $0x34] sm:$0xf]
        %v2765 = vld [vmem:[%s2750 + $0x38] sm:$0xf]
        %v2766 = vld [vmem:[%s2750 + $0x3c] sm:$0xf]
        %vm2767 = vsmask.f32 7424
        %v2769 = vshrl.u32 %v2726, 16
        %v2771 = vshll.u32 %v2726, 16
        %v2773 = vrot.slane %v2771, 1
        %v2774 = vor.u32 %v2769, %v2773
        %v2776 = vshll.u32 %v2727, 16
        %v2778 = vrot.slane %v2776, 1
        %v2779 = vsel %vm2767, %v2774, %v2778
        %v2780 = vshrl.u32 %v2727, 16
        %v2782 = vor.u32 %v2780, %v2778
        %v2784 = vshll.u32 %v2728, 16
        %v2786 = vrot.slane %v2784, 1
        %v2787 = vsel %vm2767, %v2782, %v2786
        %v2789 = vshrl.u32 %v2729, 16
        %v2791 = vshll.u32 %v2729, 16
        %v2793 = vrot.slane %v2791, 1
        %v2794 = vor.u32 %v2789, %v2793
        %v2796 = vshll.u32 %v2730, 16
        %v2798 = vrot.slane %v2796, 1
        %v2799 = vsel %vm2767, %v2794, %v2798
        %v2800 = vshrl.u32 %v2730, 16
        %v2802 = vor.u32 %v2800, %v2798
        %v2804 = vshll.u32 %v2731, 16
        %v2806 = vrot.slane %v2804, 1
        %v2807 = vsel %vm2767, %v2802, %v2806
        %v2809 = vshrl.u32 %v2732, 16
        %v2811 = vshll.u32 %v2732, 16
        %v2813 = vrot.slane %v2811, 1
        %v2814 = vor.u32 %v2809, %v2813
        %v2816 = vshll.u32 %v2733, 16
        %v2818 = vrot.slane %v2816, 1
        %v2819 = vsel %vm2767, %v2814, %v2818
        %v2820 = vshrl.u32 %v2733, 16
        %v2822 = vor.u32 %v2820, %v2818
        %v2824 = vshll.u32 %v2734, 16
        %v2826 = vrot.slane %v2824, 1
        %v2827 = vsel %vm2767, %v2822, %v2826
        %v2829 = vshrl.u32 %v2735, 16
        %v2831 = vshll.u32 %v2735, 16
        %v2833 = vrot.slane %v2831, 1
        %v2834 = vor.u32 %v2829, %v2833
        %v2836 = vshll.u32 %v2736, 16
        %v2838 = vrot.slane %v2836, 1
        %v2839 = vsel %vm2767, %v2834, %v2838
        %v2840 = vshrl.u32 %v2736, 16
        %v2842 = vor.u32 %v2840, %v2838
        %v2844 = vshll.u32 %v2737, 16
        %v2846 = vrot.slane %v2844, 1
        %v2847 = vsel %vm2767, %v2842, %v2846
        %v2849 = vshrl.u32 %v2738, 16
        %v2851 = vshll.u32 %v2738, 16
        %v2853 = vrot.slane %v2851, 1
        %v2854 = vor.u32 %v2849, %v2853
        %v2856 = vshll.u32 %v2739, 16
        %v2858 = vrot.slane %v2856, 1
        %v2859 = vsel %vm2767, %v2854, %v2858
        %v2860 = vshrl.u32 %v2739, 16
        %v2862 = vor.u32 %v2860, %v2858
        %v2864 = vshll.u32 %v2740, 16
        %v2866 = vrot.slane %v2864, 1
        %v2867 = vsel %vm2767, %v2862, %v2866
        %v2869 = vshrl.u32 %v2741, 16
        %v2871 = vshll.u32 %v2741, 16
        %v2873 = vrot.slane %v2871, 1
        %v2874 = vor.u32 %v2869, %v2873
        %v2876 = vshll.u32 %v2742, 16
        %v2878 = vrot.slane %v2876, 1
        %v2879 = vsel %vm2767, %v2874, %v2878
        %v2880 = vshrl.u32 %v2742, 16
        %v2882 = vor.u32 %v2880, %v2878
        %v2884 = vshll.u32 %v2743, 16
        %v2886 = vrot.slane %v2884, 1
        %v2887 = vsel %vm2767, %v2882, %v2886
        %v2889 = vshrl.u32 %v2744, 16
        %v2891 = vshll.u32 %v2744, 16
        %v2893 = vrot.slane %v2891, 1
        %v2894 = vor.u32 %v2889, %v2893
        %v2896 = vshll.u32 %v2745, 16
        %v2898 = vrot.slane %v2896, 1
        %v2899 = vsel %vm2767, %v2894, %v2898
        %v2900 = vshrl.u32 %v2745, 16
        %v2902 = vor.u32 %v2900, %v2898
        %v2904 = vshll.u32 %v2746, 16
        %v2906 = vrot.slane %v2904, 1
        %v2907 = vsel %vm2767, %v2902, %v2906
        %v2909 = vshrl.u32 %v2747, 16
        %v2911 = vshll.u32 %v2747, 16
        %v2913 = vrot.slane %v2911, 1
        %v2914 = vor.u32 %v2909, %v2913
        %v2916 = vshll.u32 %v2748, 16
        %v2918 = vrot.slane %v2916, 1
        %v2919 = vsel %vm2767, %v2914, %v2918
        %v2920 = vshrl.u32 %v2748, 16
        %v2922 = vor.u32 %v2920, %v2918
        %v2924 = vshll.u32 %v2749, 16
        %v2926 = vrot.slane %v2924, 1
        %v2927 = vsel %vm2767, %v2922, %v2926
        %s2944 = scalar_lea.vmem %s2, 320
        %v2945 = vld [vmem:[%s2944] sm:$0xf]
        %v2946 = vld [vmem:[%s2944 + $0x4] sm:$0xf]
        %v2947 = vld [vmem:[%s2944 + $0x8] sm:$0xf]
        %v2948 = vld [vmem:[%s2944 + $0xc] sm:$0xf]
        %v2949 = vld [vmem:[%s2944 + $0x10] sm:$0xf]
        %v2950 = vld [vmem:[%s2944 + $0x14] sm:$0xf]
        %v2951 = vld [vmem:[%s2944 + $0x18] sm:$0xf]
        %v2952 = vld [vmem:[%s2944 + $0x1c] sm:$0xf]
        %v2953 = vld [vmem:[%s2944 + $0x20] sm:$0xf]
        %v2954 = vld [vmem:[%s2944 + $0x24] sm:$0xf]
        %v2955 = vld [vmem:[%s2944 + $0x28] sm:$0xf]
        %v2956 = vld [vmem:[%s2944 + $0x2c] sm:$0xf]
        %v2957 = vld [vmem:[%s2944 + $0x30] sm:$0xf]
        %v2958 = vld [vmem:[%s2944 + $0x34] sm:$0xf]
        %v2959 = vld [vmem:[%s2944 + $0x38] sm:$0xf]
        %v2960 = vld [vmem:[%s2944 + $0x3c] sm:$0xf]
        %v2977 = vunpack.c.l.b16 %v2945
        %v2978 = vunpack.c.l.b16 %v2946
        %v2979 = vunpack.c.l.b16 %v2947
        %v2980 = vunpack.c.l.b16 %v2948
        %v2981 = vunpack.c.l.b16 %v2949
        %v2982 = vunpack.c.l.b16 %v2950
        %v2983 = vunpack.c.l.b16 %v2951
        %v2984 = vunpack.c.l.b16 %v2952
        %v2985 = vunpack.c.l.b16 %v2953
        %v2986 = vunpack.c.l.b16 %v2954
        %v2987 = vunpack.c.l.b16 %v2955
        %v2988 = vunpack.c.l.b16 %v2956
        %v2989 = vunpack.c.l.b16 %v2957
        %v2990 = vunpack.c.l.b16 %v2958
        %v2991 = vunpack.c.l.b16 %v2959
        %v2992 = vunpack.c.l.b16 %v2960
        %v2993 = vpack.c.b16 %v2978, %v2977
        %v2994 = vpack.c.b16 %v2980, %v2979
        %v2995 = vpack.c.b16 %v2982, %v2981
        %v2996 = vpack.c.b16 %v2984, %v2983
        %v2997 = vpack.c.b16 %v2986, %v2985
        %v2998 = vpack.c.b16 %v2988, %v2987
        %v2999 = vpack.c.b16 %v2990, %v2989
        %v3000 = vpack.c.b16 %v2992, %v2991
        %3009 = vmatprep.subr.bf16.mxu0 0
        %3010 = vmatpush1.bf16.msra.mxu0 %v2993
        %3011 = vmatprep.subr.bf16.mxu0 0
        %3012 = vmatpush1.bf16.msra.mxu0 %v2994
        %3013 = vmatprep.subr.bf16.mxu0 0
        %3014 = vmatpush1.bf16.msra.mxu0 %v2995
        %3015 = vmatprep.subr.bf16.mxu0 0
        %3016 = vmatpush1.bf16.msra.mxu0 %v2996
        %3017 = vmatprep.subr.bf16.mxu0 0
        %3018 = vmatpush1.bf16.msra.mxu0 %v2997
        %3019 = vmatprep.subr.bf16.mxu0 0
        %3020 = vmatpush1.bf16.msra.mxu0 %v2998
        %3021 = vmatprep.subr.bf16.mxu0 0
        %3022 = vmatpush1.bf16.msra.mxu0 %v2999
        %3023 = vmatprep.subr.bf16.mxu0 0
        %3024 = vmatpush1.bf16.msra.mxu0 %v3000
        %3025 = vmatprep.subr.bf16.mxu0 0
        %3026 = vmatpush1.bf16.msra.mxu0 0
        %3027 = vmatprep.subr.bf16.mxu0 0
        %3028 = vmatpush1.bf16.msra.mxu0 0
        %3029 = vmatprep.subr.bf16.mxu0 0
        %3030 = vmatpush1.bf16.msra.mxu0 0
        %3031 = vmatprep.subr.bf16.mxu0 0
        %3032 = vmatpush1.bf16.msra.mxu0 0
        %3033 = vmatprep.subr.bf16.mxu0 0
        %3034 = vmatpush1.bf16.msra.mxu0 0
        %3035 = vmatprep.subr.bf16.mxu0 0
        %3036 = vmatpush1.bf16.msra.mxu0 0
        %3037 = vmatprep.subr.bf16.mxu0 0
        %3038 = vmatpush1.bf16.msra.mxu0 0
        %3039 = vmatprep.subr.bf16.mxu0 0
        %3040 = vmatpush1.bf16.msra.mxu0 0
        %3041 = vmatprep.mubr.bf16.mxu0 0
        %3042 = vmatmul.mubr.bf16.gmra.mrb[0].mxu0 %v2779
        %v3043 = vpop.f32.mrb[0].mxu0
        %v3044 = vadd.f32 0.0, %v3043
        %v3045 = vpop.f32.mrb[0].mxu0
        %v3046 = vpop.f32.mrb[0].mxu0
        %v3047 = vadd.f32 0.0, %v3046
        %v3048 = vpop.f32.mrb[0].mxu0
        %3049 = vmatprep.mubr.bf16.mxu0 0
        %3050 = vmatmul.mubr.bf16.gmra.mrb[0].mxu0 %v2787
        %v3051 = vpop.f32.mrb[0].mxu0
        %v3052 = vadd.f32 0.0, %v3051
        %v3053 = vpop.f32.mrb[0].mxu0
        %v3054 = vpop.f32.mrb[0].mxu0
        %v3055 = vadd.f32 0.0, %v3054
        %v3056 = vpop.f32.mrb[0].mxu0
        %3057 = vmatprep.mubr.bf16.mxu0 0
        %3058 = vmatmul.mubr.bf16.gmra.mrb[0].mxu0 %v2799
        %v3059 = vpop.f32.mrb[0].mxu0
        %v3060 = vadd.f32 0.0, %v3059
        %v3061 = vpop.f32.mrb[0].mxu0
        %v3062 = vpop.f32.mrb[0].mxu0
        %v3063 = vadd.f32 0.0, %v3062
        %v3064 = vpop.f32.mrb[0].mxu0
        %3065 = vmatprep.mubr.bf16.mxu0 0
        %3066 = vmatmul.mubr.bf16.gmra.mrb[0].mxu0 %v2807
        %v3067 = vpop.f32.mrb[0].mxu0
        %v3068 = vadd.f32 0.0, %v3067
        %v3069 = vpop.f32.mrb[0].mxu0
        %v3070 = vpop.f32.mrb[0].mxu0
        %v3071 = vadd.f32 0.0, %v3070
        %v3072 = vpop.f32.mrb[0].mxu0
        %3073 = vmatprep.mubr.bf16.mxu0 0
        %3074 = vmatmul.mubr.bf16.gmra.mrb[0].mxu0 %v2819
        %v3075 = vpop.f32.mrb[0].mxu0
        %v3076 = vadd.f32 0.0, %v3075
        %v3077 = vpop.f32.mrb[0].mxu0
        %v3078 = vpop.f32.mrb[0].mxu0
        %v3079 = vadd.f32 0.0, %v3078
        %v3080 = vpop.f32.mrb[0].mxu0
        %3081 = vmatprep.mubr.bf16.mxu0 0
        %3082 = vmatmul.mubr.bf16.gmra.mrb[0].mxu0 %v2827
        %v3083 = vpop.f32.mrb[0].mxu0
        %v3084 = vadd.f32 0.0, %v3083
        %v3085 = vpop.f32.mrb[0].mxu0
        %v3086 = vpop.f32.mrb[0].mxu0
        %v3087 = vadd.f32 0.0, %v3086
        %v3088 = vpop.f32.mrb[0].mxu0
        %3089 = vmatprep.mubr.bf16.mxu0 0
        %3090 = vmatmul.mubr.bf16.gmra.mrb[0].mxu0 %v2839
        %v3091 = vpop.f32.mrb[0].mxu0
        %v3092 = vadd.f32 0.0, %v3091
        %v3093 = vpop.f32.mrb[0].mxu0
        %v3094 = vpop.f32.mrb[0].mxu0
        %v3095 = vadd.f32 0.0, %v3094
        %v3096 = vpop.f32.mrb[0].mxu0
        %3097 = vmatprep.mubr.bf16.mxu0 0
        %3098 = vmatmul.mubr.bf16.gmra.mrb[0].mxu0 %v2847
        %v3099 = vpop.f32.mrb[0].mxu0
        %v3100 = vadd.f32 0.0, %v3099
        %v3101 = vpop.f32.mrb[0].mxu0
        %v3102 = vpop.f32.mrb[0].mxu0
        %v3103 = vadd.f32 0.0, %v3102
        %v3104 = vpop.f32.mrb[0].mxu0
        %3105 = vmatprep.mubr.bf16.mxu0 0
        %3106 = vmatmul.mubr.bf16.gmra.mrb[0].mxu0 %v2859
        %v3107 = vpop.f32.mrb[0].mxu0
        %v3108 = vadd.f32 0.0, %v3107
        %v3109 = vpop.f32.mrb[0].mxu0
        %v3110 = vpop.f32.mrb[0].mxu0
        %v3111 = vadd.f32 0.0, %v3110
        %v3112 = vpop.f32.mrb[0].mxu0
        %3113 = vmatprep.mubr.bf16.mxu0 0
        %3114 = vmatmul.mubr.bf16.gmra.mrb[0].mxu0 %v2867
        %v3115 = vpop.f32.mrb[0].mxu0
        %v3116 = vadd.f32 0.0, %v3115
        %v3117 = vpop.f32.mrb[0].mxu0
        %v3118 = vpop.f32.mrb[0].mxu0
        %v3119 = vadd.f32 0.0, %v3118
        %v3120 = vpop.f32.mrb[0].mxu0
        %3121 = vmatprep.mubr.bf16.mxu0 0
        %3122 = vmatmul.mubr.bf16.gmra.mrb[0].mxu0 %v2879
        %v3123 = vpop.f32.mrb[0].mxu0
        %v3124 = vadd.f32 0.0, %v3123
        %v3125 = vpop.f32.mrb[0].mxu0
        %v3126 = vpop.f32.mrb[0].mxu0
        %v3127 = vadd.f32 0.0, %v3126
        %v3128 = vpop.f32.mrb[0].mxu0
        %3129 = vmatprep.mubr.bf16.mxu0 0
        %3130 = vmatmul.mubr.bf16.gmra.mrb[0].mxu0 %v2887
        %v3131 = vpop.f32.mrb[0].mxu0
        %v3132 = vadd.f32 0.0, %v3131
        %v3133 = vpop.f32.mrb[0].mxu0
        %v3134 = vpop.f32.mrb[0].mxu0
        %v3135 = vadd.f32 0.0, %v3134
        %v3136 = vpop.f32.mrb[0].mxu0
        %3137 = vmatprep.mubr.bf16.mxu0 0
        %3138 = vmatmul.mubr.bf16.gmra.mrb[0].mxu0 %v2899
        %v3139 = vpop.f32.mrb[0].mxu0
        %v3140 = vadd.f32 0.0, %v3139
        %v3141 = vpop.f32.mrb[0].mxu0
        %v3142 = vpop.f32.mrb[0].mxu0
        %v3143 = vadd.f32 0.0, %v3142
        %v3144 = vpop.f32.mrb[0].mxu0
        %3145 = vmatprep.mubr.bf16.mxu0 0
        %3146 = vmatmul.mubr.bf16.gmra.mrb[0].mxu0 %v2907
        %v3147 = vpop.f32.mrb[0].mxu0
        %v3148 = vadd.f32 0.0, %v3147
        %v3149 = vpop.f32.mrb[0].mxu0
        %v3150 = vpop.f32.mrb[0].mxu0
        %v3151 = vadd.f32 0.0, %v3150
        %v3152 = vpop.f32.mrb[0].mxu0
        %3153 = vmatprep.mubr.bf16.mxu0 0
        %3154 = vmatmul.mubr.bf16.gmra.mrb[0].mxu0 %v2919
        %v3155 = vpop.f32.mrb[0].mxu0
        %v3156 = vadd.f32 0.0, %v3155
        %v3157 = vpop.f32.mrb[0].mxu0
        %v3158 = vpop.f32.mrb[0].mxu0
        %v3159 = vadd.f32 0.0, %v3158
        %v3160 = vpop.f32.mrb[0].mxu0
        %3161 = vmatprep.mubr.bf16.mxu0 0
        %3162 = vmatmul.mubr.bf16.gmra.mrb[0].mxu0 %v2927
        %v3163 = vpop.f32.mrb[0].mxu0
        %v3164 = vadd.f32 0.0, %v3163
        %v3165 = vpop.f32.mrb[0].mxu0
        %v3166 = vpop.f32.mrb[0].mxu0
        %v3167 = vadd.f32 0.0, %v3166
        %v3168 = vpop.f32.mrb[0].mxu0
        %3169 = vdwg.mxu0
        %v3186 = vunpack.c.l.b16 %v2751
        %v3187 = vunpack.c.l.b16 %v2752
        %v3188 = vunpack.c.l.b16 %v2753
        %v3189 = vunpack.c.l.b16 %v2754
        %v3190 = vunpack.c.l.b16 %v2755
        %v3191 = vunpack.c.l.b16 %v2756
        %v3192 = vunpack.c.l.b16 %v2757
        %v3193 = vunpack.c.l.b16 %v2758
        %v3194 = vunpack.c.l.b16 %v2759
        %v3195 = vunpack.c.l.b16 %v2760
        %v3196 = vunpack.c.l.b16 %v2761
        %v3197 = vunpack.c.l.b16 %v2762
        %v3198 = vunpack.c.l.b16 %v2763
        %v3199 = vunpack.c.l.b16 %v2764
        %v3200 = vunpack.c.l.b16 %v2765
        %v3201 = vunpack.c.l.b16 %v2766
        %v3202 = vpack.c.b16 %v3187, %v3186
        %v3203 = vpack.c.b16 %v3189, %v3188
        %v3204 = vpack.c.b16 %v3191, %v3190
        %v3205 = vpack.c.b16 %v3193, %v3192
        %v3206 = vpack.c.b16 %v3195, %v3194
        %v3207 = vpack.c.b16 %v3197, %v3196
        %v3208 = vpack.c.b16 %v3199, %v3198
        %v3209 = vpack.c.b16 %v3201, %v3200
        %3218 = vmatprep.subr.bf16.mxu0 0
        %3219 = vmatpush1.bf16.msra.mxu0 %v3202
        %3220 = vmatprep.subr.bf16.mxu0 0
        %3221 = vmatpush1.bf16.msra.mxu0 %v3203
        %3222 = vmatprep.subr.bf16.mxu0 0
        %3223 = vmatpush1.bf16.msra.mxu0 %v3204
        %3224 = vmatprep.subr.bf16.mxu0 0
        %3225 = vmatpush1.bf16.msra.mxu0 %v3205
        %3226 = vmatprep.subr.bf16.mxu0 0
        %3227 = vmatpush1.bf16.msra.mxu0 %v3206
        %3228 = vmatprep.subr.bf16.mxu0 0
        %3229 = vmatpush1.bf16.msra.mxu0 %v3207
        %3230 = vmatprep.subr.bf16.mxu0 0
        %3231 = vmatpush1.bf16.msra.mxu0 %v3208
        %3232 = vmatprep.subr.bf16.mxu0 0
        %3233 = vmatpush1.bf16.msra.mxu0 %v3209
        %3234 = vmatprep.subr.bf16.mxu0 0
        %3235 = vmatpush1.bf16.msra.mxu0 0
        %3236 = vmatprep.subr.bf16.mxu0 0
        %3237 = vmatpush1.bf16.msra.mxu0 0
        %3238 = vmatprep.subr.bf16.mxu0 0
        %3239 = vmatpush1.bf16.msra.mxu0 0
        %3240 = vmatprep.subr.bf16.mxu0 0
        %3241 = vmatpush1.bf16.msra.mxu0 0
        %3242 = vmatprep.subr.bf16.mxu0 0
        %3243 = vmatpush1.bf16.msra.mxu0 0
        %3244 = vmatprep.subr.bf16.mxu0 0
        %3245 = vmatpush1.bf16.msra.mxu0 0
        %3246 = vmatprep.subr.bf16.mxu0 0
        %3247 = vmatpush1.bf16.msra.mxu0 0
        %3248 = vmatprep.subr.bf16.mxu0 0
        %3249 = vmatpush1.bf16.msra.mxu0 0
        %3250 = vmatprep.mubr.bf16.mxu0 0
        %3251 = vmatmul.mubr.bf16.gmra.mrb[0].mxu0 %v2726
        %v3252 = vpop.f32.mrb[0].mxu0
        %v3253 = vadd.f32 %v3044, %v3252
        %v3254 = vpop.f32.mrb[0].mxu0
        %v3255 = vpop.f32.mrb[0].mxu0
        %v3256 = vadd.f32 %v3047, %v3255
        %v3257 = vpop.f32.mrb[0].mxu0
        %3258 = vmatprep.mubr.bf16.mxu0 0
        %3259 = vmatmul.mubr.bf16.gmra.mrb[0].mxu0 %v2727
        %v3260 = vpop.f32.mrb[0].mxu0
        %v3261 = vadd.f32 %v3052, %v3260
        %v3262 = vpop.f32.mrb[0].mxu0
        %v3263 = vpop.f32.mrb[0].mxu0
        %v3264 = vadd.f32 %v3055, %v3263
        %v3265 = vpop.f32.mrb[0].mxu0
        %3266 = vmatprep.mubr.bf16.mxu0 0
        %3267 = vmatmul.mubr.bf16.gmra.mrb[0].mxu0 %v2729
        %v3268 = vpop.f32.mrb[0].mxu0
        %v3269 = vadd.f32 %v3060, %v3268
        %v3270 = vpop.f32.mrb[0].mxu0
        %v3271 = vpop.f32.mrb[0].mxu0
        %v3272 = vadd.f32 %v3063, %v3271
        %v3273 = vpop.f32.mrb[0].mxu0
        %3274 = vmatprep.mubr.bf16.mxu0 0
        %3275 = vmatmul.mubr.bf16.gmra.mrb[0].mxu0 %v2730
        %v3276 = vpop.f32.mrb[0].mxu0
        %v3277 = vadd.f32 %v3068, %v3276
        %v3278 = vpop.f32.mrb[0].mxu0
        %v3279 = vpop.f32.mrb[0].mxu0
        %v3280 = vadd.f32 %v3071, %v3279
        %v3281 = vpop.f32.mrb[0].mxu0
        %3282 = vmatprep.mubr.bf16.mxu0 0
        %3283 = vmatmul.mubr.bf16.gmra.mrb[0].mxu0 %v2732
        %v3284 = vpop.f32.mrb[0].mxu0
        %v3285 = vadd.f32 %v3076, %v3284
        %v3286 = vpop.f32.mrb[0].mxu0
        %v3287 = vpop.f32.mrb[0].mxu0
        %v3288 = vadd.f32 %v3079, %v3287
        %v3289 = vpop.f32.mrb[0].mxu0
        %3290 = vmatprep.mubr.bf16.mxu0 0
        %3291 = vmatmul.mubr.bf16.gmra.mrb[0].mxu0 %v2733
        %v3292 = vpop.f32.mrb[0].mxu0
        %v3293 = vadd.f32 %v3084, %v3292
        %v3294 = vpop.f32.mrb[0].mxu0
        %v3295 = vpop.f32.mrb[0].mxu0
        %v3296 = vadd.f32 %v3087, %v3295
        %v3297 = vpop.f32.mrb[0].mxu0
        %3298 = vmatprep.mubr.bf16.mxu0 0
        %3299 = vmatmul.mubr.bf16.gmra.mrb[0].mxu0 %v2735
        %v3300 = vpop.f32.mrb[0].mxu0
        %v3301 = vadd.f32 %v3092, %v3300
        %v3302 = vpop.f32.mrb[0].mxu0
        %v3303 = vpop.f32.mrb[0].mxu0
        %v3304 = vadd.f32 %v3095, %v3303
        %v3305 = vpop.f32.mrb[0].mxu0
        %3306 = vmatprep.mubr.bf16.mxu0 0
        %3307 = vmatmul.mubr.bf16.gmra.mrb[0].mxu0 %v2736
        %v3308 = vpop.f32.mrb[0].mxu0
        %v3309 = vadd.f32 %v3100, %v3308
        %v3310 = vpop.f32.mrb[0].mxu0
        %v3311 = vpop.f32.mrb[0].mxu0
        %v3312 = vadd.f32 %v3103, %v3311
        %v3313 = vpop.f32.mrb[0].mxu0
        %3314 = vmatprep.mubr.bf16.mxu0 0
        %3315 = vmatmul.mubr.bf16.gmra.mrb[0].mxu0 %v2738
        %v3316 = vpop.f32.mrb[0].mxu0
        %v3317 = vadd.f32 %v3108, %v3316
        %v3318 = vpop.f32.mrb[0].mxu0
        %v3319 = vpop.f32.mrb[0].mxu0
        %v3320 = vadd.f32 %v3111, %v3319
        %v3321 = vpop.f32.mrb[0].mxu0
        %3322 = vmatprep.mubr.bf16.mxu0 0
        %3323 = vmatmul.mubr.bf16.gmra.mrb[0].mxu0 %v2739
        %v3324 = vpop.f32.mrb[0].mxu0
        %v3325 = vadd.f32 %v3116, %v3324
        %v3326 = vpop.f32.mrb[0].mxu0
        %v3327 = vpop.f32.mrb[0].mxu0
        %v3328 = vadd.f32 %v3119, %v3327
        %v3329 = vpop.f32.mrb[0].mxu0
        %3330 = vmatprep.mubr.bf16.mxu0 0
        %3331 = vmatmul.mubr.bf16.gmra.mrb[0].mxu0 %v2741
        %v3332 = vpop.f32.mrb[0].mxu0
        %v3333 = vadd.f32 %v3124, %v3332
        %v3334 = vpop.f32.mrb[0].mxu0
        %v3335 = vpop.f32.mrb[0].mxu0
        %v3336 = vadd.f32 %v3127, %v3335
        %v3337 = vpop.f32.mrb[0].mxu0
        %3338 = vmatprep.mubr.bf16.mxu0 0
        %3339 = vmatmul.mubr.bf16.gmra.mrb[0].mxu0 %v2742
        %v3340 = vpop.f32.mrb[0].mxu0
        %v3341 = vadd.f32 %v3132, %v3340
        %v3342 = vpop.f32.mrb[0].mxu0
        %v3343 = vpop.f32.mrb[0].mxu0
        %v3344 = vadd.f32 %v3135, %v3343
        %v3345 = vpop.f32.mrb[0].mxu0
        %3346 = vmatprep.mubr.bf16.mxu0 0
        %3347 = vmatmul.mubr.bf16.gmra.mrb[0].mxu0 %v2744
        %v3348 = vpop.f32.mrb[0].mxu0
        %v3349 = vadd.f32 %v3140, %v3348
        %v3350 = vpop.f32.mrb[0].mxu0
        %v3351 = vpop.f32.mrb[0].mxu0
        %v3352 = vadd.f32 %v3143, %v3351
        %v3353 = vpop.f32.mrb[0].mxu0
        %3354 = vmatprep.mubr.bf16.mxu0 0
        %3355 = vmatmul.mubr.bf16.gmra.mrb[0].mxu0 %v2745
        %v3356 = vpop.f32.mrb[0].mxu0
        %v3357 = vadd.f32 %v3148, %v3356
        %v3358 = vpop.f32.mrb[0].mxu0
        %v3359 = vpop.f32.mrb[0].mxu0
        %v3360 = vadd.f32 %v3151, %v3359
        %v3361 = vpop.f32.mrb[0].mxu0
        %3362 = vmatprep.mubr.bf16.mxu0 0
        %3363 = vmatmul.mubr.bf16.gmra.mrb[0].mxu0 %v2747
        %v3364 = vpop.f32.mrb[0].mxu0
        %v3365 = vadd.f32 %v3156, %v3364
        %v3366 = vpop.f32.mrb[0].mxu0
        %v3367 = vpop.f32.mrb[0].mxu0
        %v3368 = vadd.f32 %v3159, %v3367
        %v3369 = vpop.f32.mrb[0].mxu0
        %3370 = vmatprep.mubr.bf16.mxu0 0
        %3371 = vmatmul.mubr.bf16.gmra.mrb[0].mxu0 %v2748
        %v3372 = vpop.f32.mrb[0].mxu0
        %v3373 = vadd.f32 %v3164, %v3372
        %v3374 = vpop.f32.mrb[0].mxu0
        %v3375 = vpop.f32.mrb[0].mxu0
        %v3376 = vadd.f32 %v3167, %v3375
        %v3377 = vpop.f32.mrb[0].mxu0
        %3378 = vdwg.mxu0
        %vm3403 = vcmask 1046528
        %v3404 = vrot.slane %v2726, 1
        %v3405 = vrot.slane %v2727, 1
        %v3406 = vsel %vm3403, %v3404, %v3405
        %v3407 = vrot.slane %v2728, 1
        %v3408 = vsel %vm3403, %v3405, %v3407
        %v3409 = vrot.slane %v2729, 1
        %v3410 = vrot.slane %v2730, 1
        %v3411 = vsel %vm3403, %v3409, %v3410
        %v3412 = vrot.slane %v2731, 1
        %v3413 = vsel %vm3403, %v3410, %v3412
        %v3414 = vrot.slane %v2732, 1
        %v3415 = vrot.slane %v2733, 1
        %v3416 = vsel %vm3403, %v3414, %v3415
        %v3417 = vrot.slane %v2734, 1
        %v3418 = vsel %vm3403, %v3415, %v3417
        %v3419 = vrot.slane %v2735, 1
        %v3420 = vrot.slane %v2736, 1
        %v3421 = vsel %vm3403, %v3419, %v3420
        %v3422 = vrot.slane %v2737, 1
        %v3423 = vsel %vm3403, %v3420, %v3422
        %v3424 = vrot.slane %v2738, 1
        %v3425 = vrot.slane %v2739, 1
        %v3426 = vsel %vm3403, %v3424, %v3425
        %v3427 = vrot.slane %v2740, 1
        %v3428 = vsel %vm3403, %v3425, %v3427
        %v3429 = vrot.slane %v2741, 1
        %v3430 = vrot.slane %v2742, 1
        %v3431 = vsel %vm3403, %v3429, %v3430
        %v3432 = vrot.slane %v2743, 1
        %v3433 = vsel %vm3403, %v3430, %v3432
        %v3434 = vrot.slane %v2744, 1
        %v3435 = vrot.slane %v2745, 1
        %v3436 = vsel %vm3403, %v3434, %v3435
        %v3437 = vrot.slane %v2746, 1
        %v3438 = vsel %vm3403, %v3435, %v3437
        %v3439 = vrot.slane %v2747, 1
        %v3440 = vrot.slane %v2748, 1
        %v3441 = vsel %vm3403, %v3439, %v3440
        %v3442 = vrot.slane %v2749, 1
        %v3443 = vsel %vm3403, %v3440, %v3442
        %s3460 = scalar_lea.vmem %s2, 384
        %v3461 = vld [vmem:[%s3460] sm:$0xf]
        %v3462 = vld [vmem:[%s3460 + $0x4] sm:$0xf]
        %v3463 = vld [vmem:[%s3460 + $0x8] sm:$0xf]
        %v3464 = vld [vmem:[%s3460 + $0xc] sm:$0xf]
        %v3465 = vld [vmem:[%s3460 + $0x10] sm:$0xf]
        %v3466 = vld [vmem:[%s3460 + $0x14] sm:$0xf]
        %v3467 = vld [vmem:[%s3460 + $0x18] sm:$0xf]
        %v3468 = vld [vmem:[%s3460 + $0x1c] sm:$0xf]
        %v3469 = vld [vmem:[%s3460 + $0x20] sm:$0xf]
        %v3470 = vld [vmem:[%s3460 + $0x24] sm:$0xf]
        %v3471 = vld [vmem:[%s3460 + $0x28] sm:$0xf]
        %v3472 = vld [vmem:[%s3460 + $0x2c] sm:$0xf]
        %v3473 = vld [vmem:[%s3460 + $0x30] sm:$0xf]
        %v3474 = vld [vmem:[%s3460 + $0x34] sm:$0xf]
        %v3475 = vld [vmem:[%s3460 + $0x38] sm:$0xf]
        %v3476 = vld [vmem:[%s3460 + $0x3c] sm:$0xf]
        %v3493 = vunpack.c.l.b16 %v3461
        %v3494 = vunpack.c.l.b16 %v3462
        %v3495 = vunpack.c.l.b16 %v3463
        %v3496 = vunpack.c.l.b16 %v3464
        %v3497 = vunpack.c.l.b16 %v3465
        %v3498 = vunpack.c.l.b16 %v3466
        %v3499 = vunpack.c.l.b16 %v3467
        %v3500 = vunpack.c.l.b16 %v3468
        %v3501 = vunpack.c.l.b16 %v3469
        %v3502 = vunpack.c.l.b16 %v3470
        %v3503 = vunpack.c.l.b16 %v3471
        %v3504 = vunpack.c.l.b16 %v3472
        %v3505 = vunpack.c.l.b16 %v3473
        %v3506 = vunpack.c.l.b16 %v3474
        %v3507 = vunpack.c.l.b16 %v3475
        %v3508 = vunpack.c.l.b16 %v3476
        %v3509 = vpack.c.b16 %v3494, %v3493
        %v3510 = vpack.c.b16 %v3496, %v3495
        %v3511 = vpack.c.b16 %v3498, %v3497
        %v3512 = vpack.c.b16 %v3500, %v3499
        %v3513 = vpack.c.b16 %v3502, %v3501
        %v3514 = vpack.c.b16 %v3504, %v3503
        %v3515 = vpack.c.b16 %v3506, %v3505
        %v3516 = vpack.c.b16 %v3508, %v3507
        %3525 = vmatprep.subr.bf16.mxu0 0
        %3526 = vmatpush1.bf16.msra.mxu0 %v3509
        %3527 = vmatprep.subr.bf16.mxu0 0
        %3528 = vmatpush1.bf16.msra.mxu0 %v3510
        %3529 = vmatprep.subr.bf16.mxu0 0
        %3530 = vmatpush1.bf16.msra.mxu0 %v3511
        %3531 = vmatprep.subr.bf16.mxu0 0
        %3532 = vmatpush1.bf16.msra.mxu0 %v3512
        %3533 = vmatprep.subr.bf16.mxu0 0
        %3534 = vmatpush1.bf16.msra.mxu0 %v3513
        %3535 = vmatprep.subr.bf16.mxu0 0
        %3536 = vmatpush1.bf16.msra.mxu0 %v3514
        %3537 = vmatprep.subr.bf16.mxu0 0
        %3538 = vmatpush1.bf16.msra.mxu0 %v3515
        %3539 = vmatprep.subr.bf16.mxu0 0
        %3540 = vmatpush1.bf16.msra.mxu0 %v3516
        %3541 = vmatprep.subr.bf16.mxu0 0
        %3542 = vmatpush1.bf16.msra.mxu0 0
        %3543 = vmatprep.subr.bf16.mxu0 0
        %3544 = vmatpush1.bf16.msra.mxu0 0
        %3545 = vmatprep.subr.bf16.mxu0 0
        %3546 = vmatpush1.bf16.msra.mxu0 0
        %3547 = vmatprep.subr.bf16.mxu0 0
        %3548 = vmatpush1.bf16.msra.mxu0 0
        %3549 = vmatprep.subr.bf16.mxu0 0
        %3550 = vmatpush1.bf16.msra.mxu0 0
        %3551 = vmatprep.subr.bf16.mxu0 0
        %3552 = vmatpush1.bf16.msra.mxu0 0
        %3553 = vmatprep.subr.bf16.mxu0 0
        %3554 = vmatpush1.bf16.msra.mxu0 0
        %3555 = vmatprep.subr.bf16.mxu0 0
        %3556 = vmatpush1.bf16.msra.mxu0 0
        %3557 = vmatprep.mubr.bf16.mxu0 0
        %3558 = vmatmul.mubr.bf16.gmra.mrb[0].mxu0 %v3406
        %v3559 = vpop.f32.mrb[0].mxu0
        %v3560 = vadd.f32 0.0, %v3559
        %v3561 = vpop.f32.mrb[0].mxu0
        %v3562 = vpop.f32.mrb[0].mxu0
        %v3563 = vadd.f32 0.0, %v3562
        %v3564 = vpop.f32.mrb[0].mxu0
        %3565 = vmatprep.mubr.bf16.mxu0 0
        %3566 = vmatmul.mubr.bf16.gmra.mrb[0].mxu0 %v3408
        %v3567 = vpop.f32.mrb[0].mxu0
        %v3568 = vadd.f32 0.0, %v3567
        %v3569 = vpop.f32.mrb[0].mxu0
        %v3570 = vpop.f32.mrb[0].mxu0
        %v3571 = vadd.f32 0.0, %v3570
        %v3572 = vpop.f32.mrb[0].mxu0
        %3573 = vmatprep.mubr.bf16.mxu0 0
        %3574 = vmatmul.mubr.bf16.gmra.mrb[0].mxu0 %v3411
        %v3575 = vpop.f32.mrb[0].mxu0
        %v3576 = vadd.f32 0.0, %v3575
        %v3577 = vpop.f32.mrb[0].mxu0
        %v3578 = vpop.f32.mrb[0].mxu0
        %v3579 = vadd.f32 0.0, %v3578
        %v3580 = vpop.f32.mrb[0].mxu0
        %3581 = vmatprep.mubr.bf16.mxu0 0
        %3582 = vmatmul.mubr.bf16.gmra.mrb[0].mxu0 %v3413
        %v3583 = vpop.f32.mrb[0].mxu0
        %v3584 = vadd.f32 0.0, %v3583
        %v3585 = vpop.f32.mrb[0].mxu0
        %v3586 = vpop.f32.mrb[0].mxu0
        %v3587 = vadd.f32 0.0, %v3586
        %v3588 = vpop.f32.mrb[0].mxu0
        %3589 = vmatprep.mubr.bf16.mxu0 0
        %3590 = vmatmul.mubr.bf16.gmra.mrb[0].mxu0 %v3416
        %v3591 = vpop.f32.mrb[0].mxu0
        %v3592 = vadd.f32 0.0, %v3591
        %v3593 = vpop.f32.mrb[0].mxu0
        %v3594 = vpop.f32.mrb[0].mxu0
        %v3595 = vadd.f32 0.0, %v3594
        %v3596 = vpop.f32.mrb[0].mxu0
        %3597 = vmatprep.mubr.bf16.mxu0 0
        %3598 = vmatmul.mubr.bf16.gmra.mrb[0].mxu0 %v3418
        %v3599 = vpop.f32.mrb[0].mxu0
        %v3600 = vadd.f32 0.0, %v3599
        %v3601 = vpop.f32.mrb[0].mxu0
        %v3602 = vpop.f32.mrb[0].mxu0
        %v3603 = vadd.f32 0.0, %v3602
        %v3604 = vpop.f32.mrb[0].mxu0
        %3605 = vmatprep.mubr.bf16.mxu0 0
        %3606 = vmatmul.mubr.bf16.gmra.mrb[0].mxu0 %v3421
        %v3607 = vpop.f32.mrb[0].mxu0
        %v3608 = vadd.f32 0.0, %v3607
        %v3609 = vpop.f32.mrb[0].mxu0
        %v3610 = vpop.f32.mrb[0].mxu0
        %v3611 = vadd.f32 0.0, %v3610
        %v3612 = vpop.f32.mrb[0].mxu0
        %3613 = vmatprep.mubr.bf16.mxu0 0
        %3614 = vmatmul.mubr.bf16.gmra.mrb[0].mxu0 %v3423
        %v3615 = vpop.f32.mrb[0].mxu0
        %v3616 = vadd.f32 0.0, %v3615
        %v3617 = vpop.f32.mrb[0].mxu0
        %v3618 = vpop.f32.mrb[0].mxu0
        %v3619 = vadd.f32 0.0, %v3618
        %v3620 = vpop.f32.mrb[0].mxu0
        %3621 = vmatprep.mubr.bf16.mxu0 0
        %3622 = vmatmul.mubr.bf16.gmra.mrb[0].mxu0 %v3426
        %v3623 = vpop.f32.mrb[0].mxu0
        %v3624 = vadd.f32 0.0, %v3623
        %v3625 = vpop.f32.mrb[0].mxu0
        %v3626 = vpop.f32.mrb[0].mxu0
        %v3627 = vadd.f32 0.0, %v3626
        %v3628 = vpop.f32.mrb[0].mxu0
        %3629 = vmatprep.mubr.bf16.mxu0 0
        %3630 = vmatmul.mubr.bf16.gmra.mrb[0].mxu0 %v3428
        %v3631 = vpop.f32.mrb[0].mxu0
        %v3632 = vadd.f32 0.0, %v3631
        %v3633 = vpop.f32.mrb[0].mxu0
        %v3634 = vpop.f32.mrb[0].mxu0
        %v3635 = vadd.f32 0.0, %v3634
        %v3636 = vpop.f32.mrb[0].mxu0
        %3637 = vmatprep.mubr.bf16.mxu0 0
        %3638 = vmatmul.mubr.bf16.gmra.mrb[0].mxu0 %v3431
        %v3639 = vpop.f32.mrb[0].mxu0
        %v3640 = vadd.f32 0.0, %v3639
        %v3641 = vpop.f32.mrb[0].mxu0
        %v3642 = vpop.f32.mrb[0].mxu0
        %v3643 = vadd.f32 0.0, %v3642
        %v3644 = vpop.f32.mrb[0].mxu0
        %3645 = vmatprep.mubr.bf16.mxu0 0
        %3646 = vmatmul.mubr.bf16.gmra.mrb[0].mxu0 %v3433
        %v3647 = vpop.f32.mrb[0].mxu0
        %v3648 = vadd.f32 0.0, %v3647
        %v3649 = vpop.f32.mrb[0].mxu0
        %v3650 = vpop.f32.mrb[0].mxu0
        %v3651 = vadd.f32 0.0, %v3650
        %v3652 = vpop.f32.mrb[0].mxu0
        %3653 = vmatprep.mubr.bf16.mxu0 0
        %3654 = vmatmul.mubr.bf16.gmra.mrb[0].mxu0 %v3436
        %v3655 = vpop.f32.mrb[0].mxu0
        %v3656 = vadd.f32 0.0, %v3655
        %v3657 = vpop.f32.mrb[0].mxu0
        %v3658 = vpop.f32.mrb[0].mxu0
        %v3659 = vadd.f32 0.0, %v3658
        %v3660 = vpop.f32.mrb[0].mxu0
        %3661 = vmatprep.mubr.bf16.mxu0 0
        %3662 = vmatmul.mubr.bf16.gmra.mrb[0].mxu0 %v3438
        %v3663 = vpop.f32.mrb[0].mxu0
        %v3664 = vadd.f32 0.0, %v3663
        %v3665 = vpop.f32.mrb[0].mxu0
        %v3666 = vpop.f32.mrb[0].mxu0
        %v3667 = vadd.f32 0.0, %v3666
        %v3668 = vpop.f32.mrb[0].mxu0
        %3669 = vmatprep.mubr.bf16.mxu0 0
        %3670 = vmatmul.mubr.bf16.gmra.mrb[0].mxu0 %v3441
        %v3671 = vpop.f32.mrb[0].mxu0
        %v3672 = vadd.f32 0.0, %v3671
        %v3673 = vpop.f32.mrb[0].mxu0
        %v3674 = vpop.f32.mrb[0].mxu0
        %v3675 = vadd.f32 0.0, %v3674
        %v3676 = vpop.f32.mrb[0].mxu0
        %3677 = vmatprep.mubr.bf16.mxu0 0
        %3678 = vmatmul.mubr.bf16.gmra.mrb[0].mxu0 %v3443
        %v3679 = vpop.f32.mrb[0].mxu0
        %v3680 = vadd.f32 0.0, %v3679
        %v3681 = vpop.f32.mrb[0].mxu0
        %v3682 = vpop.f32.mrb[0].mxu0
        %v3683 = vadd.f32 0.0, %v3682
        %v3684 = vpop.f32.mrb[0].mxu0
        %3685 = vdwg.mxu0
        %v3686 = vadd.f32 %v3253, %v3560
        %v3687 = vadd.f32 %v3256, %v3563
        %v3688 = vadd.f32 %v3261, %v3568
        %v3689 = vadd.f32 %v3264, %v3571
        %v3690 = vadd.f32 %v3269, %v3576
        %v3691 = vadd.f32 %v3272, %v3579
        %v3692 = vadd.f32 %v3277, %v3584
        %v3693 = vadd.f32 %v3280, %v3587
        %v3694 = vadd.f32 %v3285, %v3592
        %v3695 = vadd.f32 %v3288, %v3595
        %v3696 = vadd.f32 %v3293, %v3600
        %v3697 = vadd.f32 %v3296, %v3603
        %v3698 = vadd.f32 %v3301, %v3608
        %v3699 = vadd.f32 %v3304, %v3611
        %v3700 = vadd.f32 %v3309, %v3616
        %v3701 = vadd.f32 %v3312, %v3619
        %v3702 = vadd.f32 %v3317, %v3624
        %v3703 = vadd.f32 %v3320, %v3627
        %v3704 = vadd.f32 %v3325, %v3632
        %v3705 = vadd.f32 %v3328, %v3635
        %v3706 = vadd.f32 %v3333, %v3640
        %v3707 = vadd.f32 %v3336, %v3643
        %v3708 = vadd.f32 %v3341, %v3648
        %v3709 = vadd.f32 %v3344, %v3651
        %v3710 = vadd.f32 %v3349, %v3656
        %v3711 = vadd.f32 %v3352, %v3659
        %v3712 = vadd.f32 %v3357, %v3664
        %v3713 = vadd.f32 %v3360, %v3667
        %v3714 = vadd.f32 %v3365, %v3672
        %v3715 = vadd.f32 %v3368, %v3675
        %v3716 = vadd.f32 %v3373, %v3680
        %v3717 = vadd.f32 %v3376, %v3683
        %s3718 = scalar_lea.vmem %s3, 1
        %v3719 = vld [vmem:[%s3718] sm:$0x1]
        %v3721 = vlaneseq
        %v3722 = vshrl.u32 %v3721, 7
        %v3723 = vsub.s32 0, %v3722
        %v3724 = vrot.slane %v3719, %v3723
        %v3726 = vadd.f32 %v3686, %v3724
        %v3727 = vadd.f32 %v3687, %v3724
        %v3728 = vadd.f32 %v3688, %v3724
        %v3729 = vadd.f32 %v3689, %v3724
        %v3730 = vadd.f32 %v3690, %v3724
        %v3731 = vadd.f32 %v3691, %v3724
        %v3732 = vadd.f32 %v3692, %v3724
        %v3733 = vadd.f32 %v3693, %v3724
        %v3734 = vadd.f32 %v3694, %v3724
        %v3735 = vadd.f32 %v3695, %v3724
        %v3736 = vadd.f32 %v3696, %v3724
        %v3737 = vadd.f32 %v3697, %v3724
        %v3738 = vadd.f32 %v3698, %v3724
        %v3739 = vadd.f32 %v3699, %v3724
        %v3740 = vadd.f32 %v3700, %v3724
        %v3741 = vadd.f32 %v3701, %v3724
        %v3742 = vadd.f32 %v3702, %v3724
        %v3743 = vadd.f32 %v3703, %v3724
        %v3744 = vadd.f32 %v3704, %v3724
        %v3745 = vadd.f32 %v3705, %v3724
        %v3746 = vadd.f32 %v3706, %v3724
        %v3747 = vadd.f32 %v3707, %v3724
        %v3748 = vadd.f32 %v3708, %v3724
        %v3749 = vadd.f32 %v3709, %v3724
        %v3750 = vadd.f32 %v3710, %v3724
        %v3751 = vadd.f32 %v3711, %v3724
        %v3752 = vadd.f32 %v3712, %v3724
        %v3753 = vadd.f32 %v3713, %v3724
        %v3754 = vadd.f32 %v3714, %v3724
        %v3755 = vadd.f32 %v3715, %v3724
        %v3756 = vadd.f32 %v3716, %v3724
        %v3757 = vadd.f32 %v3717, %v3724
        %vm3758 = vcmp.ge.f32.partialorder %v3726, 0.0
        %vm3759 = vcmp.ge.f32.partialorder %v3727, 0.0
        %vm3760 = vcmp.ge.f32.partialorder %v3728, 0.0
        %vm3761 = vcmp.ge.f32.partialorder %v3729, 0.0
        %vm3762 = vcmp.ge.f32.partialorder %v3730, 0.0
        %vm3763 = vcmp.ge.f32.partialorder %v3731, 0.0
        %vm3764 = vcmp.ge.f32.partialorder %v3732, 0.0
        %vm3765 = vcmp.ge.f32.partialorder %v3733, 0.0
        %vm3766 = vcmp.ge.f32.partialorder %v3734, 0.0
        %vm3767 = vcmp.ge.f32.partialorder %v3735, 0.0
        %vm3768 = vcmp.ge.f32.partialorder %v3736, 0.0
        %vm3769 = vcmp.ge.f32.partialorder %v3737, 0.0
        %vm3770 = vcmp.ge.f32.partialorder %v3738, 0.0
        %vm3771 = vcmp.ge.f32.partialorder %v3739, 0.0
        %vm3772 = vcmp.ge.f32.partialorder %v3740, 0.0
        %vm3773 = vcmp.ge.f32.partialorder %v3741, 0.0
        %vm3774 = vcmp.ge.f32.partialorder %v3742, 0.0
        %vm3775 = vcmp.ge.f32.partialorder %v3743, 0.0
        %vm3776 = vcmp.ge.f32.partialorder %v3744, 0.0
        %vm3777 = vcmp.ge.f32.partialorder %v3745, 0.0
        %vm3778 = vcmp.ge.f32.partialorder %v3746, 0.0
        %vm3779 = vcmp.ge.f32.partialorder %v3747, 0.0
        %vm3780 = vcmp.ge.f32.partialorder %v3748, 0.0
        %vm3781 = vcmp.ge.f32.partialorder %v3749, 0.0
        %vm3782 = vcmp.ge.f32.partialorder %v3750, 0.0
        %vm3783 = vcmp.ge.f32.partialorder %v3751, 0.0
        %vm3784 = vcmp.ge.f32.partialorder %v3752, 0.0
        %vm3785 = vcmp.ge.f32.partialorder %v3753, 0.0
        %vm3786 = vcmp.ge.f32.partialorder %v3754, 0.0
        %vm3787 = vcmp.ge.f32.partialorder %v3755, 0.0
        %vm3788 = vcmp.ge.f32.partialorder %v3756, 0.0
        %vm3789 = vcmp.ge.f32.partialorder %v3757, 0.0
        %v3790 = vmul.f32 %v3726, 0.2
        %v3791 = vmul.f32 %v3727, 0.2
        %v3792 = vmul.f32 %v3728, 0.2
        %v3793 = vmul.f32 %v3729, 0.2
        %v3794 = vmul.f32 %v3730, 0.2
        %v3795 = vmul.f32 %v3731, 0.2
        %v3796 = vmul.f32 %v3732, 0.2
        %v3797 = vmul.f32 %v3733, 0.2
        %v3798 = vmul.f32 %v3734, 0.2
        %v3799 = vmul.f32 %v3735, 0.2
        %v3800 = vmul.f32 %v3736, 0.2
        %v3801 = vmul.f32 %v3737, 0.2
        %v3802 = vmul.f32 %v3738, 0.2
        %v3803 = vmul.f32 %v3739, 0.2
        %v3804 = vmul.f32 %v3740, 0.2
        %v3805 = vmul.f32 %v3741, 0.2
        %v3806 = vmul.f32 %v3742, 0.2
        %v3807 = vmul.f32 %v3743, 0.2
        %v3808 = vmul.f32 %v3744, 0.2
        %v3809 = vmul.f32 %v3745, 0.2
        %v3810 = vmul.f32 %v3746, 0.2
        %v3811 = vmul.f32 %v3747, 0.2
        %v3812 = vmul.f32 %v3748, 0.2
        %v3813 = vmul.f32 %v3749, 0.2
        %v3814 = vmul.f32 %v3750, 0.2
        %v3815 = vmul.f32 %v3751, 0.2
        %v3816 = vmul.f32 %v3752, 0.2
        %v3817 = vmul.f32 %v3753, 0.2
        %v3818 = vmul.f32 %v3754, 0.2
        %v3819 = vmul.f32 %v3755, 0.2
        %v3820 = vmul.f32 %v3756, 0.2
        %v3821 = vmul.f32 %v3757, 0.2
        %v3822 = vsel %vm3758, %v3726, %v3790
        %v3823 = vsel %vm3759, %v3727, %v3791
        %v3824 = vsel %vm3760, %v3728, %v3792
        %v3825 = vsel %vm3761, %v3729, %v3793
        %v3826 = vsel %vm3762, %v3730, %v3794
        %v3827 = vsel %vm3763, %v3731, %v3795
        %v3828 = vsel %vm3764, %v3732, %v3796
        %v3829 = vsel %vm3765, %v3733, %v3797
        %v3830 = vsel %vm3766, %v3734, %v3798
        %v3831 = vsel %vm3767, %v3735, %v3799
        %v3832 = vsel %vm3768, %v3736, %v3800
        %v3833 = vsel %vm3769, %v3737, %v3801
        %v3834 = vsel %vm3770, %v3738, %v3802
        %v3835 = vsel %vm3771, %v3739, %v3803
        %v3836 = vsel %vm3772, %v3740, %v3804
        %v3837 = vsel %vm3773, %v3741, %v3805
        %v3838 = vsel %vm3774, %v3742, %v3806
        %v3839 = vsel %vm3775, %v3743, %v3807
        %v3840 = vsel %vm3776, %v3744, %v3808
        %v3841 = vsel %vm3777, %v3745, %v3809
        %v3842 = vsel %vm3778, %v3746, %v3810
        %v3843 = vsel %vm3779, %v3747, %v3811
        %v3844 = vsel %vm3780, %v3748, %v3812
        %v3845 = vsel %vm3781, %v3749, %v3813
        %v3846 = vsel %vm3782, %v3750, %v3814
        %v3847 = vsel %vm3783, %v3751, %v3815
        %v3848 = vsel %vm3784, %v3752, %v3816
        %v3849 = vsel %vm3785, %v3753, %v3817
        %v3850 = vsel %vm3786, %v3754, %v3818
        %v3851 = vsel %vm3787, %v3755, %v3819
        %v3852 = vsel %vm3788, %v3756, %v3820
        %v3853 = vsel %vm3789, %v3757, %v3821
        %3854 = vst [vmem:[#allocation2 + $0x1] sm:$0xff] %v3822
        %3855 = vst [vmem:[#allocation2 + $0x9] sm:$0xff] %v3823
        %3856 = vst [vmem:[#allocation2 + $0x11] sm:$0xff] %v3824
        %3857 = vst [vmem:[#allocation2 + $0x19] sm:$0xff] %v3825
        %3858 = vst [vmem:[#allocation2 + $0x49] sm:$0xff] %v3826
        %3859 = vst [vmem:[#allocation2 + $0x51] sm:$0xff] %v3827
        %3860 = vst [vmem:[#allocation2 + $0x59] sm:$0xff] %v3828
        %3861 = vst [vmem:[#allocation2 + $0x61] sm:$0xff] %v3829
        %3862 = vst [vmem:[#allocation2 + $0x91] sm:$0xff] %v3830
        %3863 = vst [vmem:[#allocation2 + $0x99] sm:$0xff] %v3831
        %3864 = vst [vmem:[#allocation2 + $0xa1] sm:$0xff] %v3832
        %3865 = vst [vmem:[#allocation2 + $0xa9] sm:$0xff] %v3833
        %3866 = vst [vmem:[#allocation2 + $0xd9] sm:$0xff] %v3834
        %3867 = vst [vmem:[#allocation2 + $0xe1] sm:$0xff] %v3835
        %3868 = vst [vmem:[#allocation2 + $0xe9] sm:$0xff] %v3836
        %3869 = vst [vmem:[#allocation2 + $0xf1] sm:$0xff] %v3837
        %3870 = vst [vmem:[#allocation2 + $0x121] sm:$0xff] %v3838
        %3871 = vst [vmem:[#allocation2 + $0x129] sm:$0xff] %v3839
        %3872 = vst [vmem:[#allocation2 + $0x131] sm:$0xff] %v3840
        %3873 = vst [vmem:[#allocation2 + $0x139] sm:$0xff] %v3841
        %3874 = vst [vmem:[#allocation2 + $0x169] sm:$0xff] %v3842
        %3875 = vst [vmem:[#allocation2 + $0x171] sm:$0xff] %v3843
        %3876 = vst [vmem:[#allocation2 + $0x179] sm:$0xff] %v3844
        %3877 = vst [vmem:[#allocation2 + $0x181] sm:$0xff] %v3845
        %3878 = vst [vmem:[#allocation2 + $0x1b1] sm:$0xff] %v3846
        %3879 = vst [vmem:[#allocation2 + $0x1b9] sm:$0xff] %v3847
        %3880 = vst [vmem:[#allocation2 + $0x1c1] sm:$0xff] %v3848
        %3881 = vst [vmem:[#allocation2 + $0x1c9] sm:$0xff] %v3849
        %3882 = vst [vmem:[#allocation2 + $0x1f9] sm:$0xff] %v3850
        %3883 = vst [vmem:[#allocation2 + $0x201] sm:$0xff] %v3851
        %3884 = vst [vmem:[#allocation2 + $0x209] sm:$0xff] %v3852
        %3885 = vst [vmem:[#allocation2 + $0x211] sm:$0xff] %v3853
        %3886 = vst [vmem:[#allocation2 + $0x21] sm:$0x1] 0.0
        %3887 = vst [vmem:[#allocation2 + $0x69] sm:$0x1] 0.0
        %3888 = vst [vmem:[#allocation2 + $0xb1] sm:$0x1] 0.0
        %3889 = vst [vmem:[#allocation2 + $0xf9] sm:$0x1] 0.0
        %3890 = vst [vmem:[#allocation2 + $0x141] sm:$0x1] 0.0
        %3891 = vst [vmem:[#allocation2 + $0x189] sm:$0x1] 0.0
        %3892 = vst [vmem:[#allocation2 + $0x1d1] sm:$0x1] 0.0
        %3893 = vst [vmem:[#allocation2 + $0x219] sm:$0x1] 0.0
        %v3894 = vld [vmem:[#allocation2] ss:$2 sm:$0xff]
        %v3895 = vld [vmem:[%s1226] ss:$2 sm:$0xff]
        %v3896 = vld [vmem:[%s1232] ss:$2 sm:$0xff]
        %v3897 = vld [vmem:[%s1234] ss:$2 sm:$0xff]
        %v3898 = vld [vmem:[%s1240] ss:$2 sm:$0xff]
        %v3899 = vld [vmem:[%s1242] ss:$2 sm:$0xff]
        %v3900 = vld [vmem:[%s1248] ss:$2 sm:$0xff]
        %v3901 = vld [vmem:[%s1250] ss:$2 sm:$0xff]
        %v3902 = vld [vmem:[%s1256] ss:$2 sm:$0xff]
        %v3903 = vld [vmem:[%s1258] ss:$2 sm:$0xff]
        %v3904 = vld [vmem:[%s1264] ss:$2 sm:$0xff]
        %v3905 = vld [vmem:[%s1266] ss:$2 sm:$0xff]
        %v3906 = vld [vmem:[%s1272] ss:$2 sm:$0xff]
        %v3907 = vld [vmem:[%s1274] ss:$2 sm:$0xff]
        %v3908 = vld [vmem:[%s1280] ss:$2 sm:$0xff]
        %v3909 = vld [vmem:[%s1282] ss:$2 sm:$0xff]
        %v3910 = vpack.c.bf16 %v3895, %v3894
        %v3911 = vpack.c.bf16 %v3897, %v3896
        %v3912 = vpack.c.bf16 %v3899, %v3898
        %v3913 = vpack.c.bf16 %v3901, %v3900
        %v3914 = vpack.c.bf16 %v3903, %v3902
        %v3915 = vpack.c.bf16 %v3905, %v3904
        %v3916 = vpack.c.bf16 %v3907, %v3906
        %v3917 = vpack.c.bf16 %v3909, %v3908
        %s3918 = scalar_lea.vmem %s2, 448
        %v3919 = vld [vmem:[%s3918] sm:$0xf]
        %v3920 = vld [vmem:[%s3918 + $0x4] sm:$0xf]
        %v3921 = vld [vmem:[%s3918 + $0x8] sm:$0xf]
        %v3922 = vld [vmem:[%s3918 + $0xc] sm:$0xf]
        %v3923 = vld [vmem:[%s3918 + $0x10] sm:$0xf]
        %v3924 = vld [vmem:[%s3918 + $0x14] sm:$0xf]
        %v3925 = vld [vmem:[%s3918 + $0x18] sm:$0xf]
        %v3926 = vld [vmem:[%s3918 + $0x1c] sm:$0xf]
        %v3927 = vld [vmem:[%s3918 + $0x20] sm:$0xf]
        %v3928 = vld [vmem:[%s3918 + $0x24] sm:$0xf]
        %v3929 = vld [vmem:[%s3918 + $0x28] sm:$0xf]
        %v3930 = vld [vmem:[%s3918 + $0x2c] sm:$0xf]
        %v3931 = vld [vmem:[%s3918 + $0x30] sm:$0xf]
        %v3932 = vld [vmem:[%s3918 + $0x34] sm:$0xf]
        %v3933 = vld [vmem:[%s3918 + $0x38] sm:$0xf]
        %v3934 = vld [vmem:[%s3918 + $0x3c] sm:$0xf]
        %v3935 = vld [vmem:[%s1320] ss:$2 sm:$0xff]
        %v3936 = vld [vmem:[%s1322] ss:$2 sm:$0xff]
        %v3937 = vld [vmem:[%s1328] ss:$2 sm:$0xff]
        %v3938 = vld [vmem:[%s1330] ss:$2 sm:$0xff]
        %v3939 = vld [vmem:[%s1336] ss:$2 sm:$0xff]
        %v3940 = vld [vmem:[%s1338] ss:$2 sm:$0xff]
        %v3941 = vld [vmem:[%s1344] ss:$2 sm:$0xff]
        %v3942 = vld [vmem:[%s1346] ss:$2 sm:$0xff]
        %v3943 = vld [vmem:[%s1352] ss:$2 sm:$0xff]
        %v3944 = vld [vmem:[%s1354] ss:$2 sm:$0xff]
        %v3945 = vld [vmem:[%s1360] ss:$2 sm:$0xff]
        %v3946 = vld [vmem:[%s1362] ss:$2 sm:$0xff]
        %v3947 = vld [vmem:[%s1368] ss:$2 sm:$0xff]
        %v3948 = vld [vmem:[%s1370] ss:$2 sm:$0xff]
        %v3949 = vld [vmem:[%s1376] ss:$2 sm:$0xff]
        %v3950 = vld [vmem:[%s1378] ss:$2 sm:$0xff]
        %v3951 = vpack.c.bf16 %v3936, %v3935
        %v3952 = vpack.c.bf16 %v3938, %v3937
        %v3953 = vpack.c.bf16 %v3940, %v3939
        %v3954 = vpack.c.bf16 %v3942, %v3941
        %v3955 = vpack.c.bf16 %v3944, %v3943
        %v3956 = vpack.c.bf16 %v3946, %v3945
        %v3957 = vpack.c.bf16 %v3948, %v3947
        %v3958 = vpack.c.bf16 %v3950, %v3949
        %s3959 = scalar_lea.vmem %s2, 512
        %v3960 = vld [vmem:[%s3959] sm:$0xf]
        %v3961 = vld [vmem:[%s3959 + $0x4] sm:$0xf]
        %v3962 = vld [vmem:[%s3959 + $0x8] sm:$0xf]
        %v3963 = vld [vmem:[%s3959 + $0xc] sm:$0xf]
        %v3964 = vld [vmem:[%s3959 + $0x10] sm:$0xf]
        %v3965 = vld [vmem:[%s3959 + $0x14] sm:$0xf]
        %v3966 = vld [vmem:[%s3959 + $0x18] sm:$0xf]
        %v3967 = vld [vmem:[%s3959 + $0x1c] sm:$0xf]
        %v3968 = vld [vmem:[%s3959 + $0x20] sm:$0xf]
        %v3969 = vld [vmem:[%s3959 + $0x24] sm:$0xf]
        %v3970 = vld [vmem:[%s3959 + $0x28] sm:$0xf]
        %v3971 = vld [vmem:[%s3959 + $0x2c] sm:$0xf]
        %v3972 = vld [vmem:[%s3959 + $0x30] sm:$0xf]
        %v3973 = vld [vmem:[%s3959 + $0x34] sm:$0xf]
        %v3974 = vld [vmem:[%s3959 + $0x38] sm:$0xf]
        %v3975 = vld [vmem:[%s3959 + $0x3c] sm:$0xf]
        %v3992 = vunpack.c.l.b16 %v3960
        %v3993 = vunpack.c.l.b16 %v3961
        %v3994 = vunpack.c.l.b16 %v3962
        %v3995 = vunpack.c.l.b16 %v3963
        %v3996 = vunpack.c.l.b16 %v3964
        %v3997 = vunpack.c.l.b16 %v3965
        %v3998 = vunpack.c.l.b16 %v3966
        %v3999 = vunpack.c.l.b16 %v3967
        %v4000 = vunpack.c.l.b16 %v3968
        %v4001 = vunpack.c.l.b16 %v3969
        %v4002 = vunpack.c.l.b16 %v3970
        %v4003 = vunpack.c.l.b16 %v3971
        %v4004 = vunpack.c.l.b16 %v3972
        %v4005 = vunpack.c.l.b16 %v3973
        %v4006 = vunpack.c.l.b16 %v3974
        %v4007 = vunpack.c.l.b16 %v3975
        %v4008 = vpack.c.b16 %v3993, %v3992
        %v4009 = vpack.c.b16 %v3995, %v3994
        %v4010 = vpack.c.b16 %v3997, %v3996
        %v4011 = vpack.c.b16 %v3999, %v3998
        %v4012 = vpack.c.b16 %v4001, %v4000
        %v4013 = vpack.c.b16 %v4003, %v4002
        %v4014 = vpack.c.b16 %v4005, %v4004
        %v4015 = vpack.c.b16 %v4007, %v4006
        %4024 = vmatprep.subr.bf16.mxu0 0
        %4025 = vmatpush1.bf16.msra.mxu0 %v4008
        %4026 = vmatprep.subr.bf16.mxu0 0
        %4027 = vmatpush1.bf16.msra.mxu0 %v4009
        %4028 = vmatprep.subr.bf16.mxu0 0
        %4029 = vmatpush1.bf16.msra.mxu0 %v4010
        %4030 = vmatprep.subr.bf16.mxu0 0
        %4031 = vmatpush1.bf16.msra.mxu0 %v4011
        %4032 = vmatprep.subr.bf16.mxu0 0
        %4033 = vmatpush1.bf16.msra.mxu0 %v4012
        %4034 = vmatprep.subr.bf16.mxu0 0
        %4035 = vmatpush1.bf16.msra.mxu0 %v4013
        %4036 = vmatprep.subr.bf16.mxu0 0
        %4037 = vmatpush1.bf16.msra.mxu0 %v4014
        %4038 = vmatprep.subr.bf16.mxu0 0
        %4039 = vmatpush1.bf16.msra.mxu0 %v4015
        %4040 = vmatprep.subr.bf16.mxu0 0
        %4041 = vmatpush1.bf16.msra.mxu0 0
        %4042 = vmatprep.subr.bf16.mxu0 0
        %4043 = vmatpush1.bf16.msra.mxu0 0
        %4044 = vmatprep.subr.bf16.mxu0 0
        %4045 = vmatpush1.bf16.msra.mxu0 0
        %4046 = vmatprep.subr.bf16.mxu0 0
        %4047 = vmatpush1.bf16.msra.mxu0 0
        %4048 = vmatprep.subr.bf16.mxu0 0
        %4049 = vmatpush1.bf16.msra.mxu0 0
        %4050 = vmatprep.subr.bf16.mxu0 0
        %4051 = vmatpush1.bf16.msra.mxu0 0
        %4052 = vmatprep.subr.bf16.mxu0 0
        %4053 = vmatpush1.bf16.msra.mxu0 0
        %4054 = vmatprep.subr.bf16.mxu0 0
        %4055 = vmatpush1.bf16.msra.mxu0 0
        %4056 = vmatprep.mubr.bf16.mxu0 0
        %4057 = vmatmul.mubr.bf16.gmra.mrb[0].mxu0 %v3951
        %v4058 = vpop.f32.mrb[0].mxu0
        %v4059 = vadd.f32 0.0, %v4058
        %v4060 = vpop.f32.mrb[0].mxu0
        %v4061 = vpop.f32.mrb[0].mxu0
        %v4062 = vadd.f32 0.0, %v4061
        %v4063 = vpop.f32.mrb[0].mxu0
        %4064 = vmatprep.mubr.bf16.mxu0 0
        %4065 = vmatmul.mubr.bf16.gmra.mrb[0].mxu0 %v3952
        %v4066 = vpop.f32.mrb[0].mxu0
        %v4067 = vadd.f32 0.0, %v4066
        %v4068 = vpop.f32.mrb[0].mxu0
        %v4069 = vpop.f32.mrb[0].mxu0
        %v4070 = vadd.f32 0.0, %v4069
        %v4071 = vpop.f32.mrb[0].mxu0
        %4072 = vmatprep.mubr.bf16.mxu0 0
        %4073 = vmatmul.mubr.bf16.gmra.mrb[0].mxu0 %v3953
        %v4074 = vpop.f32.mrb[0].mxu0
        %v4075 = vadd.f32 0.0, %v4074
        %v4076 = vpop.f32.mrb[0].mxu0
        %v4077 = vpop.f32.mrb[0].mxu0
        %v4078 = vadd.f32 0.0, %v4077
        %v4079 = vpop.f32.mrb[0].mxu0
        %4080 = vmatprep.mubr.bf16.mxu0 0
        %4081 = vmatmul.mubr.bf16.gmra.mrb[0].mxu0 %v3954
        %v4082 = vpop.f32.mrb[0].mxu0
        %v4083 = vadd.f32 0.0, %v4082
        %v4084 = vpop.f32.mrb[0].mxu0
        %v4085 = vpop.f32.mrb[0].mxu0
        %v4086 = vadd.f32 0.0, %v4085
        %v4087 = vpop.f32.mrb[0].mxu0
        %4088 = vmatprep.mubr.bf16.mxu0 0
        %4089 = vmatmul.mubr.bf16.gmra.mrb[0].mxu0 %v3955
        %v4090 = vpop.f32.mrb[0].mxu0
        %v4091 = vadd.f32 0.0, %v4090
        %v4092 = vpop.f32.mrb[0].mxu0
        %v4093 = vpop.f32.mrb[0].mxu0
        %v4094 = vadd.f32 0.0, %v4093
        %v4095 = vpop.f32.mrb[0].mxu0
        %4096 = vmatprep.mubr.bf16.mxu0 0
        %4097 = vmatmul.mubr.bf16.gmra.mrb[0].mxu0 %v3956
        %v4098 = vpop.f32.mrb[0].mxu0
        %v4099 = vadd.f32 0.0, %v4098
        %v4100 = vpop.f32.mrb[0].mxu0
        %v4101 = vpop.f32.mrb[0].mxu0
        %v4102 = vadd.f32 0.0, %v4101
        %v4103 = vpop.f32.mrb[0].mxu0
        %4104 = vmatprep.mubr.bf16.mxu0 0
        %4105 = vmatmul.mubr.bf16.gmra.mrb[0].mxu0 %v3957
        %v4106 = vpop.f32.mrb[0].mxu0
        %v4107 = vadd.f32 0.0, %v4106
        %v4108 = vpop.f32.mrb[0].mxu0
        %v4109 = vpop.f32.mrb[0].mxu0
        %v4110 = vadd.f32 0.0, %v4109
        %v4111 = vpop.f32.mrb[0].mxu0
        %4112 = vmatprep.mubr.bf16.mxu0 0
        %4113 = vmatmul.mubr.bf16.gmra.mrb[0].mxu0 %v3958
        %v4114 = vpop.f32.mrb[0].mxu0
        %v4115 = vadd.f32 0.0, %v4114
        %v4116 = vpop.f32.mrb[0].mxu0
        %v4117 = vpop.f32.mrb[0].mxu0
        %v4118 = vadd.f32 0.0, %v4117
        %v4119 = vpop.f32.mrb[0].mxu0
        %4120 = vdwg.mxu0
        %v4137 = vunpack.c.l.b16 %v3919
        %v4138 = vunpack.c.l.b16 %v3920
        %v4139 = vunpack.c.l.b16 %v3921
        %v4140 = vunpack.c.l.b16 %v3922
        %v4141 = vunpack.c.l.b16 %v3923
        %v4142 = vunpack.c.l.b16 %v3924
        %v4143 = vunpack.c.l.b16 %v3925
        %v4144 = vunpack.c.l.b16 %v3926
        %v4145 = vunpack.c.l.b16 %v3927
        %v4146 = vunpack.c.l.b16 %v3928
        %v4147 = vunpack.c.l.b16 %v3929
        %v4148 = vunpack.c.l.b16 %v3930
        %v4149 = vunpack.c.l.b16 %v3931
        %v4150 = vunpack.c.l.b16 %v3932
        %v4151 = vunpack.c.l.b16 %v3933
        %v4152 = vunpack.c.l.b16 %v3934
        %v4153 = vpack.c.b16 %v4138, %v4137
        %v4154 = vpack.c.b16 %v4140, %v4139
        %v4155 = vpack.c.b16 %v4142, %v4141
        %v4156 = vpack.c.b16 %v4144, %v4143
        %v4157 = vpack.c.b16 %v4146, %v4145
        %v4158 = vpack.c.b16 %v4148, %v4147
        %v4159 = vpack.c.b16 %v4150, %v4149
        %v4160 = vpack.c.b16 %v4152, %v4151
        %4169 = vmatprep.subr.bf16.mxu0 0
        %4170 = vmatpush1.bf16.msra.mxu0 %v4153
        %4171 = vmatprep.subr.bf16.mxu0 0
        %4172 = vmatpush1.bf16.msra.mxu0 %v4154
        %4173 = vmatprep.subr.bf16.mxu0 0
        %4174 = vmatpush1.bf16.msra.mxu0 %v4155
        %4175 = vmatprep.subr.bf16.mxu0 0
        %4176 = vmatpush1.bf16.msra.mxu0 %v4156
        %4177 = vmatprep.subr.bf16.mxu0 0
        %4178 = vmatpush1.bf16.msra.mxu0 %v4157
        %4179 = vmatprep.subr.bf16.mxu0 0
        %4180 = vmatpush1.bf16.msra.mxu0 %v4158
        %4181 = vmatprep.subr.bf16.mxu0 0
        %4182 = vmatpush1.bf16.msra.mxu0 %v4159
        %4183 = vmatprep.subr.bf16.mxu0 0
        %4184 = vmatpush1.bf16.msra.mxu0 %v4160
        %4185 = vmatprep.subr.bf16.mxu0 0
        %4186 = vmatpush1.bf16.msra.mxu0 0
        %4187 = vmatprep.subr.bf16.mxu0 0
        %4188 = vmatpush1.bf16.msra.mxu0 0
        %4189 = vmatprep.subr.bf16.mxu0 0
        %4190 = vmatpush1.bf16.msra.mxu0 0
        %4191 = vmatprep.subr.bf16.mxu0 0
        %4192 = vmatpush1.bf16.msra.mxu0 0
        %4193 = vmatprep.subr.bf16.mxu0 0
        %4194 = vmatpush1.bf16.msra.mxu0 0
        %4195 = vmatprep.subr.bf16.mxu0 0
        %4196 = vmatpush1.bf16.msra.mxu0 0
        %4197 = vmatprep.subr.bf16.mxu0 0
        %4198 = vmatpush1.bf16.msra.mxu0 0
        %4199 = vmatprep.subr.bf16.mxu0 0
        %4200 = vmatpush1.bf16.msra.mxu0 0
        %4201 = vmatprep.mubr.bf16.mxu0 0
        %4202 = vmatmul.mubr.bf16.gmra.mrb[0].mxu0 %v3910
        %v4203 = vpop.f32.mrb[0].mxu0
        %v4204 = vadd.f32 %v4059, %v4203
        %v4205 = vpop.f32.mrb[0].mxu0
        %v4206 = vpop.f32.mrb[0].mxu0
        %v4207 = vadd.f32 %v4062, %v4206
        %v4208 = vpop.f32.mrb[0].mxu0
        %4209 = vmatprep.mubr.bf16.mxu0 0
        %4210 = vmatmul.mubr.bf16.gmra.mrb[0].mxu0 %v3911
        %v4211 = vpop.f32.mrb[0].mxu0
        %v4212 = vadd.f32 %v4067, %v4211
        %v4213 = vpop.f32.mrb[0].mxu0
        %v4214 = vpop.f32.mrb[0].mxu0
        %v4215 = vadd.f32 %v4070, %v4214
        %v4216 = vpop.f32.mrb[0].mxu0
        %4217 = vmatprep.mubr.bf16.mxu0 0
        %4218 = vmatmul.mubr.bf16.gmra.mrb[0].mxu0 %v3912
        %v4219 = vpop.f32.mrb[0].mxu0
        %v4220 = vadd.f32 %v4075, %v4219
        %v4221 = vpop.f32.mrb[0].mxu0
        %v4222 = vpop.f32.mrb[0].mxu0
        %v4223 = vadd.f32 %v4078, %v4222
        %v4224 = vpop.f32.mrb[0].mxu0
        %4225 = vmatprep.mubr.bf16.mxu0 0
        %4226 = vmatmul.mubr.bf16.gmra.mrb[0].mxu0 %v3913
        %v4227 = vpop.f32.mrb[0].mxu0
        %v4228 = vadd.f32 %v4083, %v4227
        %v4229 = vpop.f32.mrb[0].mxu0
        %v4230 = vpop.f32.mrb[0].mxu0
        %v4231 = vadd.f32 %v4086, %v4230
        %v4232 = vpop.f32.mrb[0].mxu0
        %4233 = vmatprep.mubr.bf16.mxu0 0
        %4234 = vmatmul.mubr.bf16.gmra.mrb[0].mxu0 %v3914
        %v4235 = vpop.f32.mrb[0].mxu0
        %v4236 = vadd.f32 %v4091, %v4235
        %v4237 = vpop.f32.mrb[0].mxu0
        %v4238 = vpop.f32.mrb[0].mxu0
        %v4239 = vadd.f32 %v4094, %v4238
        %v4240 = vpop.f32.mrb[0].mxu0
        %4241 = vmatprep.mubr.bf16.mxu0 0
        %4242 = vmatmul.mubr.bf16.gmra.mrb[0].mxu0 %v3915
        %v4243 = vpop.f32.mrb[0].mxu0
        %v4244 = vadd.f32 %v4099, %v4243
        %v4245 = vpop.f32.mrb[0].mxu0
        %v4246 = vpop.f32.mrb[0].mxu0
        %v4247 = vadd.f32 %v4102, %v4246
        %v4248 = vpop.f32.mrb[0].mxu0
        %4249 = vmatprep.mubr.bf16.mxu0 0
        %4250 = vmatmul.mubr.bf16.gmra.mrb[0].mxu0 %v3916
        %v4251 = vpop.f32.mrb[0].mxu0
        %v4252 = vadd.f32 %v4107, %v4251
        %v4253 = vpop.f32.mrb[0].mxu0
        %v4254 = vpop.f32.mrb[0].mxu0
        %v4255 = vadd.f32 %v4110, %v4254
        %v4256 = vpop.f32.mrb[0].mxu0
        %4257 = vmatprep.mubr.bf16.mxu0 0
        %4258 = vmatmul.mubr.bf16.gmra.mrb[0].mxu0 %v3917
        %v4259 = vpop.f32.mrb[0].mxu0
        %v4260 = vadd.f32 %v4115, %v4259
        %v4261 = vpop.f32.mrb[0].mxu0
        %v4262 = vpop.f32.mrb[0].mxu0
        %v4263 = vadd.f32 %v4118, %v4262
        %v4264 = vpop.f32.mrb[0].mxu0
        %4265 = vdwg.mxu0
        %s4266 = scalar_lea.vmem [#allocation2], 2
        %v4267 = vld [vmem:[%s4266] ss:$2 sm:$0xff]
        %s4268 = scalar_lea.vmem [#allocation2], 18
        %v4269 = vld [vmem:[%s4268] ss:$2 sm:$0xff]
        %s4270 = scalar_lea.vmem [#allocation2], 74
        %v4271 = vld [vmem:[%s4270] ss:$2 sm:$0xff]
        %s4272 = scalar_lea.vmem [#allocation2], 90
        %v4273 = vld [vmem:[%s4272] ss:$2 sm:$0xff]
        %s4274 = scalar_lea.vmem [#allocation2], 146
        %v4275 = vld [vmem:[%s4274] ss:$2 sm:$0xff]
        %s4276 = scalar_lea.vmem [#allocation2], 162
        %v4277 = vld [vmem:[%s4276] ss:$2 sm:$0xff]
        %s4278 = scalar_lea.vmem [#allocation2], 218
        %v4279 = vld [vmem:[%s4278] ss:$2 sm:$0xff]
        %s4280 = scalar_lea.vmem [#allocation2], 234
        %v4281 = vld [vmem:[%s4280] ss:$2 sm:$0xff]
        %s4282 = scalar_lea.vmem [#allocation2], 290
        %v4283 = vld [vmem:[%s4282] ss:$2 sm:$0xff]
        %s4284 = scalar_lea.vmem [#allocation2], 306
        %v4285 = vld [vmem:[%s4284] ss:$2 sm:$0xff]
        %s4286 = scalar_lea.vmem [#allocation2], 362
        %v4287 = vld [vmem:[%s4286] ss:$2 sm:$0xff]
        %s4288 = scalar_lea.vmem [#allocation2], 378
        %v4289 = vld [vmem:[%s4288] ss:$2 sm:$0xff]
        %s4290 = scalar_lea.vmem [#allocation2], 434
        %v4291 = vld [vmem:[%s4290] ss:$2 sm:$0xff]
        %s4292 = scalar_lea.vmem [#allocation2], 450
        %v4293 = vld [vmem:[%s4292] ss:$2 sm:$0xff]
        %s4294 = scalar_lea.vmem [#allocation2], 506
        %v4295 = vld [vmem:[%s4294] ss:$2 sm:$0xff]
        %s4296 = scalar_lea.vmem [#allocation2], 522
        %v4297 = vld [vmem:[%s4296] ss:$2 sm:$0xff]
        %v4298 = vpack.c.bf16 %v4269, %v4267
        %v4299 = vpack.c.bf16 %v4273, %v4271
        %v4300 = vpack.c.bf16 %v4277, %v4275
        %v4301 = vpack.c.bf16 %v4281, %v4279
        %v4302 = vpack.c.bf16 %v4285, %v4283
        %v4303 = vpack.c.bf16 %v4289, %v4287
        %v4304 = vpack.c.bf16 %v4293, %v4291
        %v4305 = vpack.c.bf16 %v4297, %v4295
        %s4306 = scalar_lea.vmem %s2, 576
        %v4307 = vld [vmem:[%s4306] sm:$0xf]
        %v4308 = vld [vmem:[%s4306 + $0x4] sm:$0xf]
        %v4309 = vld [vmem:[%s4306 + $0x8] sm:$0xf]
        %v4310 = vld [vmem:[%s4306 + $0xc] sm:$0xf]
        %v4311 = vld [vmem:[%s4306 + $0x10] sm:$0xf]
        %v4312 = vld [vmem:[%s4306 + $0x14] sm:$0xf]
        %v4313 = vld [vmem:[%s4306 + $0x18] sm:$0xf]
        %v4314 = vld [vmem:[%s4306 + $0x1c] sm:$0xf]
        %v4315 = vld [vmem:[%s4306 + $0x20] sm:$0xf]
        %v4316 = vld [vmem:[%s4306 + $0x24] sm:$0xf]
        %v4317 = vld [vmem:[%s4306 + $0x28] sm:$0xf]
        %v4318 = vld [vmem:[%s4306 + $0x2c] sm:$0xf]
        %v4319 = vld [vmem:[%s4306 + $0x30] sm:$0xf]
        %v4320 = vld [vmem:[%s4306 + $0x34] sm:$0xf]
        %v4321 = vld [vmem:[%s4306 + $0x38] sm:$0xf]
        %v4322 = vld [vmem:[%s4306 + $0x3c] sm:$0xf]
        %v4339 = vunpack.c.l.b16 %v4307
        %v4340 = vunpack.c.l.b16 %v4308
        %v4341 = vunpack.c.l.b16 %v4309
        %v4342 = vunpack.c.l.b16 %v4310
        %v4343 = vunpack.c.l.b16 %v4311
        %v4344 = vunpack.c.l.b16 %v4312
        %v4345 = vunpack.c.l.b16 %v4313
        %v4346 = vunpack.c.l.b16 %v4314
        %v4347 = vunpack.c.l.b16 %v4315
        %v4348 = vunpack.c.l.b16 %v4316
        %v4349 = vunpack.c.l.b16 %v4317
        %v4350 = vunpack.c.l.b16 %v4318
        %v4351 = vunpack.c.l.b16 %v4319
        %v4352 = vunpack.c.l.b16 %v4320
        %v4353 = vunpack.c.l.b16 %v4321
        %v4354 = vunpack.c.l.b16 %v4322
        %v4355 = vpack.c.b16 %v4340, %v4339
        %v4356 = vpack.c.b16 %v4342, %v4341
        %v4357 = vpack.c.b16 %v4344, %v4343
        %v4358 = vpack.c.b16 %v4346, %v4345
        %v4359 = vpack.c.b16 %v4348, %v4347
        %v4360 = vpack.c.b16 %v4350, %v4349
        %v4361 = vpack.c.b16 %v4352, %v4351
        %v4362 = vpack.c.b16 %v4354, %v4353
        %4371 = vmatprep.subr.bf16.mxu0 0
        %4372 = vmatpush1.bf16.msra.mxu0 %v4355
        %4373 = vmatprep.subr.bf16.mxu0 0
        %4374 = vmatpush1.bf16.msra.mxu0 %v4356
        %4375 = vmatprep.subr.bf16.mxu0 0
        %4376 = vmatpush1.bf16.msra.mxu0 %v4357
        %4377 = vmatprep.subr.bf16.mxu0 0
        %4378 = vmatpush1.bf16.msra.mxu0 %v4358
        %4379 = vmatprep.subr.bf16.mxu0 0
        %4380 = vmatpush1.bf16.msra.mxu0 %v4359
        %4381 = vmatprep.subr.bf16.mxu0 0
        %4382 = vmatpush1.bf16.msra.mxu0 %v4360
        %4383 = vmatprep.subr.bf16.mxu0 0
        %4384 = vmatpush1.bf16.msra.mxu0 %v4361
        %4385 = vmatprep.subr.bf16.mxu0 0
        %4386 = vmatpush1.bf16.msra.mxu0 %v4362
        %4387 = vmatprep.subr.bf16.mxu0 0
        %4388 = vmatpush1.bf16.msra.mxu0 0
        %4389 = vmatprep.subr.bf16.mxu0 0
        %4390 = vmatpush1.bf16.msra.mxu0 0
        %4391 = vmatprep.subr.bf16.mxu0 0
        %4392 = vmatpush1.bf16.msra.mxu0 0
        %4393 = vmatprep.subr.bf16.mxu0 0
        %4394 = vmatpush1.bf16.msra.mxu0 0
        %4395 = vmatprep.subr.bf16.mxu0 0
        %4396 = vmatpush1.bf16.msra.mxu0 0
        %4397 = vmatprep.subr.bf16.mxu0 0
        %4398 = vmatpush1.bf16.msra.mxu0 0
        %4399 = vmatprep.subr.bf16.mxu0 0
        %4400 = vmatpush1.bf16.msra.mxu0 0
        %4401 = vmatprep.subr.bf16.mxu0 0
        %4402 = vmatpush1.bf16.msra.mxu0 0
        %4403 = vmatprep.mubr.bf16.mxu0 0
        %4404 = vmatmul.mubr.bf16.gmra.mrb[0].mxu0 %v4298
        %v4405 = vpop.f32.mrb[0].mxu0
        %v4406 = vadd.f32 0.0, %v4405
        %v4407 = vpop.f32.mrb[0].mxu0
        %v4408 = vpop.f32.mrb[0].mxu0
        %v4409 = vadd.f32 0.0, %v4408
        %v4410 = vpop.f32.mrb[0].mxu0
        %4411 = vmatprep.mubr.bf16.mxu0 0
        %4412 = vmatmul.mubr.bf16.gmra.mrb[0].mxu0 %v4299
        %v4413 = vpop.f32.mrb[0].mxu0
        %v4414 = vadd.f32 0.0, %v4413
        %v4415 = vpop.f32.mrb[0].mxu0
        %v4416 = vpop.f32.mrb[0].mxu0
        %v4417 = vadd.f32 0.0, %v4416
        %v4418 = vpop.f32.mrb[0].mxu0
        %4419 = vmatprep.mubr.bf16.mxu0 0
        %4420 = vmatmul.mubr.bf16.gmra.mrb[0].mxu0 %v4300
        %v4421 = vpop.f32.mrb[0].mxu0
        %v4422 = vadd.f32 0.0, %v4421
        %v4423 = vpop.f32.mrb[0].mxu0
        %v4424 = vpop.f32.mrb[0].mxu0
        %v4425 = vadd.f32 0.0, %v4424
        %v4426 = vpop.f32.mrb[0].mxu0
        %4427 = vmatprep.mubr.bf16.mxu0 0
        %4428 = vmatmul.mubr.bf16.gmra.mrb[0].mxu0 %v4301
        %v4429 = vpop.f32.mrb[0].mxu0
        %v4430 = vadd.f32 0.0, %v4429
        %v4431 = vpop.f32.mrb[0].mxu0
        %v4432 = vpop.f32.mrb[0].mxu0
        %v4433 = vadd.f32 0.0, %v4432
        %v4434 = vpop.f32.mrb[0].mxu0
        %4435 = vmatprep.mubr.bf16.mxu0 0
        %4436 = vmatmul.mubr.bf16.gmra.mrb[0].mxu0 %v4302
        %v4437 = vpop.f32.mrb[0].mxu0
        %v4438 = vadd.f32 0.0, %v4437
        %v4439 = vpop.f32.mrb[0].mxu0
        %v4440 = vpop.f32.mrb[0].mxu0
        %v4441 = vadd.f32 0.0, %v4440
        %v4442 = vpop.f32.mrb[0].mxu0
        %4443 = vmatprep.mubr.bf16.mxu0 0
        %4444 = vmatmul.mubr.bf16.gmra.mrb[0].mxu0 %v4303
        %v4445 = vpop.f32.mrb[0].mxu0
        %v4446 = vadd.f32 0.0, %v4445
        %v4447 = vpop.f32.mrb[0].mxu0
        %v4448 = vpop.f32.mrb[0].mxu0
        %v4449 = vadd.f32 0.0, %v4448
        %v4450 = vpop.f32.mrb[0].mxu0
        %4451 = vmatprep.mubr.bf16.mxu0 0
        %4452 = vmatmul.mubr.bf16.gmra.mrb[0].mxu0 %v4304
        %v4453 = vpop.f32.mrb[0].mxu0
        %v4454 = vadd.f32 0.0, %v4453
        %v4455 = vpop.f32.mrb[0].mxu0
        %v4456 = vpop.f32.mrb[0].mxu0
        %v4457 = vadd.f32 0.0, %v4456
        %v4458 = vpop.f32.mrb[0].mxu0
        %4459 = vmatprep.mubr.bf16.mxu0 0
        %4460 = vmatmul.mubr.bf16.gmra.mrb[0].mxu0 %v4305
        %v4461 = vpop.f32.mrb[0].mxu0
        %v4462 = vadd.f32 0.0, %v4461
        %v4463 = vpop.f32.mrb[0].mxu0
        %v4464 = vpop.f32.mrb[0].mxu0
        %v4465 = vadd.f32 0.0, %v4464
        %v4466 = vpop.f32.mrb[0].mxu0
        %4467 = vdwg.mxu0
        %v4468 = vadd.f32 %v4204, %v4406
        %v4469 = vadd.f32 %v4207, %v4409
        %v4470 = vadd.f32 %v4212, %v4414
        %v4471 = vadd.f32 %v4215, %v4417
        %v4472 = vadd.f32 %v4220, %v4422
        %v4473 = vadd.f32 %v4223, %v4425
        %v4474 = vadd.f32 %v4228, %v4430
        %v4475 = vadd.f32 %v4231, %v4433
        %v4476 = vadd.f32 %v4236, %v4438
        %v4477 = vadd.f32 %v4239, %v4441
        %v4478 = vadd.f32 %v4244, %v4446
        %v4479 = vadd.f32 %v4247, %v4449
        %v4480 = vadd.f32 %v4252, %v4454
        %v4481 = vadd.f32 %v4255, %v4457
        %v4482 = vadd.f32 %v4260, %v4462
        %v4483 = vadd.f32 %v4263, %v4465
        %v4484 = vld [vmem:[%s2173] ss:$2 sm:$0xff]
        %v4485 = vld [vmem:[%s2175] ss:$2 sm:$0xff]
        %v4486 = vld [vmem:[%s2181] ss:$2 sm:$0xff]
        %v4487 = vld [vmem:[%s2183] ss:$2 sm:$0xff]
        %v4488 = vld [vmem:[%s2189] ss:$2 sm:$0xff]
        %v4489 = vld [vmem:[%s2191] ss:$2 sm:$0xff]
        %v4490 = vld [vmem:[%s2197] ss:$2 sm:$0xff]
        %v4491 = vld [vmem:[%s2199] ss:$2 sm:$0xff]
        %v4492 = vld [vmem:[%s2205] ss:$2 sm:$0xff]
        %v4493 = vld [vmem:[%s2207] ss:$2 sm:$0xff]
        %v4494 = vld [vmem:[%s2213] ss:$2 sm:$0xff]
        %v4495 = vld [vmem:[%s2215] ss:$2 sm:$0xff]
        %v4496 = vld [vmem:[%s2221] ss:$2 sm:$0xff]
        %v4497 = vld [vmem:[%s2223] ss:$2 sm:$0xff]
        %v4498 = vld [vmem:[%s2229] ss:$2 sm:$0xff]
        %v4499 = vld [vmem:[%s2231] ss:$2 sm:$0xff]
        %v4500 = vpack.c.bf16 %v4485, %v4484
        %v4501 = vpack.c.bf16 %v4487, %v4486
        %v4502 = vpack.c.bf16 %v4489, %v4488
        %v4503 = vpack.c.bf16 %v4491, %v4490
        %v4504 = vpack.c.bf16 %v4493, %v4492
        %v4505 = vpack.c.bf16 %v4495, %v4494
        %v4506 = vpack.c.bf16 %v4497, %v4496
        %v4507 = vpack.c.bf16 %v4499, %v4498
        %s4508 = scalar_lea.vmem %s2, 640
        %v4509 = vld [vmem:[%s4508] sm:$0xf]
        %v4510 = vld [vmem:[%s4508 + $0x4] sm:$0xf]
        %v4511 = vld [vmem:[%s4508 + $0x8] sm:$0xf]
        %v4512 = vld [vmem:[%s4508 + $0xc] sm:$0xf]
        %v4513 = vld [vmem:[%s4508 + $0x10] sm:$0xf]
        %v4514 = vld [vmem:[%s4508 + $0x14] sm:$0xf]
        %v4515 = vld [vmem:[%s4508 + $0x18] sm:$0xf]
        %v4516 = vld [vmem:[%s4508 + $0x1c] sm:$0xf]
        %v4517 = vld [vmem:[%s4508 + $0x20] sm:$0xf]
        %v4518 = vld [vmem:[%s4508 + $0x24] sm:$0xf]
        %v4519 = vld [vmem:[%s4508 + $0x28] sm:$0xf]
        %v4520 = vld [vmem:[%s4508 + $0x2c] sm:$0xf]
        %v4521 = vld [vmem:[%s4508 + $0x30] sm:$0xf]
        %v4522 = vld [vmem:[%s4508 + $0x34] sm:$0xf]
        %v4523 = vld [vmem:[%s4508 + $0x38] sm:$0xf]
        %v4524 = vld [vmem:[%s4508 + $0x3c] sm:$0xf]
        %v4541 = vunpack.c.l.b16 %v4509
        %v4542 = vunpack.c.l.b16 %v4510
        %v4543 = vunpack.c.l.b16 %v4511
        %v4544 = vunpack.c.l.b16 %v4512
        %v4545 = vunpack.c.l.b16 %v4513
        %v4546 = vunpack.c.l.b16 %v4514
        %v4547 = vunpack.c.l.b16 %v4515
        %v4548 = vunpack.c.l.b16 %v4516
        %v4549 = vunpack.c.l.b16 %v4517
        %v4550 = vunpack.c.l.b16 %v4518
        %v4551 = vunpack.c.l.b16 %v4519
        %v4552 = vunpack.c.l.b16 %v4520
        %v4553 = vunpack.c.l.b16 %v4521
        %v4554 = vunpack.c.l.b16 %v4522
        %v4555 = vunpack.c.l.b16 %v4523
        %v4556 = vunpack.c.l.b16 %v4524
        %v4557 = vpack.c.b16 %v4542, %v4541
        %v4558 = vpack.c.b16 %v4544, %v4543
        %v4559 = vpack.c.b16 %v4546, %v4545
        %v4560 = vpack.c.b16 %v4548, %v4547
        %v4561 = vpack.c.b16 %v4550, %v4549
        %v4562 = vpack.c.b16 %v4552, %v4551
        %v4563 = vpack.c.b16 %v4554, %v4553
        %v4564 = vpack.c.b16 %v4556, %v4555
        %4573 = vmatprep.subr.bf16.mxu0 0
        %4574 = vmatpush1.bf16.msra.mxu0 %v4557
        %4575 = vmatprep.subr.bf16.mxu0 0
        %4576 = vmatpush1.bf16.msra.mxu0 %v4558
        %4577 = vmatprep.subr.bf16.mxu0 0
        %4578 = vmatpush1.bf16.msra.mxu0 %v4559
        %4579 = vmatprep.subr.bf16.mxu0 0
        %4580 = vmatpush1.bf16.msra.mxu0 %v4560
        %4581 = vmatprep.subr.bf16.mxu0 0
        %4582 = vmatpush1.bf16.msra.mxu0 %v4561
        %4583 = vmatprep.subr.bf16.mxu0 0
        %4584 = vmatpush1.bf16.msra.mxu0 %v4562
        %4585 = vmatprep.subr.bf16.mxu0 0
        %4586 = vmatpush1.bf16.msra.mxu0 %v4563
        %4587 = vmatprep.subr.bf16.mxu0 0
        %4588 = vmatpush1.bf16.msra.mxu0 %v4564
        %4589 = vmatprep.subr.bf16.mxu0 0
        %4590 = vmatpush1.bf16.msra.mxu0 0
        %4591 = vmatprep.subr.bf16.mxu0 0
        %4592 = vmatpush1.bf16.msra.mxu0 0
        %4593 = vmatprep.subr.bf16.mxu0 0
        %4594 = vmatpush1.bf16.msra.mxu0 0
        %4595 = vmatprep.subr.bf16.mxu0 0
        %4596 = vmatpush1.bf16.msra.mxu0 0
        %4597 = vmatprep.subr.bf16.mxu0 0
        %4598 = vmatpush1.bf16.msra.mxu0 0
        %4599 = vmatprep.subr.bf16.mxu0 0
        %4600 = vmatpush1.bf16.msra.mxu0 0
        %4601 = vmatprep.subr.bf16.mxu0 0
        %4602 = vmatpush1.bf16.msra.mxu0 0
        %4603 = vmatprep.subr.bf16.mxu0 0
        %4604 = vmatpush1.bf16.msra.mxu0 0
        %4605 = vmatprep.mubr.bf16.mxu0 0
        %4606 = vmatmul.mubr.bf16.gmra.mrb[0].mxu0 %v4500
        %v4607 = vpop.f32.mrb[0].mxu0
        %v4608 = vadd.f32 0.0, %v4607
        %v4609 = vpop.f32.mrb[0].mxu0
        %v4610 = vpop.f32.mrb[0].mxu0
        %v4611 = vadd.f32 0.0, %v4610
        %v4612 = vpop.f32.mrb[0].mxu0
        %4613 = vmatprep.mubr.bf16.mxu0 0
        %4614 = vmatmul.mubr.bf16.gmra.mrb[0].mxu0 %v4501
        %v4615 = vpop.f32.mrb[0].mxu0
        %v4616 = vadd.f32 0.0, %v4615
        %v4617 = vpop.f32.mrb[0].mxu0
        %v4618 = vpop.f32.mrb[0].mxu0
        %v4619 = vadd.f32 0.0, %v4618
        %v4620 = vpop.f32.mrb[0].mxu0
        %4621 = vmatprep.mubr.bf16.mxu0 0
        %4622 = vmatmul.mubr.bf16.gmra.mrb[0].mxu0 %v4502
        %v4623 = vpop.f32.mrb[0].mxu0
        %v4624 = vadd.f32 0.0, %v4623
        %v4625 = vpop.f32.mrb[0].mxu0
        %v4626 = vpop.f32.mrb[0].mxu0
        %v4627 = vadd.f32 0.0, %v4626
        %v4628 = vpop.f32.mrb[0].mxu0
        %4629 = vmatprep.mubr.bf16.mxu0 0
        %4630 = vmatmul.mubr.bf16.gmra.mrb[0].mxu0 %v4503
        %v4631 = vpop.f32.mrb[0].mxu0
        %v4632 = vadd.f32 0.0, %v4631
        %v4633 = vpop.f32.mrb[0].mxu0
        %v4634 = vpop.f32.mrb[0].mxu0
        %v4635 = vadd.f32 0.0, %v4634
        %v4636 = vpop.f32.mrb[0].mxu0
        %4637 = vmatprep.mubr.bf16.mxu0 0
        %4638 = vmatmul.mubr.bf16.gmra.mrb[0].mxu0 %v4504
        %v4639 = vpop.f32.mrb[0].mxu0
        %v4640 = vadd.f32 0.0, %v4639
        %v4641 = vpop.f32.mrb[0].mxu0
        %v4642 = vpop.f32.mrb[0].mxu0
        %v4643 = vadd.f32 0.0, %v4642
        %v4644 = vpop.f32.mrb[0].mxu0
        %4645 = vmatprep.mubr.bf16.mxu0 0
        %4646 = vmatmul.mubr.bf16.gmra.mrb[0].mxu0 %v4505
        %v4647 = vpop.f32.mrb[0].mxu0
        %v4648 = vadd.f32 0.0, %v4647
        %v4649 = vpop.f32.mrb[0].mxu0
        %v4650 = vpop.f32.mrb[0].mxu0
        %v4651 = vadd.f32 0.0, %v4650
        %v4652 = vpop.f32.mrb[0].mxu0
        %4653 = vmatprep.mubr.bf16.mxu0 0
        %4654 = vmatmul.mubr.bf16.gmra.mrb[0].mxu0 %v4506
        %v4655 = vpop.f32.mrb[0].mxu0
        %v4656 = vadd.f32 0.0, %v4655
        %v4657 = vpop.f32.mrb[0].mxu0
        %v4658 = vpop.f32.mrb[0].mxu0
        %v4659 = vadd.f32 0.0, %v4658
        %v4660 = vpop.f32.mrb[0].mxu0
        %4661 = vmatprep.mubr.bf16.mxu0 0
        %4662 = vmatmul.mubr.bf16.gmra.mrb[0].mxu0 %v4507
        %v4663 = vpop.f32.mrb[0].mxu0
        %v4664 = vadd.f32 0.0, %v4663
        %v4665 = vpop.f32.mrb[0].mxu0
        %v4666 = vpop.f32.mrb[0].mxu0
        %v4667 = vadd.f32 0.0, %v4666
        %v4668 = vpop.f32.mrb[0].mxu0
        %4669 = vdwg.mxu0
        %v4670 = vadd.f32 %v4468, %v4608
        %v4671 = vadd.f32 %v4469, %v4611
        %v4672 = vadd.f32 %v4470, %v4616
        %v4673 = vadd.f32 %v4471, %v4619
        %v4674 = vadd.f32 %v4472, %v4624
        %v4675 = vadd.f32 %v4473, %v4627
        %v4676 = vadd.f32 %v4474, %v4632
        %v4677 = vadd.f32 %v4475, %v4635
        %v4678 = vadd.f32 %v4476, %v4640
        %v4679 = vadd.f32 %v4477, %v4643
        %v4680 = vadd.f32 %v4478, %v4648
        %v4681 = vadd.f32 %v4479, %v4651
        %v4682 = vadd.f32 %v4480, %v4656
        %v4683 = vadd.f32 %v4481, %v4659
        %v4684 = vadd.f32 %v4482, %v4664
        %v4685 = vadd.f32 %v4483, %v4667
        %s4686 = scalar_lea.vmem %s3, 2
        %v4687 = vld [vmem:[%s4686] sm:$0x1]
        %v4689 = vlaneseq
        %v4690 = vshrl.u32 %v4689, 7
        %v4691 = vsub.s32 0, %v4690
        %v4692 = vrot.slane %v4687, %v4691
        %v4694 = vadd.f32 %v4670, %v4692
        %v4695 = vadd.f32 %v4671, %v4692
        %v4696 = vadd.f32 %v4672, %v4692
        %v4697 = vadd.f32 %v4673, %v4692
        %v4698 = vadd.f32 %v4674, %v4692
        %v4699 = vadd.f32 %v4675, %v4692
        %v4700 = vadd.f32 %v4676, %v4692
        %v4701 = vadd.f32 %v4677, %v4692
        %v4702 = vadd.f32 %v4678, %v4692
        %v4703 = vadd.f32 %v4679, %v4692
        %v4704 = vadd.f32 %v4680, %v4692
        %v4705 = vadd.f32 %v4681, %v4692
        %v4706 = vadd.f32 %v4682, %v4692
        %v4707 = vadd.f32 %v4683, %v4692
        %v4708 = vadd.f32 %v4684, %v4692
        %v4709 = vadd.f32 %v4685, %v4692
        %vm4710 = vcmp.ge.f32.partialorder %v4694, 0.0
        %vm4711 = vcmp.ge.f32.partialorder %v4695, 0.0
        %vm4712 = vcmp.ge.f32.partialorder %v4696, 0.0
        %vm4713 = vcmp.ge.f32.partialorder %v4697, 0.0
        %vm4714 = vcmp.ge.f32.partialorder %v4698, 0.0
        %vm4715 = vcmp.ge.f32.partialorder %v4699, 0.0
        %vm4716 = vcmp.ge.f32.partialorder %v4700, 0.0
        %vm4717 = vcmp.ge.f32.partialorder %v4701, 0.0
        %vm4718 = vcmp.ge.f32.partialorder %v4702, 0.0
        %vm4719 = vcmp.ge.f32.partialorder %v4703, 0.0
        %vm4720 = vcmp.ge.f32.partialorder %v4704, 0.0
        %vm4721 = vcmp.ge.f32.partialorder %v4705, 0.0
        %vm4722 = vcmp.ge.f32.partialorder %v4706, 0.0
        %vm4723 = vcmp.ge.f32.partialorder %v4707, 0.0
        %vm4724 = vcmp.ge.f32.partialorder %v4708, 0.0
        %vm4725 = vcmp.ge.f32.partialorder %v4709, 0.0
        %v4726 = vmul.f32 %v4694, 0.2
        %v4727 = vmul.f32 %v4695, 0.2
        %v4728 = vmul.f32 %v4696, 0.2
        %v4729 = vmul.f32 %v4697, 0.2
        %v4730 = vmul.f32 %v4698, 0.2
        %v4731 = vmul.f32 %v4699, 0.2
        %v4732 = vmul.f32 %v4700, 0.2
        %v4733 = vmul.f32 %v4701, 0.2
        %v4734 = vmul.f32 %v4702, 0.2
        %v4735 = vmul.f32 %v4703, 0.2
        %v4736 = vmul.f32 %v4704, 0.2
        %v4737 = vmul.f32 %v4705, 0.2
        %v4738 = vmul.f32 %v4706, 0.2
        %v4739 = vmul.f32 %v4707, 0.2
        %v4740 = vmul.f32 %v4708, 0.2
        %v4741 = vmul.f32 %v4709, 0.2
        %v4742 = vsel %vm4710, %v4694, %v4726
        %v4743 = vsel %vm4711, %v4695, %v4727
        %v4744 = vsel %vm4712, %v4696, %v4728
        %v4745 = vsel %vm4713, %v4697, %v4729
        %v4746 = vsel %vm4714, %v4698, %v4730
        %v4747 = vsel %vm4715, %v4699, %v4731
        %v4748 = vsel %vm4716, %v4700, %v4732
        %v4749 = vsel %vm4717, %v4701, %v4733
        %v4750 = vsel %vm4718, %v4702, %v4734
        %v4751 = vsel %vm4719, %v4703, %v4735
        %v4752 = vsel %vm4720, %v4704, %v4736
        %v4753 = vsel %vm4721, %v4705, %v4737
        %v4754 = vsel %vm4722, %v4706, %v4738
        %v4755 = vsel %vm4723, %v4707, %v4739
        %v4756 = vsel %vm4724, %v4708, %v4740
        %v4757 = vsel %vm4725, %v4709, %v4741
        %4758 = vst [vmem:[#allocation3 + $0x1] sm:$0xff] %v4742
        %4759 = vst [vmem:[#allocation3 + $0x9] sm:$0xff] %v4743
        %4760 = vst [vmem:[#allocation3 + $0x49] sm:$0xff] %v4744
        %4761 = vst [vmem:[#allocation3 + $0x51] sm:$0xff] %v4745
        %4762 = vst [vmem:[#allocation3 + $0x91] sm:$0xff] %v4746
        %4763 = vst [vmem:[#allocation3 + $0x99] sm:$0xff] %v4747
        %4764 = vst [vmem:[#allocation3 + $0xd9] sm:$0xff] %v4748
        %4765 = vst [vmem:[#allocation3 + $0xe1] sm:$0xff] %v4749
        %4766 = vst [vmem:[#allocation3 + $0x121] sm:$0xff] %v4750
        %4767 = vst [vmem:[#allocation3 + $0x129] sm:$0xff] %v4751
        %4768 = vst [vmem:[#allocation3 + $0x169] sm:$0xff] %v4752
        %4769 = vst [vmem:[#allocation3 + $0x171] sm:$0xff] %v4753
        %4770 = vst [vmem:[#allocation3 + $0x1b1] sm:$0xff] %v4754
        %4771 = vst [vmem:[#allocation3 + $0x1b9] sm:$0xff] %v4755
        %4772 = vst [vmem:[#allocation3 + $0x1f9] sm:$0xff] %v4756
        %4773 = vst [vmem:[#allocation3 + $0x201] sm:$0xff] %v4757
        %4774 = vst [vmem:[#allocation3 + $0x11] sm:$0x1] 0.0
        %4775 = vst [vmem:[#allocation3 + $0x59] sm:$0x1] 0.0
        %4776 = vst [vmem:[#allocation3 + $0xa1] sm:$0x1] 0.0
        %4777 = vst [vmem:[#allocation3 + $0xe9] sm:$0x1] 0.0
        %4778 = vst [vmem:[#allocation3 + $0x131] sm:$0x1] 0.0
        %4779 = vst [vmem:[#allocation3 + $0x179] sm:$0x1] 0.0
        %4780 = vst [vmem:[#allocation3 + $0x1c1] sm:$0x1] 0.0
        %4781 = vst [vmem:[#allocation3 + $0x209] sm:$0x1] 0.0
        %v4782 = vld [vmem:[#allocation3] sm:$0xff]
        %v4783 = vld [vmem:[#allocation3 + $0x8] sm:$0xff]
        %v4784 = vld [vmem:[#allocation3 + $0x10] sm:$0x3]
        %v4785 = vld [vmem:[#allocation3 + $0x48] sm:$0xff]
        %v4786 = vld [vmem:[#allocation3 + $0x50] sm:$0xff]
        %v4787 = vld [vmem:[#allocation3 + $0x58] sm:$0x3]
        %v4788 = vld [vmem:[#allocation3 + $0x90] sm:$0xff]
        %v4789 = vld [vmem:[#allocation3 + $0x98] sm:$0xff]
        %v4790 = vld [vmem:[#allocation3 + $0xa0] sm:$0x3]
        %v4791 = vld [vmem:[#allocation3 + $0xd8] sm:$0xff]
        %v4792 = vld [vmem:[#allocation3 + $0xe0] sm:$0xff]
        %v4793 = vld [vmem:[#allocation3 + $0xe8] sm:$0x3]
        %v4794 = vld [vmem:[#allocation3 + $0x120] sm:$0xff]
        %v4795 = vld [vmem:[#allocation3 + $0x128] sm:$0xff]
        %v4796 = vld [vmem:[#allocation3 + $0x130] sm:$0x3]
        %v4797 = vld [vmem:[#allocation3 + $0x168] sm:$0xff]
        %v4798 = vld [vmem:[#allocation3 + $0x170] sm:$0xff]
        %v4799 = vld [vmem:[#allocation3 + $0x178] sm:$0x3]
        %v4800 = vld [vmem:[#allocation3 + $0x1b0] sm:$0xff]
        %v4801 = vld [vmem:[#allocation3 + $0x1b8] sm:$0xff]
        %v4802 = vld [vmem:[#allocation3 + $0x1c0] sm:$0x3]
        %v4803 = vld [vmem:[#allocation3 + $0x1f8] sm:$0xff]
        %v4804 = vld [vmem:[#allocation3 + $0x200] sm:$0xff]
        %v4805 = vld [vmem:[#allocation3 + $0x208] sm:$0x3]
        %v4806 = vpack.c.bf16 %v4783, %v4782
        %v4807 = vpack.c.bf16 %v4784, %v4784
        %v4808 = vpack.c.bf16 %v4786, %v4785
        %v4809 = vpack.c.bf16 %v4787, %v4787
        %v4810 = vpack.c.bf16 %v4789, %v4788
        %v4811 = vpack.c.bf16 %v4790, %v4790
        %v4812 = vpack.c.bf16 %v4792, %v4791
        %v4813 = vpack.c.bf16 %v4793, %v4793
        %v4814 = vpack.c.bf16 %v4795, %v4794
        %v4815 = vpack.c.bf16 %v4796, %v4796
        %v4816 = vpack.c.bf16 %v4798, %v4797
        %v4817 = vpack.c.bf16 %v4799, %v4799
        %v4818 = vpack.c.bf16 %v4801, %v4800
        %v4819 = vpack.c.bf16 %v4802, %v4802
        %v4820 = vpack.c.bf16 %v4804, %v4803
        %v4821 = vpack.c.bf16 %v4805, %v4805
        %s4822 = scalar_lea.vmem %s2, 704
        %v4823 = vld [vmem:[%s4822] sm:$0xf]
        %v4824 = vld [vmem:[%s4822 + $0x4] sm:$0xf]
        %v4825 = vld [vmem:[%s4822 + $0x8] sm:$0xf]
        %v4826 = vld [vmem:[%s4822 + $0xc] sm:$0xf]
        %v4827 = vld [vmem:[%s4822 + $0x10] sm:$0xf]
        %v4828 = vld [vmem:[%s4822 + $0x14] sm:$0xf]
        %v4829 = vld [vmem:[%s4822 + $0x18] sm:$0xf]
        %v4830 = vld [vmem:[%s4822 + $0x1c] sm:$0xf]
        %v4831 = vld [vmem:[%s4822 + $0x20] sm:$0xf]
        %v4832 = vld [vmem:[%s4822 + $0x24] sm:$0xf]
        %v4833 = vld [vmem:[%s4822 + $0x28] sm:$0xf]
        %v4834 = vld [vmem:[%s4822 + $0x2c] sm:$0xf]
        %v4835 = vld [vmem:[%s4822 + $0x30] sm:$0xf]
        %v4836 = vld [vmem:[%s4822 + $0x34] sm:$0xf]
        %v4837 = vld [vmem:[%s4822 + $0x38] sm:$0xf]
        %v4838 = vld [vmem:[%s4822 + $0x3c] sm:$0xf]
        %v4840 = vshrl.u32 %v4806, 16
        %v4842 = vshll.u32 %v4806, 16
        %v4844 = vrot.slane %v4842, 1
        %v4845 = vor.u32 %v4840, %v4844
        %v4847 = vshll.u32 %v4807, 16
        %v4849 = vrot.slane %v4847, 1
        %v4850 = vsel %vm2767, %v4845, %v4849
        %v4852 = vshrl.u32 %v4808, 16
        %v4854 = vshll.u32 %v4808, 16
        %v4856 = vrot.slane %v4854, 1
        %v4857 = vor.u32 %v4852, %v4856
        %v4859 = vshll.u32 %v4809, 16
        %v4861 = vrot.slane %v4859, 1
        %v4862 = vsel %vm2767, %v4857, %v4861
        %v4864 = vshrl.u32 %v4810, 16
        %v4866 = vshll.u32 %v4810, 16
        %v4868 = vrot.slane %v4866, 1
        %v4869 = vor.u32 %v4864, %v4868
        %v4871 = vshll.u32 %v4811, 16
        %v4873 = vrot.slane %v4871, 1
        %v4874 = vsel %vm2767, %v4869, %v4873
        %v4876 = vshrl.u32 %v4812, 16
        %v4878 = vshll.u32 %v4812, 16
        %v4880 = vrot.slane %v4878, 1
        %v4881 = vor.u32 %v4876, %v4880
        %v4883 = vshll.u32 %v4813, 16
        %v4885 = vrot.slane %v4883, 1
        %v4886 = vsel %vm2767, %v4881, %v4885
        %v4888 = vshrl.u32 %v4814, 16
        %v4890 = vshll.u32 %v4814, 16
        %v4892 = vrot.slane %v4890, 1
        %v4893 = vor.u32 %v4888, %v4892
        %v4895 = vshll.u32 %v4815, 16
        %v4897 = vrot.slane %v4895, 1
        %v4898 = vsel %vm2767, %v4893, %v4897
        %v4900 = vshrl.u32 %v4816, 16
        %v4902 = vshll.u32 %v4816, 16
        %v4904 = vrot.slane %v4902, 1
        %v4905 = vor.u32 %v4900, %v4904
        %v4907 = vshll.u32 %v4817, 16
        %v4909 = vrot.slane %v4907, 1
        %v4910 = vsel %vm2767, %v4905, %v4909
        %v4912 = vshrl.u32 %v4818, 16
        %v4914 = vshll.u32 %v4818, 16
        %v4916 = vrot.slane %v4914, 1
        %v4917 = vor.u32 %v4912, %v4916
        %v4919 = vshll.u32 %v4819, 16
        %v4921 = vrot.slane %v4919, 1
        %v4922 = vsel %vm2767, %v4917, %v4921
        %v4924 = vshrl.u32 %v4820, 16
        %v4926 = vshll.u32 %v4820, 16
        %v4928 = vrot.slane %v4926, 1
        %v4929 = vor.u32 %v4924, %v4928
        %v4931 = vshll.u32 %v4821, 16
        %v4933 = vrot.slane %v4931, 1
        %v4934 = vsel %vm2767, %v4929, %v4933
        %s4943 = scalar_lea.vmem %s2, 768
        %v4944 = vld [vmem:[%s4943] sm:$0xf]
        %v4945 = vld [vmem:[%s4943 + $0x4] sm:$0xf]
        %v4946 = vld [vmem:[%s4943 + $0x8] sm:$0xf]
        %v4947 = vld [vmem:[%s4943 + $0xc] sm:$0xf]
        %v4948 = vld [vmem:[%s4943 + $0x10] sm:$0xf]
        %v4949 = vld [vmem:[%s4943 + $0x14] sm:$0xf]
        %v4950 = vld [vmem:[%s4943 + $0x18] sm:$0xf]
        %v4951 = vld [vmem:[%s4943 + $0x1c] sm:$0xf]
        %v4952 = vld [vmem:[%s4943 + $0x20] sm:$0xf]
        %v4953 = vld [vmem:[%s4943 + $0x24] sm:$0xf]
        %v4954 = vld [vmem:[%s4943 + $0x28] sm:$0xf]
        %v4955 = vld [vmem:[%s4943 + $0x2c] sm:$0xf]
        %v4956 = vld [vmem:[%s4943 + $0x30] sm:$0xf]
        %v4957 = vld [vmem:[%s4943 + $0x34] sm:$0xf]
        %v4958 = vld [vmem:[%s4943 + $0x38] sm:$0xf]
        %v4959 = vld [vmem:[%s4943 + $0x3c] sm:$0xf]
        %v4976 = vunpack.c.l.b16 %v4944
        %v4977 = vunpack.c.l.b16 %v4945
        %v4978 = vunpack.c.l.b16 %v4946
        %v4979 = vunpack.c.l.b16 %v4947
        %v4980 = vunpack.c.l.b16 %v4948
        %v4981 = vunpack.c.l.b16 %v4949
        %v4982 = vunpack.c.l.b16 %v4950
        %v4983 = vunpack.c.l.b16 %v4951
        %v4984 = vunpack.c.l.b16 %v4952
        %v4985 = vunpack.c.l.b16 %v4953
        %v4986 = vunpack.c.l.b16 %v4954
        %v4987 = vunpack.c.l.b16 %v4955
        %v4988 = vunpack.c.l.b16 %v4956
        %v4989 = vunpack.c.l.b16 %v4957
        %v4990 = vunpack.c.l.b16 %v4958
        %v4991 = vunpack.c.l.b16 %v4959
        %v4992 = vpack.c.b16 %v4977, %v4976
        %v4993 = vpack.c.b16 %v4979, %v4978
        %v4994 = vpack.c.b16 %v4981, %v4980
        %v4995 = vpack.c.b16 %v4983, %v4982
        %v4996 = vpack.c.b16 %v4985, %v4984
        %v4997 = vpack.c.b16 %v4987, %v4986
        %v4998 = vpack.c.b16 %v4989, %v4988
        %v4999 = vpack.c.b16 %v4991, %v4990
        %5008 = vmatprep.subr.bf16.mxu0 0
        %5009 = vmatpush1.bf16.msra.mxu0 %v4992
        %5010 = vmatprep.subr.bf16.mxu0 0
        %5011 = vmatpush1.bf16.msra.mxu0 %v4993
        %5012 = vmatprep.subr.bf16.mxu0 0
        %5013 = vmatpush1.bf16.msra.mxu0 %v4994
        %5014 = vmatprep.subr.bf16.mxu0 0
        %5015 = vmatpush1.bf16.msra.mxu0 %v4995
        %5016 = vmatprep.subr.bf16.mxu0 0
        %5017 = vmatpush1.bf16.msra.mxu0 %v4996
        %5018 = vmatprep.subr.bf16.mxu0 0
        %5019 = vmatpush1.bf16.msra.mxu0 %v4997
        %5020 = vmatprep.subr.bf16.mxu0 0
        %5021 = vmatpush1.bf16.msra.mxu0 %v4998
        %5022 = vmatprep.subr.bf16.mxu0 0
        %5023 = vmatpush1.bf16.msra.mxu0 %v4999
        %5024 = vmatprep.subr.bf16.mxu0 0
        %5025 = vmatpush1.bf16.msra.mxu0 0
        %5026 = vmatprep.subr.bf16.mxu0 0
        %5027 = vmatpush1.bf16.msra.mxu0 0
        %5028 = vmatprep.subr.bf16.mxu0 0
        %5029 = vmatpush1.bf16.msra.mxu0 0
        %5030 = vmatprep.subr.bf16.mxu0 0
        %5031 = vmatpush1.bf16.msra.mxu0 0
        %5032 = vmatprep.subr.bf16.mxu0 0
        %5033 = vmatpush1.bf16.msra.mxu0 0
        %5034 = vmatprep.subr.bf16.mxu0 0
        %5035 = vmatpush1.bf16.msra.mxu0 0
        %5036 = vmatprep.subr.bf16.mxu0 0
        %5037 = vmatpush1.bf16.msra.mxu0 0
        %5038 = vmatprep.subr.bf16.mxu0 0
        %5039 = vmatpush1.bf16.msra.mxu0 0
        %5040 = vmatprep.mubr.bf16.mxu0 0
        %5041 = vmatmul.mubr.bf16.gmra.mrb[0].mxu0 %v4850
        %v5042 = vpop.f32.mrb[0].mxu0
        %v5043 = vadd.f32 0.0, %v5042
        %v5044 = vpop.f32.mrb[0].mxu0
        %v5045 = vpop.f32.mrb[0].mxu0
        %v5046 = vadd.f32 0.0, %v5045
        %v5047 = vpop.f32.mrb[0].mxu0
        %5048 = vmatprep.mubr.bf16.mxu0 0
        %5049 = vmatmul.mubr.bf16.gmra.mrb[0].mxu0 %v4862
        %v5050 = vpop.f32.mrb[0].mxu0
        %v5051 = vadd.f32 0.0, %v5050
        %v5052 = vpop.f32.mrb[0].mxu0
        %v5053 = vpop.f32.mrb[0].mxu0
        %v5054 = vadd.f32 0.0, %v5053
        %v5055 = vpop.f32.mrb[0].mxu0
        %5056 = vmatprep.mubr.bf16.mxu0 0
        %5057 = vmatmul.mubr.bf16.gmra.mrb[0].mxu0 %v4874
        %v5058 = vpop.f32.mrb[0].mxu0
        %v5059 = vadd.f32 0.0, %v5058
        %v5060 = vpop.f32.mrb[0].mxu0
        %v5061 = vpop.f32.mrb[0].mxu0
        %v5062 = vadd.f32 0.0, %v5061
        %v5063 = vpop.f32.mrb[0].mxu0
        %5064 = vmatprep.mubr.bf16.mxu0 0
        %5065 = vmatmul.mubr.bf16.gmra.mrb[0].mxu0 %v4886
        %v5066 = vpop.f32.mrb[0].mxu0
        %v5067 = vadd.f32 0.0, %v5066
        %v5068 = vpop.f32.mrb[0].mxu0
        %v5069 = vpop.f32.mrb[0].mxu0
        %v5070 = vadd.f32 0.0, %v5069
        %v5071 = vpop.f32.mrb[0].mxu0
        %5072 = vmatprep.mubr.bf16.mxu0 0
        %5073 = vmatmul.mubr.bf16.gmra.mrb[0].mxu0 %v4898
        %v5074 = vpop.f32.mrb[0].mxu0
        %v5075 = vadd.f32 0.0, %v5074
        %v5076 = vpop.f32.mrb[0].mxu0
        %v5077 = vpop.f32.mrb[0].mxu0
        %v5078 = vadd.f32 0.0, %v5077
        %v5079 = vpop.f32.mrb[0].mxu0
        %5080 = vmatprep.mubr.bf16.mxu0 0
        %5081 = vmatmul.mubr.bf16.gmra.mrb[0].mxu0 %v4910
        %v5082 = vpop.f32.mrb[0].mxu0
        %v5083 = vadd.f32 0.0, %v5082
        %v5084 = vpop.f32.mrb[0].mxu0
        %v5085 = vpop.f32.mrb[0].mxu0
        %v5086 = vadd.f32 0.0, %v5085
        %v5087 = vpop.f32.mrb[0].mxu0
        %5088 = vmatprep.mubr.bf16.mxu0 0
        %5089 = vmatmul.mubr.bf16.gmra.mrb[0].mxu0 %v4922
        %v5090 = vpop.f32.mrb[0].mxu0
        %v5091 = vadd.f32 0.0, %v5090
        %v5092 = vpop.f32.mrb[0].mxu0
        %v5093 = vpop.f32.mrb[0].mxu0
        %v5094 = vadd.f32 0.0, %v5093
        %v5095 = vpop.f32.mrb[0].mxu0
        %5096 = vmatprep.mubr.bf16.mxu0 0
        %5097 = vmatmul.mubr.bf16.gmra.mrb[0].mxu0 %v4934
        %v5098 = vpop.f32.mrb[0].mxu0
        %v5099 = vadd.f32 0.0, %v5098
        %v5100 = vpop.f32.mrb[0].mxu0
        %v5101 = vpop.f32.mrb[0].mxu0
        %v5102 = vadd.f32 0.0, %v5101
        %v5103 = vpop.f32.mrb[0].mxu0
        %5104 = vdwg.mxu0
        %v5121 = vunpack.c.l.b16 %v4823
        %v5122 = vunpack.c.l.b16 %v4824
        %v5123 = vunpack.c.l.b16 %v4825
        %v5124 = vunpack.c.l.b16 %v4826
        %v5125 = vunpack.c.l.b16 %v4827
        %v5126 = vunpack.c.l.b16 %v4828
        %v5127 = vunpack.c.l.b16 %v4829
        %v5128 = vunpack.c.l.b16 %v4830
        %v5129 = vunpack.c.l.b16 %v4831
        %v5130 = vunpack.c.l.b16 %v4832
        %v5131 = vunpack.c.l.b16 %v4833
        %v5132 = vunpack.c.l.b16 %v4834
        %v5133 = vunpack.c.l.b16 %v4835
        %v5134 = vunpack.c.l.b16 %v4836
        %v5135 = vunpack.c.l.b16 %v4837
        %v5136 = vunpack.c.l.b16 %v4838
        %v5137 = vpack.c.b16 %v5122, %v5121
        %v5138 = vpack.c.b16 %v5124, %v5123
        %v5139 = vpack.c.b16 %v5126, %v5125
        %v5140 = vpack.c.b16 %v5128, %v5127
        %v5141 = vpack.c.b16 %v5130, %v5129
        %v5142 = vpack.c.b16 %v5132, %v5131
        %v5143 = vpack.c.b16 %v5134, %v5133
        %v5144 = vpack.c.b16 %v5136, %v5135
        %5153 = vmatprep.subr.bf16.mxu0 0
        %5154 = vmatpush1.bf16.msra.mxu0 %v5137
        %5155 = vmatprep.subr.bf16.mxu0 0
        %5156 = vmatpush1.bf16.msra.mxu0 %v5138
        %5157 = vmatprep.subr.bf16.mxu0 0
        %5158 = vmatpush1.bf16.msra.mxu0 %v5139
        %5159 = vmatprep.subr.bf16.mxu0 0
        %5160 = vmatpush1.bf16.msra.mxu0 %v5140
        %5161 = vmatprep.subr.bf16.mxu0 0
        %5162 = vmatpush1.bf16.msra.mxu0 %v5141
        %5163 = vmatprep.subr.bf16.mxu0 0
        %5164 = vmatpush1.bf16.msra.mxu0 %v5142
        %5165 = vmatprep.subr.bf16.mxu0 0
        %5166 = vmatpush1.bf16.msra.mxu0 %v5143
        %5167 = vmatprep.subr.bf16.mxu0 0
        %5168 = vmatpush1.bf16.msra.mxu0 %v5144
        %5169 = vmatprep.subr.bf16.mxu0 0
        %5170 = vmatpush1.bf16.msra.mxu0 0
        %5171 = vmatprep.subr.bf16.mxu0 0
        %5172 = vmatpush1.bf16.msra.mxu0 0
        %5173 = vmatprep.subr.bf16.mxu0 0
        %5174 = vmatpush1.bf16.msra.mxu0 0
        %5175 = vmatprep.subr.bf16.mxu0 0
        %5176 = vmatpush1.bf16.msra.mxu0 0
        %5177 = vmatprep.subr.bf16.mxu0 0
        %5178 = vmatpush1.bf16.msra.mxu0 0
        %5179 = vmatprep.subr.bf16.mxu0 0
        %5180 = vmatpush1.bf16.msra.mxu0 0
        %5181 = vmatprep.subr.bf16.mxu0 0
        %5182 = vmatpush1.bf16.msra.mxu0 0
        %5183 = vmatprep.subr.bf16.mxu0 0
        %5184 = vmatpush1.bf16.msra.mxu0 0
        %5185 = vmatprep.mubr.bf16.mxu0 0
        %5186 = vmatmul.mubr.bf16.gmra.mrb[0].mxu0 %v4806
        %v5187 = vpop.f32.mrb[0].mxu0
        %v5188 = vadd.f32 %v5043, %v5187
        %v5189 = vpop.f32.mrb[0].mxu0
        %v5190 = vpop.f32.mrb[0].mxu0
        %v5191 = vadd.f32 %v5046, %v5190
        %v5192 = vpop.f32.mrb[0].mxu0
        %5193 = vmatprep.mubr.bf16.mxu0 0
        %5194 = vmatmul.mubr.bf16.gmra.mrb[0].mxu0 %v4808
        %v5195 = vpop.f32.mrb[0].mxu0
        %v5196 = vadd.f32 %v5051, %v5195
        %v5197 = vpop.f32.mrb[0].mxu0
        %v5198 = vpop.f32.mrb[0].mxu0
        %v5199 = vadd.f32 %v5054, %v5198
        %v5200 = vpop.f32.mrb[0].mxu0
        %5201 = vmatprep.mubr.bf16.mxu0 0
        %5202 = vmatmul.mubr.bf16.gmra.mrb[0].mxu0 %v4810
        %v5203 = vpop.f32.mrb[0].mxu0
        %v5204 = vadd.f32 %v5059, %v5203
        %v5205 = vpop.f32.mrb[0].mxu0
        %v5206 = vpop.f32.mrb[0].mxu0
        %v5207 = vadd.f32 %v5062, %v5206
        %v5208 = vpop.f32.mrb[0].mxu0
        %5209 = vmatprep.mubr.bf16.mxu0 0
        %5210 = vmatmul.mubr.bf16.gmra.mrb[0].mxu0 %v4812
        %v5211 = vpop.f32.mrb[0].mxu0
        %v5212 = vadd.f32 %v5067, %v5211
        %v5213 = vpop.f32.mrb[0].mxu0
        %v5214 = vpop.f32.mrb[0].mxu0
        %v5215 = vadd.f32 %v5070, %v5214
        %v5216 = vpop.f32.mrb[0].mxu0
        %5217 = vmatprep.mubr.bf16.mxu0 0
        %5218 = vmatmul.mubr.bf16.gmra.mrb[0].mxu0 %v4814
        %v5219 = vpop.f32.mrb[0].mxu0
        %v5220 = vadd.f32 %v5075, %v5219
        %v5221 = vpop.f32.mrb[0].mxu0
        %v5222 = vpop.f32.mrb[0].mxu0
        %v5223 = vadd.f32 %v5078, %v5222
        %v5224 = vpop.f32.mrb[0].mxu0
        %5225 = vmatprep.mubr.bf16.mxu0 0
        %5226 = vmatmul.mubr.bf16.gmra.mrb[0].mxu0 %v4816
        %v5227 = vpop.f32.mrb[0].mxu0
        %v5228 = vadd.f32 %v5083, %v5227
        %v5229 = vpop.f32.mrb[0].mxu0
        %v5230 = vpop.f32.mrb[0].mxu0
        %v5231 = vadd.f32 %v5086, %v5230
        %v5232 = vpop.f32.mrb[0].mxu0
        %5233 = vmatprep.mubr.bf16.mxu0 0
        %5234 = vmatmul.mubr.bf16.gmra.mrb[0].mxu0 %v4818
        %v5235 = vpop.f32.mrb[0].mxu0
        %v5236 = vadd.f32 %v5091, %v5235
        %v5237 = vpop.f32.mrb[0].mxu0
        %v5238 = vpop.f32.mrb[0].mxu0
        %v5239 = vadd.f32 %v5094, %v5238
        %v5240 = vpop.f32.mrb[0].mxu0
        %5241 = vmatprep.mubr.bf16.mxu0 0
        %5242 = vmatmul.mubr.bf16.gmra.mrb[0].mxu0 %v4820
        %v5243 = vpop.f32.mrb[0].mxu0
        %v5244 = vadd.f32 %v5099, %v5243
        %v5245 = vpop.f32.mrb[0].mxu0
        %v5246 = vpop.f32.mrb[0].mxu0
        %v5247 = vadd.f32 %v5102, %v5246
        %v5248 = vpop.f32.mrb[0].mxu0
        %5249 = vdwg.mxu0
        %v5266 = vrot.slane %v4806, 1
        %v5267 = vrot.slane %v4807, 1
        %v5268 = vsel %vm3403, %v5266, %v5267
        %v5269 = vrot.slane %v4808, 1
        %v5270 = vrot.slane %v4809, 1
        %v5271 = vsel %vm3403, %v5269, %v5270
        %v5272 = vrot.slane %v4810, 1
        %v5273 = vrot.slane %v4811, 1
        %v5274 = vsel %vm3403, %v5272, %v5273
        %v5275 = vrot.slane %v4812, 1
        %v5276 = vrot.slane %v4813, 1
        %v5277 = vsel %vm3403, %v5275, %v5276
        %v5278 = vrot.slane %v4814, 1
        %v5279 = vrot.slane %v4815, 1
        %v5280 = vsel %vm3403, %v5278, %v5279
        %v5281 = vrot.slane %v4816, 1
        %v5282 = vrot.slane %v4817, 1
        %v5283 = vsel %vm3403, %v5281, %v5282
        %v5284 = vrot.slane %v4818, 1
        %v5285 = vrot.slane %v4819, 1
        %v5286 = vsel %vm3403, %v5284, %v5285
        %v5287 = vrot.slane %v4820, 1
        %v5288 = vrot.slane %v4821, 1
        %v5289 = vsel %vm3403, %v5287, %v5288
        %s5298 = scalar_lea.vmem %s2, 832
        %v5299 = vld [vmem:[%s5298] sm:$0xf]
        %v5300 = vld [vmem:[%s5298 + $0x4] sm:$0xf]
        %v5301 = vld [vmem:[%s5298 + $0x8] sm:$0xf]
        %v5302 = vld [vmem:[%s5298 + $0xc] sm:$0xf]
        %v5303 = vld [vmem:[%s5298 + $0x10] sm:$0xf]
        %v5304 = vld [vmem:[%s5298 + $0x14] sm:$0xf]
        %v5305 = vld [vmem:[%s5298 + $0x18] sm:$0xf]
        %v5306 = vld [vmem:[%s5298 + $0x1c] sm:$0xf]
        %v5307 = vld [vmem:[%s5298 + $0x20] sm:$0xf]
        %v5308 = vld [vmem:[%s5298 + $0x24] sm:$0xf]
        %v5309 = vld [vmem:[%s5298 + $0x28] sm:$0xf]
        %v5310 = vld [vmem:[%s5298 + $0x2c] sm:$0xf]
        %v5311 = vld [vmem:[%s5298 + $0x30] sm:$0xf]
        %v5312 = vld [vmem:[%s5298 + $0x34] sm:$0xf]
        %v5313 = vld [vmem:[%s5298 + $0x38] sm:$0xf]
        %v5314 = vld [vmem:[%s5298 + $0x3c] sm:$0xf]
        %v5331 = vunpack.c.l.b16 %v5299
        %v5332 = vunpack.c.l.b16 %v5300
        %v5333 = vunpack.c.l.b16 %v5301
        %v5334 = vunpack.c.l.b16 %v5302
        %v5335 = vunpack.c.l.b16 %v5303
        %v5336 = vunpack.c.l.b16 %v5304
        %v5337 = vunpack.c.l.b16 %v5305
        %v5338 = vunpack.c.l.b16 %v5306
        %v5339 = vunpack.c.l.b16 %v5307
        %v5340 = vunpack.c.l.b16 %v5308
        %v5341 = vunpack.c.l.b16 %v5309
        %v5342 = vunpack.c.l.b16 %v5310
        %v5343 = vunpack.c.l.b16 %v5311
        %v5344 = vunpack.c.l.b16 %v5312
        %v5345 = vunpack.c.l.b16 %v5313
        %v5346 = vunpack.c.l.b16 %v5314
        %v5347 = vpack.c.b16 %v5332, %v5331
        %v5348 = vpack.c.b16 %v5334, %v5333
        %v5349 = vpack.c.b16 %v5336, %v5335
        %v5350 = vpack.c.b16 %v5338, %v5337
        %v5351 = vpack.c.b16 %v5340, %v5339
        %v5352 = vpack.c.b16 %v5342, %v5341
        %v5353 = vpack.c.b16 %v5344, %v5343
        %v5354 = vpack.c.b16 %v5346, %v5345
        %5363 = vmatprep.subr.bf16.mxu0 0
        %5364 = vmatpush1.bf16.msra.mxu0 %v5347
        %5365 = vmatprep.subr.bf16.mxu0 0
        %5366 = vmatpush1.bf16.msra.mxu0 %v5348
        %5367 = vmatprep.subr.bf16.mxu0 0
        %5368 = vmatpush1.bf16.msra.mxu0 %v5349
        %5369 = vmatprep.subr.bf16.mxu0 0
        %5370 = vmatpush1.bf16.msra.mxu0 %v5350
        %5371 = vmatprep.subr.bf16.mxu0 0
        %5372 = vmatpush1.bf16.msra.mxu0 %v5351
        %5373 = vmatprep.subr.bf16.mxu0 0
        %5374 = vmatpush1.bf16.msra.mxu0 %v5352
        %5375 = vmatprep.subr.bf16.mxu0 0
        %5376 = vmatpush1.bf16.msra.mxu0 %v5353
        %5377 = vmatprep.subr.bf16.mxu0 0
        %5378 = vmatpush1.bf16.msra.mxu0 %v5354
        %5379 = vmatprep.subr.bf16.mxu0 0
        %5380 = vmatpush1.bf16.msra.mxu0 0
        %5381 = vmatprep.subr.bf16.mxu0 0
        %5382 = vmatpush1.bf16.msra.mxu0 0
        %5383 = vmatprep.subr.bf16.mxu0 0
        %5384 = vmatpush1.bf16.msra.mxu0 0
        %5385 = vmatprep.subr.bf16.mxu0 0
        %5386 = vmatpush1.bf16.msra.mxu0 0
        %5387 = vmatprep.subr.bf16.mxu0 0
        %5388 = vmatpush1.bf16.msra.mxu0 0
        %5389 = vmatprep.subr.bf16.mxu0 0
        %5390 = vmatpush1.bf16.msra.mxu0 0
        %5391 = vmatprep.subr.bf16.mxu0 0
        %5392 = vmatpush1.bf16.msra.mxu0 0
        %5393 = vmatprep.subr.bf16.mxu0 0
        %5394 = vmatpush1.bf16.msra.mxu0 0
        %5395 = vmatprep.mubr.bf16.mxu0 0
        %5396 = vmatmul.mubr.bf16.gmra.mrb[0].mxu0 %v5268
        %v5397 = vpop.f32.mrb[0].mxu0
        %v5398 = vadd.f32 0.0, %v5397
        %v5399 = vpop.f32.mrb[0].mxu0
        %v5400 = vpop.f32.mrb[0].mxu0
        %v5401 = vadd.f32 0.0, %v5400
        %v5402 = vpop.f32.mrb[0].mxu0
        %5403 = vmatprep.mubr.bf16.mxu0 0
        %5404 = vmatmul.mubr.bf16.gmra.mrb[0].mxu0 %v5271
        %v5405 = vpop.f32.mrb[0].mxu0
        %v5406 = vadd.f32 0.0, %v5405
        %v5407 = vpop.f32.mrb[0].mxu0
        %v5408 = vpop.f32.mrb[0].mxu0
        %v5409 = vadd.f32 0.0, %v5408
        %v5410 = vpop.f32.mrb[0].mxu0
        %5411 = vmatprep.mubr.bf16.mxu0 0
        %5412 = vmatmul.mubr.bf16.gmra.mrb[0].mxu0 %v5274
        %v5413 = vpop.f32.mrb[0].mxu0
        %v5414 = vadd.f32 0.0, %v5413
        %v5415 = vpop.f32.mrb[0].mxu0
        %v5416 = vpop.f32.mrb[0].mxu0
        %v5417 = vadd.f32 0.0, %v5416
        %v5418 = vpop.f32.mrb[0].mxu0
        %5419 = vmatprep.mubr.bf16.mxu0 0
        %5420 = vmatmul.mubr.bf16.gmra.mrb[0].mxu0 %v5277
        %v5421 = vpop.f32.mrb[0].mxu0
        %v5422 = vadd.f32 0.0, %v5421
        %v5423 = vpop.f32.mrb[0].mxu0
        %v5424 = vpop.f32.mrb[0].mxu0
        %v5425 = vadd.f32 0.0, %v5424
        %v5426 = vpop.f32.mrb[0].mxu0
        %5427 = vmatprep.mubr.bf16.mxu0 0
        %5428 = vmatmul.mubr.bf16.gmra.mrb[0].mxu0 %v5280
        %v5429 = vpop.f32.mrb[0].mxu0
        %v5430 = vadd.f32 0.0, %v5429
        %v5431 = vpop.f32.mrb[0].mxu0
        %v5432 = vpop.f32.mrb[0].mxu0
        %v5433 = vadd.f32 0.0, %v5432
        %v5434 = vpop.f32.mrb[0].mxu0
        %5435 = vmatprep.mubr.bf16.mxu0 0
        %5436 = vmatmul.mubr.bf16.gmra.mrb[0].mxu0 %v5283
        %v5437 = vpop.f32.mrb[0].mxu0
        %v5438 = vadd.f32 0.0, %v5437
        %v5439 = vpop.f32.mrb[0].mxu0
        %v5440 = vpop.f32.mrb[0].mxu0
        %v5441 = vadd.f32 0.0, %v5440
        %v5442 = vpop.f32.mrb[0].mxu0
        %5443 = vmatprep.mubr.bf16.mxu0 0
        %5444 = vmatmul.mubr.bf16.gmra.mrb[0].mxu0 %v5286
        %v5445 = vpop.f32.mrb[0].mxu0
        %v5446 = vadd.f32 0.0, %v5445
        %v5447 = vpop.f32.mrb[0].mxu0
        %v5448 = vpop.f32.mrb[0].mxu0
        %v5449 = vadd.f32 0.0, %v5448
        %v5450 = vpop.f32.mrb[0].mxu0
        %5451 = vmatprep.mubr.bf16.mxu0 0
        %5452 = vmatmul.mubr.bf16.gmra.mrb[0].mxu0 %v5289
        %v5453 = vpop.f32.mrb[0].mxu0
        %v5454 = vadd.f32 0.0, %v5453
        %v5455 = vpop.f32.mrb[0].mxu0
        %v5456 = vpop.f32.mrb[0].mxu0
        %v5457 = vadd.f32 0.0, %v5456
        %v5458 = vpop.f32.mrb[0].mxu0
        %5459 = vdwg.mxu0
        %v5460 = vadd.f32 %v5188, %v5398
        %v5461 = vadd.f32 %v5191, %v5401
        %v5462 = vadd.f32 %v5196, %v5406
        %v5463 = vadd.f32 %v5199, %v5409
        %v5464 = vadd.f32 %v5204, %v5414
        %v5465 = vadd.f32 %v5207, %v5417
        %v5466 = vadd.f32 %v5212, %v5422
        %v5467 = vadd.f32 %v5215, %v5425
        %v5468 = vadd.f32 %v5220, %v5430
        %v5469 = vadd.f32 %v5223, %v5433
        %v5470 = vadd.f32 %v5228, %v5438
        %v5471 = vadd.f32 %v5231, %v5441
        %v5472 = vadd.f32 %v5236, %v5446
        %v5473 = vadd.f32 %v5239, %v5449
        %v5474 = vadd.f32 %v5244, %v5454
        %v5475 = vadd.f32 %v5247, %v5457
        %s5476 = scalar_lea.vmem %s3, 3
        %v5477 = vld [vmem:[%s5476] sm:$0x1]
        %v5479 = vlaneseq
        %v5480 = vshrl.u32 %v5479, 7
        %v5481 = vsub.s32 0, %v5480
        %v5482 = vrot.slane %v5477, %v5481
        %v5484 = vadd.f32 %v5460, %v5482
        %v5485 = vadd.f32 %v5461, %v5482
        %v5486 = vadd.f32 %v5462, %v5482
        %v5487 = vadd.f32 %v5463, %v5482
        %v5488 = vadd.f32 %v5464, %v5482
        %v5489 = vadd.f32 %v5465, %v5482
        %v5490 = vadd.f32 %v5466, %v5482
        %v5491 = vadd.f32 %v5467, %v5482
        %v5492 = vadd.f32 %v5468, %v5482
        %v5493 = vadd.f32 %v5469, %v5482
        %v5494 = vadd.f32 %v5470, %v5482
        %v5495 = vadd.f32 %v5471, %v5482
        %v5496 = vadd.f32 %v5472, %v5482
        %v5497 = vadd.f32 %v5473, %v5482
        %v5498 = vadd.f32 %v5474, %v5482
        %v5499 = vadd.f32 %v5475, %v5482
        %vm5500 = vcmp.ge.f32.partialorder %v5484, 0.0
        %vm5501 = vcmp.ge.f32.partialorder %v5485, 0.0
        %vm5502 = vcmp.ge.f32.partialorder %v5486, 0.0
        %vm5503 = vcmp.ge.f32.partialorder %v5487, 0.0
        %vm5504 = vcmp.ge.f32.partialorder %v5488, 0.0
        %vm5505 = vcmp.ge.f32.partialorder %v5489, 0.0
        %vm5506 = vcmp.ge.f32.partialorder %v5490, 0.0
        %vm5507 = vcmp.ge.f32.partialorder %v5491, 0.0
        %vm5508 = vcmp.ge.f32.partialorder %v5492, 0.0
        %vm5509 = vcmp.ge.f32.partialorder %v5493, 0.0
        %vm5510 = vcmp.ge.f32.partialorder %v5494, 0.0
        %vm5511 = vcmp.ge.f32.partialorder %v5495, 0.0
        %vm5512 = vcmp.ge.f32.partialorder %v5496, 0.0
        %vm5513 = vcmp.ge.f32.partialorder %v5497, 0.0
        %vm5514 = vcmp.ge.f32.partialorder %v5498, 0.0
        %vm5515 = vcmp.ge.f32.partialorder %v5499, 0.0
        %v5516 = vmul.f32 %v5484, 0.2
        %v5517 = vmul.f32 %v5485, 0.2
        %v5518 = vmul.f32 %v5486, 0.2
        %v5519 = vmul.f32 %v5487, 0.2
        %v5520 = vmul.f32 %v5488, 0.2
        %v5521 = vmul.f32 %v5489, 0.2
        %v5522 = vmul.f32 %v5490, 0.2
        %v5523 = vmul.f32 %v5491, 0.2
        %v5524 = vmul.f32 %v5492, 0.2
        %v5525 = vmul.f32 %v5493, 0.2
        %v5526 = vmul.f32 %v5494, 0.2
        %v5527 = vmul.f32 %v5495, 0.2
        %v5528 = vmul.f32 %v5496, 0.2
        %v5529 = vmul.f32 %v5497, 0.2
        %v5530 = vmul.f32 %v5498, 0.2
        %v5531 = vmul.f32 %v5499, 0.2
        %v5532 = vsel %vm5500, %v5484, %v5516
        %v5533 = vsel %vm5501, %v5485, %v5517
        %v5534 = vsel %vm5502, %v5486, %v5518
        %v5535 = vsel %vm5503, %v5487, %v5519
        %v5536 = vsel %vm5504, %v5488, %v5520
        %v5537 = vsel %vm5505, %v5489, %v5521
        %v5538 = vsel %vm5506, %v5490, %v5522
        %v5539 = vsel %vm5507, %v5491, %v5523
        %v5540 = vsel %vm5508, %v5492, %v5524
        %v5541 = vsel %vm5509, %v5493, %v5525
        %v5542 = vsel %vm5510, %v5494, %v5526
        %v5543 = vsel %vm5511, %v5495, %v5527
        %v5544 = vsel %vm5512, %v5496, %v5528
        %v5545 = vsel %vm5513, %v5497, %v5529
        %v5546 = vsel %vm5514, %v5498, %v5530
        %v5547 = vsel %vm5515, %v5499, %v5531
        %5548 = vst [vmem:[#allocation2 + $0x1] sm:$0xff] %v5532
        %5549 = vst [vmem:[#allocation2 + $0x9] sm:$0xff] %v5533
        %5550 = vst [vmem:[#allocation2 + $0x49] sm:$0xff] %v5534
        %5551 = vst [vmem:[#allocation2 + $0x51] sm:$0xff] %v5535
        %5552 = vst [vmem:[#allocation2 + $0x91] sm:$0xff] %v5536
        %5553 = vst [vmem:[#allocation2 + $0x99] sm:$0xff] %v5537
        %5554 = vst [vmem:[#allocation2 + $0xd9] sm:$0xff] %v5538
        %5555 = vst [vmem:[#allocation2 + $0xe1] sm:$0xff] %v5539
        %5556 = vst [vmem:[#allocation2 + $0x121] sm:$0xff] %v5540
        %5557 = vst [vmem:[#allocation2 + $0x129] sm:$0xff] %v5541
        %5558 = vst [vmem:[#allocation2 + $0x169] sm:$0xff] %v5542
        %5559 = vst [vmem:[#allocation2 + $0x171] sm:$0xff] %v5543
        %5560 = vst [vmem:[#allocation2 + $0x1b1] sm:$0xff] %v5544
        %5561 = vst [vmem:[#allocation2 + $0x1b9] sm:$0xff] %v5545
        %5562 = vst [vmem:[#allocation2 + $0x1f9] sm:$0xff] %v5546
        %5563 = vst [vmem:[#allocation2 + $0x201] sm:$0xff] %v5547
        %5564 = vst [vmem:[#allocation2 + $0x11] sm:$0x1] 0.0
        %5565 = vst [vmem:[#allocation2 + $0x59] sm:$0x1] 0.0
        %5566 = vst [vmem:[#allocation2 + $0xa1] sm:$0x1] 0.0
        %5567 = vst [vmem:[#allocation2 + $0xe9] sm:$0x1] 0.0
        %5568 = vst [vmem:[#allocation2 + $0x131] sm:$0x1] 0.0
        %5569 = vst [vmem:[#allocation2 + $0x179] sm:$0x1] 0.0
        %5570 = vst [vmem:[#allocation2 + $0x1c1] sm:$0x1] 0.0
        %5571 = vst [vmem:[#allocation2 + $0x209] sm:$0x1] 0.0
        %v5572 = vld [vmem:[#allocation2] ss:$2 sm:$0xff]
        %v5573 = vld [vmem:[%s1232] ss:$2 sm:$0xff]
        %v5574 = vld [vmem:[%s1240] ss:$2 sm:$0xff]
        %v5575 = vld [vmem:[%s1248] ss:$2 sm:$0xff]
        %v5576 = vld [vmem:[%s1256] ss:$2 sm:$0xff]
        %v5577 = vld [vmem:[%s1264] ss:$2 sm:$0xff]
        %v5578 = vld [vmem:[%s1272] ss:$2 sm:$0xff]
        %v5579 = vld [vmem:[%s1280] ss:$2 sm:$0xff]
        %v5580 = vpack.c.bf16 %v5573, %v5572
        %v5581 = vpack.c.bf16 %v5575, %v5574
        %v5582 = vpack.c.bf16 %v5577, %v5576
        %v5583 = vpack.c.bf16 %v5579, %v5578
        %s5584 = scalar_lea.vmem %s2, 896
        %v5585 = vld [vmem:[%s5584] sm:$0xf]
        %v5586 = vld [vmem:[%s5584 + $0x4] sm:$0xf]
        %v5587 = vld [vmem:[%s5584 + $0x8] sm:$0xf]
        %v5588 = vld [vmem:[%s5584 + $0xc] sm:$0xf]
        %v5589 = vld [vmem:[%s5584 + $0x10] sm:$0xf]
        %v5590 = vld [vmem:[%s5584 + $0x14] sm:$0xf]
        %v5591 = vld [vmem:[%s5584 + $0x18] sm:$0xf]
        %v5592 = vld [vmem:[%s5584 + $0x1c] sm:$0xf]
        %v5593 = vld [vmem:[%s5584 + $0x20] sm:$0xf]
        %v5594 = vld [vmem:[%s5584 + $0x24] sm:$0xf]
        %v5595 = vld [vmem:[%s5584 + $0x28] sm:$0xf]
        %v5596 = vld [vmem:[%s5584 + $0x2c] sm:$0xf]
        %v5597 = vld [vmem:[%s5584 + $0x30] sm:$0xf]
        %v5598 = vld [vmem:[%s5584 + $0x34] sm:$0xf]
        %v5599 = vld [vmem:[%s5584 + $0x38] sm:$0xf]
        %v5600 = vld [vmem:[%s5584 + $0x3c] sm:$0xf]
        %v5601 = vld [vmem:[%s1320] ss:$2 sm:$0xff]
        %v5602 = vld [vmem:[%s1328] ss:$2 sm:$0xff]
        %v5603 = vld [vmem:[%s1336] ss:$2 sm:$0xff]
        %v5604 = vld [vmem:[%s1344] ss:$2 sm:$0xff]
        %v5605 = vld [vmem:[%s1352] ss:$2 sm:$0xff]
        %v5606 = vld [vmem:[%s1360] ss:$2 sm:$0xff]
        %v5607 = vld [vmem:[%s1368] ss:$2 sm:$0xff]
        %v5608 = vld [vmem:[%s1376] ss:$2 sm:$0xff]
        %v5609 = vpack.c.bf16 %v5602, %v5601
        %v5610 = vpack.c.bf16 %v5604, %v5603
        %v5611 = vpack.c.bf16 %v5606, %v5605
        %v5612 = vpack.c.bf16 %v5608, %v5607
        %s5613 = scalar_lea.vmem %s2, 960
        %v5614 = vld [vmem:[%s5613] sm:$0xf]
        %v5615 = vld [vmem:[%s5613 + $0x4] sm:$0xf]
        %v5616 = vld [vmem:[%s5613 + $0x8] sm:$0xf]
        %v5617 = vld [vmem:[%s5613 + $0xc] sm:$0xf]
        %v5618 = vld [vmem:[%s5613 + $0x10] sm:$0xf]
        %v5619 = vld [vmem:[%s5613 + $0x14] sm:$0xf]
        %v5620 = vld [vmem:[%s5613 + $0x18] sm:$0xf]
        %v5621 = vld [vmem:[%s5613 + $0x1c] sm:$0xf]
        %v5622 = vld [vmem:[%s5613 + $0x20] sm:$0xf]
        %v5623 = vld [vmem:[%s5613 + $0x24] sm:$0xf]
        %v5624 = vld [vmem:[%s5613 + $0x28] sm:$0xf]
        %v5625 = vld [vmem:[%s5613 + $0x2c] sm:$0xf]
        %v5626 = vld [vmem:[%s5613 + $0x30] sm:$0xf]
        %v5627 = vld [vmem:[%s5613 + $0x34] sm:$0xf]
        %v5628 = vld [vmem:[%s5613 + $0x38] sm:$0xf]
        %v5629 = vld [vmem:[%s5613 + $0x3c] sm:$0xf]
        %v5646 = vunpack.c.l.b16 %v5614
        %v5647 = vunpack.c.l.b16 %v5615
        %v5648 = vunpack.c.l.b16 %v5616
        %v5649 = vunpack.c.l.b16 %v5617
        %v5650 = vunpack.c.l.b16 %v5618
        %v5651 = vunpack.c.l.b16 %v5619
        %v5652 = vunpack.c.l.b16 %v5620
        %v5653 = vunpack.c.l.b16 %v5621
        %v5654 = vunpack.c.l.b16 %v5622
        %v5655 = vunpack.c.l.b16 %v5623
        %v5656 = vunpack.c.l.b16 %v5624
        %v5657 = vunpack.c.l.b16 %v5625
        %v5658 = vunpack.c.l.b16 %v5626
        %v5659 = vunpack.c.l.b16 %v5627
        %v5660 = vunpack.c.l.b16 %v5628
        %v5661 = vunpack.c.l.b16 %v5629
        %v5662 = vpack.c.b16 %v5647, %v5646
        %v5663 = vpack.c.b16 %v5649, %v5648
        %v5664 = vpack.c.b16 %v5651, %v5650
        %v5665 = vpack.c.b16 %v5653, %v5652
        %v5666 = vpack.c.b16 %v5655, %v5654
        %v5667 = vpack.c.b16 %v5657, %v5656
        %v5668 = vpack.c.b16 %v5659, %v5658
        %v5669 = vpack.c.b16 %v5661, %v5660
        %5678 = vmatprep.subr.bf16.mxu0 0
        %5679 = vmatpush1.bf16.msra.mxu0 %v5662
        %5680 = vmatprep.subr.bf16.mxu0 0
        %5681 = vmatpush1.bf16.msra.mxu0 %v5663
        %5682 = vmatprep.subr.bf16.mxu0 0
        %5683 = vmatpush1.bf16.msra.mxu0 %v5664
        %5684 = vmatprep.subr.bf16.mxu0 0
        %5685 = vmatpush1.bf16.msra.mxu0 %v5665
        %5686 = vmatprep.subr.bf16.mxu0 0
        %5687 = vmatpush1.bf16.msra.mxu0 %v5666
        %5688 = vmatprep.subr.bf16.mxu0 0
        %5689 = vmatpush1.bf16.msra.mxu0 %v5667
        %5690 = vmatprep.subr.bf16.mxu0 0
        %5691 = vmatpush1.bf16.msra.mxu0 %v5668
        %5692 = vmatprep.subr.bf16.mxu0 0
        %5693 = vmatpush1.bf16.msra.mxu0 %v5669
        %5694 = vmatprep.subr.bf16.mxu0 0
        %5695 = vmatpush1.bf16.msra.mxu0 0
        %5696 = vmatprep.subr.bf16.mxu0 0
        %5697 = vmatpush1.bf16.msra.mxu0 0
        %5698 = vmatprep.subr.bf16.mxu0 0
        %5699 = vmatpush1.bf16.msra.mxu0 0
        %5700 = vmatprep.subr.bf16.mxu0 0
        %5701 = vmatpush1.bf16.msra.mxu0 0
        %5702 = vmatprep.subr.bf16.mxu0 0
        %5703 = vmatpush1.bf16.msra.mxu0 0
        %5704 = vmatprep.subr.bf16.mxu0 0
        %5705 = vmatpush1.bf16.msra.mxu0 0
        %5706 = vmatprep.subr.bf16.mxu0 0
        %5707 = vmatpush1.bf16.msra.mxu0 0
        %5708 = vmatprep.subr.bf16.mxu0 0
        %5709 = vmatpush1.bf16.msra.mxu0 0
        %5710 = vmatprep.mubr.bf16.mxu0 0
        %5711 = vmatmul.mubr.bf16.gmra.mrb[0].mxu0 %v5609
        %v5712 = vpop.f32.mrb[0].mxu0
        %v5713 = vadd.f32 0.0, %v5712
        %v5714 = vpop.f32.mrb[0].mxu0
        %v5715 = vpop.f32.mrb[0].mxu0
        %v5716 = vadd.f32 0.0, %v5715
        %v5717 = vpop.f32.mrb[0].mxu0
        %5718 = vmatprep.mubr.bf16.mxu0 0
        %5719 = vmatmul.mubr.bf16.gmra.mrb[0].mxu0 %v5610
        %v5720 = vpop.f32.mrb[0].mxu0
        %v5721 = vadd.f32 0.0, %v5720
        %v5722 = vpop.f32.mrb[0].mxu0
        %v5723 = vpop.f32.mrb[0].mxu0
        %v5724 = vadd.f32 0.0, %v5723
        %v5725 = vpop.f32.mrb[0].mxu0
        %5726 = vmatprep.mubr.bf16.mxu0 0
        %5727 = vmatmul.mubr.bf16.gmra.mrb[0].mxu0 %v5611
        %v5728 = vpop.f32.mrb[0].mxu0
        %v5729 = vadd.f32 0.0, %v5728
        %v5730 = vpop.f32.mrb[0].mxu0
        %v5731 = vpop.f32.mrb[0].mxu0
        %v5732 = vadd.f32 0.0, %v5731
        %v5733 = vpop.f32.mrb[0].mxu0
        %5734 = vmatprep.mubr.bf16.mxu0 0
        %5735 = vmatmul.mubr.bf16.gmra.mrb[0].mxu0 %v5612
        %v5736 = vpop.f32.mrb[0].mxu0
        %v5737 = vadd.f32 0.0, %v5736
        %v5738 = vpop.f32.mrb[0].mxu0
        %v5739 = vpop.f32.mrb[0].mxu0
        %v5740 = vadd.f32 0.0, %v5739
        %v5741 = vpop.f32.mrb[0].mxu0
        %5742 = vdwg.mxu0
        %v5759 = vunpack.c.l.b16 %v5585
        %v5760 = vunpack.c.l.b16 %v5586
        %v5761 = vunpack.c.l.b16 %v5587
        %v5762 = vunpack.c.l.b16 %v5588
        %v5763 = vunpack.c.l.b16 %v5589
        %v5764 = vunpack.c.l.b16 %v5590
        %v5765 = vunpack.c.l.b16 %v5591
        %v5766 = vunpack.c.l.b16 %v5592
        %v5767 = vunpack.c.l.b16 %v5593
        %v5768 = vunpack.c.l.b16 %v5594
        %v5769 = vunpack.c.l.b16 %v5595
        %v5770 = vunpack.c.l.b16 %v5596
        %v5771 = vunpack.c.l.b16 %v5597
        %v5772 = vunpack.c.l.b16 %v5598
        %v5773 = vunpack.c.l.b16 %v5599
        %v5774 = vunpack.c.l.b16 %v5600
        %v5775 = vpack.c.b16 %v5760, %v5759
        %v5776 = vpack.c.b16 %v5762, %v5761
        %v5777 = vpack.c.b16 %v5764, %v5763
        %v5778 = vpack.c.b16 %v5766, %v5765
        %v5779 = vpack.c.b16 %v5768, %v5767
        %v5780 = vpack.c.b16 %v5770, %v5769
        %v5781 = vpack.c.b16 %v5772, %v5771
        %v5782 = vpack.c.b16 %v5774, %v5773
        %5791 = vmatprep.subr.bf16.mxu0 0
        %5792 = vmatpush1.bf16.msra.mxu0 %v5775
        %5793 = vmatprep.subr.bf16.mxu0 0
        %5794 = vmatpush1.bf16.msra.mxu0 %v5776
        %5795 = vmatprep.subr.bf16.mxu0 0
        %5796 = vmatpush1.bf16.msra.mxu0 %v5777
        %5797 = vmatprep.subr.bf16.mxu0 0
        %5798 = vmatpush1.bf16.msra.mxu0 %v5778
        %5799 = vmatprep.subr.bf16.mxu0 0
        %5800 = vmatpush1.bf16.msra.mxu0 %v5779
        %5801 = vmatprep.subr.bf16.mxu0 0
        %5802 = vmatpush1.bf16.msra.mxu0 %v5780
        %5803 = vmatprep.subr.bf16.mxu0 0
        %5804 = vmatpush1.bf16.msra.mxu0 %v5781
        %5805 = vmatprep.subr.bf16.mxu0 0
        %5806 = vmatpush1.bf16.msra.mxu0 %v5782
        %5807 = vmatprep.subr.bf16.mxu0 0
        %5808 = vmatpush1.bf16.msra.mxu0 0
        %5809 = vmatprep.subr.bf16.mxu0 0
        %5810 = vmatpush1.bf16.msra.mxu0 0
        %5811 = vmatprep.subr.bf16.mxu0 0
        %5812 = vmatpush1.bf16.msra.mxu0 0
        %5813 = vmatprep.subr.bf16.mxu0 0
        %5814 = vmatpush1.bf16.msra.mxu0 0
        %5815 = vmatprep.subr.bf16.mxu0 0
        %5816 = vmatpush1.bf16.msra.mxu0 0
        %5817 = vmatprep.subr.bf16.mxu0 0
        %5818 = vmatpush1.bf16.msra.mxu0 0
        %5819 = vmatprep.subr.bf16.mxu0 0
        %5820 = vmatpush1.bf16.msra.mxu0 0
        %5821 = vmatprep.subr.bf16.mxu0 0
        %5822 = vmatpush1.bf16.msra.mxu0 0
        %5823 = vmatprep.mubr.bf16.mxu0 0
        %5824 = vmatmul.mubr.bf16.gmra.mrb[0].mxu0 %v5580
        %v5825 = vpop.f32.mrb[0].mxu0
        %v5826 = vadd.f32 %v5713, %v5825
        %v5827 = vpop.f32.mrb[0].mxu0
        %v5828 = vpop.f32.mrb[0].mxu0
        %v5829 = vadd.f32 %v5716, %v5828
        %v5830 = vpop.f32.mrb[0].mxu0
        %5831 = vmatprep.mubr.bf16.mxu0 0
        %5832 = vmatmul.mubr.bf16.gmra.mrb[0].mxu0 %v5581
        %v5833 = vpop.f32.mrb[0].mxu0
        %v5834 = vadd.f32 %v5721, %v5833
        %v5835 = vpop.f32.mrb[0].mxu0
        %v5836 = vpop.f32.mrb[0].mxu0
        %v5837 = vadd.f32 %v5724, %v5836
        %v5838 = vpop.f32.mrb[0].mxu0
        %5839 = vmatprep.mubr.bf16.mxu0 0
        %5840 = vmatmul.mubr.bf16.gmra.mrb[0].mxu0 %v5582
        %v5841 = vpop.f32.mrb[0].mxu0
        %v5842 = vadd.f32 %v5729, %v5841
        %v5843 = vpop.f32.mrb[0].mxu0
        %v5844 = vpop.f32.mrb[0].mxu0
        %v5845 = vadd.f32 %v5732, %v5844
        %v5846 = vpop.f32.mrb[0].mxu0
        %5847 = vmatprep.mubr.bf16.mxu0 0
        %5848 = vmatmul.mubr.bf16.gmra.mrb[0].mxu0 %v5583
        %v5849 = vpop.f32.mrb[0].mxu0
        %v5850 = vadd.f32 %v5737, %v5849
        %v5851 = vpop.f32.mrb[0].mxu0
        %v5852 = vpop.f32.mrb[0].mxu0
        %v5853 = vadd.f32 %v5740, %v5852
        %v5854 = vpop.f32.mrb[0].mxu0
        %5855 = vdwg.mxu0
        %v5856 = vld [vmem:[%s4266] ss:$2 sm:$0xff]
        %v5857 = vld [vmem:[%s4270] ss:$2 sm:$0xff]
        %v5858 = vld [vmem:[%s4274] ss:$2 sm:$0xff]
        %v5859 = vld [vmem:[%s4278] ss:$2 sm:$0xff]
        %v5860 = vld [vmem:[%s4282] ss:$2 sm:$0xff]
        %v5861 = vld [vmem:[%s4286] ss:$2 sm:$0xff]
        %v5862 = vld [vmem:[%s4290] ss:$2 sm:$0xff]
        %v5863 = vld [vmem:[%s4294] ss:$2 sm:$0xff]
        %v5864 = vpack.c.bf16 %v5857, %v5856
        %v5865 = vpack.c.bf16 %v5859, %v5858
        %v5866 = vpack.c.bf16 %v5861, %v5860
        %v5867 = vpack.c.bf16 %v5863, %v5862
        %s5868 = scalar_lea.vmem %s2, 1024
        %v5869 = vld [vmem:[%s5868] sm:$0xf]
        %v5870 = vld [vmem:[%s5868 + $0x4] sm:$0xf]
        %v5871 = vld [vmem:[%s5868 + $0x8] sm:$0xf]
        %v5872 = vld [vmem:[%s5868 + $0xc] sm:$0xf]
        %v5873 = vld [vmem:[%s5868 + $0x10] sm:$0xf]
        %v5874 = vld [vmem:[%s5868 + $0x14] sm:$0xf]
        %v5875 = vld [vmem:[%s5868 + $0x18] sm:$0xf]
        %v5876 = vld [vmem:[%s5868 + $0x1c] sm:$0xf]
        %v5877 = vld [vmem:[%s5868 + $0x20] sm:$0xf]
        %v5878 = vld [vmem:[%s5868 + $0x24] sm:$0xf]
        %v5879 = vld [vmem:[%s5868 + $0x28] sm:$0xf]
        %v5880 = vld [vmem:[%s5868 + $0x2c] sm:$0xf]
        %v5881 = vld [vmem:[%s5868 + $0x30] sm:$0xf]
        %v5882 = vld [vmem:[%s5868 + $0x34] sm:$0xf]
        %v5883 = vld [vmem:[%s5868 + $0x38] sm:$0xf]
        %v5884 = vld [vmem:[%s5868 + $0x3c] sm:$0xf]
        %v5901 = vunpack.c.l.b16 %v5869
        %v5902 = vunpack.c.l.b16 %v5870
        %v5903 = vunpack.c.l.b16 %v5871
        %v5904 = vunpack.c.l.b16 %v5872
        %v5905 = vunpack.c.l.b16 %v5873
        %v5906 = vunpack.c.l.b16 %v5874
        %v5907 = vunpack.c.l.b16 %v5875
        %v5908 = vunpack.c.l.b16 %v5876
        %v5909 = vunpack.c.l.b16 %v5877
        %v5910 = vunpack.c.l.b16 %v5878
        %v5911 = vunpack.c.l.b16 %v5879
        %v5912 = vunpack.c.l.b16 %v5880
        %v5913 = vunpack.c.l.b16 %v5881
        %v5914 = vunpack.c.l.b16 %v5882
        %v5915 = vunpack.c.l.b16 %v5883
        %v5916 = vunpack.c.l.b16 %v5884
        %v5917 = vpack.c.b16 %v5902, %v5901
        %v5918 = vpack.c.b16 %v5904, %v5903
        %v5919 = vpack.c.b16 %v5906, %v5905
        %v5920 = vpack.c.b16 %v5908, %v5907
        %v5921 = vpack.c.b16 %v5910, %v5909
        %v5922 = vpack.c.b16 %v5912, %v5911
        %v5923 = vpack.c.b16 %v5914, %v5913
        %v5924 = vpack.c.b16 %v5916, %v5915
        %5933 = vmatprep.subr.bf16.mxu0 0
        %5934 = vmatpush1.bf16.msra.mxu0 %v5917
        %5935 = vmatprep.subr.bf16.mxu0 0
        %5936 = vmatpush1.bf16.msra.mxu0 %v5918
        %5937 = vmatprep.subr.bf16.mxu0 0
        %5938 = vmatpush1.bf16.msra.mxu0 %v5919
        %5939 = vmatprep.subr.bf16.mxu0 0
        %5940 = vmatpush1.bf16.msra.mxu0 %v5920
        %5941 = vmatprep.subr.bf16.mxu0 0
        %5942 = vmatpush1.bf16.msra.mxu0 %v5921
        %5943 = vmatprep.subr.bf16.mxu0 0
        %5944 = vmatpush1.bf16.msra.mxu0 %v5922
        %5945 = vmatprep.subr.bf16.mxu0 0
        %5946 = vmatpush1.bf16.msra.mxu0 %v5923
        %5947 = vmatprep.subr.bf16.mxu0 0
        %5948 = vmatpush1.bf16.msra.mxu0 %v5924
        %5949 = vmatprep.subr.bf16.mxu0 0
        %5950 = vmatpush1.bf16.msra.mxu0 0
        %5951 = vmatprep.subr.bf16.mxu0 0
        %5952 = vmatpush1.bf16.msra.mxu0 0
        %5953 = vmatprep.subr.bf16.mxu0 0
        %5954 = vmatpush1.bf16.msra.mxu0 0
        %5955 = vmatprep.subr.bf16.mxu0 0
        %5956 = vmatpush1.bf16.msra.mxu0 0
        %5957 = vmatprep.subr.bf16.mxu0 0
        %5958 = vmatpush1.bf16.msra.mxu0 0
        %5959 = vmatprep.subr.bf16.mxu0 0
        %5960 = vmatpush1.bf16.msra.mxu0 0
        %5961 = vmatprep.subr.bf16.mxu0 0
        %5962 = vmatpush1.bf16.msra.mxu0 0
        %5963 = vmatprep.subr.bf16.mxu0 0
        %5964 = vmatpush1.bf16.msra.mxu0 0
        %5965 = vmatprep.mubr.bf16.mxu0 0
        %5966 = vmatmul.mubr.bf16.gmra.mrb[0].mxu0 %v5864
        %v5967 = vpop.f32.mrb[0].mxu0
        %v5968 = vadd.f32 0.0, %v5967
        %v5969 = vpop.f32.mrb[0].mxu0
        %v5970 = vpop.f32.mrb[0].mxu0
        %v5971 = vadd.f32 0.0, %v5970
        %v5972 = vpop.f32.mrb[0].mxu0
        %5973 = vmatprep.mubr.bf16.mxu0 0
        %5974 = vmatmul.mubr.bf16.gmra.mrb[0].mxu0 %v5865
        %v5975 = vpop.f32.mrb[0].mxu0
        %v5976 = vadd.f32 0.0, %v5975
        %v5977 = vpop.f32.mrb[0].mxu0
        %v5978 = vpop.f32.mrb[0].mxu0
        %v5979 = vadd.f32 0.0, %v5978
        %v5980 = vpop.f32.mrb[0].mxu0
        %5981 = vmatprep.mubr.bf16.mxu0 0
        %5982 = vmatmul.mubr.bf16.gmra.mrb[0].mxu0 %v5866
        %v5983 = vpop.f32.mrb[0].mxu0
        %v5984 = vadd.f32 0.0, %v5983
        %v5985 = vpop.f32.mrb[0].mxu0
        %v5986 = vpop.f32.mrb[0].mxu0
        %v5987 = vadd.f32 0.0, %v5986
        %v5988 = vpop.f32.mrb[0].mxu0
        %5989 = vmatprep.mubr.bf16.mxu0 0
        %5990 = vmatmul.mubr.bf16.gmra.mrb[0].mxu0 %v5867
        %v5991 = vpop.f32.mrb[0].mxu0
        %v5992 = vadd.f32 0.0, %v5991
        %v5993 = vpop.f32.mrb[0].mxu0
        %v5994 = vpop.f32.mrb[0].mxu0
        %v5995 = vadd.f32 0.0, %v5994
        %v5996 = vpop.f32.mrb[0].mxu0
        %5997 = vdwg.mxu0
        %v5998 = vadd.f32 %v5826, %v5968
        %v5999 = vadd.f32 %v5829, %v5971
        %v6000 = vadd.f32 %v5834, %v5976
        %v6001 = vadd.f32 %v5837, %v5979
        %v6002 = vadd.f32 %v5842, %v5984
        %v6003 = vadd.f32 %v5845, %v5987
        %v6004 = vadd.f32 %v5850, %v5992
        %v6005 = vadd.f32 %v5853, %v5995
        %v6006 = vld [vmem:[%s2173] ss:$2 sm:$0xff]
        %v6007 = vld [vmem:[%s2181] ss:$2 sm:$0xff]
        %v6008 = vld [vmem:[%s2189] ss:$2 sm:$0xff]
        %v6009 = vld [vmem:[%s2197] ss:$2 sm:$0xff]
        %v6010 = vld [vmem:[%s2205] ss:$2 sm:$0xff]
        %v6011 = vld [vmem:[%s2213] ss:$2 sm:$0xff]
        %v6012 = vld [vmem:[%s2221] ss:$2 sm:$0xff]
        %v6013 = vld [vmem:[%s2229] ss:$2 sm:$0xff]
        %v6014 = vpack.c.bf16 %v6007, %v6006
        %v6015 = vpack.c.bf16 %v6009, %v6008
        %v6016 = vpack.c.bf16 %v6011, %v6010
        %v6017 = vpack.c.bf16 %v6013, %v6012
        %s6018 = scalar_lea.vmem %s2, 1088
        %v6019 = vld [vmem:[%s6018] sm:$0xf]
        %v6020 = vld [vmem:[%s6018 + $0x4] sm:$0xf]
        %v6021 = vld [vmem:[%s6018 + $0x8] sm:$0xf]
        %v6022 = vld [vmem:[%s6018 + $0xc] sm:$0xf]
        %v6023 = vld [vmem:[%s6018 + $0x10] sm:$0xf]
        %v6024 = vld [vmem:[%s6018 + $0x14] sm:$0xf]
        %v6025 = vld [vmem:[%s6018 + $0x18] sm:$0xf]
        %v6026 = vld [vmem:[%s6018 + $0x1c] sm:$0xf]
        %v6027 = vld [vmem:[%s6018 + $0x20] sm:$0xf]
        %v6028 = vld [vmem:[%s6018 + $0x24] sm:$0xf]
        %v6029 = vld [vmem:[%s6018 + $0x28] sm:$0xf]
        %v6030 = vld [vmem:[%s6018 + $0x2c] sm:$0xf]
        %v6031 = vld [vmem:[%s6018 + $0x30] sm:$0xf]
        %v6032 = vld [vmem:[%s6018 + $0x34] sm:$0xf]
        %v6033 = vld [vmem:[%s6018 + $0x38] sm:$0xf]
        %v6034 = vld [vmem:[%s6018 + $0x3c] sm:$0xf]
        %v6051 = vunpack.c.l.b16 %v6019
        %v6052 = vunpack.c.l.b16 %v6020
        %v6053 = vunpack.c.l.b16 %v6021
        %v6054 = vunpack.c.l.b16 %v6022
        %v6055 = vunpack.c.l.b16 %v6023
        %v6056 = vunpack.c.l.b16 %v6024
        %v6057 = vunpack.c.l.b16 %v6025
        %v6058 = vunpack.c.l.b16 %v6026
        %v6059 = vunpack.c.l.b16 %v6027
        %v6060 = vunpack.c.l.b16 %v6028
        %v6061 = vunpack.c.l.b16 %v6029
        %v6062 = vunpack.c.l.b16 %v6030
        %v6063 = vunpack.c.l.b16 %v6031
        %v6064 = vunpack.c.l.b16 %v6032
        %v6065 = vunpack.c.l.b16 %v6033
        %v6066 = vunpack.c.l.b16 %v6034
        %v6067 = vpack.c.b16 %v6052, %v6051
        %v6068 = vpack.c.b16 %v6054, %v6053
        %v6069 = vpack.c.b16 %v6056, %v6055
        %v6070 = vpack.c.b16 %v6058, %v6057
        %v6071 = vpack.c.b16 %v6060, %v6059
        %v6072 = vpack.c.b16 %v6062, %v6061
        %v6073 = vpack.c.b16 %v6064, %v6063
        %v6074 = vpack.c.b16 %v6066, %v6065
        %6083 = vmatprep.subr.bf16.mxu0 0
        %6084 = vmatpush1.bf16.msra.mxu0 %v6067
        %6085 = vmatprep.subr.bf16.mxu0 0
        %6086 = vmatpush1.bf16.msra.mxu0 %v6068
        %6087 = vmatprep.subr.bf16.mxu0 0
        %6088 = vmatpush1.bf16.msra.mxu0 %v6069
        %6089 = vmatprep.subr.bf16.mxu0 0
        %6090 = vmatpush1.bf16.msra.mxu0 %v6070
        %6091 = vmatprep.subr.bf16.mxu0 0
        %6092 = vmatpush1.bf16.msra.mxu0 %v6071
        %6093 = vmatprep.subr.bf16.mxu0 0
        %6094 = vmatpush1.bf16.msra.mxu0 %v6072
        %6095 = vmatprep.subr.bf16.mxu0 0
        %6096 = vmatpush1.bf16.msra.mxu0 %v6073
        %6097 = vmatprep.subr.bf16.mxu0 0
        %6098 = vmatpush1.bf16.msra.mxu0 %v6074
        %6099 = vmatprep.subr.bf16.mxu0 0
        %6100 = vmatpush1.bf16.msra.mxu0 0
        %6101 = vmatprep.subr.bf16.mxu0 0
        %6102 = vmatpush1.bf16.msra.mxu0 0
        %6103 = vmatprep.subr.bf16.mxu0 0
        %6104 = vmatpush1.bf16.msra.mxu0 0
        %6105 = vmatprep.subr.bf16.mxu0 0
        %6106 = vmatpush1.bf16.msra.mxu0 0
        %6107 = vmatprep.subr.bf16.mxu0 0
        %6108 = vmatpush1.bf16.msra.mxu0 0
        %6109 = vmatprep.subr.bf16.mxu0 0
        %6110 = vmatpush1.bf16.msra.mxu0 0
        %6111 = vmatprep.subr.bf16.mxu0 0
        %6112 = vmatpush1.bf16.msra.mxu0 0
        %6113 = vmatprep.subr.bf16.mxu0 0
        %6114 = vmatpush1.bf16.msra.mxu0 0
        %6115 = vmatprep.mubr.bf16.mxu0 0
        %6116 = vmatmul.mubr.bf16.gmra.mrb[0].mxu0 %v6014
        %v6117 = vpop.f32.mrb[0].mxu0
        %v6118 = vadd.f32 0.0, %v6117
        %v6119 = vpop.f32.mrb[0].mxu0
        %v6120 = vpop.f32.mrb[0].mxu0
        %v6121 = vadd.f32 0.0, %v6120
        %v6122 = vpop.f32.mrb[0].mxu0
        %6123 = vmatprep.mubr.bf16.mxu0 0
        %6124 = vmatmul.mubr.bf16.gmra.mrb[0].mxu0 %v6015
        %v6125 = vpop.f32.mrb[0].mxu0
        %v6126 = vadd.f32 0.0, %v6125
        %v6127 = vpop.f32.mrb[0].mxu0
        %v6128 = vpop.f32.mrb[0].mxu0
        %v6129 = vadd.f32 0.0, %v6128
        %v6130 = vpop.f32.mrb[0].mxu0
        %6131 = vmatprep.mubr.bf16.mxu0 0
        %6132 = vmatmul.mubr.bf16.gmra.mrb[0].mxu0 %v6016
        %v6133 = vpop.f32.mrb[0].mxu0
        %v6134 = vadd.f32 0.0, %v6133
        %v6135 = vpop.f32.mrb[0].mxu0
        %v6136 = vpop.f32.mrb[0].mxu0
        %v6137 = vadd.f32 0.0, %v6136
        %v6138 = vpop.f32.mrb[0].mxu0
        %6139 = vmatprep.mubr.bf16.mxu0 0
        %6140 = vmatmul.mubr.bf16.gmra.mrb[0].mxu0 %v6017
        %v6141 = vpop.f32.mrb[0].mxu0
        %v6142 = vadd.f32 0.0, %v6141
        %v6143 = vpop.f32.mrb[0].mxu0
        %v6144 = vpop.f32.mrb[0].mxu0
        %v6145 = vadd.f32 0.0, %v6144
        %v6146 = vpop.f32.mrb[0].mxu0
        %6147 = vdwg.mxu0
        %v6148 = vadd.f32 %v5998, %v6118
        %v6149 = vadd.f32 %v5999, %v6121
        %v6150 = vadd.f32 %v6000, %v6126
        %v6151 = vadd.f32 %v6001, %v6129
        %v6152 = vadd.f32 %v6002, %v6134
        %v6153 = vadd.f32 %v6003, %v6137
        %v6154 = vadd.f32 %v6004, %v6142
        %v6155 = vadd.f32 %v6005, %v6145
        %s6156 = scalar_lea.vmem %s3, 4
        %v6157 = vld [vmem:[%s6156] sm:$0x1]
        %v6159 = vlaneseq
        %v6160 = vshrl.u32 %v6159, 7
        %v6161 = vsub.s32 0, %v6160
        %v6162 = vrot.slane %v6157, %v6161
        %v6164 = vadd.f32 %v6148, %v6162
        %v6165 = vadd.f32 %v6149, %v6162
        %v6166 = vadd.f32 %v6150, %v6162
        %v6167 = vadd.f32 %v6151, %v6162
        %v6168 = vadd.f32 %v6152, %v6162
        %v6169 = vadd.f32 %v6153, %v6162
        %v6170 = vadd.f32 %v6154, %v6162
        %v6171 = vadd.f32 %v6155, %v6162
        %vm6172 = vcmp.ge.f32.partialorder %v6164, 0.0
        %vm6173 = vcmp.ge.f32.partialorder %v6165, 0.0
        %vm6174 = vcmp.ge.f32.partialorder %v6166, 0.0
        %vm6175 = vcmp.ge.f32.partialorder %v6167, 0.0
        %vm6176 = vcmp.ge.f32.partialorder %v6168, 0.0
        %vm6177 = vcmp.ge.f32.partialorder %v6169, 0.0
        %vm6178 = vcmp.ge.f32.partialorder %v6170, 0.0
        %vm6179 = vcmp.ge.f32.partialorder %v6171, 0.0
        %v6180 = vmul.f32 %v6164, 0.2
        %v6181 = vmul.f32 %v6165, 0.2
        %v6182 = vmul.f32 %v6166, 0.2
        %v6183 = vmul.f32 %v6167, 0.2
        %v6184 = vmul.f32 %v6168, 0.2
        %v6185 = vmul.f32 %v6169, 0.2
        %v6186 = vmul.f32 %v6170, 0.2
        %v6187 = vmul.f32 %v6171, 0.2
        %v6188 = vsel %vm6172, %v6164, %v6180
        %v6189 = vsel %vm6173, %v6165, %v6181
        %v6190 = vsel %vm6174, %v6166, %v6182
        %v6191 = vsel %vm6175, %v6167, %v6183
        %v6192 = vsel %vm6176, %v6168, %v6184
        %v6193 = vsel %vm6177, %v6169, %v6185
        %v6194 = vsel %vm6178, %v6170, %v6186
        %v6195 = vsel %vm6179, %v6171, %v6187
        %6196 = vst [vmem:[#allocation3 + $0x1] sm:$0xff] %v6188
        %6197 = vst [vmem:[#allocation3 + $0x49] sm:$0xff] %v6189
        %6198 = vst [vmem:[#allocation3 + $0x91] sm:$0xff] %v6190
        %6199 = vst [vmem:[#allocation3 + $0xd9] sm:$0xff] %v6191
        %6200 = vst [vmem:[#allocation3 + $0x121] sm:$0xff] %v6192
        %6201 = vst [vmem:[#allocation3 + $0x169] sm:$0xff] %v6193
        %6202 = vst [vmem:[#allocation3 + $0x1b1] sm:$0xff] %v6194
        %6203 = vst [vmem:[#allocation3 + $0x1f9] sm:$0xff] %v6195
        %6204 = vst [vmem:[#allocation3 + $0x9] sm:$0x1] 0.0
        %6205 = vst [vmem:[#allocation3 + $0x51] sm:$0x1] 0.0
        %6206 = vst [vmem:[#allocation3 + $0x99] sm:$0x1] 0.0
        %6207 = vst [vmem:[#allocation3 + $0xe1] sm:$0x1] 0.0
        %6208 = vst [vmem:[#allocation3 + $0x129] sm:$0x1] 0.0
        %6209 = vst [vmem:[#allocation3 + $0x171] sm:$0x1] 0.0
        %6210 = vst [vmem:[#allocation3 + $0x1b9] sm:$0x1] 0.0
        %6211 = vst [vmem:[#allocation3 + $0x201] sm:$0x1] 0.0
        %v6212 = vld [vmem:[#allocation3] sm:$0xff]
        %v6213 = vld [vmem:[#allocation3 + $0x8] sm:$0x3]
        %v6214 = vld [vmem:[#allocation3 + $0x48] sm:$0xff]
        %v6215 = vld [vmem:[#allocation3 + $0x50] sm:$0x3]
        %v6216 = vld [vmem:[#allocation3 + $0x90] sm:$0xff]
        %v6217 = vld [vmem:[#allocation3 + $0x98] sm:$0x3]
        %v6218 = vld [vmem:[#allocation3 + $0xd8] sm:$0xff]
        %v6219 = vld [vmem:[#allocation3 + $0xe0] sm:$0x3]
        %v6220 = vld [vmem:[#allocation3 + $0x120] sm:$0xff]
        %v6221 = vld [vmem:[#allocation3 + $0x128] sm:$0x3]
        %v6222 = vld [vmem:[#allocation3 + $0x168] sm:$0xff]
        %v6223 = vld [vmem:[#allocation3 + $0x170] sm:$0x3]
        %v6224 = vld [vmem:[#allocation3 + $0x1b0] sm:$0xff]
        %v6225 = vld [vmem:[#allocation3 + $0x1b8] sm:$0x3]
        %v6226 = vld [vmem:[#allocation3 + $0x1f8] sm:$0xff]
        %v6227 = vld [vmem:[#allocation3 + $0x200] sm:$0x3]
        %v6228 = vpack.c.bf16 %v6213, %v6212
        %v6229 = vpack.c.bf16 %v6215, %v6214
        %v6230 = vpack.c.bf16 %v6217, %v6216
        %v6231 = vpack.c.bf16 %v6219, %v6218
        %v6232 = vpack.c.bf16 %v6221, %v6220
        %v6233 = vpack.c.bf16 %v6223, %v6222
        %v6234 = vpack.c.bf16 %v6225, %v6224
        %v6235 = vpack.c.bf16 %v6227, %v6226
        %s6236 = scalar_lea.vmem %s2, 1152
        %v6237 = vld [vmem:[%s6236] sm:$0xf]
        %v6238 = vld [vmem:[%s6236 + $0x4] sm:$0xf]
        %v6239 = vld [vmem:[%s6236 + $0x8] sm:$0xf]
        %v6240 = vld [vmem:[%s6236 + $0xc] sm:$0xf]
        %v6241 = vld [vmem:[%s6236 + $0x10] sm:$0xf]
        %v6242 = vld [vmem:[%s6236 + $0x14] sm:$0xf]
        %v6243 = vld [vmem:[%s6236 + $0x18] sm:$0xf]
        %v6244 = vld [vmem:[%s6236 + $0x1c] sm:$0xf]
        %v6245 = vld [vmem:[%s6236 + $0x20] sm:$0xf]
        %v6246 = vld [vmem:[%s6236 + $0x24] sm:$0xf]
        %v6247 = vld [vmem:[%s6236 + $0x28] sm:$0xf]
        %v6248 = vld [vmem:[%s6236 + $0x2c] sm:$0xf]
        %v6249 = vld [vmem:[%s6236 + $0x30] sm:$0xf]
        %v6250 = vld [vmem:[%s6236 + $0x34] sm:$0xf]
        %v6251 = vld [vmem:[%s6236 + $0x38] sm:$0xf]
        %v6252 = vld [vmem:[%s6236 + $0x3c] sm:$0xf]
        %v6261 = vunpack.c.l.b16 %v6228
        %v6262 = vunpack.c.h.b16 %v6228
        %v6263 = vunpack.c.l.b16 %v6229
        %v6264 = vunpack.c.h.b16 %v6229
        %v6265 = vunpack.c.l.b16 %v6230
        %v6266 = vunpack.c.h.b16 %v6230
        %v6267 = vunpack.c.l.b16 %v6231
        %v6268 = vunpack.c.h.b16 %v6231
        %v6269 = vunpack.c.l.b16 %v6232
        %v6270 = vunpack.c.h.b16 %v6232
        %v6271 = vunpack.c.l.b16 %v6233
        %v6272 = vunpack.c.h.b16 %v6233
        %v6273 = vunpack.c.l.b16 %v6234
        %v6274 = vunpack.c.h.b16 %v6234
        %v6275 = vunpack.c.l.b16 %v6235
        %v6276 = vunpack.c.h.b16 %v6235
        %v6277 = vpack.c.b16 %v6261, %v6261
        %v6278 = vpack.c.b16 %v6262, %v6262
        %v6279 = vpack.c.b16 %v6263, %v6263
        %v6280 = vpack.c.b16 %v6264, %v6264
        %v6281 = vpack.c.b16 %v6265, %v6265
        %v6282 = vpack.c.b16 %v6266, %v6266
        %v6283 = vpack.c.b16 %v6267, %v6267
        %v6284 = vpack.c.b16 %v6268, %v6268
        %v6285 = vpack.c.b16 %v6269, %v6269
        %v6286 = vpack.c.b16 %v6270, %v6270
        %v6287 = vpack.c.b16 %v6271, %v6271
        %v6288 = vpack.c.b16 %v6272, %v6272
        %v6289 = vpack.c.b16 %v6273, %v6273
        %v6290 = vpack.c.b16 %v6274, %v6274
        %v6291 = vpack.c.b16 %v6275, %v6275
        %v6292 = vpack.c.b16 %v6276, %v6276
        %vm6293 = vsmask.f32 3328
        %vm6294 = vsmask.f32 7440
        %vm6295 = vmor %vm6293, %vm6294
        %v6297 = vshrl.u32 %v6277, 16
        %v6299 = vrot.slane %v6297, 4
        %v6300 = vshll.u32 %v6277, 16
        %v6302 = vrot.slane %v6300, 5
        %v6303 = vor.u32 %v6299, %v6302
        %v6304 = vrot.slane %v6303, 4
        %v6306 = vshll.u32 %v6278, 16
        %v6308 = vrot.slane %v6306, 5
        %v6309 = vsel %vm6295, %v6304, %v6308
        %v6311 = vshrl.u32 %v6279, 16
        %v6313 = vrot.slane %v6311, 4
        %v6314 = vshll.u32 %v6279, 16
        %v6316 = vrot.slane %v6314, 5
        %v6317 = vor.u32 %v6313, %v6316
        %v6318 = vrot.slane %v6317, 4
        %v6320 = vshll.u32 %v6280, 16
        %v6322 = vrot.slane %v6320, 5
        %v6323 = vsel %vm6295, %v6318, %v6322
        %v6325 = vshrl.u32 %v6281, 16
        %v6327 = vrot.slane %v6325, 4
        %v6328 = vshll.u32 %v6281, 16
        %v6330 = vrot.slane %v6328, 5
        %v6331 = vor.u32 %v6327, %v6330
        %v6332 = vrot.slane %v6331, 4
        %v6334 = vshll.u32 %v6282, 16
        %v6336 = vrot.slane %v6334, 5
        %v6337 = vsel %vm6295, %v6332, %v6336
        %v6339 = vshrl.u32 %v6283, 16
        %v6341 = vrot.slane %v6339, 4
        %v6342 = vshll.u32 %v6283, 16
        %v6344 = vrot.slane %v6342, 5
        %v6345 = vor.u32 %v6341, %v6344
        %v6346 = vrot.slane %v6345, 4
        %v6348 = vshll.u32 %v6284, 16
        %v6350 = vrot.slane %v6348, 5
        %v6351 = vsel %vm6295, %v6346, %v6350
        %v6353 = vshrl.u32 %v6285, 16
        %v6355 = vrot.slane %v6353, 4
        %v6356 = vshll.u32 %v6285, 16
        %v6358 = vrot.slane %v6356, 5
        %v6359 = vor.u32 %v6355, %v6358
        %v6360 = vrot.slane %v6359, 4
        %v6362 = vshll.u32 %v6286, 16
        %v6364 = vrot.slane %v6362, 5
        %v6365 = vsel %vm6295, %v6360, %v6364
        %v6367 = vshrl.u32 %v6287, 16
        %v6369 = vrot.slane %v6367, 4
        %v6370 = vshll.u32 %v6287, 16
        %v6372 = vrot.slane %v6370, 5
        %v6373 = vor.u32 %v6369, %v6372
        %v6374 = vrot.slane %v6373, 4
        %v6376 = vshll.u32 %v6288, 16
        %v6378 = vrot.slane %v6376, 5
        %v6379 = vsel %vm6295, %v6374, %v6378
        %v6381 = vshrl.u32 %v6289, 16
        %v6383 = vrot.slane %v6381, 4
        %v6384 = vshll.u32 %v6289, 16
        %v6386 = vrot.slane %v6384, 5
        %v6387 = vor.u32 %v6383, %v6386
        %v6388 = vrot.slane %v6387, 4
        %v6390 = vshll.u32 %v6290, 16
        %v6392 = vrot.slane %v6390, 5
        %v6393 = vsel %vm6295, %v6388, %v6392
        %v6395 = vshrl.u32 %v6291, 16
        %v6397 = vrot.slane %v6395, 4
        %v6398 = vshll.u32 %v6291, 16
        %v6400 = vrot.slane %v6398, 5
        %v6401 = vor.u32 %v6397, %v6400
        %v6402 = vrot.slane %v6401, 4
        %v6404 = vshll.u32 %v6292, 16
        %v6406 = vrot.slane %v6404, 5
        %v6407 = vsel %vm6295, %v6402, %v6406
        %s6408 = scalar_lea.vmem %s2, 1216
        %v6409 = vld [vmem:[%s6408] sm:$0xf]
        %v6410 = vld [vmem:[%s6408 + $0x4] sm:$0xf]
        %v6411 = vld [vmem:[%s6408 + $0x8] sm:$0xf]
        %v6412 = vld [vmem:[%s6408 + $0xc] sm:$0xf]
        %v6413 = vld [vmem:[%s6408 + $0x10] sm:$0xf]
        %v6414 = vld [vmem:[%s6408 + $0x14] sm:$0xf]
        %v6415 = vld [vmem:[%s6408 + $0x18] sm:$0xf]
        %v6416 = vld [vmem:[%s6408 + $0x1c] sm:$0xf]
        %v6417 = vld [vmem:[%s6408 + $0x20] sm:$0xf]
        %v6418 = vld [vmem:[%s6408 + $0x24] sm:$0xf]
        %v6419 = vld [vmem:[%s6408 + $0x28] sm:$0xf]
        %v6420 = vld [vmem:[%s6408 + $0x2c] sm:$0xf]
        %v6421 = vld [vmem:[%s6408 + $0x30] sm:$0xf]
        %v6422 = vld [vmem:[%s6408 + $0x34] sm:$0xf]
        %v6423 = vld [vmem:[%s6408 + $0x38] sm:$0xf]
        %v6424 = vld [vmem:[%s6408 + $0x3c] sm:$0xf]
        %v6425 = vunpack.c.l.b16 %v6309
        %v6426 = vunpack.c.l.b16 %v6323
        %v6427 = vunpack.c.l.b16 %v6337
        %v6428 = vunpack.c.l.b16 %v6351
        %v6429 = vunpack.c.l.b16 %v6365
        %v6430 = vunpack.c.l.b16 %v6379
        %v6431 = vunpack.c.l.b16 %v6393
        %v6432 = vunpack.c.l.b16 %v6407
        %v6433 = vpack.c.b16 %v6426, %v6425
        %v6434 = vpack.c.b16 %v6428, %v6427
        %v6435 = vpack.c.b16 %v6430, %v6429
        %v6436 = vpack.c.b16 %v6432, %v6431
        %v6457 = vunpack.c.l.b16 %v6409
        %v6458 = vunpack.c.l.b16 %v6410
        %v6459 = vunpack.c.l.b16 %v6411
        %v6460 = vunpack.c.l.b16 %v6412
        %v6461 = vunpack.c.l.b16 %v6413
        %v6462 = vunpack.c.l.b16 %v6414
        %v6463 = vunpack.c.l.b16 %v6415
        %v6464 = vunpack.c.l.b16 %v6416
        %v6465 = vunpack.c.l.b16 %v6417
        %v6466 = vunpack.c.l.b16 %v6418
        %v6467 = vunpack.c.l.b16 %v6419
        %v6468 = vunpack.c.l.b16 %v6420
        %v6469 = vunpack.c.l.b16 %v6421
        %v6470 = vunpack.c.l.b16 %v6422
        %v6471 = vunpack.c.l.b16 %v6423
        %v6472 = vunpack.c.l.b16 %v6424
        %v6473 = vpack.c.b16 %v6458, %v6457
        %v6474 = vpack.c.b16 %v6460, %v6459
        %v6475 = vpack.c.b16 %v6462, %v6461
        %v6476 = vpack.c.b16 %v6464, %v6463
        %v6477 = vpack.c.b16 %v6466, %v6465
        %v6478 = vpack.c.b16 %v6468, %v6467
        %v6479 = vpack.c.b16 %v6470, %v6469
        %v6480 = vpack.c.b16 %v6472, %v6471
        %6489 = vmatprep.subr.bf16.mxu0 0
        %6490 = vmatpush1.bf16.msra.mxu0 %v6473
        %6491 = vmatprep.subr.bf16.mxu0 0
        %6492 = vmatpush1.bf16.msra.mxu0 %v6474
        %6493 = vmatprep.subr.bf16.mxu0 0
        %6494 = vmatpush1.bf16.msra.mxu0 %v6475
        %6495 = vmatprep.subr.bf16.mxu0 0
        %6496 = vmatpush1.bf16.msra.mxu0 %v6476
        %6497 = vmatprep.subr.bf16.mxu0 0
        %6498 = vmatpush1.bf16.msra.mxu0 %v6477
        %6499 = vmatprep.subr.bf16.mxu0 0
        %6500 = vmatpush1.bf16.msra.mxu0 %v6478
        %6501 = vmatprep.subr.bf16.mxu0 0
        %6502 = vmatpush1.bf16.msra.mxu0 %v6479
        %6503 = vmatprep.subr.bf16.mxu0 0
        %6504 = vmatpush1.bf16.msra.mxu0 %v6480
        %6505 = vmatprep.subr.bf16.mxu0 0
        %6506 = vmatpush1.bf16.msra.mxu0 0
        %6507 = vmatprep.subr.bf16.mxu0 0
        %6508 = vmatpush1.bf16.msra.mxu0 0
        %6509 = vmatprep.subr.bf16.mxu0 0
        %6510 = vmatpush1.bf16.msra.mxu0 0
        %6511 = vmatprep.subr.bf16.mxu0 0
        %6512 = vmatpush1.bf16.msra.mxu0 0
        %6513 = vmatprep.subr.bf16.mxu0 0
        %6514 = vmatpush1.bf16.msra.mxu0 0
        %6515 = vmatprep.subr.bf16.mxu0 0
        %6516 = vmatpush1.bf16.msra.mxu0 0
        %6517 = vmatprep.subr.bf16.mxu0 0
        %6518 = vmatpush1.bf16.msra.mxu0 0
        %6519 = vmatprep.subr.bf16.mxu0 0
        %6520 = vmatpush1.bf16.msra.mxu0 0
        %6521 = vmatprep.mubr.bf16.mxu0 0
        %6522 = vmatmul.mubr.bf16.gmra.mrb[0].mxu0 %v6433
        %v6523 = vpop.f32.mrb[0].mxu0
        %v6524 = vadd.f32 0.0, %v6523
        %v6525 = vpop.f32.mrb[0].mxu0
        %v6526 = vpop.f32.mrb[0].mxu0
        %v6527 = vadd.f32 0.0, %v6526
        %v6528 = vpop.f32.mrb[0].mxu0
        %6529 = vmatprep.mubr.bf16.mxu0 0
        %6530 = vmatmul.mubr.bf16.gmra.mrb[0].mxu0 %v6434
        %v6531 = vpop.f32.mrb[0].mxu0
        %v6532 = vadd.f32 0.0, %v6531
        %v6533 = vpop.f32.mrb[0].mxu0
        %v6534 = vpop.f32.mrb[0].mxu0
        %v6535 = vadd.f32 0.0, %v6534
        %v6536 = vpop.f32.mrb[0].mxu0
        %6537 = vmatprep.mubr.bf16.mxu0 0
        %6538 = vmatmul.mubr.bf16.gmra.mrb[0].mxu0 %v6435
        %v6539 = vpop.f32.mrb[0].mxu0
        %v6540 = vadd.f32 0.0, %v6539
        %v6541 = vpop.f32.mrb[0].mxu0
        %v6542 = vpop.f32.mrb[0].mxu0
        %v6543 = vadd.f32 0.0, %v6542
        %v6544 = vpop.f32.mrb[0].mxu0
        %6545 = vmatprep.mubr.bf16.mxu0 0
        %6546 = vmatmul.mubr.bf16.gmra.mrb[0].mxu0 %v6436
        %v6547 = vpop.f32.mrb[0].mxu0
        %v6548 = vadd.f32 0.0, %v6547
        %v6549 = vpop.f32.mrb[0].mxu0
        %v6550 = vpop.f32.mrb[0].mxu0
        %v6551 = vadd.f32 0.0, %v6550
        %v6552 = vpop.f32.mrb[0].mxu0
        %6553 = vdwg.mxu0
        %v6554 = vpack.c.b16 %v6263, %v6261
        %v6555 = vpack.c.b16 %v6267, %v6265
        %v6556 = vpack.c.b16 %v6271, %v6269
        %v6557 = vpack.c.b16 %v6275, %v6273
        %v6578 = vunpack.c.l.b16 %v6237
        %v6579 = vunpack.c.l.b16 %v6238
        %v6580 = vunpack.c.l.b16 %v6239
        %v6581 = vunpack.c.l.b16 %v6240
        %v6582 = vunpack.c.l.b16 %v6241
        %v6583 = vunpack.c.l.b16 %v6242
        %v6584 = vunpack.c.l.b16 %v6243
        %v6585 = vunpack.c.l.b16 %v6244
        %v6586 = vunpack.c.l.b16 %v6245
        %v6587 = vunpack.c.l.b16 %v6246
        %v6588 = vunpack.c.l.b16 %v6247
        %v6589 = vunpack.c.l.b16 %v6248
        %v6590 = vunpack.c.l.b16 %v6249
        %v6591 = vunpack.c.l.b16 %v6250
        %v6592 = vunpack.c.l.b16 %v6251
        %v6593 = vunpack.c.l.b16 %v6252
        %v6594 = vpack.c.b16 %v6579, %v6578
        %v6595 = vpack.c.b16 %v6581, %v6580
        %v6596 = vpack.c.b16 %v6583, %v6582
        %v6597 = vpack.c.b16 %v6585, %v6584
        %v6598 = vpack.c.b16 %v6587, %v6586
        %v6599 = vpack.c.b16 %v6589, %v6588
        %v6600 = vpack.c.b16 %v6591, %v6590
        %v6601 = vpack.c.b16 %v6593, %v6592
        %6610 = vmatprep.subr.bf16.mxu0 0
        %6611 = vmatpush1.bf16.msra.mxu0 %v6594
        %6612 = vmatprep.subr.bf16.mxu0 0
        %6613 = vmatpush1.bf16.msra.mxu0 %v6595
        %6614 = vmatprep.subr.bf16.mxu0 0
        %6615 = vmatpush1.bf16.msra.mxu0 %v6596
        %6616 = vmatprep.subr.bf16.mxu0 0
        %6617 = vmatpush1.bf16.msra.mxu0 %v6597
        %6618 = vmatprep.subr.bf16.mxu0 0
        %6619 = vmatpush1.bf16.msra.mxu0 %v6598
        %6620 = vmatprep.subr.bf16.mxu0 0
        %6621 = vmatpush1.bf16.msra.mxu0 %v6599
        %6622 = vmatprep.subr.bf16.mxu0 0
        %6623 = vmatpush1.bf16.msra.mxu0 %v6600
        %6624 = vmatprep.subr.bf16.mxu0 0
        %6625 = vmatpush1.bf16.msra.mxu0 %v6601
        %6626 = vmatprep.subr.bf16.mxu0 0
        %6627 = vmatpush1.bf16.msra.mxu0 0
        %6628 = vmatprep.subr.bf16.mxu0 0
        %6629 = vmatpush1.bf16.msra.mxu0 0
        %6630 = vmatprep.subr.bf16.mxu0 0
        %6631 = vmatpush1.bf16.msra.mxu0 0
        %6632 = vmatprep.subr.bf16.mxu0 0
        %6633 = vmatpush1.bf16.msra.mxu0 0
        %6634 = vmatprep.subr.bf16.mxu0 0
        %6635 = vmatpush1.bf16.msra.mxu0 0
        %6636 = vmatprep.subr.bf16.mxu0 0
        %6637 = vmatpush1.bf16.msra.mxu0 0
        %6638 = vmatprep.subr.bf16.mxu0 0
        %6639 = vmatpush1.bf16.msra.mxu0 0
        %6640 = vmatprep.subr.bf16.mxu0 0
        %6641 = vmatpush1.bf16.msra.mxu0 0
        %6642 = vmatprep.mubr.bf16.mxu0 0
        %6643 = vmatmul.mubr.bf16.gmra.mrb[0].mxu0 %v6554
        %v6644 = vpop.f32.mrb[0].mxu0
        %v6645 = vadd.f32 %v6524, %v6644
        %v6646 = vpop.f32.mrb[0].mxu0
        %v6647 = vpop.f32.mrb[0].mxu0
        %v6648 = vadd.f32 %v6527, %v6647
        %v6649 = vpop.f32.mrb[0].mxu0
        %6650 = vmatprep.mubr.bf16.mxu0 0
        %6651 = vmatmul.mubr.bf16.gmra.mrb[0].mxu0 %v6555
        %v6652 = vpop.f32.mrb[0].mxu0
        %v6653 = vadd.f32 %v6532, %v6652
        %v6654 = vpop.f32.mrb[0].mxu0
        %v6655 = vpop.f32.mrb[0].mxu0
        %v6656 = vadd.f32 %v6535, %v6655
        %v6657 = vpop.f32.mrb[0].mxu0
        %6658 = vmatprep.mubr.bf16.mxu0 0
        %6659 = vmatmul.mubr.bf16.gmra.mrb[0].mxu0 %v6556
        %v6660 = vpop.f32.mrb[0].mxu0
        %v6661 = vadd.f32 %v6540, %v6660
        %v6662 = vpop.f32.mrb[0].mxu0
        %v6663 = vpop.f32.mrb[0].mxu0
        %v6664 = vadd.f32 %v6543, %v6663
        %v6665 = vpop.f32.mrb[0].mxu0
        %6666 = vmatprep.mubr.bf16.mxu0 0
        %6667 = vmatmul.mubr.bf16.gmra.mrb[0].mxu0 %v6557
        %v6668 = vpop.f32.mrb[0].mxu0
        %v6669 = vadd.f32 %v6548, %v6668
        %v6670 = vpop.f32.mrb[0].mxu0
        %v6671 = vpop.f32.mrb[0].mxu0
        %v6672 = vadd.f32 %v6551, %v6671
        %v6673 = vpop.f32.mrb[0].mxu0
        %6674 = vdwg.mxu0
        %vm6675 = vcmask 1042432
        %vm6676 = vcmask 1046532
        %vm6677 = vmor %vm6675, %vm6676
        %v6678 = vrot.slane %v6277, 5
        %v6679 = vrot.slane %v6678, 4
        %v6680 = vrot.slane %v6278, 5
        %v6681 = vsel %vm6677, %v6679, %v6680
        %v6682 = vrot.slane %v6279, 5
        %v6683 = vrot.slane %v6682, 4
        %v6684 = vrot.slane %v6280, 5
        %v6685 = vsel %vm6677, %v6683, %v6684
        %v6686 = vrot.slane %v6281, 5
        %v6687 = vrot.slane %v6686, 4
        %v6688 = vrot.slane %v6282, 5
        %v6689 = vsel %vm6677, %v6687, %v6688
        %v6690 = vrot.slane %v6283, 5
        %v6691 = vrot.slane %v6690, 4
        %v6692 = vrot.slane %v6284, 5
        %v6693 = vsel %vm6677, %v6691, %v6692
        %v6694 = vrot.slane %v6285, 5
        %v6695 = vrot.slane %v6694, 4
        %v6696 = vrot.slane %v6286, 5
        %v6697 = vsel %vm6677, %v6695, %v6696
        %v6698 = vrot.slane %v6287, 5
        %v6699 = vrot.slane %v6698, 4
        %v6700 = vrot.slane %v6288, 5
        %v6701 = vsel %vm6677, %v6699, %v6700
        %v6702 = vrot.slane %v6289, 5
        %v6703 = vrot.slane %v6702, 4
        %v6704 = vrot.slane %v6290, 5
        %v6705 = vsel %vm6677, %v6703, %v6704
        %v6706 = vrot.slane %v6291, 5
        %v6707 = vrot.slane %v6706, 4
        %v6708 = vrot.slane %v6292, 5
        %v6709 = vsel %vm6677, %v6707, %v6708
        %s6710 = scalar_lea.vmem %s2, 1280
        %v6711 = vld [vmem:[%s6710] sm:$0xf]
        %v6712 = vld [vmem:[%s6710 + $0x4] sm:$0xf]
        %v6713 = vld [vmem:[%s6710 + $0x8] sm:$0xf]
        %v6714 = vld [vmem:[%s6710 + $0xc] sm:$0xf]
        %v6715 = vld [vmem:[%s6710 + $0x10] sm:$0xf]
        %v6716 = vld [vmem:[%s6710 + $0x14] sm:$0xf]
        %v6717 = vld [vmem:[%s6710 + $0x18] sm:$0xf]
        %v6718 = vld [vmem:[%s6710 + $0x1c] sm:$0xf]
        %v6719 = vld [vmem:[%s6710 + $0x20] sm:$0xf]
        %v6720 = vld [vmem:[%s6710 + $0x24] sm:$0xf]
        %v6721 = vld [vmem:[%s6710 + $0x28] sm:$0xf]
        %v6722 = vld [vmem:[%s6710 + $0x2c] sm:$0xf]
        %v6723 = vld [vmem:[%s6710 + $0x30] sm:$0xf]
        %v6724 = vld [vmem:[%s6710 + $0x34] sm:$0xf]
        %v6725 = vld [vmem:[%s6710 + $0x38] sm:$0xf]
        %v6726 = vld [vmem:[%s6710 + $0x3c] sm:$0xf]
        %v6727 = vunpack.c.l.b16 %v6681
        %v6728 = vunpack.c.l.b16 %v6685
        %v6729 = vunpack.c.l.b16 %v6689
        %v6730 = vunpack.c.l.b16 %v6693
        %v6731 = vunpack.c.l.b16 %v6697
        %v6732 = vunpack.c.l.b16 %v6701
        %v6733 = vunpack.c.l.b16 %v6705
        %v6734 = vunpack.c.l.b16 %v6709
        %v6735 = vpack.c.b16 %v6728, %v6727
        %v6736 = vpack.c.b16 %v6730, %v6729
        %v6737 = vpack.c.b16 %v6732, %v6731
        %v6738 = vpack.c.b16 %v6734, %v6733
        %v6759 = vunpack.c.l.b16 %v6711
        %v6760 = vunpack.c.l.b16 %v6712
        %v6761 = vunpack.c.l.b16 %v6713
        %v6762 = vunpack.c.l.b16 %v6714
        %v6763 = vunpack.c.l.b16 %v6715
        %v6764 = vunpack.c.l.b16 %v6716
        %v6765 = vunpack.c.l.b16 %v6717
        %v6766 = vunpack.c.l.b16 %v6718
        %v6767 = vunpack.c.l.b16 %v6719
        %v6768 = vunpack.c.l.b16 %v6720
        %v6769 = vunpack.c.l.b16 %v6721
        %v6770 = vunpack.c.l.b16 %v6722
        %v6771 = vunpack.c.l.b16 %v6723
        %v6772 = vunpack.c.l.b16 %v6724
        %v6773 = vunpack.c.l.b16 %v6725
        %v6774 = vunpack.c.l.b16 %v6726
        %v6775 = vpack.c.b16 %v6760, %v6759
        %v6776 = vpack.c.b16 %v6762, %v6761
        %v6777 = vpack.c.b16 %v6764, %v6763
        %v6778 = vpack.c.b16 %v6766, %v6765
        %v6779 = vpack.c.b16 %v6768, %v6767
        %v6780 = vpack.c.b16 %v6770, %v6769
        %v6781 = vpack.c.b16 %v6772, %v6771
        %v6782 = vpack.c.b16 %v6774, %v6773
        %6791 = vmatprep.subr.bf16.mxu0 0
        %6792 = vmatpush1.bf16.msra.mxu0 %v6775
        %6793 = vmatprep.subr.bf16.mxu0 0
        %6794 = vmatpush1.bf16.msra.mxu0 %v6776
        %6795 = vmatprep.subr.bf16.mxu0 0
        %6796 = vmatpush1.bf16.msra.mxu0 %v6777
        %6797 = vmatprep.subr.bf16.mxu0 0
        %6798 = vmatpush1.bf16.msra.mxu0 %v6778
        %6799 = vmatprep.subr.bf16.mxu0 0
        %6800 = vmatpush1.bf16.msra.mxu0 %v6779
        %6801 = vmatprep.subr.bf16.mxu0 0
        %6802 = vmatpush1.bf16.msra.mxu0 %v6780
        %6803 = vmatprep.subr.bf16.mxu0 0
        %6804 = vmatpush1.bf16.msra.mxu0 %v6781
        %6805 = vmatprep.subr.bf16.mxu0 0
        %6806 = vmatpush1.bf16.msra.mxu0 %v6782
        %6807 = vmatprep.subr.bf16.mxu0 0
        %6808 = vmatpush1.bf16.msra.mxu0 0
        %6809 = vmatprep.subr.bf16.mxu0 0
        %6810 = vmatpush1.bf16.msra.mxu0 0
        %6811 = vmatprep.subr.bf16.mxu0 0
        %6812 = vmatpush1.bf16.msra.mxu0 0
        %6813 = vmatprep.subr.bf16.mxu0 0
        %6814 = vmatpush1.bf16.msra.mxu0 0
        %6815 = vmatprep.subr.bf16.mxu0 0
        %6816 = vmatpush1.bf16.msra.mxu0 0
        %6817 = vmatprep.subr.bf16.mxu0 0
        %6818 = vmatpush1.bf16.msra.mxu0 0
        %6819 = vmatprep.subr.bf16.mxu0 0
        %6820 = vmatpush1.bf16.msra.mxu0 0
        %6821 = vmatprep.subr.bf16.mxu0 0
        %6822 = vmatpush1.bf16.msra.mxu0 0
        %6823 = vmatprep.mubr.bf16.mxu0 0
        %6824 = vmatmul.mubr.bf16.gmra.mrb[0].mxu0 %v6735
        %v6825 = vpop.f32.mrb[0].mxu0
        %v6826 = vadd.f32 0.0, %v6825
        %v6827 = vpop.f32.mrb[0].mxu0
        %v6828 = vpop.f32.mrb[0].mxu0
        %v6829 = vadd.f32 0.0, %v6828
        %v6830 = vpop.f32.mrb[0].mxu0
        %6831 = vmatprep.mubr.bf16.mxu0 0
        %6832 = vmatmul.mubr.bf16.gmra.mrb[0].mxu0 %v6736
        %v6833 = vpop.f32.mrb[0].mxu0
        %v6834 = vadd.f32 0.0, %v6833
        %v6835 = vpop.f32.mrb[0].mxu0
        %v6836 = vpop.f32.mrb[0].mxu0
        %v6837 = vadd.f32 0.0, %v6836
        %v6838 = vpop.f32.mrb[0].mxu0
        %6839 = vmatprep.mubr.bf16.mxu0 0
        %6840 = vmatmul.mubr.bf16.gmra.mrb[0].mxu0 %v6737
        %v6841 = vpop.f32.mrb[0].mxu0
        %v6842 = vadd.f32 0.0, %v6841
        %v6843 = vpop.f32.mrb[0].mxu0
        %v6844 = vpop.f32.mrb[0].mxu0
        %v6845 = vadd.f32 0.0, %v6844
        %v6846 = vpop.f32.mrb[0].mxu0
        %6847 = vmatprep.mubr.bf16.mxu0 0
        %6848 = vmatmul.mubr.bf16.gmra.mrb[0].mxu0 %v6738
        %v6849 = vpop.f32.mrb[0].mxu0
        %v6850 = vadd.f32 0.0, %v6849
        %v6851 = vpop.f32.mrb[0].mxu0
        %v6852 = vpop.f32.mrb[0].mxu0
        %v6853 = vadd.f32 0.0, %v6852
        %v6854 = vpop.f32.mrb[0].mxu0
        %6855 = vdwg.mxu0
        %v6856 = vadd.f32 %v6645, %v6826
        %v6857 = vadd.f32 %v6648, %v6829
        %v6858 = vadd.f32 %v6653, %v6834
        %v6859 = vadd.f32 %v6656, %v6837
        %v6860 = vadd.f32 %v6661, %v6842
        %v6861 = vadd.f32 %v6664, %v6845
        %v6862 = vadd.f32 %v6669, %v6850
        %v6863 = vadd.f32 %v6672, %v6853
        %s6864 = scalar_lea.vmem %s3, 5
        %v6865 = vld [vmem:[%s6864] sm:$0x1]
        %v6867 = vlaneseq
        %v6868 = vshrl.u32 %v6867, 7
        %v6869 = vsub.s32 0, %v6868
        %v6870 = vrot.slane %v6865, %v6869
        %v6872 = vadd.f32 %v6856, %v6870
        %v6873 = vadd.f32 %v6857, %v6870
        %v6874 = vadd.f32 %v6858, %v6870
        %v6875 = vadd.f32 %v6859, %v6870
        %v6876 = vadd.f32 %v6860, %v6870
        %v6877 = vadd.f32 %v6861, %v6870
        %v6878 = vadd.f32 %v6862, %v6870
        %v6879 = vadd.f32 %v6863, %v6870
        %vm6880 = vcmp.ge.f32.partialorder %v6872, 0.0
        %vm6881 = vcmp.ge.f32.partialorder %v6873, 0.0
        %vm6882 = vcmp.ge.f32.partialorder %v6874, 0.0
        %vm6883 = vcmp.ge.f32.partialorder %v6875, 0.0
        %vm6884 = vcmp.ge.f32.partialorder %v6876, 0.0
        %vm6885 = vcmp.ge.f32.partialorder %v6877, 0.0
        %vm6886 = vcmp.ge.f32.partialorder %v6878, 0.0
        %vm6887 = vcmp.ge.f32.partialorder %v6879, 0.0
        %v6888 = vmul.f32 %v6872, 0.2
        %v6889 = vmul.f32 %v6873, 0.2
        %v6890 = vmul.f32 %v6874, 0.2
        %v6891 = vmul.f32 %v6875, 0.2
        %v6892 = vmul.f32 %v6876, 0.2
        %v6893 = vmul.f32 %v6877, 0.2
        %v6894 = vmul.f32 %v6878, 0.2
        %v6895 = vmul.f32 %v6879, 0.2
        %v6896 = vsel %vm6880, %v6872, %v6888
        %v6897 = vsel %vm6881, %v6873, %v6889
        %v6898 = vsel %vm6882, %v6874, %v6890
        %v6899 = vsel %vm6883, %v6875, %v6891
        %v6900 = vsel %vm6884, %v6876, %v6892
        %v6901 = vsel %vm6885, %v6877, %v6893
        %v6902 = vsel %vm6886, %v6878, %v6894
        %v6903 = vsel %vm6887, %v6879, %v6895
        %6904 = vst [vmem:[#allocation2 + $0x1] sm:$0xff] %v6896
        %6905 = vst [vmem:[#allocation2 + $0x49] sm:$0xff] %v6897
        %6906 = vst [vmem:[#allocation2 + $0x91] sm:$0xff] %v6898
        %6907 = vst [vmem:[#allocation2 + $0xd9] sm:$0xff] %v6899
        %6908 = vst [vmem:[#allocation2 + $0x121] sm:$0xff] %v6900
        %6909 = vst [vmem:[#allocation2 + $0x169] sm:$0xff] %v6901
        %6910 = vst [vmem:[#allocation2 + $0x1b1] sm:$0xff] %v6902
        %6911 = vst [vmem:[#allocation2 + $0x1f9] sm:$0xff] %v6903
        %6912 = vst [vmem:[#allocation2 + $0x9] sm:$0x1] 0.0
        %6913 = vst [vmem:[#allocation2 + $0x51] sm:$0x1] 0.0
        %6914 = vst [vmem:[#allocation2 + $0x99] sm:$0x1] 0.0
        %6915 = vst [vmem:[#allocation2 + $0xe1] sm:$0x1] 0.0
        %6916 = vst [vmem:[#allocation2 + $0x129] sm:$0x1] 0.0
        %6917 = vst [vmem:[#allocation2 + $0x171] sm:$0x1] 0.0
        %6918 = vst [vmem:[#allocation2 + $0x1b9] sm:$0x1] 0.0
        %6919 = vst [vmem:[#allocation2 + $0x201] sm:$0x1] 0.0
        %v6920 = vld [vmem:[#allocation2 + $0x1] sm:$0x1]
        %v6921 = vld [vmem:[#allocation2 + $0x49] sm:$0x1]
        %v6922 = vld [vmem:[#allocation2 + $0x91] sm:$0x1]
        %v6923 = vld [vmem:[#allocation2 + $0xd9] sm:$0x1]
        %v6924 = vld [vmem:[#allocation2 + $0x121] sm:$0x1]
        %v6925 = vld [vmem:[#allocation2 + $0x169] sm:$0x1]
        %v6926 = vld [vmem:[#allocation2 + $0x1b1] sm:$0x1]
        %v6927 = vld [vmem:[#allocation2 + $0x1f9] sm:$0x1]
        %v6928 = vpack.c.bf16 %v6920, %v6920
        %v6929 = vpack.c.bf16 %v6921, %v6921
        %v6930 = vpack.c.bf16 %v6922, %v6922
        %v6931 = vpack.c.bf16 %v6923, %v6923
        %v6932 = vpack.c.bf16 %v6924, %v6924
        %v6933 = vpack.c.bf16 %v6925, %v6925
        %v6934 = vpack.c.bf16 %v6926, %v6926
        %v6935 = vpack.c.bf16 %v6927, %v6927
        %s6936 = scalar_lea.vmem %s2, 1344
        %v6937 = vld [vmem:[%s6936] sm:$0xf]
        %v6938 = vld [vmem:[%s6936 + $0x4] sm:$0xf]
        %v6939 = vld [vmem:[%s6936 + $0x8] sm:$0xf]
        %v6940 = vld [vmem:[%s6936 + $0xc] sm:$0xf]
        %v6941 = vld [vmem:[%s6936 + $0x10] sm:$0xf]
        %v6942 = vld [vmem:[%s6936 + $0x14] sm:$0xf]
        %v6943 = vld [vmem:[%s6936 + $0x18] sm:$0xf]
        %v6944 = vld [vmem:[%s6936 + $0x1c] sm:$0xf]
        %v6945 = vld [vmem:[%s6936 + $0x20] sm:$0xf]
        %v6946 = vld [vmem:[%s6936 + $0x24] sm:$0xf]
        %v6947 = vld [vmem:[%s6936 + $0x28] sm:$0xf]
        %v6948 = vld [vmem:[%s6936 + $0x2c] sm:$0xf]
        %v6949 = vld [vmem:[%s6936 + $0x30] sm:$0xf]
        %v6950 = vld [vmem:[%s6936 + $0x34] sm:$0xf]
        %v6951 = vld [vmem:[%s6936 + $0x38] sm:$0xf]
        %v6952 = vld [vmem:[%s6936 + $0x3c] sm:$0xf]
        %v6953 = vld [vmem:[#allocation2 + $0x2] sm:$0x1]
        %v6954 = vld [vmem:[#allocation2 + $0x4a] sm:$0x1]
        %v6955 = vld [vmem:[#allocation2 + $0x92] sm:$0x1]
        %v6956 = vld [vmem:[#allocation2 + $0xda] sm:$0x1]
        %v6957 = vld [vmem:[#allocation2 + $0x122] sm:$0x1]
        %v6958 = vld [vmem:[#allocation2 + $0x16a] sm:$0x1]
        %v6959 = vld [vmem:[#allocation2 + $0x1b2] sm:$0x1]
        %v6960 = vld [vmem:[#allocation2 + $0x1fa] sm:$0x1]
        %v6961 = vpack.c.bf16 %v6953, %v6953
        %v6962 = vpack.c.bf16 %v6954, %v6954
        %v6963 = vpack.c.bf16 %v6955, %v6955
        %v6964 = vpack.c.bf16 %v6956, %v6956
        %v6965 = vpack.c.bf16 %v6957, %v6957
        %v6966 = vpack.c.bf16 %v6958, %v6958
        %v6967 = vpack.c.bf16 %v6959, %v6959
        %v6968 = vpack.c.bf16 %v6960, %v6960
        %s6969 = scalar_lea.vmem %s2, 1408
        %v6970 = vld [vmem:[%s6969] sm:$0xf]
        %v6971 = vld [vmem:[%s6969 + $0x4] sm:$0xf]
        %v6972 = vld [vmem:[%s6969 + $0x8] sm:$0xf]
        %v6973 = vld [vmem:[%s6969 + $0xc] sm:$0xf]
        %v6974 = vld [vmem:[%s6969 + $0x10] sm:$0xf]
        %v6975 = vld [vmem:[%s6969 + $0x14] sm:$0xf]
        %v6976 = vld [vmem:[%s6969 + $0x18] sm:$0xf]
        %v6977 = vld [vmem:[%s6969 + $0x1c] sm:$0xf]
        %v6978 = vld [vmem:[%s6969 + $0x20] sm:$0xf]
        %v6979 = vld [vmem:[%s6969 + $0x24] sm:$0xf]
        %v6980 = vld [vmem:[%s6969 + $0x28] sm:$0xf]
        %v6981 = vld [vmem:[%s6969 + $0x2c] sm:$0xf]
        %v6982 = vld [vmem:[%s6969 + $0x30] sm:$0xf]
        %v6983 = vld [vmem:[%s6969 + $0x34] sm:$0xf]
        %v6984 = vld [vmem:[%s6969 + $0x38] sm:$0xf]
        %v6985 = vld [vmem:[%s6969 + $0x3c] sm:$0xf]
        %v6994 = vunpack.c.l.b16 %v6961
        %v6995 = vunpack.c.l.b16 %v6962
        %v6996 = vunpack.c.l.b16 %v6963
        %v6997 = vunpack.c.l.b16 %v6964
        %v6998 = vunpack.c.l.b16 %v6965
        %v6999 = vunpack.c.l.b16 %v6966
        %v7000 = vunpack.c.l.b16 %v6967
        %v7001 = vunpack.c.l.b16 %v6968
        %v7002 = vrot.slane %v6995, 7
        %vm7003 = vcmask 1041409
        %v7004 = vsel %vm7003, %v7002, %v6994
        %v7005 = vrot.slane %v6996, 6
        %vm7006 = vcmask 1042434
        %v7007 = vsel %vm7006, %v7005, %v7004
        %v7008 = vrot.slane %v6997, 5
        %vm7009 = vcmask 1043459
        %v7010 = vsel %vm7009, %v7008, %v7007
        %v7011 = vrot.slane %v6998, 4
        %vm7012 = vcmask 1044484
        %v7013 = vsel %vm7012, %v7011, %v7010
        %v7014 = vrot.slane %v6999, 3
        %vm7015 = vcmask 1045509
        %v7016 = vsel %vm7015, %v7014, %v7013
        %v7017 = vrot.slane %v7000, 2
        %vm7018 = vcmask 1046534
        %v7019 = vsel %vm7018, %v7017, %v7016
        %v7020 = vrot.slane %v7001, 1
        %vm7021 = vcmask 1047559
        %v7022 = vsel %vm7021, %v7020, %v7019
        %v7023 = vpack.c.b16 %v7022, %v7022
        %v7041 = vunpack.c.l.b16 %v6970
        %v7042 = vunpack.c.l.b16 %v6971
        %v7043 = vunpack.c.l.b16 %v6972
        %v7044 = vunpack.c.l.b16 %v6973
        %v7045 = vunpack.c.l.b16 %v6974
        %v7046 = vunpack.c.l.b16 %v6975
        %v7047 = vunpack.c.l.b16 %v6976
        %v7048 = vunpack.c.l.b16 %v6977
        %v7049 = vunpack.c.l.b16 %v6978
        %v7050 = vunpack.c.l.b16 %v6979
        %v7051 = vunpack.c.l.b16 %v6980
        %v7052 = vunpack.c.l.b16 %v6981
        %v7053 = vunpack.c.l.b16 %v6982
        %v7054 = vunpack.c.l.b16 %v6983
        %v7055 = vunpack.c.l.b16 %v6984
        %v7056 = vunpack.c.l.b16 %v6985
        %v7057 = vpack.c.b16 %v7042, %v7041
        %v7058 = vpack.c.b16 %v7044, %v7043
        %v7059 = vpack.c.b16 %v7046, %v7045
        %v7060 = vpack.c.b16 %v7048, %v7047
        %v7061 = vpack.c.b16 %v7050, %v7049
        %v7062 = vpack.c.b16 %v7052, %v7051
        %v7063 = vpack.c.b16 %v7054, %v7053
        %v7064 = vpack.c.b16 %v7056, %v7055
        %7073 = vmatprep.subr.bf16.mxu0 0
        %7074 = vmatpush1.bf16.msra.mxu0 %v7057
        %7075 = vmatprep.subr.bf16.mxu0 0
        %7076 = vmatpush1.bf16.msra.mxu0 %v7058
        %7077 = vmatprep.subr.bf16.mxu0 0
        %7078 = vmatpush1.bf16.msra.mxu0 %v7059
        %7079 = vmatprep.subr.bf16.mxu0 0
        %7080 = vmatpush1.bf16.msra.mxu0 %v7060
        %7081 = vmatprep.subr.bf16.mxu0 0
        %7082 = vmatpush1.bf16.msra.mxu0 %v7061
        %7083 = vmatprep.subr.bf16.mxu0 0
        %7084 = vmatpush1.bf16.msra.mxu0 %v7062
        %7085 = vmatprep.subr.bf16.mxu0 0
        %7086 = vmatpush1.bf16.msra.mxu0 %v7063
        %7087 = vmatprep.subr.bf16.mxu0 0
        %7088 = vmatpush1.bf16.msra.mxu0 %v7064
        %7089 = vmatprep.subr.bf16.mxu0 0
        %7090 = vmatpush1.bf16.msra.mxu0 0
        %7091 = vmatprep.subr.bf16.mxu0 0
        %7092 = vmatpush1.bf16.msra.mxu0 0
        %7093 = vmatprep.subr.bf16.mxu0 0
        %7094 = vmatpush1.bf16.msra.mxu0 0
        %7095 = vmatprep.subr.bf16.mxu0 0
        %7096 = vmatpush1.bf16.msra.mxu0 0
        %7097 = vmatprep.subr.bf16.mxu0 0
        %7098 = vmatpush1.bf16.msra.mxu0 0
        %7099 = vmatprep.subr.bf16.mxu0 0
        %7100 = vmatpush1.bf16.msra.mxu0 0
        %7101 = vmatprep.subr.bf16.mxu0 0
        %7102 = vmatpush1.bf16.msra.mxu0 0
        %7103 = vmatprep.subr.bf16.mxu0 0
        %7104 = vmatpush1.bf16.msra.mxu0 0
        %7105 = vmatprep.mubr.bf16.mxu0 0
        %7106 = vmatmul.mubr.bf16.gmra.mrb[0].mxu0 %v7023
        %v7107 = vpop.f32.mrb[0].mxu0
        %v7108 = vadd.f32 0.0, %v7107
        %v7109 = vpop.f32.mrb[0].mxu0
        %v7110 = vpop.f32.mrb[0].mxu0
        %v7111 = vpop.f32.mrb[0].mxu0
        %7112 = vdwg.mxu0
        %v7121 = vunpack.c.l.b16 %v6928
        %v7122 = vunpack.c.l.b16 %v6929
        %v7123 = vunpack.c.l.b16 %v6930
        %v7124 = vunpack.c.l.b16 %v6931
        %v7125 = vunpack.c.l.b16 %v6932
        %v7126 = vunpack.c.l.b16 %v6933
        %v7127 = vunpack.c.l.b16 %v6934
        %v7128 = vunpack.c.l.b16 %v6935
        %v7129 = vrot.slane %v7122, 7
        %v7130 = vsel %vm7003, %v7129, %v7121
        %v7131 = vrot.slane %v7123, 6
        %v7132 = vsel %vm7006, %v7131, %v7130
        %v7133 = vrot.slane %v7124, 5
        %v7134 = vsel %vm7009, %v7133, %v7132
        %v7135 = vrot.slane %v7125, 4
        %v7136 = vsel %vm7012, %v7135, %v7134
        %v7137 = vrot.slane %v7126, 3
        %v7138 = vsel %vm7015, %v7137, %v7136
        %v7139 = vrot.slane %v7127, 2
        %v7140 = vsel %vm7018, %v7139, %v7138
        %v7141 = vrot.slane %v7128, 1
        %v7142 = vsel %vm7021, %v7141, %v7140
        %v7143 = vpack.c.b16 %v7142, %v7142
        %v7161 = vunpack.c.l.b16 %v6937
        %v7162 = vunpack.c.l.b16 %v6938
        %v7163 = vunpack.c.l.b16 %v6939
        %v7164 = vunpack.c.l.b16 %v6940
        %v7165 = vunpack.c.l.b16 %v6941
        %v7166 = vunpack.c.l.b16 %v6942
        %v7167 = vunpack.c.l.b16 %v6943
        %v7168 = vunpack.c.l.b16 %v6944
        %v7169 = vunpack.c.l.b16 %v6945
        %v7170 = vunpack.c.l.b16 %v6946
        %v7171 = vunpack.c.l.b16 %v6947
        %v7172 = vunpack.c.l.b16 %v6948
        %v7173 = vunpack.c.l.b16 %v6949
        %v7174 = vunpack.c.l.b16 %v6950
        %v7175 = vunpack.c.l.b16 %v6951
        %v7176 = vunpack.c.l.b16 %v6952
        %v7177 = vpack.c.b16 %v7162, %v7161
        %v7178 = vpack.c.b16 %v7164, %v7163
        %v7179 = vpack.c.b16 %v7166, %v7165
        %v7180 = vpack.c.b16 %v7168, %v7167
        %v7181 = vpack.c.b16 %v7170, %v7169
        %v7182 = vpack.c.b16 %v7172, %v7171
        %v7183 = vpack.c.b16 %v7174, %v7173
        %v7184 = vpack.c.b16 %v7176, %v7175
        %7193 = vmatprep.subr.bf16.mxu0 0
        %7194 = vmatpush1.bf16.msra.mxu0 %v7177
        %7195 = vmatprep.subr.bf16.mxu0 0
        %7196 = vmatpush1.bf16.msra.mxu0 %v7178
        %7197 = vmatprep.subr.bf16.mxu0 0
        %7198 = vmatpush1.bf16.msra.mxu0 %v7179
        %7199 = vmatprep.subr.bf16.mxu0 0
        %7200 = vmatpush1.bf16.msra.mxu0 %v7180
        %7201 = vmatprep.subr.bf16.mxu0 0
        %7202 = vmatpush1.bf16.msra.mxu0 %v7181
        %7203 = vmatprep.subr.bf16.mxu0 0
        %7204 = vmatpush1.bf16.msra.mxu0 %v7182
        %7205 = vmatprep.subr.bf16.mxu0 0
        %7206 = vmatpush1.bf16.msra.mxu0 %v7183
        %7207 = vmatprep.subr.bf16.mxu0 0
        %7208 = vmatpush1.bf16.msra.mxu0 %v7184
        %7209 = vmatprep.subr.bf16.mxu0 0
        %7210 = vmatpush1.bf16.msra.mxu0 0
        %7211 = vmatprep.subr.bf16.mxu0 0
        %7212 = vmatpush1.bf16.msra.mxu0 0
        %7213 = vmatprep.subr.bf16.mxu0 0
        %7214 = vmatpush1.bf16.msra.mxu0 0
        %7215 = vmatprep.subr.bf16.mxu0 0
        %7216 = vmatpush1.bf16.msra.mxu0 0
        %7217 = vmatprep.subr.bf16.mxu0 0
        %7218 = vmatpush1.bf16.msra.mxu0 0
        %7219 = vmatprep.subr.bf16.mxu0 0
        %7220 = vmatpush1.bf16.msra.mxu0 0
        %7221 = vmatprep.subr.bf16.mxu0 0
        %7222 = vmatpush1.bf16.msra.mxu0 0
        %7223 = vmatprep.subr.bf16.mxu0 0
        %7224 = vmatpush1.bf16.msra.mxu0 0
        %7225 = vmatprep.mubr.bf16.mxu0 0
        %7226 = vmatmul.mubr.bf16.gmra.mrb[0].mxu0 %v7143
        %v7227 = vpop.f32.mrb[0].mxu0
        %v7228 = vadd.f32 %v7108, %v7227
        %v7229 = vpop.f32.mrb[0].mxu0
        %v7230 = vpop.f32.mrb[0].mxu0
        %v7231 = vpop.f32.mrb[0].mxu0
        %7232 = vdwg.mxu0
        %v7233 = vld [vmem:[#allocation2 + $0x3] sm:$0x1]
        %v7234 = vld [vmem:[#allocation2 + $0x4b] sm:$0x1]
        %v7235 = vld [vmem:[#allocation2 + $0x93] sm:$0x1]
        %v7236 = vld [vmem:[#allocation2 + $0xdb] sm:$0x1]
        %v7237 = vld [vmem:[#allocation2 + $0x123] sm:$0x1]
        %v7238 = vld [vmem:[#allocation2 + $0x16b] sm:$0x1]
        %v7239 = vld [vmem:[#allocation2 + $0x1b3] sm:$0x1]
        %v7240 = vld [vmem:[#allocation2 + $0x1fb] sm:$0x1]
        %v7241 = vpack.c.bf16 %v7233, %v7233
        %v7242 = vpack.c.bf16 %v7234, %v7234
        %v7243 = vpack.c.bf16 %v7235, %v7235
        %v7244 = vpack.c.bf16 %v7236, %v7236
        %v7245 = vpack.c.bf16 %v7237, %v7237
        %v7246 = vpack.c.bf16 %v7238, %v7238
        %v7247 = vpack.c.bf16 %v7239, %v7239
        %v7248 = vpack.c.bf16 %v7240, %v7240
        %s7249 = scalar_lea.vmem %s2, 1472
        %v7250 = vld [vmem:[%s7249] sm:$0xf]
        %v7251 = vld [vmem:[%s7249 + $0x4] sm:$0xf]
        %v7252 = vld [vmem:[%s7249 + $0x8] sm:$0xf]
        %v7253 = vld [vmem:[%s7249 + $0xc] sm:$0xf]
        %v7254 = vld [vmem:[%s7249 + $0x10] sm:$0xf]
        %v7255 = vld [vmem:[%s7249 + $0x14] sm:$0xf]
        %v7256 = vld [vmem:[%s7249 + $0x18] sm:$0xf]
        %v7257 = vld [vmem:[%s7249 + $0x1c] sm:$0xf]
        %v7258 = vld [vmem:[%s7249 + $0x20] sm:$0xf]
        %v7259 = vld [vmem:[%s7249 + $0x24] sm:$0xf]
        %v7260 = vld [vmem:[%s7249 + $0x28] sm:$0xf]
        %v7261 = vld [vmem:[%s7249 + $0x2c] sm:$0xf]
        %v7262 = vld [vmem:[%s7249 + $0x30] sm:$0xf]
        %v7263 = vld [vmem:[%s7249 + $0x34] sm:$0xf]
        %v7264 = vld [vmem:[%s7249 + $0x38] sm:$0xf]
        %v7265 = vld [vmem:[%s7249 + $0x3c] sm:$0xf]
        %v7274 = vunpack.c.l.b16 %v7241
        %v7275 = vunpack.c.l.b16 %v7242
        %v7276 = vunpack.c.l.b16 %v7243
        %v7277 = vunpack.c.l.b16 %v7244
        %v7278 = vunpack.c.l.b16 %v7245
        %v7279 = vunpack.c.l.b16 %v7246
        %v7280 = vunpack.c.l.b16 %v7247
        %v7281 = vunpack.c.l.b16 %v7248
        %v7282 = vrot.slane %v7275, 7
        %v7283 = vsel %vm7003, %v7282, %v7274
        %v7284 = vrot.slane %v7276, 6
        %v7285 = vsel %vm7006, %v7284, %v7283
        %v7286 = vrot.slane %v7277, 5
        %v7287 = vsel %vm7009, %v7286, %v7285
        %v7288 = vrot.slane %v7278, 4
        %v7289 = vsel %vm7012, %v7288, %v7287
        %v7290 = vrot.slane %v7279, 3
        %v7291 = vsel %vm7015, %v7290, %v7289
        %v7292 = vrot.slane %v7280, 2
        %v7293 = vsel %vm7018, %v7292, %v7291
        %v7294 = vrot.slane %v7281, 1
        %v7295 = vsel %vm7021, %v7294, %v7293
        %v7296 = vpack.c.b16 %v7295, %v7295
        %v7314 = vunpack.c.l.b16 %v7250
        %v7315 = vunpack.c.l.b16 %v7251
        %v7316 = vunpack.c.l.b16 %v7252
        %v7317 = vunpack.c.l.b16 %v7253
        %v7318 = vunpack.c.l.b16 %v7254
        %v7319 = vunpack.c.l.b16 %v7255
        %v7320 = vunpack.c.l.b16 %v7256
        %v7321 = vunpack.c.l.b16 %v7257
        %v7322 = vunpack.c.l.b16 %v7258
        %v7323 = vunpack.c.l.b16 %v7259
        %v7324 = vunpack.c.l.b16 %v7260
        %v7325 = vunpack.c.l.b16 %v7261
        %v7326 = vunpack.c.l.b16 %v7262
        %v7327 = vunpack.c.l.b16 %v7263
        %v7328 = vunpack.c.l.b16 %v7264
        %v7329 = vunpack.c.l.b16 %v7265
        %v7330 = vpack.c.b16 %v7315, %v7314
        %v7331 = vpack.c.b16 %v7317, %v7316
        %v7332 = vpack.c.b16 %v7319, %v7318
        %v7333 = vpack.c.b16 %v7321, %v7320
        %v7334 = vpack.c.b16 %v7323, %v7322
        %v7335 = vpack.c.b16 %v7325, %v7324
        %v7336 = vpack.c.b16 %v7327, %v7326
        %v7337 = vpack.c.b16 %v7329, %v7328
        %7346 = vmatprep.subr.bf16.mxu0 0
        %7347 = vmatpush1.bf16.msra.mxu0 %v7330
        %7348 = vmatprep.subr.bf16.mxu0 0
        %7349 = vmatpush1.bf16.msra.mxu0 %v7331
        %7350 = vmatprep.subr.bf16.mxu0 0
        %7351 = vmatpush1.bf16.msra.mxu0 %v7332
        %7352 = vmatprep.subr.bf16.mxu0 0
        %7353 = vmatpush1.bf16.msra.mxu0 %v7333
        %7354 = vmatprep.subr.bf16.mxu0 0
        %7355 = vmatpush1.bf16.msra.mxu0 %v7334
        %7356 = vmatprep.subr.bf16.mxu0 0
        %7357 = vmatpush1.bf16.msra.mxu0 %v7335
        %7358 = vmatprep.subr.bf16.mxu0 0
        %7359 = vmatpush1.bf16.msra.mxu0 %v7336
        %7360 = vmatprep.subr.bf16.mxu0 0
        %7361 = vmatpush1.bf16.msra.mxu0 %v7337
        %7362 = vmatprep.subr.bf16.mxu0 0
        %7363 = vmatpush1.bf16.msra.mxu0 0
        %7364 = vmatprep.subr.bf16.mxu0 0
        %7365 = vmatpush1.bf16.msra.mxu0 0
        %7366 = vmatprep.subr.bf16.mxu0 0
        %7367 = vmatpush1.bf16.msra.mxu0 0
        %7368 = vmatprep.subr.bf16.mxu0 0
        %7369 = vmatpush1.bf16.msra.mxu0 0
        %7370 = vmatprep.subr.bf16.mxu0 0
        %7371 = vmatpush1.bf16.msra.mxu0 0
        %7372 = vmatprep.subr.bf16.mxu0 0
        %7373 = vmatpush1.bf16.msra.mxu0 0
        %7374 = vmatprep.subr.bf16.mxu0 0
        %7375 = vmatpush1.bf16.msra.mxu0 0
        %7376 = vmatprep.subr.bf16.mxu0 0
        %7377 = vmatpush1.bf16.msra.mxu0 0
        %7378 = vmatprep.mubr.bf16.mxu0 0
        %7379 = vmatmul.mubr.bf16.gmra.mrb[0].mxu0 %v7296
        %v7380 = vpop.f32.mrb[0].mxu0
        %v7381 = vadd.f32 0.0, %v7380
        %v7382 = vpop.f32.mrb[0].mxu0
        %v7383 = vpop.f32.mrb[0].mxu0
        %v7384 = vpop.f32.mrb[0].mxu0
        %7385 = vdwg.mxu0
        %v7386 = vadd.f32 %v7228, %v7381
        %v7387 = vld [vmem:[#allocation2 + $0x4] sm:$0x1]
        %v7388 = vld [vmem:[#allocation2 + $0x4c] sm:$0x1]
        %v7389 = vld [vmem:[#allocation2 + $0x94] sm:$0x1]
        %v7390 = vld [vmem:[#allocation2 + $0xdc] sm:$0x1]
        %v7391 = vld [vmem:[#allocation2 + $0x124] sm:$0x1]
        %v7392 = vld [vmem:[#allocation2 + $0x16c] sm:$0x1]
        %v7393 = vld [vmem:[#allocation2 + $0x1b4] sm:$0x1]
        %v7394 = vld [vmem:[#allocation2 + $0x1fc] sm:$0x1]
        %v7395 = vpack.c.bf16 %v7387, %v7387
        %v7396 = vpack.c.bf16 %v7388, %v7388
        %v7397 = vpack.c.bf16 %v7389, %v7389
        %v7398 = vpack.c.bf16 %v7390, %v7390
        %v7399 = vpack.c.bf16 %v7391, %v7391
        %v7400 = vpack.c.bf16 %v7392, %v7392
        %v7401 = vpack.c.bf16 %v7393, %v7393
        %v7402 = vpack.c.bf16 %v7394, %v7394
        %s7403 = scalar_lea.vmem %s2, 1536
        %v7404 = vld [vmem:[%s7403] sm:$0xf]
        %v7405 = vld [vmem:[%s7403 + $0x4] sm:$0xf]
        %v7406 = vld [vmem:[%s7403 + $0x8] sm:$0xf]
        %v7407 = vld [vmem:[%s7403 + $0xc] sm:$0xf]
        %v7408 = vld [vmem:[%s7403 + $0x10] sm:$0xf]
        %v7409 = vld [vmem:[%s7403 + $0x14] sm:$0xf]
        %v7410 = vld [vmem:[%s7403 + $0x18] sm:$0xf]
        %v7411 = vld [vmem:[%s7403 + $0x1c] sm:$0xf]
        %v7412 = vld [vmem:[%s7403 + $0x20] sm:$0xf]
        %v7413 = vld [vmem:[%s7403 + $0x24] sm:$0xf]
        %v7414 = vld [vmem:[%s7403 + $0x28] sm:$0xf]
        %v7415 = vld [vmem:[%s7403 + $0x2c] sm:$0xf]
        %v7416 = vld [vmem:[%s7403 + $0x30] sm:$0xf]
        %v7417 = vld [vmem:[%s7403 + $0x34] sm:$0xf]
        %v7418 = vld [vmem:[%s7403 + $0x38] sm:$0xf]
        %v7419 = vld [vmem:[%s7403 + $0x3c] sm:$0xf]
        %v7428 = vunpack.c.l.b16 %v7395
        %v7429 = vunpack.c.l.b16 %v7396
        %v7430 = vunpack.c.l.b16 %v7397
        %v7431 = vunpack.c.l.b16 %v7398
        %v7432 = vunpack.c.l.b16 %v7399
        %v7433 = vunpack.c.l.b16 %v7400
        %v7434 = vunpack.c.l.b16 %v7401
        %v7435 = vunpack.c.l.b16 %v7402
        %v7436 = vrot.slane %v7429, 7
        %v7437 = vsel %vm7003, %v7436, %v7428
        %v7438 = vrot.slane %v7430, 6
        %v7439 = vsel %vm7006, %v7438, %v7437
        %v7440 = vrot.slane %v7431, 5
        %v7441 = vsel %vm7009, %v7440, %v7439
        %v7442 = vrot.slane %v7432, 4
        %v7443 = vsel %vm7012, %v7442, %v7441
        %v7444 = vrot.slane %v7433, 3
        %v7445 = vsel %vm7015, %v7444, %v7443
        %v7446 = vrot.slane %v7434, 2
        %v7447 = vsel %vm7018, %v7446, %v7445
        %v7448 = vrot.slane %v7435, 1
        %v7449 = vsel %vm7021, %v7448, %v7447
        %v7450 = vpack.c.b16 %v7449, %v7449
        %v7468 = vunpack.c.l.b16 %v7404
        %v7469 = vunpack.c.l.b16 %v7405
        %v7470 = vunpack.c.l.b16 %v7406
        %v7471 = vunpack.c.l.b16 %v7407
        %v7472 = vunpack.c.l.b16 %v7408
        %v7473 = vunpack.c.l.b16 %v7409
        %v7474 = vunpack.c.l.b16 %v7410
        %v7475 = vunpack.c.l.b16 %v7411
        %v7476 = vunpack.c.l.b16 %v7412
        %v7477 = vunpack.c.l.b16 %v7413
        %v7478 = vunpack.c.l.b16 %v7414
        %v7479 = vunpack.c.l.b16 %v7415
        %v7480 = vunpack.c.l.b16 %v7416
        %v7481 = vunpack.c.l.b16 %v7417
        %v7482 = vunpack.c.l.b16 %v7418
        %v7483 = vunpack.c.l.b16 %v7419
        %v7484 = vpack.c.b16 %v7469, %v7468
        %v7485 = vpack.c.b16 %v7471, %v7470
        %v7486 = vpack.c.b16 %v7473, %v7472
        %v7487 = vpack.c.b16 %v7475, %v7474
        %v7488 = vpack.c.b16 %v7477, %v7476
        %v7489 = vpack.c.b16 %v7479, %v7478
        %v7490 = vpack.c.b16 %v7481, %v7480
        %v7491 = vpack.c.b16 %v7483, %v7482
        %7500 = vmatprep.subr.bf16.mxu0 0
        %7501 = vmatpush1.bf16.msra.mxu0 %v7484
        %7502 = vmatprep.subr.bf16.mxu0 0
        %7503 = vmatpush1.bf16.msra.mxu0 %v7485
        %7504 = vmatprep.subr.bf16.mxu0 0
        %7505 = vmatpush1.bf16.msra.mxu0 %v7486
        %7506 = vmatprep.subr.bf16.mxu0 0
        %7507 = vmatpush1.bf16.msra.mxu0 %v7487
        %7508 = vmatprep.subr.bf16.mxu0 0
        %7509 = vmatpush1.bf16.msra.mxu0 %v7488
        %7510 = vmatprep.subr.bf16.mxu0 0
        %7511 = vmatpush1.bf16.msra.mxu0 %v7489
        %7512 = vmatprep.subr.bf16.mxu0 0
        %7513 = vmatpush1.bf16.msra.mxu0 %v7490
        %7514 = vmatprep.subr.bf16.mxu0 0
        %7515 = vmatpush1.bf16.msra.mxu0 %v7491
        %7516 = vmatprep.subr.bf16.mxu0 0
        %7517 = vmatpush1.bf16.msra.mxu0 0
        %7518 = vmatprep.subr.bf16.mxu0 0
        %7519 = vmatpush1.bf16.msra.mxu0 0
        %7520 = vmatprep.subr.bf16.mxu0 0
        %7521 = vmatpush1.bf16.msra.mxu0 0
        %7522 = vmatprep.subr.bf16.mxu0 0
        %7523 = vmatpush1.bf16.msra.mxu0 0
        %7524 = vmatprep.subr.bf16.mxu0 0
        %7525 = vmatpush1.bf16.msra.mxu0 0
        %7526 = vmatprep.subr.bf16.mxu0 0
        %7527 = vmatpush1.bf16.msra.mxu0 0
        %7528 = vmatprep.subr.bf16.mxu0 0
        %7529 = vmatpush1.bf16.msra.mxu0 0
        %7530 = vmatprep.subr.bf16.mxu0 0
        %7531 = vmatpush1.bf16.msra.mxu0 0
        %7532 = vmatprep.mubr.bf16.mxu0 0
        %7533 = vmatmul.mubr.bf16.gmra.mrb[0].mxu0 %v7450
        %v7534 = vpop.f32.mrb[0].mxu0
        %v7535 = vadd.f32 0.0, %v7534
        %v7536 = vpop.f32.mrb[0].mxu0
        %v7537 = vpop.f32.mrb[0].mxu0
        %v7538 = vpop.f32.mrb[0].mxu0
        %7539 = vdwg.mxu0
        %v7540 = vadd.f32 %v7386, %v7535
        %v7541 = vld [vmem:[#allocation2 + $0x5] sm:$0x1]
        %v7542 = vld [vmem:[#allocation2 + $0x4d] sm:$0x1]
        %v7543 = vld [vmem:[#allocation2 + $0x95] sm:$0x1]
        %v7544 = vld [vmem:[#allocation2 + $0xdd] sm:$0x1]
        %v7545 = vld [vmem:[#allocation2 + $0x125] sm:$0x1]
        %v7546 = vld [vmem:[#allocation2 + $0x16d] sm:$0x1]
        %v7547 = vld [vmem:[#allocation2 + $0x1b5] sm:$0x1]
        %v7548 = vld [vmem:[#allocation2 + $0x1fd] sm:$0x1]
        %v7549 = vpack.c.bf16 %v7541, %v7541
        %v7550 = vpack.c.bf16 %v7542, %v7542
        %v7551 = vpack.c.bf16 %v7543, %v7543
        %v7552 = vpack.c.bf16 %v7544, %v7544
        %v7553 = vpack.c.bf16 %v7545, %v7545
        %v7554 = vpack.c.bf16 %v7546, %v7546
        %v7555 = vpack.c.bf16 %v7547, %v7547
        %v7556 = vpack.c.bf16 %v7548, %v7548
        %s7557 = scalar_lea.vmem %s2, 1600
        %v7558 = vld [vmem:[%s7557] sm:$0xf]
        %v7559 = vld [vmem:[%s7557 + $0x4] sm:$0xf]
        %v7560 = vld [vmem:[%s7557 + $0x8] sm:$0xf]
        %v7561 = vld [vmem:[%s7557 + $0xc] sm:$0xf]
        %v7562 = vld [vmem:[%s7557 + $0x10] sm:$0xf]
        %v7563 = vld [vmem:[%s7557 + $0x14] sm:$0xf]
        %v7564 = vld [vmem:[%s7557 + $0x18] sm:$0xf]
        %v7565 = vld [vmem:[%s7557 + $0x1c] sm:$0xf]
        %v7566 = vld [vmem:[%s7557 + $0x20] sm:$0xf]
        %v7567 = vld [vmem:[%s7557 + $0x24] sm:$0xf]
        %v7568 = vld [vmem:[%s7557 + $0x28] sm:$0xf]
        %v7569 = vld [vmem:[%s7557 + $0x2c] sm:$0xf]
        %v7570 = vld [vmem:[%s7557 + $0x30] sm:$0xf]
        %v7571 = vld [vmem:[%s7557 + $0x34] sm:$0xf]
        %v7572 = vld [vmem:[%s7557 + $0x38] sm:$0xf]
        %v7573 = vld [vmem:[%s7557 + $0x3c] sm:$0xf]
        %v7582 = vunpack.c.l.b16 %v7549
        %v7583 = vunpack.c.l.b16 %v7550
        %v7584 = vunpack.c.l.b16 %v7551
        %v7585 = vunpack.c.l.b16 %v7552
        %v7586 = vunpack.c.l.b16 %v7553
        %v7587 = vunpack.c.l.b16 %v7554
        %v7588 = vunpack.c.l.b16 %v7555
        %v7589 = vunpack.c.l.b16 %v7556
        %v7590 = vrot.slane %v7583, 7
        %v7591 = vsel %vm7003, %v7590, %v7582
        %v7592 = vrot.slane %v7584, 6
        %v7593 = vsel %vm7006, %v7592, %v7591
        %v7594 = vrot.slane %v7585, 5
        %v7595 = vsel %vm7009, %v7594, %v7593
        %v7596 = vrot.slane %v7586, 4
        %v7597 = vsel %vm7012, %v7596, %v7595
        %v7598 = vrot.slane %v7587, 3
        %v7599 = vsel %vm7015, %v7598, %v7597
        %v7600 = vrot.slane %v7588, 2
        %v7601 = vsel %vm7018, %v7600, %v7599
        %v7602 = vrot.slane %v7589, 1
        %v7603 = vsel %vm7021, %v7602, %v7601
        %v7604 = vpack.c.b16 %v7603, %v7603
        %v7622 = vunpack.c.l.b16 %v7558
        %v7623 = vunpack.c.l.b16 %v7559
        %v7624 = vunpack.c.l.b16 %v7560
        %v7625 = vunpack.c.l.b16 %v7561
        %v7626 = vunpack.c.l.b16 %v7562
        %v7627 = vunpack.c.l.b16 %v7563
        %v7628 = vunpack.c.l.b16 %v7564
        %v7629 = vunpack.c.l.b16 %v7565
        %v7630 = vunpack.c.l.b16 %v7566
        %v7631 = vunpack.c.l.b16 %v7567
        %v7632 = vunpack.c.l.b16 %v7568
        %v7633 = vunpack.c.l.b16 %v7569
        %v7634 = vunpack.c.l.b16 %v7570
        %v7635 = vunpack.c.l.b16 %v7571
        %v7636 = vunpack.c.l.b16 %v7572
        %v7637 = vunpack.c.l.b16 %v7573
        %v7638 = vpack.c.b16 %v7623, %v7622
        %v7639 = vpack.c.b16 %v7625, %v7624
        %v7640 = vpack.c.b16 %v7627, %v7626
        %v7641 = vpack.c.b16 %v7629, %v7628
        %v7642 = vpack.c.b16 %v7631, %v7630
        %v7643 = vpack.c.b16 %v7633, %v7632
        %v7644 = vpack.c.b16 %v7635, %v7634
        %v7645 = vpack.c.b16 %v7637, %v7636
        %7654 = vmatprep.subr.bf16.mxu0 0
        %7655 = vmatpush1.bf16.msra.mxu0 %v7638
        %7656 = vmatprep.subr.bf16.mxu0 0
        %7657 = vmatpush1.bf16.msra.mxu0 %v7639
        %7658 = vmatprep.subr.bf16.mxu0 0
        %7659 = vmatpush1.bf16.msra.mxu0 %v7640
        %7660 = vmatprep.subr.bf16.mxu0 0
        %7661 = vmatpush1.bf16.msra.mxu0 %v7641
        %7662 = vmatprep.subr.bf16.mxu0 0
        %7663 = vmatpush1.bf16.msra.mxu0 %v7642
        %7664 = vmatprep.subr.bf16.mxu0 0
        %7665 = vmatpush1.bf16.msra.mxu0 %v7643
        %7666 = vmatprep.subr.bf16.mxu0 0
        %7667 = vmatpush1.bf16.msra.mxu0 %v7644
        %7668 = vmatprep.subr.bf16.mxu0 0
        %7669 = vmatpush1.bf16.msra.mxu0 %v7645
        %7670 = vmatprep.subr.bf16.mxu0 0
        %7671 = vmatpush1.bf16.msra.mxu0 0
        %7672 = vmatprep.subr.bf16.mxu0 0
        %7673 = vmatpush1.bf16.msra.mxu0 0
        %7674 = vmatprep.subr.bf16.mxu0 0
        %7675 = vmatpush1.bf16.msra.mxu0 0
        %7676 = vmatprep.subr.bf16.mxu0 0
        %7677 = vmatpush1.bf16.msra.mxu0 0
        %7678 = vmatprep.subr.bf16.mxu0 0
        %7679 = vmatpush1.bf16.msra.mxu0 0
        %7680 = vmatprep.subr.bf16.mxu0 0
        %7681 = vmatpush1.bf16.msra.mxu0 0
        %7682 = vmatprep.subr.bf16.mxu0 0
        %7683 = vmatpush1.bf16.msra.mxu0 0
        %7684 = vmatprep.subr.bf16.mxu0 0
        %7685 = vmatpush1.bf16.msra.mxu0 0
        %7686 = vmatprep.mubr.bf16.mxu0 0
        %7687 = vmatmul.mubr.bf16.gmra.mrb[0].mxu0 %v7604
        %v7688 = vpop.f32.mrb[0].mxu0
        %v7689 = vadd.f32 0.0, %v7688
        %v7690 = vpop.f32.mrb[0].mxu0
        %v7691 = vpop.f32.mrb[0].mxu0
        %v7692 = vpop.f32.mrb[0].mxu0
        %7693 = vdwg.mxu0
        %v7694 = vadd.f32 %v7540, %v7689
        %v7695 = vld [vmem:[#allocation2 + $0x6] sm:$0x1]
        %v7696 = vld [vmem:[#allocation2 + $0x4e] sm:$0x1]
        %v7697 = vld [vmem:[#allocation2 + $0x96] sm:$0x1]
        %v7698 = vld [vmem:[#allocation2 + $0xde] sm:$0x1]
        %v7699 = vld [vmem:[#allocation2 + $0x126] sm:$0x1]
        %v7700 = vld [vmem:[#allocation2 + $0x16e] sm:$0x1]
        %v7701 = vld [vmem:[#allocation2 + $0x1b6] sm:$0x1]
        %v7702 = vld [vmem:[#allocation2 + $0x1fe] sm:$0x1]
        %v7703 = vpack.c.bf16 %v7695, %v7695
        %v7704 = vpack.c.bf16 %v7696, %v7696
        %v7705 = vpack.c.bf16 %v7697, %v7697
        %v7706 = vpack.c.bf16 %v7698, %v7698
        %v7707 = vpack.c.bf16 %v7699, %v7699
        %v7708 = vpack.c.bf16 %v7700, %v7700
        %v7709 = vpack.c.bf16 %v7701, %v7701
        %v7710 = vpack.c.bf16 %v7702, %v7702
        %s7711 = scalar_lea.vmem %s2, 1664
        %v7712 = vld [vmem:[%s7711] sm:$0xf]
        %v7713 = vld [vmem:[%s7711 + $0x4] sm:$0xf]
        %v7714 = vld [vmem:[%s7711 + $0x8] sm:$0xf]
        %v7715 = vld [vmem:[%s7711 + $0xc] sm:$0xf]
        %v7716 = vld [vmem:[%s7711 + $0x10] sm:$0xf]
        %v7717 = vld [vmem:[%s7711 + $0x14] sm:$0xf]
        %v7718 = vld [vmem:[%s7711 + $0x18] sm:$0xf]
        %v7719 = vld [vmem:[%s7711 + $0x1c] sm:$0xf]
        %v7720 = vld [vmem:[%s7711 + $0x20] sm:$0xf]
        %v7721 = vld [vmem:[%s7711 + $0x24] sm:$0xf]
        %v7722 = vld [vmem:[%s7711 + $0x28] sm:$0xf]
        %v7723 = vld [vmem:[%s7711 + $0x2c] sm:$0xf]
        %v7724 = vld [vmem:[%s7711 + $0x30] sm:$0xf]
        %v7725 = vld [vmem:[%s7711 + $0x34] sm:$0xf]
        %v7726 = vld [vmem:[%s7711 + $0x38] sm:$0xf]
        %v7727 = vld [vmem:[%s7711 + $0x3c] sm:$0xf]
        %v7736 = vunpack.c.l.b16 %v7703
        %v7737 = vunpack.c.l.b16 %v7704
        %v7738 = vunpack.c.l.b16 %v7705
        %v7739 = vunpack.c.l.b16 %v7706
        %v7740 = vunpack.c.l.b16 %v7707
        %v7741 = vunpack.c.l.b16 %v7708
        %v7742 = vunpack.c.l.b16 %v7709
        %v7743 = vunpack.c.l.b16 %v7710
        %v7744 = vrot.slane %v7737, 7
        %v7745 = vsel %vm7003, %v7744, %v7736
        %v7746 = vrot.slane %v7738, 6
        %v7747 = vsel %vm7006, %v7746, %v7745
        %v7748 = vrot.slane %v7739, 5
        %v7749 = vsel %vm7009, %v7748, %v7747
        %v7750 = vrot.slane %v7740, 4
        %v7751 = vsel %vm7012, %v7750, %v7749
        %v7752 = vrot.slane %v7741, 3
        %v7753 = vsel %vm7015, %v7752, %v7751
        %v7754 = vrot.slane %v7742, 2
        %v7755 = vsel %vm7018, %v7754, %v7753
        %v7756 = vrot.slane %v7743, 1
        %v7757 = vsel %vm7021, %v7756, %v7755
        %v7758 = vpack.c.b16 %v7757, %v7757
        %v7776 = vunpack.c.l.b16 %v7712
        %v7777 = vunpack.c.l.b16 %v7713
        %v7778 = vunpack.c.l.b16 %v7714
        %v7779 = vunpack.c.l.b16 %v7715
        %v7780 = vunpack.c.l.b16 %v7716
        %v7781 = vunpack.c.l.b16 %v7717
        %v7782 = vunpack.c.l.b16 %v7718
        %v7783 = vunpack.c.l.b16 %v7719
        %v7784 = vunpack.c.l.b16 %v7720
        %v7785 = vunpack.c.l.b16 %v7721
        %v7786 = vunpack.c.l.b16 %v7722
        %v7787 = vunpack.c.l.b16 %v7723
        %v7788 = vunpack.c.l.b16 %v7724
        %v7789 = vunpack.c.l.b16 %v7725
        %v7790 = vunpack.c.l.b16 %v7726
        %v7791 = vunpack.c.l.b16 %v7727
        %v7792 = vpack.c.b16 %v7777, %v7776
        %v7793 = vpack.c.b16 %v7779, %v7778
        %v7794 = vpack.c.b16 %v7781, %v7780
        %v7795 = vpack.c.b16 %v7783, %v7782
        %v7796 = vpack.c.b16 %v7785, %v7784
        %v7797 = vpack.c.b16 %v7787, %v7786
        %v7798 = vpack.c.b16 %v7789, %v7788
        %v7799 = vpack.c.b16 %v7791, %v7790
        %7808 = vmatprep.subr.bf16.mxu0 0
        %7809 = vmatpush1.bf16.msra.mxu0 %v7792
        %7810 = vmatprep.subr.bf16.mxu0 0
        %7811 = vmatpush1.bf16.msra.mxu0 %v7793
        %7812 = vmatprep.subr.bf16.mxu0 0
        %7813 = vmatpush1.bf16.msra.mxu0 %v7794
        %7814 = vmatprep.subr.bf16.mxu0 0
        %7815 = vmatpush1.bf16.msra.mxu0 %v7795
        %7816 = vmatprep.subr.bf16.mxu0 0
        %7817 = vmatpush1.bf16.msra.mxu0 %v7796
        %7818 = vmatprep.subr.bf16.mxu0 0
        %7819 = vmatpush1.bf16.msra.mxu0 %v7797
        %7820 = vmatprep.subr.bf16.mxu0 0
        %7821 = vmatpush1.bf16.msra.mxu0 %v7798
        %7822 = vmatprep.subr.bf16.mxu0 0
        %7823 = vmatpush1.bf16.msra.mxu0 %v7799
        %7824 = vmatprep.subr.bf16.mxu0 0
        %7825 = vmatpush1.bf16.msra.mxu0 0
        %7826 = vmatprep.subr.bf16.mxu0 0
        %7827 = vmatpush1.bf16.msra.mxu0 0
        %7828 = vmatprep.subr.bf16.mxu0 0
        %7829 = vmatpush1.bf16.msra.mxu0 0
        %7830 = vmatprep.subr.bf16.mxu0 0
        %7831 = vmatpush1.bf16.msra.mxu0 0
        %7832 = vmatprep.subr.bf16.mxu0 0
        %7833 = vmatpush1.bf16.msra.mxu0 0
        %7834 = vmatprep.subr.bf16.mxu0 0
        %7835 = vmatpush1.bf16.msra.mxu0 0
        %7836 = vmatprep.subr.bf16.mxu0 0
        %7837 = vmatpush1.bf16.msra.mxu0 0
        %7838 = vmatprep.subr.bf16.mxu0 0
        %7839 = vmatpush1.bf16.msra.mxu0 0
        %7840 = vmatprep.mubr.bf16.mxu0 0
        %7841 = vmatmul.mubr.bf16.gmra.mrb[0].mxu0 %v7758
        %v7842 = vpop.f32.mrb[0].mxu0
        %v7843 = vadd.f32 0.0, %v7842
        %v7844 = vpop.f32.mrb[0].mxu0
        %v7845 = vpop.f32.mrb[0].mxu0
        %v7846 = vpop.f32.mrb[0].mxu0
        %7847 = vdwg.mxu0
        %v7848 = vadd.f32 %v7694, %v7843
        %v7849 = vld [vmem:[#allocation2 + $0x7] sm:$0x1]
        %v7850 = vld [vmem:[#allocation2 + $0x4f] sm:$0x1]
        %v7851 = vld [vmem:[#allocation2 + $0x97] sm:$0x1]
        %v7852 = vld [vmem:[#allocation2 + $0xdf] sm:$0x1]
        %v7853 = vld [vmem:[#allocation2 + $0x127] sm:$0x1]
        %v7854 = vld [vmem:[#allocation2 + $0x16f] sm:$0x1]
        %v7855 = vld [vmem:[#allocation2 + $0x1b7] sm:$0x1]
        %v7856 = vld [vmem:[#allocation2 + $0x1ff] sm:$0x1]
        %v7857 = vpack.c.bf16 %v7849, %v7849
        %v7858 = vpack.c.bf16 %v7850, %v7850
        %v7859 = vpack.c.bf16 %v7851, %v7851
        %v7860 = vpack.c.bf16 %v7852, %v7852
        %v7861 = vpack.c.bf16 %v7853, %v7853
        %v7862 = vpack.c.bf16 %v7854, %v7854
        %v7863 = vpack.c.bf16 %v7855, %v7855
        %v7864 = vpack.c.bf16 %v7856, %v7856
        %s7865 = scalar_lea.vmem %s2, 1728
        %v7866 = vld [vmem:[%s7865] sm:$0xf]
        %v7867 = vld [vmem:[%s7865 + $0x4] sm:$0xf]
        %v7868 = vld [vmem:[%s7865 + $0x8] sm:$0xf]
        %v7869 = vld [vmem:[%s7865 + $0xc] sm:$0xf]
        %v7870 = vld [vmem:[%s7865 + $0x10] sm:$0xf]
        %v7871 = vld [vmem:[%s7865 + $0x14] sm:$0xf]
        %v7872 = vld [vmem:[%s7865 + $0x18] sm:$0xf]
        %v7873 = vld [vmem:[%s7865 + $0x1c] sm:$0xf]
        %v7874 = vld [vmem:[%s7865 + $0x20] sm:$0xf]
        %v7875 = vld [vmem:[%s7865 + $0x24] sm:$0xf]
        %v7876 = vld [vmem:[%s7865 + $0x28] sm:$0xf]
        %v7877 = vld [vmem:[%s7865 + $0x2c] sm:$0xf]
        %v7878 = vld [vmem:[%s7865 + $0x30] sm:$0xf]
        %v7879 = vld [vmem:[%s7865 + $0x34] sm:$0xf]
        %v7880 = vld [vmem:[%s7865 + $0x38] sm:$0xf]
        %v7881 = vld [vmem:[%s7865 + $0x3c] sm:$0xf]
        %v7890 = vunpack.c.l.b16 %v7857
        %v7891 = vunpack.c.l.b16 %v7858
        %v7892 = vunpack.c.l.b16 %v7859
        %v7893 = vunpack.c.l.b16 %v7860
        %v7894 = vunpack.c.l.b16 %v7861
        %v7895 = vunpack.c.l.b16 %v7862
        %v7896 = vunpack.c.l.b16 %v7863
        %v7897 = vunpack.c.l.b16 %v7864
        %v7898 = vrot.slane %v7891, 7
        %v7899 = vsel %vm7003, %v7898, %v7890
        %v7900 = vrot.slane %v7892, 6
        %v7901 = vsel %vm7006, %v7900, %v7899
        %v7902 = vrot.slane %v7893, 5
        %v7903 = vsel %vm7009, %v7902, %v7901
        %v7904 = vrot.slane %v7894, 4
        %v7905 = vsel %vm7012, %v7904, %v7903
        %v7906 = vrot.slane %v7895, 3
        %v7907 = vsel %vm7015, %v7906, %v7905
        %v7908 = vrot.slane %v7896, 2
        %v7909 = vsel %vm7018, %v7908, %v7907
        %v7910 = vrot.slane %v7897, 1
        %v7911 = vsel %vm7021, %v7910, %v7909
        %v7912 = vpack.c.b16 %v7911, %v7911
        %v7930 = vunpack.c.l.b16 %v7866
        %v7931 = vunpack.c.l.b16 %v7867
        %v7932 = vunpack.c.l.b16 %v7868
        %v7933 = vunpack.c.l.b16 %v7869
        %v7934 = vunpack.c.l.b16 %v7870
        %v7935 = vunpack.c.l.b16 %v7871
        %v7936 = vunpack.c.l.b16 %v7872
        %v7937 = vunpack.c.l.b16 %v7873
        %v7938 = vunpack.c.l.b16 %v7874
        %v7939 = vunpack.c.l.b16 %v7875
        %v7940 = vunpack.c.l.b16 %v7876
        %v7941 = vunpack.c.l.b16 %v7877
        %v7942 = vunpack.c.l.b16 %v7878
        %v7943 = vunpack.c.l.b16 %v7879
        %v7944 = vunpack.c.l.b16 %v7880
        %v7945 = vunpack.c.l.b16 %v7881
        %v7946 = vpack.c.b16 %v7931, %v7930
        %v7947 = vpack.c.b16 %v7933, %v7932
        %v7948 = vpack.c.b16 %v7935, %v7934
        %v7949 = vpack.c.b16 %v7937, %v7936
        %v7950 = vpack.c.b16 %v7939, %v7938
        %v7951 = vpack.c.b16 %v7941, %v7940
        %v7952 = vpack.c.b16 %v7943, %v7942
        %v7953 = vpack.c.b16 %v7945, %v7944
        %7962 = vmatprep.subr.bf16.mxu0 0
        %7963 = vmatpush1.bf16.msra.mxu0 %v7946
        %7964 = vmatprep.subr.bf16.mxu0 0
        %7965 = vmatpush1.bf16.msra.mxu0 %v7947
        %7966 = vmatprep.subr.bf16.mxu0 0
        %7967 = vmatpush1.bf16.msra.mxu0 %v7948
        %7968 = vmatprep.subr.bf16.mxu0 0
        %7969 = vmatpush1.bf16.msra.mxu0 %v7949
        %7970 = vmatprep.subr.bf16.mxu0 0
        %7971 = vmatpush1.bf16.msra.mxu0 %v7950
        %7972 = vmatprep.subr.bf16.mxu0 0
        %7973 = vmatpush1.bf16.msra.mxu0 %v7951
        %7974 = vmatprep.subr.bf16.mxu0 0
        %7975 = vmatpush1.bf16.msra.mxu0 %v7952
        %7976 = vmatprep.subr.bf16.mxu0 0
        %7977 = vmatpush1.bf16.msra.mxu0 %v7953
        %7978 = vmatprep.subr.bf16.mxu0 0
        %7979 = vmatpush1.bf16.msra.mxu0 0
        %7980 = vmatprep.subr.bf16.mxu0 0
        %7981 = vmatpush1.bf16.msra.mxu0 0
        %7982 = vmatprep.subr.bf16.mxu0 0
        %7983 = vmatpush1.bf16.msra.mxu0 0
        %7984 = vmatprep.subr.bf16.mxu0 0
        %7985 = vmatpush1.bf16.msra.mxu0 0
        %7986 = vmatprep.subr.bf16.mxu0 0
        %7987 = vmatpush1.bf16.msra.mxu0 0
        %7988 = vmatprep.subr.bf16.mxu0 0
        %7989 = vmatpush1.bf16.msra.mxu0 0
        %7990 = vmatprep.subr.bf16.mxu0 0
        %7991 = vmatpush1.bf16.msra.mxu0 0
        %7992 = vmatprep.subr.bf16.mxu0 0
        %7993 = vmatpush1.bf16.msra.mxu0 0
        %7994 = vmatprep.mubr.bf16.mxu0 0
        %7995 = vmatmul.mubr.bf16.gmra.mrb[0].mxu0 %v7912
        %v7996 = vpop.f32.mrb[0].mxu0
        %v7997 = vadd.f32 0.0, %v7996
        %v7998 = vpop.f32.mrb[0].mxu0
        %v7999 = vpop.f32.mrb[0].mxu0
        %v8000 = vpop.f32.mrb[0].mxu0
        %8001 = vdwg.mxu0
        %v8002 = vadd.f32 %v7848, %v7997
        %v8003 = vld [vmem:[#allocation2 + $0x8] sm:$0x1]
        %v8004 = vld [vmem:[#allocation2 + $0x50] sm:$0x1]
        %v8005 = vld [vmem:[#allocation2 + $0x98] sm:$0x1]
        %v8006 = vld [vmem:[#allocation2 + $0xe0] sm:$0x1]
        %v8007 = vld [vmem:[#allocation2 + $0x128] sm:$0x1]
        %v8008 = vld [vmem:[#allocation2 + $0x170] sm:$0x1]
        %v8009 = vld [vmem:[#allocation2 + $0x1b8] sm:$0x1]
        %v8010 = vld [vmem:[#allocation2 + $0x200] sm:$0x1]
        %v8011 = vpack.c.bf16 %v8003, %v8003
        %v8012 = vpack.c.bf16 %v8004, %v8004
        %v8013 = vpack.c.bf16 %v8005, %v8005
        %v8014 = vpack.c.bf16 %v8006, %v8006
        %v8015 = vpack.c.bf16 %v8007, %v8007
        %v8016 = vpack.c.bf16 %v8008, %v8008
        %v8017 = vpack.c.bf16 %v8009, %v8009
        %v8018 = vpack.c.bf16 %v8010, %v8010
        %s8019 = scalar_lea.vmem %s2, 1792
        %v8020 = vld [vmem:[%s8019] sm:$0xf]
        %v8021 = vld [vmem:[%s8019 + $0x4] sm:$0xf]
        %v8022 = vld [vmem:[%s8019 + $0x8] sm:$0xf]
        %v8023 = vld [vmem:[%s8019 + $0xc] sm:$0xf]
        %v8024 = vld [vmem:[%s8019 + $0x10] sm:$0xf]
        %v8025 = vld [vmem:[%s8019 + $0x14] sm:$0xf]
        %v8026 = vld [vmem:[%s8019 + $0x18] sm:$0xf]
        %v8027 = vld [vmem:[%s8019 + $0x1c] sm:$0xf]
        %v8028 = vld [vmem:[%s8019 + $0x20] sm:$0xf]
        %v8029 = vld [vmem:[%s8019 + $0x24] sm:$0xf]
        %v8030 = vld [vmem:[%s8019 + $0x28] sm:$0xf]
        %v8031 = vld [vmem:[%s8019 + $0x2c] sm:$0xf]
        %v8032 = vld [vmem:[%s8019 + $0x30] sm:$0xf]
        %v8033 = vld [vmem:[%s8019 + $0x34] sm:$0xf]
        %v8034 = vld [vmem:[%s8019 + $0x38] sm:$0xf]
        %v8035 = vld [vmem:[%s8019 + $0x3c] sm:$0xf]
        %v8044 = vunpack.c.l.b16 %v8011
        %v8045 = vunpack.c.l.b16 %v8012
        %v8046 = vunpack.c.l.b16 %v8013
        %v8047 = vunpack.c.l.b16 %v8014
        %v8048 = vunpack.c.l.b16 %v8015
        %v8049 = vunpack.c.l.b16 %v8016
        %v8050 = vunpack.c.l.b16 %v8017
        %v8051 = vunpack.c.l.b16 %v8018
        %v8052 = vrot.slane %v8045, 7
        %v8053 = vsel %vm7003, %v8052, %v8044
        %v8054 = vrot.slane %v8046, 6
        %v8055 = vsel %vm7006, %v8054, %v8053
        %v8056 = vrot.slane %v8047, 5
        %v8057 = vsel %vm7009, %v8056, %v8055
        %v8058 = vrot.slane %v8048, 4
        %v8059 = vsel %vm7012, %v8058, %v8057
        %v8060 = vrot.slane %v8049, 3
        %v8061 = vsel %vm7015, %v8060, %v8059
        %v8062 = vrot.slane %v8050, 2
        %v8063 = vsel %vm7018, %v8062, %v8061
        %v8064 = vrot.slane %v8051, 1
        %v8065 = vsel %vm7021, %v8064, %v8063
        %v8066 = vpack.c.b16 %v8065, %v8065
        %v8084 = vunpack.c.l.b16 %v8020
        %v8085 = vunpack.c.l.b16 %v8021
        %v8086 = vunpack.c.l.b16 %v8022
        %v8087 = vunpack.c.l.b16 %v8023
        %v8088 = vunpack.c.l.b16 %v8024
        %v8089 = vunpack.c.l.b16 %v8025
        %v8090 = vunpack.c.l.b16 %v8026
        %v8091 = vunpack.c.l.b16 %v8027
        %v8092 = vunpack.c.l.b16 %v8028
        %v8093 = vunpack.c.l.b16 %v8029
        %v8094 = vunpack.c.l.b16 %v8030
        %v8095 = vunpack.c.l.b16 %v8031
        %v8096 = vunpack.c.l.b16 %v8032
        %v8097 = vunpack.c.l.b16 %v8033
        %v8098 = vunpack.c.l.b16 %v8034
        %v8099 = vunpack.c.l.b16 %v8035
        %v8100 = vpack.c.b16 %v8085, %v8084
        %v8101 = vpack.c.b16 %v8087, %v8086
        %v8102 = vpack.c.b16 %v8089, %v8088
        %v8103 = vpack.c.b16 %v8091, %v8090
        %v8104 = vpack.c.b16 %v8093, %v8092
        %v8105 = vpack.c.b16 %v8095, %v8094
        %v8106 = vpack.c.b16 %v8097, %v8096
        %v8107 = vpack.c.b16 %v8099, %v8098
        %8116 = vmatprep.subr.bf16.mxu0 0
        %8117 = vmatpush1.bf16.msra.mxu0 %v8100
        %8118 = vmatprep.subr.bf16.mxu0 0
        %8119 = vmatpush1.bf16.msra.mxu0 %v8101
        %8120 = vmatprep.subr.bf16.mxu0 0
        %8121 = vmatpush1.bf16.msra.mxu0 %v8102
        %8122 = vmatprep.subr.bf16.mxu0 0
        %8123 = vmatpush1.bf16.msra.mxu0 %v8103
        %8124 = vmatprep.subr.bf16.mxu0 0
        %8125 = vmatpush1.bf16.msra.mxu0 %v8104
        %8126 = vmatprep.subr.bf16.mxu0 0
        %8127 = vmatpush1.bf16.msra.mxu0 %v8105
        %8128 = vmatprep.subr.bf16.mxu0 0
        %8129 = vmatpush1.bf16.msra.mxu0 %v8106
        %8130 = vmatprep.subr.bf16.mxu0 0
        %8131 = vmatpush1.bf16.msra.mxu0 %v8107
        %8132 = vmatprep.subr.bf16.mxu0 0
        %8133 = vmatpush1.bf16.msra.mxu0 0
        %8134 = vmatprep.subr.bf16.mxu0 0
        %8135 = vmatpush1.bf16.msra.mxu0 0
        %8136 = vmatprep.subr.bf16.mxu0 0
        %8137 = vmatpush1.bf16.msra.mxu0 0
        %8138 = vmatprep.subr.bf16.mxu0 0
        %8139 = vmatpush1.bf16.msra.mxu0 0
        %8140 = vmatprep.subr.bf16.mxu0 0
        %8141 = vmatpush1.bf16.msra.mxu0 0
        %8142 = vmatprep.subr.bf16.mxu0 0
        %8143 = vmatpush1.bf16.msra.mxu0 0
        %8144 = vmatprep.subr.bf16.mxu0 0
        %8145 = vmatpush1.bf16.msra.mxu0 0
        %8146 = vmatprep.subr.bf16.mxu0 0
        %8147 = vmatpush1.bf16.msra.mxu0 0
        %8148 = vmatprep.mubr.bf16.mxu0 0
        %8149 = vmatmul.mubr.bf16.gmra.mrb[0].mxu0 %v8066
        %v8150 = vpop.f32.mrb[0].mxu0
        %v8151 = vadd.f32 0.0, %v8150
        %v8152 = vpop.f32.mrb[0].mxu0
        %v8153 = vpop.f32.mrb[0].mxu0
        %v8154 = vpop.f32.mrb[0].mxu0
        %8155 = vdwg.mxu0
        %v8156 = vadd.f32 %v8002, %v8151
        %s8157 = scalar_lea.vmem %s3, 6
        %v8158 = vld [vmem:[%s8157] sm:$0x1]
        %v8160 = vlaneseq
        %v8161 = vshrl.u32 %v8160, 7
        %v8162 = vsub.s32 0, %v8161
        %v8163 = vrot.slane %v8158, %v8162
        %v8165 = vadd.f32 %v8156, %v8163
        %vm8166 = vcmp.ge.f32.partialorder %v8165, 0.0
        %v8167 = vmul.f32 %v8165, 0.2
        %v8168 = vsel %vm8166, %v8165, %v8167
        %v8169 = vpack.c.bf16 %v8168, %v8168
        %s8170 = scalar_lea.vmem %s2, 1856
        %v8171 = vld [vmem:[%s8170] sm:$0xf]
        %v8172 = vld [vmem:[%s8170 + $0x4] sm:$0xf]
        %v8173 = vld [vmem:[%s8170 + $0x8] sm:$0xf]
        %v8174 = vld [vmem:[%s8170 + $0xc] sm:$0xf]
        %v8175 = vld [vmem:[%s8170 + $0x10] sm:$0xf]
        %v8176 = vld [vmem:[%s8170 + $0x14] sm:$0xf]
        %v8177 = vld [vmem:[%s8170 + $0x18] sm:$0xf]
        %v8178 = vld [vmem:[%s8170 + $0x1c] sm:$0xf]
        %v8179 = vld [vmem:[%s8170 + $0x20] sm:$0xf]
        %v8180 = vld [vmem:[%s8170 + $0x24] sm:$0xf]
        %v8181 = vld [vmem:[%s8170 + $0x28] sm:$0xf]
        %v8182 = vld [vmem:[%s8170 + $0x2c] sm:$0xf]
        %v8183 = vld [vmem:[%s8170 + $0x30] sm:$0xf]
        %v8184 = vld [vmem:[%s8170 + $0x34] sm:$0xf]
        %v8185 = vld [vmem:[%s8170 + $0x38] sm:$0xf]
        %v8186 = vld [vmem:[%s8170 + $0x3c] sm:$0xf]
        %s8187 = scalar_lea.vmem %s3, 7
        %v8188 = vld [vmem:[%s8187] sm:$0x1]
        %v8190 = vlaneseq
        %v8191 = vshrl.u32 %v8190, 7
        %v8192 = vsub.s32 0, %v8191
        %v8193 = vrot.slane %v8188, %v8192
        %v8211 = vunpack.c.l.b16 %v8171
        %v8212 = vunpack.c.l.b16 %v8172
        %v8213 = vunpack.c.l.b16 %v8173
        %v8214 = vunpack.c.l.b16 %v8174
        %v8215 = vunpack.c.l.b16 %v8175
        %v8216 = vunpack.c.l.b16 %v8176
        %v8217 = vunpack.c.l.b16 %v8177
        %v8218 = vunpack.c.l.b16 %v8178
        %v8219 = vunpack.c.l.b16 %v8179
        %v8220 = vunpack.c.l.b16 %v8180
        %v8221 = vunpack.c.l.b16 %v8181
        %v8222 = vunpack.c.l.b16 %v8182
        %v8223 = vunpack.c.l.b16 %v8183
        %v8224 = vunpack.c.l.b16 %v8184
        %v8225 = vunpack.c.l.b16 %v8185
        %v8226 = vunpack.c.l.b16 %v8186
        %v8227 = vpack.c.b16 %v8212, %v8211
        %v8228 = vpack.c.b16 %v8214, %v8213
        %v8229 = vpack.c.b16 %v8216, %v8215
        %v8230 = vpack.c.b16 %v8218, %v8217
        %v8231 = vpack.c.b16 %v8220, %v8219
        %v8232 = vpack.c.b16 %v8222, %v8221
        %v8233 = vpack.c.b16 %v8224, %v8223
        %v8234 = vpack.c.b16 %v8226, %v8225
        %8243 = vmatprep.subr.bf16.mxu0 0
        %8244 = vmatpush1.bf16.msra.mxu0 %v8227
        %8245 = vmatprep.subr.bf16.mxu0 0
        %8246 = vmatpush1.bf16.msra.mxu0 %v8228
        %8247 = vmatprep.subr.bf16.mxu0 0
        %8248 = vmatpush1.bf16.msra.mxu0 %v8229
        %8249 = vmatprep.subr.bf16.mxu0 0
        %8250 = vmatpush1.bf16.msra.mxu0 %v8230
        %8251 = vmatprep.subr.bf16.mxu0 0
        %8252 = vmatpush1.bf16.msra.mxu0 %v8231
        %8253 = vmatprep.subr.bf16.mxu0 0
        %8254 = vmatpush1.bf16.msra.mxu0 %v8232
        %8255 = vmatprep.subr.bf16.mxu0 0
        %8256 = vmatpush1.bf16.msra.mxu0 %v8233
        %8257 = vmatprep.subr.bf16.mxu0 0
        %8258 = vmatpush1.bf16.msra.mxu0 %v8234
        %8259 = vmatprep.subr.bf16.mxu0 0
        %8260 = vmatpush1.bf16.msra.mxu0 0
        %8261 = vmatprep.subr.bf16.mxu0 0
        %8262 = vmatpush1.bf16.msra.mxu0 0
        %8263 = vmatprep.subr.bf16.mxu0 0
        %8264 = vmatpush1.bf16.msra.mxu0 0
        %8265 = vmatprep.subr.bf16.mxu0 0
        %8266 = vmatpush1.bf16.msra.mxu0 0
        %8267 = vmatprep.subr.bf16.mxu0 0
        %8268 = vmatpush1.bf16.msra.mxu0 0
        %8269 = vmatprep.subr.bf16.mxu0 0
        %8270 = vmatpush1.bf16.msra.mxu0 0
        %8271 = vmatprep.subr.bf16.mxu0 0
        %8272 = vmatpush1.bf16.msra.mxu0 0
        %8273 = vmatprep.subr.bf16.mxu0 0
        %8274 = vmatpush1.bf16.msra.mxu0 0
        %8275 = vmatprep.mubr.bf16.mxu0 0
        %8276 = vmatmul.mubr.bf16.gmra.mrb[0].mxu0 %v8169
        %v8277 = vpop.f32.mrb[0].mxu0
        %v8278 = vadd.f32 %v8193, %v8277
        %v8279 = vpop.f32.mrb[0].mxu0
        %v8280 = vpop.f32.mrb[0].mxu0
        %v8281 = vpop.f32.mrb[0].mxu0
        %8282 = vdwg.mxu0
        %8283 = vst [vmem:[%s193] sm:$0xff] %v8278
        %s8284 = sand.u32 %s115, 1
        %s8285 = scalar_lea.sflag [#allocation5], %s8284
        %s8286 = sand.u32 %s115, 1
        %s8287 = smul.addr %s8286, 8
        %s8288 = scalar_lea.vmem [#allocation4], %s8287
        // Predicated region
        $region37: #{net_forward_pallas.1} parent=35 // pred_check
          %p8289 = pneg %p125
        $region38: #{net_forward_pallas.1} parent=35 // pred_check_branch
          %8291 = sbr.rel (%p8289) target = $region40
        $region39: #{net_forward_pallas.1} parent=35 // pred_region
          %s8293 = ssub.s32 128, 128
          %8294 = vsyncadd %s8285, %s8293
          %s8295 = smul.addr %s18, 128
          %s8296 = scalar_lea.hbm %s4, %s8295
          %s8298 = sshll.u32 %s8288, 4
          %s8299 = int_to_ptr.vmem [resolvable:$true] %s8298
          %8301 = dma.vmem_to_hbm [thread:$0]  %s8299, 128, %s8296, %s8285
        $region40: #{net_forward_pallas.1} parent=35 // pred_fallthru
          _
      $region36: #{net_forward_pallas.1} parent=5 // pred_fallthru
        _
      %p8302 = scmp.le.s32.totalorder 2, %s13
      // Predicated region
      $region41: #{net_forward_pallas.1} parent=5 // pred_check
        %p8303 = pneg %p8302
      $region42: #{net_forward_pallas.1} parent=5 // pred_check_branch
        %8305 = sbr.rel (%p8303) target = $region44
      $region43: #{net_forward_pallas.1} parent=5 // pred_region
        %s8306 = ssub.s32 %s13, 2
        // Predicated region
        $region45: #{net_forward_pallas.1} parent=43 // pred_check
          %p8307 = pneg %p131
        $region46: #{net_forward_pallas.1} parent=43 // pred_check_branch
          %8309 = sbr.rel (%p8307) target = $region48
        $region47: #{net_forward_pallas.1} parent=43 // pred_region
          %s8310 = sand.u32 %s116, 1
          %s8311 = scalar_lea.sflag [#allocation5], %s8310
          %s8312 = sand.u32 %s116, 1
          %s8313 = smul.addr %s8312, 8
          %s8314 = scalar_lea.vmem [#allocation4], %s8313
          %8315 = dma.done %s8311, 128
        $region48: #{net_forward_pallas.1} parent=43 // pred_fallthru
          _
      $region44: #{net_forward_pallas.1} parent=5 // pred_fallthru
        _
    $region6: #{net_forward_pallas.1} parent=1 // loop_footer
      %s17 = sadd.s32 1, %s13
    $region7: #{net_forward_pallas.1} parent=1 // loop_footer_branch
      %12 = sbr.rel target = $region3
    $region8: #{net_forward_pallas.1} parent=1 // loop_exit
      _
    %8316 = vsyncpa [#allocation5], 1
    %s8317 = scalar_lea.sflag [#allocation5], 1
    %8318 = vsyncpa %s8317, 1

</llo_original>
